<compile_context>
chip_gen: v6e
topology: v6e:2x2x1
jax: 0.10.0
libtpu: 0.0.40
codegen_flags: <defaults>
</compile_context>

<pallas_src>
import jax
import jax.numpy as jnp
from jax import lax
from jax.experimental import pallas as pl
from jax.experimental.pallas import tpu as pltpu


KK = 3                  # 3x3 convs, padding 1
NTAP = KK * KK          # 9 taps
COL = 8                 # sublane-aligned column offset of the interior in pad scratch
N_BLOCKS = 8            # LFB_D has 8 AWRUs


# -----------------------------------------------------------------------------
# Fused LFB_D Pallas kernel
# -----------------------------------------------------------------------------
def _make_lfb_d_kernel(H, W, C, BF, n_blocks):
    HW = H * W
    WPAD = W + 2 * COL

    def zero_halo(ref):
        # Only the halo must be zero; the interior is overwritten before every read.
        hp, wp, cin = ref.shape
        zrow = jnp.zeros((1, wp, cin), ref.dtype)
        ref[0:1, :, :] = zrow
        ref[hp - 1:hp, :, :] = zrow
        zcol = jnp.zeros((hp, COL, cin), ref.dtype)
        ref[:, 0:COL, :] = zcol                    # left halo band  (sublane-aligned)
        ref[:, COL + W:wp, :] = zcol               # right halo band (sublane-aligned)

    def build_patch(pad_ref, cin):
        # Densely packed im2col: tap t = ky*3+kx occupies lanes [t*cin, (t+1)*cin).
        # Assembled as a register value (9 loads + one lane concat); cast to bf16
        # so the matmul runs on the MXU's native bf16 path with f32 accumulation.
        taps = [pad_ref[ky:ky + H, COL - 1 + kx:COL - 1 + kx + W, :]
                for ky in range(KK) for kx in range(KK)]
        patch = jnp.concatenate(taps, axis=-1)            # (H, W, 9*cin) f32
        return patch.reshape(HW, NTAP * cin).astype(jnp.bfloat16)

    def mxu(a, b):
        # (M, K) bf16 x (K, N) bf16 -> (M, N) f32, one MXU matmul.
        return jnp.dot(a, b, preferred_element_type=jnp.float32)

    def kernel(x_ref, w10_ref, b1_ref, w2_ref, b2_ref, wc_ref, br_ref, sc_ref,
               o_ref, padc_ref, padb_ref, cur_ref, red_ref, hpre_ref):
        zero_halo(padc_ref)
        zero_halo(padb_ref)

        x_img = x_ref[0]                                  # (H, W, C) f32
        cur_ref[...] = x_img.reshape(HW, C)               # residual chain stays f32
        red_ref[...] = jnp.zeros_like(red_ref)

        # Seed the padded scratch with x and pre-compute block 0's conv1 (no bias).
        padc_ref[1:1 + H, COL:COL + W, :] = x_img
        hpre_ref[...] = mxu(build_patch(padc_ref, C), w10_ref[...])

        def body(i, carry):
            # --- AWRU i: conv3x3 -> ReLU -> conv3x3 (each conv is one matmul) ---
            h = jnp.maximum(hpre_ref[...] + b1_ref[i], 0.0)          # (HW, BF) f32
            padb_ref[1:1 + H, COL:COL + W, :] = h.reshape(H, W, BF)
            body_v = mxu(build_patch(padb_ref, BF), w2_ref[i]) + b2_ref[i]

            rs = sc_ref[2 * i]                                       # AWRU res_scale
            xs = sc_ref[2 * i + 1]                                   # AWRU x_scale
            cur = rs * body_v + xs * cur_ref[...]                    # x_i (f32)
            cur_ref[...] = cur

            # --- x_i feeds slab i of the reduction conv AND block (i+1)'s conv1:
            # one shared patch, one fused matmul, split the result. ---
            padc_ref[1:1 + H, COL:COL + W, :] = cur.reshape(H, W, C)
            fused = mxu(build_patch(padc_ref, C), wc_ref[i])         # (HW, BF + C)
            hpre_ref[...] = fused[:, :BF]                            # next conv1 (pre-bias)
            red_ref[...] = red_ref[...] + fused[:, BF:]              # reduction slab i
            return carry

        lax.fori_loop(0, n_blocks, body, 0)

        res = red_ref[...] + br_ref[...]
        out = (sc_ref[2 * n_blocks] * res
               + sc_ref[2 * n_blocks + 1] * x_ref[0].reshape(HW, C))
        o_ref[...] = out.reshape(1, H, W, C).astype(o_ref.dtype)

    return kernel


# -----------------------------------------------------------------------------
# Wrapper: parameter packing + pallas_call
# -----------------------------------------------------------------------------
def _flatten_w(w):
    """(3,3,Cin,Cout) HWIO -> (9*Cin, Cout): K index = (ky*3+kx)*Cin + c (dense)."""
    k, _, cin, cout = w.shape
    return w.reshape(k * k * cin, cout)


def pack_lfb_d_params(params):
    blocks = params["blocks"]
    nb = len(blocks)
    C = blocks[0]["w1"].shape[2]
    BF = blocks[0]["w1"].shape[3]
    KC = NTAP * C

    W10 = _flatten_w(blocks[0]["w1"]).astype(jnp.bfloat16)                  # (KC, BF)
    W2 = jnp.stack([_flatten_w(b["w2"]) for b in blocks]).astype(jnp.bfloat16)  # (nb, KB, C)
    B1 = jnp.stack([b["b1"] for b in blocks]).astype(jnp.float32).reshape(nb, 1, BF)
    B2 = jnp.stack([b["b2"] for b in blocks]).astype(jnp.float32).reshape(nb, 1, C)

    # Fused weights: [ W1 of block i+1 | reduction slab i ] — both consume x_i's patch.
    red_w = params["red_w"]                                                 # (3,3,nb*C,C)
    wcs = []
    for i in range(nb):
        wr_i = _flatten_w(red_w[:, :, i * C:(i + 1) * C, :])                # (KC, C)
        if i + 1 < nb:
            w1_next = _flatten_w(blocks[i + 1]["w1"])                       # (KC, BF)
        else:
            w1_next = jnp.zeros((KC, BF), jnp.float32)                      # last: unused
        wcs.append(jnp.concatenate([w1_next, wr_i], axis=1))                # (KC, BF+C)
    WC = jnp.stack(wcs).astype(jnp.bfloat16)                                # (nb, KC, BF+C)

    BR = params["red_b"].reshape(1, -1).astype(jnp.float32)                 # (1, C)

    sc = []
    for b in blocks:
        sc += [b["res_scale"], b["x_scale"]]
    sc += [params["res_scale"], params["x_scale"]]
    SC = jnp.stack(sc).astype(jnp.float32)                                  # (2*nb + 2,)
    return dict(W10=W10, B1=B1, W2=W2, B2=B2, WC=WC, BR=BR, SC=SC)


def lfb_d_forward(x, packed):
    """x: (N, H, W, C) float32 NHWC.  Returns LFB_D(x), same shape, one pallas_call."""
    N, H, W, C = x.shape
    KC, BF = packed["W10"].shape
    nb, KB, _ = packed["W2"].shape
    assert KC == NTAP * C and KB == NTAP * BF
    HW = H * W
    WPAD = W + 2 * COL

    kernel = _make_lfb_d_kernel(H, W, C, BF, nb)

    return pl.pallas_call(
        kernel,
        out_shape=jax.ShapeDtypeStruct((N, H, W, C), x.dtype),
        grid=(N,),
        in_specs=[
            pl.BlockSpec((1, H, W, C), lambda n: (n, 0, 0, 0)),      # x: per-image block
            # Weights / biases: whole-array VMEM blocks with constant index maps
            # -> DMA'd once, resident across the grid.
            pl.BlockSpec((KC, BF), lambda n: (0, 0)),                # W1 of block 0 (bf16)
            pl.BlockSpec((nb, 1, BF), lambda n: (0, 0, 0)),          # conv1 biases (f32)
            pl.BlockSpec((nb, KB, C), lambda n: (0, 0, 0)),          # conv2 weights (bf16)
            pl.BlockSpec((nb, 1, C), lambda n: (0, 0, 0)),           # conv2 biases (f32)
            pl.BlockSpec((nb, KC, BF + C), lambda n: (0, 0, 0)),     # fused [W1_next | WR_i]
            pl.BlockSpec((1, C), lambda n: (0, 0)),                  # reduction bias (f32)
            pl.BlockSpec(memory_space=pltpu.MemorySpace.SMEM),       # scales (SMEM scalars)
        ],
        out_specs=pl.BlockSpec((1, H, W, C), lambda n: (n, 0, 0, 0)),
        scratch_shapes=[
            pltpu.VMEM((H + 2, WPAD, C), jnp.float32),   # zero-padded current feature
            pltpu.VMEM((H + 2, WPAD, BF), jnp.float32),  # zero-padded AWRU hidden
            pltpu.VMEM((HW, C), jnp.float32),            # cur (residual chain, f32)
            pltpu.VMEM((HW, C), jnp.float32),            # reduction-conv accumulator
            pltpu.VMEM((HW, BF), jnp.float32),           # next block's conv1 pre-activation
        ],
        compiler_params=pltpu.CompilerParams(
            dimension_semantics=("parallel",),           # batch across TCs on v7x (N>=2)
            vmem_limit_bytes=32 * 1024 * 1024,           # explicit budget (v7x-safe)
        ),
    )(x, packed["W10"], packed["B1"], packed["W2"], packed["B2"],
      packed["WC"], packed["BR"], packed["SC"])


# -----------------------------------------------------------------------------
# Deterministic parameter init (weight-norm reparam folded into effective weights)
# -----------------------------------------------------------------------------
def init_params(key, n_feats, block_feats, kernel_size):
    def conv_init(k, cin, cout, ksz):
        kw, kb = jax.random.split(k)
        w = jax.random.normal(kw, (ksz, ksz, cin, cout), jnp.float32) * 0.05
        b = jax.random.normal(kb, (cout,), jnp.float32) * 0.01
        return w, b

    blocks = []
    keys = jax.random.split(key, 10)
    for i in range(N_BLOCKS):
        k1, k2 = jax.random.split(keys[i])
        w1, b1 = conv_init(k1, n_feats, block_feats, kernel_size)
        w2, b2 = conv_init(k2, block_feats, n_feats, kernel_size)
        blocks.append(dict(
            w1=w1, b1=b1, w2=w2, b2=b2,
            res_scale=jnp.array(1.0, jnp.float32),   # Scale(1)
            x_scale=jnp.array(1.0, jnp.float32),     # Scale(1)
        ))
    red_w, red_b = conv_init(keys[8], n_feats * N_BLOCKS, n_feats, 3)
    return dict(
        blocks=blocks,
        red_w=red_w, red_b=red_b,
        res_scale=jnp.array(1.0, jnp.float32),
        x_scale=jnp.array(1.0, jnp.float32),
    )


# -----------------------------------------------------------------------------
# Pure-JAX references (for verification)
# -----------------------------------------------------------------------------
def _conv_ref(x, w, b):
    y = lax.conv_general_dilated(
        x, w, window_strides=(1, 1), padding="SAME",
        dimension_numbers=("NHWC", "HWIO", "NHWC"))
    return y + b[None, None, None, :]


def _conv_ref_bf16(x, w, b):
    # Precision-matched reference: bf16 operands, f32 accumulation (as the kernel).
    y = lax.conv_general_dilated(
        x.astype(jnp.bfloat16), w.astype(jnp.bfloat16),
        window_strides=(1, 1), padding="SAME",
        dimension_numbers=("NHWC", "HWIO", "NHWC"),
        preferred_element_type=jnp.float32)
    return y + b[None, None, None, :]


def _lfb_d_ref(x, params, conv):
    def awru(x, p):
        h = jnp.maximum(conv(x, p["w1"], p["b1"]), 0.0)
        body = conv(h, p["w2"], p["b2"])
        return p["res_scale"] * body + p["x_scale"] * x

    feats, h = [], x
    for i in range(N_BLOCKS):
        h = awru(h, params["blocks"][i])
        feats.append(h)
    cat = jnp.concatenate(feats, axis=-1)
    res = conv(cat, params["red_w"], params["red_b"])
    return params["res_scale"] * res + params["x_scale"] * x


def lfb_d_ref_f32(x, params):
    return _lfb_d_ref(x, params, _conv_ref)


def lfb_d_ref_mixed(x, params):
    return _lfb_d_ref(x, params, _conv_ref_bf16)


# -----------------------------------------------------------------------------
if __name__ == "__main__":
    # Small shapes consistent with the module: N=2, n_feats=4, H=W=16, block_feats=8.
    N, n_feats, H, W = 2, 4, 16, 16
    block_feats, kernel_size = 8, 3

    key = jax.random.PRNGKey(0)
    kx_, kp = jax.random.split(key)
    # PyTorch input would be NCHW (2, 4, 16, 16); the kernel works in NHWC.
    x_nchw = jax.random.normal(kx_, (N, n_feats, H, W), jnp.float32)
    x = jnp.transpose(x_nchw, (0, 2, 3, 1))                 # -> (2, 16, 16, 4)

    params = init_params(kp, n_feats, block_feats, kernel_size)
    packed = pack_lfb_d_params(params)

    fwd = jax.jit(lfb_d_forward)
    out = jax.block_until_ready(fwd(x, packed))
    assert out.shape == (N, H, W, n_feats)

    # Tight check against a precision-matched (bf16-operand / f32-accum) reference.
    ref_mixed = lfb_d_ref_mixed(x, params)
    assert jnp.allclose(out, ref_mixed, atol=5e-3, rtol=5e-3), (
        "mismatch vs bf16-matched reference, max err="
        f"{float(jnp.max(jnp.abs(out - ref_mixed)))}")

    # Loose sanity check against the pure-f32 module semantics (bf16 MXU operands
    # introduce ~1e-2-scale rounding over 8 residual blocks).
    ref_f32 = lfb_d_ref_f32(x, params)
    assert jnp.allclose(out, ref_f32, atol=1e-1, rtol=1e-1), (
        "mismatch vs f32 reference, max err="
        f"{float(jnp.max(jnp.abs(out - ref_f32)))}")

    print("KERNEL_OK")
</pallas_src>

<mosaic_0001>
module attributes {stable_mosaic.version = 11 : i64} {
  func.func @kernel(%arg0: i32, %arg1: memref<1x16x16x4xf32, #tpu.memory_space<vmem>>, %arg2: memref<36x8xbf16, #tpu.memory_space<vmem>>, %arg3: memref<8x1x8xf32, #tpu.memory_space<vmem>>, %arg4: memref<8x72x4xbf16, #tpu.memory_space<vmem>>, %arg5: memref<8x1x4xf32, #tpu.memory_space<vmem>>, %arg6: memref<8x36x12xbf16, #tpu.memory_space<vmem>>, %arg7: memref<1x4xf32, #tpu.memory_space<vmem>>, %arg8: memref<18xf32, #tpu.memory_space<smem>>, %arg9: memref<1x16x16x4xf32, #tpu.memory_space<vmem>>, %arg10: memref<18x32x4xf32, #tpu.memory_space<vmem>>, %arg11: memref<18x32x8xf32, #tpu.memory_space<vmem>>, %arg12: memref<256x4xf32, #tpu.memory_space<vmem>>, %arg13: memref<256x4xf32, #tpu.memory_space<vmem>>, %arg14: memref<256x8xf32, #tpu.memory_space<vmem>>) attributes {dimension_semantics = [#tpu.dimension_semantics<parallel>], iteration_bounds = array<i64: 2>, scalar_prefetch = 0 : i64, scratch_operands = 5 : i64, tpu.core_type = #tpu.core_type<tc>, window_params = [{transform_indices = @transform_0, window_bounds = array<i64: 1, 16, 16, 4>}, {pipeline_mode = #tpu.pipeline_mode<synchronous>, transform_indices = @transform_1, window_bounds = array<i64: 36, 8>}, {pipeline_mode = #tpu.pipeline_mode<synchronous>, transform_indices = @transform_2, window_bounds = array<i64: 8, 1, 8>}, {pipeline_mode = #tpu.pipeline_mode<synchronous>, transform_indices = @transform_3, window_bounds = array<i64: 8, 72, 4>}, {pipeline_mode = #tpu.pipeline_mode<synchronous>, transform_indices = @transform_4, window_bounds = array<i64: 8, 1, 4>}, {pipeline_mode = #tpu.pipeline_mode<synchronous>, transform_indices = @transform_5, window_bounds = array<i64: 8, 36, 12>}, {pipeline_mode = #tpu.pipeline_mode<synchronous>, transform_indices = @transform_6, window_bounds = array<i64: 1, 4>}, {transform_indices = @transform_7, window_bounds = array<i64: 18>}, {transform_indices = @transform_8, window_bounds = array<i64: 1, 16, 16, 4>}]} {
    %cst = arith.constant 0.000000e+00 : f32
    %0 = vector.broadcast %cst : f32 to vector<1x32x4xf32>
    %c0 = arith.constant 0 : index
    %c0_0 = arith.constant 0 : index
    %c0_1 = arith.constant 0 : index
    %1 = vector.load %arg10[%c0, %c0_0, %c0_1] : memref<18x32x4xf32, #tpu.memory_space<vmem>>, vector<1x32x4xf32>
    tpu.vector_store %arg10[%c0, %c0_0, %c0_1], %0 {strides = array<i32>} : memref<18x32x4xf32, #tpu.memory_space<vmem>>, vector<1x32x4xf32>,
    %c17 = arith.constant 17 : index
    %c0_2 = arith.constant 0 : index
    %c0_3 = arith.constant 0 : index
    %2 = vector.load %arg10[%c17, %c0_2, %c0_3] : memref<18x32x4xf32, #tpu.memory_space<vmem>>, vector<1x32x4xf32>
    tpu.vector_store %arg10[%c17, %c0_2, %c0_3], %0 {strides = array<i32>} : memref<18x32x4xf32, #tpu.memory_space<vmem>>, vector<1x32x4xf32>,
    %cst_4 = arith.constant 0.000000e+00 : f32
    %3 = vector.broadcast %cst_4 : f32 to vector<18x8x4xf32>
    %c0_5 = arith.constant 0 : index
    %c0_6 = arith.constant 0 : index
    %c0_7 = arith.constant 0 : index
    %4 = vector.load %arg10[%c0_5, %c0_6, %c0_7] : memref<18x32x4xf32, #tpu.memory_space<vmem>>, vector<18x8x4xf32>
    tpu.vector_store %arg10[%c0_5, %c0_6, %c0_7], %3 {strides = array<i32>} : memref<18x32x4xf32, #tpu.memory_space<vmem>>, vector<18x8x4xf32>,
    %c0_8 = arith.constant 0 : index
    %c24 = arith.constant 24 : index
    %c0_9 = arith.constant 0 : index
    %5 = vector.load %arg10[%c0_8, %c24, %c0_9] : memref<18x32x4xf32, #tpu.memory_space<vmem>>, vector<18x8x4xf32>
    tpu.vector_store %arg10[%c0_8, %c24, %c0_9], %3 {strides = array<i32>} : memref<18x32x4xf32, #tpu.memory_space<vmem>>, vector<18x8x4xf32>,
    %cst_10 = arith.constant 0.000000e+00 : f32
    %6 = vector.broadcast %cst_10 : f32 to vector<1x32x8xf32>
    %c0_11 = arith.constant 0 : index
    %c0_12 = arith.constant 0 : index
    %c0_13 = arith.constant 0 : index
    %7 = vector.load %arg11[%c0_11, %c0_12, %c0_13] : memref<18x32x8xf32, #tpu.memory_space<vmem>>, vector<1x32x8xf32>
    tpu.vector_store %arg11[%c0_11, %c0_12, %c0_13], %6 {strides = array<i32>} : memref<18x32x8xf32, #tpu.memory_space<vmem>>, vector<1x32x8xf32>,
    %c17_14 = arith.constant 17 : index
    %c0_15 = arith.constant 0 : index
    %c0_16 = arith.constant 0 : index
    %8 = vector.load %arg11[%c17_14, %c0_15, %c0_16] : memref<18x32x8xf32, #tpu.memory_space<vmem>>, vector<1x32x8xf32>
    tpu.vector_store %arg11[%c17_14, %c0_15, %c0_16], %6 {strides = array<i32>} : memref<18x32x8xf32, #tpu.memory_space<vmem>>, vector<1x32x8xf32>,
    %cst_17 = arith.constant 0.000000e+00 : f32
    %9 = vector.broadcast %cst_17 : f32 to vector<18x8x8xf32>
    %c0_18 = arith.constant 0 : index
    %c0_19 = arith.constant 0 : index
    %c0_20 = arith.constant 0 : index
    %10 = vector.load %arg11[%c0_18, %c0_19, %c0_20] : memref<18x32x8xf32, #tpu.memory_space<vmem>>, vector<18x8x8xf32>
    tpu.vector_store %arg11[%c0_18, %c0_19, %c0_20], %9 {strides = array<i32>} : memref<18x32x8xf32, #tpu.memory_space<vmem>>, vector<18x8x8xf32>,
    %c0_21 = arith.constant 0 : index
    %c24_22 = arith.constant 24 : index
    %c0_23 = arith.constant 0 : index
    %11 = vector.load %arg11[%c0_21, %c24_22, %c0_23] : memref<18x32x8xf32, #tpu.memory_space<vmem>>, vector<18x8x8xf32>
    tpu.vector_store %arg11[%c0_21, %c24_22, %c0_23], %9 {strides = array<i32>} : memref<18x32x8xf32, #tpu.memory_space<vmem>>, vector<18x8x8xf32>,
    %c0_24 = arith.constant 0 : index
    %c0_25 = arith.constant 0 : index
    %c0_26 = arith.constant 0 : index
    %c0_27 = arith.constant 0 : index
    %12 = vector.load %arg1[%c0_24, %c0_25, %c0_26, %c0_27] : memref<1x16x16x4xf32, #tpu.memory_space<vmem>>, vector<1x16x16x4xf32>
    %13 = vector.shape_cast %12 : vector<1x16x16x4xf32> to vector<16x16x4xf32>
    %14 = vector.shape_cast %13 : vector<16x16x4xf32> to vector<256x4xf32>
    %c0_28 = arith.constant 0 : index
    %c0_29 = arith.constant 0 : index
    %15 = vector.load %arg12[%c0_28, %c0_29] : memref<256x4xf32, #tpu.memory_space<vmem>>, vector<256x4xf32>
    tpu.vector_store %arg12[%c0_28, %c0_29], %14 {strides = array<i32>} : memref<256x4xf32, #tpu.memory_space<vmem>>, vector<256x4xf32>,
    %cst_30 = arith.constant 0.000000e+00 : f32
    %16 = vector.broadcast %cst_30 : f32 to vector<256x4xf32>
    %c0_31 = arith.constant 0 : index
    %c0_32 = arith.constant 0 : index
    %17 = vector.load %arg13[%c0_31, %c0_32] : memref<256x4xf32, #tpu.memory_space<vmem>>, vector<256x4xf32>
    tpu.vector_store %arg13[%c0_31, %c0_32], %16 {strides = array<i32>} : memref<256x4xf32, #tpu.memory_space<vmem>>, vector<256x4xf32>,
    %c1 = arith.constant 1 : index
    %c8 = arith.constant 8 : index
    %c0_33 = arith.constant 0 : index
    %18 = vector.load %arg10[%c1, %c8, %c0_33] : memref<18x32x4xf32, #tpu.memory_space<vmem>>, vector<16x16x4xf32>
    tpu.vector_store %arg10[%c1, %c8, %c0_33], %13 {strides = array<i32>} : memref<18x32x4xf32, #tpu.memory_space<vmem>>, vector<16x16x4xf32>,
    %c0_34 = arith.constant 0 : index
    %c7 = arith.constant 7 : index
    %c0_35 = arith.constant 0 : index
    %19 = vector.load %arg10[%c0_34, %c7, %c0_35] : memref<18x32x4xf32, #tpu.memory_space<vmem>>, vector<16x16x4xf32>
    %c0_36 = arith.constant 0 : index
    %c8_37 = arith.constant 8 : index
    %c0_38 = arith.constant 0 : index
    %20 = vector.load %arg10[%c0_36, %c8_37, %c0_38] : memref<18x32x4xf32, #tpu.memory_space<vmem>>, vector<16x16x4xf32>
    %c0_39 = arith.constant 0 : index
    %c9 = arith.constant 9 : index
    %c0_40 = arith.constant 0 : index
    %21 = vector.load %arg10[%c0_39, %c9, %c0_40] : memref<18x32x4xf32, #tpu.memory_space<vmem>>, vector<16x16x4xf32>
    %c1_41 = arith.constant 1 : index
    %c7_42 = arith.constant 7 : index
    %c0_43 = arith.constant 0 : index
    %22 = vector.load %arg10[%c1_41, %c7_42, %c0_43] : memref<18x32x4xf32, #tpu.memory_space<vmem>>, vector<16x16x4xf32>
    %c1_44 = arith.constant 1 : index
    %c8_45 = arith.constant 8 : index
    %c0_46 = arith.constant 0 : index
    %23 = vector.load %arg10[%c1_44, %c8_45, %c0_46] : memref<18x32x4xf32, #tpu.memory_space<vmem>>, vector<16x16x4xf32>
    %c1_47 = arith.constant 1 : index
    %c9_48 = arith.constant 9 : index
    %c0_49 = arith.constant 0 : index
    %24 = vector.load %arg10[%c1_47, %c9_48, %c0_49] : memref<18x32x4xf32, #tpu.memory_space<vmem>>, vector<16x16x4xf32>
    %c2 = arith.constant 2 : index
    %c7_50 = arith.constant 7 : index
    %c0_51 = arith.constant 0 : index
    %25 = vector.load %arg10[%c2, %c7_50, %c0_51] : memref<18x32x4xf32, #tpu.memory_space<vmem>>, vector<16x16x4xf32>
    %c2_52 = arith.constant 2 : index
    %c8_53 = arith.constant 8 : index
    %c0_54 = arith.constant 0 : index
    %26 = vector.load %arg10[%c2_52, %c8_53, %c0_54] : memref<18x32x4xf32, #tpu.memory_space<vmem>>, vector<16x16x4xf32>
    %c2_55 = arith.constant 2 : index
    %c9_56 = arith.constant 9 : index
    %c0_57 = arith.constant 0 : index
    %27 = vector.load %arg10[%c2_55, %c9_56, %c0_57] : memref<18x32x4xf32, #tpu.memory_space<vmem>>, vector<16x16x4xf32>
    %28 = tpu.concatenate %19, %20, %21, %22, %23, %24, %25, %26, %27 in 2 : vector<16x16x4xf32>, vector<16x16x4xf32>, vector<16x16x4xf32>, vector<16x16x4xf32>, vector<16x16x4xf32>, vector<16x16x4xf32>, vector<16x16x4xf32>, vector<16x16x4xf32>, vector<16x16x4xf32> -> vector<16x16x36xf32>
    %29 = vector.shape_cast %28 : vector<16x16x36xf32> to vector<256x36xf32>
    %30 = arith.truncf %29 : vector<256x36xf32> to vector<256x36xbf16>
    %c0_58 = arith.constant 0 : index
    %c0_59 = arith.constant 0 : index
    %31 = vector.load %arg2[%c0_58, %c0_59] : memref<36x8xbf16, #tpu.memory_space<vmem>>, vector<36x8xbf16>
    %cst_60 = arith.constant dense<0.000000e+00> : vector<256x8xf32>
    %32 = tpu.matmul %30, %31, %cst_60 {dimension_numbers = #tpu.dot_dimension_numbers<[1], [0], [0], [1], [0, 0, 1, 1], [], []>} : vector<256x36xbf16>, vector<36x8xbf16>, vector<256x8xf32> -> vector<256x8xf32>
    %c0_61 = arith.constant 0 : index
    %c0_62 = arith.constant 0 : index
    %33 = vector.load %arg14[%c0_61, %c0_62] : memref<256x8xf32, #tpu.memory_space<vmem>>, vector<256x8xf32>
    tpu.vector_store %arg14[%c0_61, %c0_62], %32 {strides = array<i32>} : memref<256x8xf32, #tpu.memory_space<vmem>>, vector<256x8xf32>,
    %c0_i32 = arith.constant 0 : i32
    %c8_i32 = arith.constant 8 : i32
    %34 = arith.addi %c0_i32, %c8_i32 : i32
    %c1_i32 = arith.constant 1 : i32
    scf.for %arg15 = %c0_i32 to %34 step %c1_i32  : i32 {
      %c0_77 = arith.constant 0 : index
      %c0_78 = arith.constant 0 : index
      %51 = vector.load %arg14[%c0_77, %c0_78] : memref<256x8xf32, #tpu.memory_space<vmem>>, vector<256x8xf32>
      %52 = arith.index_cast %arg15 : i32 to index
      %c0_79 = arith.constant 0 : index
      %c0_80 = arith.constant 0 : index
      %53 = vector.load %arg3[%52, %c0_79, %c0_80] : memref<8x1x8xf32, #tpu.memory_space<vmem>>, vector<1x1x8xf32>
      %54 = vector.shape_cast %53 : vector<1x1x8xf32> to vector<1x8xf32>
      %55 = vector.broadcast %54 : vector<1x8xf32> to vector<256x8xf32>
      %56 = arith.addf %51, %55 : vector<256x8xf32>
      %cst_81 = arith.constant 0.000000e+00 : f32
      %57 = vector.broadcast %cst_81 : f32 to vector<256x8xf32>
      %58 = arith.maximumf %56, %57 : vector<256x8xf32>
      %59 = vector.shape_cast %58 : vector<256x8xf32> to vector<16x16x8xf32>
      %c1_82 = arith.constant 1 : index
      %c8_83 = arith.constant 8 : index
      %c0_84 = arith.constant 0 : index
      %60 = vector.load %arg11[%c1_82, %c8_83, %c0_84] : memref<18x32x8xf32, #tpu.memory_space<vmem>>, vector<16x16x8xf32>
      tpu.vector_store %arg11[%c1_82, %c8_83, %c0_84], %59 {strides = array<i32>} : memref<18x32x8xf32, #tpu.memory_space<vmem>>, vector<16x16x8xf32>,
      %c0_85 = arith.constant 0 : index
      %c7_86 = arith.constant 7 : index
      %c0_87 = arith.constant 0 : index
      %61 = vector.load %arg11[%c0_85, %c7_86, %c0_87] : memref<18x32x8xf32, #tpu.memory_space<vmem>>, vector<16x16x8xf32>
      %c0_88 = arith.constant 0 : index
      %c8_89 = arith.constant 8 : index
      %c0_90 = arith.constant 0 : index
      %62 = vector.load %arg11[%c0_88, %c8_89, %c0_90] : memref<18x32x8xf32, #tpu.memory_space<vmem>>, vector<16x16x8xf32>
      %c0_91 = arith.constant 0 : index
      %c9_92 = arith.constant 9 : index
      %c0_93 = arith.constant 0 : index
      %63 = vector.load %arg11[%c0_91, %c9_92, %c0_93] : memref<18x32x8xf32, #tpu.memory_space<vmem>>, vector<16x16x8xf32>
      %c1_94 = arith.constant 1 : index
      %c7_95 = arith.constant 7 : index
      %c0_96 = arith.constant 0 : index
      %64 = vector.load %arg11[%c1_94, %c7_95, %c0_96] : memref<18x32x8xf32, #tpu.memory_space<vmem>>, vector<16x16x8xf32>
      %c1_97 = arith.constant 1 : index
      %c8_98 = arith.constant 8 : index
      %c0_99 = arith.constant 0 : index
      %65 = vector.load %arg11[%c1_97, %c8_98, %c0_99] : memref<18x32x8xf32, #tpu.memory_space<vmem>>, vector<16x16x8xf32>
      %c1_100 = arith.constant 1 : index
      %c9_101 = arith.constant 9 : index
      %c0_102 = arith.constant 0 : index
      %66 = vector.load %arg11[%c1_100, %c9_101, %c0_102] : memref<18x32x8xf32, #tpu.memory_space<vmem>>, vector<16x16x8xf32>
      %c2_103 = arith.constant 2 : index
      %c7_104 = arith.constant 7 : index
      %c0_105 = arith.constant 0 : index
      %67 = vector.load %arg11[%c2_103, %c7_104, %c0_105] : memref<18x32x8xf32, #tpu.memory_space<vmem>>, vector<16x16x8xf32>
      %c2_106 = arith.constant 2 : index
      %c8_107 = arith.constant 8 : index
      %c0_108 = arith.constant 0 : index
      %68 = vector.load %arg11[%c2_106, %c8_107, %c0_108] : memref<18x32x8xf32, #tpu.memory_space<vmem>>, vector<16x16x8xf32>
      %c2_109 = arith.constant 2 : index
      %c9_110 = arith.constant 9 : index
      %c0_111 = arith.constant 0 : index
      %69 = vector.load %arg11[%c2_109, %c9_110, %c0_111] : memref<18x32x8xf32, #tpu.memory_space<vmem>>, vector<16x16x8xf32>
      %70 = tpu.concatenate %61, %62, %63, %64, %65, %66, %67, %68, %69 in 2 : vector<16x16x8xf32>, vector<16x16x8xf32>, vector<16x16x8xf32>, vector<16x16x8xf32>, vector<16x16x8xf32>, vector<16x16x8xf32>, vector<16x16x8xf32>, vector<16x16x8xf32>, vector<16x16x8xf32> -> vector<16x16x72xf32>
      %71 = vector.shape_cast %70 : vector<16x16x72xf32> to vector<256x72xf32>
      %72 = arith.truncf %71 : vector<256x72xf32> to vector<256x72xbf16>
      %73 = arith.index_cast %arg15 : i32 to index
      %c0_112 = arith.constant 0 : index
      %c0_113 = arith.constant 0 : index
      %74 = vector.load %arg4[%73, %c0_112, %c0_113] : memref<8x72x4xbf16, #tpu.memory_space<vmem>>, vector<1x72x4xbf16>
      %75 = vector.shape_cast %74 : vector<1x72x4xbf16> to vector<72x4xbf16>
      %cst_114 = arith.constant dense<0.000000e+00> : vector<256x4xf32>
      %76 = tpu.matmul %72, %75, %cst_114 {dimension_numbers = #tpu.dot_dimension_numbers<[1], [0], [0], [1], [0, 0, 1, 1], [], []>} : vector<256x72xbf16>, vector<72x4xbf16>, vector<256x4xf32> -> vector<256x4xf32>
      %77 = arith.index_cast %arg15 : i32 to index
      %c0_115 = arith.constant 0 : index
      %c0_116 = arith.constant 0 : index
      %78 = vector.load %arg5[%77, %c0_115, %c0_116] : memref<8x1x4xf32, #tpu.memory_space<vmem>>, vector<1x1x4xf32>
      %79 = vector.shape_cast %78 : vector<1x1x4xf32> to vector<1x4xf32>
      %80 = vector.broadcast %79 : vector<1x4xf32> to vector<256x4xf32>
      %81 = arith.addf %76, %80 : vector<256x4xf32>
      %c2_i32 = arith.constant 2 : i32
      %82 = arith.muli %c2_i32, %arg15 : i32
      %83 = arith.index_cast %82 : i32 to index
      %84 = memref.load %arg8[%83] : memref<18xf32, #tpu.memory_space<smem>>
      %c2_i32_117 = arith.constant 2 : i32
      %85 = arith.muli %c2_i32_117, %arg15 : i32
      %c1_i32_118 = arith.constant 1 : i32
      %86 = arith.addi %85, %c1_i32_118 : i32
      %87 = arith.index_cast %86 : i32 to index
      %88 = memref.load %arg8[%87] : memref<18xf32, #tpu.memory_space<smem>>
      %89 = vector.broadcast %84 : f32 to vector<256x4xf32>
      %90 = arith.mulf %89, %81 : vector<256x4xf32>
      %c0_119 = arith.constant 0 : index
      %c0_120 = arith.constant 0 : index
      %91 = vector.load %arg12[%c0_119, %c0_120] : memref<256x4xf32, #tpu.memory_space<vmem>>, vector<256x4xf32>
      %92 = vector.broadcast %88 : f32 to vector<256x4xf32>
      %93 = arith.mulf %92, %91 : vector<256x4xf32>
      %94 = arith.addf %90, %93 : vector<256x4xf32>
      %c0_121 = arith.constant 0 : index
      %c0_122 = arith.constant 0 : index
      %95 = vector.load %arg12[%c0_121, %c0_122] : memref<256x4xf32, #tpu.memory_space<vmem>>, vector<256x4xf32>
      tpu.vector_store %arg12[%c0_121, %c0_122], %94 {strides = array<i32>} : memref<256x4xf32, #tpu.memory_space<vmem>>, vector<256x4xf32>,
      %96 = vector.shape_cast %94 : vector<256x4xf32> to vector<16x16x4xf32>
      %c1_123 = arith.constant 1 : index
      %c8_124 = arith.constant 8 : index
      %c0_125 = arith.constant 0 : index
      %97 = vector.load %arg10[%c1_123, %c8_124, %c0_125] : memref<18x32x4xf32, #tpu.memory_space<vmem>>, vector<16x16x4xf32>
      tpu.vector_store %arg10[%c1_123, %c8_124, %c0_125], %96 {strides = array<i32>} : memref<18x32x4xf32, #tpu.memory_space<vmem>>, vector<16x16x4xf32>,
      %c0_126 = arith.constant 0 : index
      %c7_127 = arith.constant 7 : index
      %c0_128 = arith.constant 0 : index
      %98 = vector.load %arg10[%c0_126, %c7_127, %c0_128] : memref<18x32x4xf32, #tpu.memory_space<vmem>>, vector<16x16x4xf32>
      %c0_129 = arith.constant 0 : index
      %c8_130 = arith.constant 8 : index
      %c0_131 = arith.constant 0 : index
      %99 = vector.load %arg10[%c0_129, %c8_130, %c0_131] : memref<18x32x4xf32, #tpu.memory_space<vmem>>, vector<16x16x4xf32>
      %c0_132 = arith.constant 0 : index
      %c9_133 = arith.constant 9 : index
      %c0_134 = arith.constant 0 : index
      %100 = vector.load %arg10[%c0_132, %c9_133, %c0_134] : memref<18x32x4xf32, #tpu.memory_space<vmem>>, vector<16x16x4xf32>
      %c1_135 = arith.constant 1 : index
      %c7_136 = arith.constant 7 : index
      %c0_137 = arith.constant 0 : index
      %101 = vector.load %arg10[%c1_135, %c7_136, %c0_137] : memref<18x32x4xf32, #tpu.memory_space<vmem>>, vector<16x16x4xf32>
      %c1_138 = arith.constant 1 : index
      %c8_139 = arith.constant 8 : index
      %c0_140 = arith.constant 0 : index
      %102 = vector.load %arg10[%c1_138, %c8_139, %c0_140] : memref<18x32x4xf32, #tpu.memory_space<vmem>>, vector<16x16x4xf32>
      %c1_141 = arith.constant 1 : index
      %c9_142 = arith.constant 9 : index
      %c0_143 = arith.constant 0 : index
      %103 = vector.load %arg10[%c1_141, %c9_142, %c0_143] : memref<18x32x4xf32, #tpu.memory_space<vmem>>, vector<16x16x4xf32>
      %c2_144 = arith.constant 2 : index
      %c7_145 = arith.constant 7 : index
      %c0_146 = arith.constant 0 : index
      %104 = vector.load %arg10[%c2_144, %c7_145, %c0_146] : memref<18x32x4xf32, #tpu.memory_space<vmem>>, vector<16x16x4xf32>
      %c2_147 = arith.constant 2 : index
      %c8_148 = arith.constant 8 : index
      %c0_149 = arith.constant 0 : index
      %105 = vector.load %arg10[%c2_147, %c8_148, %c0_149] : memref<18x32x4xf32, #tpu.memory_space<vmem>>, vector<16x16x4xf32>
      %c2_150 = arith.constant 2 : index
      %c9_151 = arith.constant 9 : index
      %c0_152 = arith.constant 0 : index
      %106 = vector.load %arg10[%c2_150, %c9_151, %c0_152] : memref<18x32x4xf32, #tpu.memory_space<vmem>>, vector<16x16x4xf32>
      %107 = tpu.concatenate %98, %99, %100, %101, %102, %103, %104, %105, %106 in 2 : vector<16x16x4xf32>, vector<16x16x4xf32>, vector<16x16x4xf32>, vector<16x16x4xf32>, vector<16x16x4xf32>, vector<16x16x4xf32>, vector<16x16x4xf32>, vector<16x16x4xf32>, vector<16x16x4xf32> -> vector<16x16x36xf32>
      %108 = vector.shape_cast %107 : vector<16x16x36xf32> to vector<256x36xf32>
      %109 = arith.truncf %108 : vector<256x36xf32> to vector<256x36xbf16>
      %110 = arith.index_cast %arg15 : i32 to index
      %c0_153 = arith.constant 0 : index
      %c0_154 = arith.constant 0 : index
      %111 = vector.load %arg6[%110, %c0_153, %c0_154] : memref<8x36x12xbf16, #tpu.memory_space<vmem>>, vector<1x36x12xbf16>
      %112 = vector.shape_cast %111 : vector<1x36x12xbf16> to vector<36x12xbf16>
      %cst_155 = arith.constant dense<0.000000e+00> : vector<256x12xf32>
      %113 = tpu.matmul %109, %112, %cst_155 {dimension_numbers = #tpu.dot_dimension_numbers<[1], [0], [0], [1], [0, 0, 1, 1], [], []>} : vector<256x36xbf16>, vector<36x12xbf16>, vector<256x12xf32> -> vector<256x12xf32>
      %114 = vector.extract_strided_slice %113 {offsets = [0, 0], sizes = [256, 8], strides = [1, 1]} : vector<256x12xf32> to vector<256x8xf32>
      %c0_156 = arith.constant 0 : index
      %c0_157 = arith.constant 0 : index
      %115 = vector.load %arg14[%c0_156, %c0_157] : memref<256x8xf32, #tpu.memory_space<vmem>>, vector<256x8xf32>
      tpu.vector_store %arg14[%c0_156, %c0_157], %114 {strides = array<i32>} : memref<256x8xf32, #tpu.memory_space<vmem>>, vector<256x8xf32>,
      %c0_158 = arith.constant 0 : index
      %c0_159 = arith.constant 0 : index
      %116 = vector.load %arg13[%c0_158, %c0_159] : memref<256x4xf32, #tpu.memory_space<vmem>>, vector<256x4xf32>
      %117 = vector.extract_strided_slice %113 {offsets = [0, 8], sizes = [256, 4], strides = [1, 1]} : vector<256x12xf32> to vector<256x4xf32>
      %118 = arith.addf %116, %117 : vector<256x4xf32>
      %c0_160 = arith.constant 0 : index
      %c0_161 = arith.constant 0 : index
      %119 = vector.load %arg13[%c0_160, %c0_161] : memref<256x4xf32, #tpu.memory_space<vmem>>, vector<256x4xf32>
      tpu.vector_store %arg13[%c0_160, %c0_161], %118 {strides = array<i32>} : memref<256x4xf32, #tpu.memory_space<vmem>>, vector<256x4xf32>,
    }
    %c8_i32_63 = arith.constant 8 : i32
    %c0_64 = arith.constant 0 : index
    %c0_65 = arith.constant 0 : index
    %35 = vector.load %arg13[%c0_64, %c0_65] : memref<256x4xf32, #tpu.memory_space<vmem>>, vector<256x4xf32>
    %c0_66 = arith.constant 0 : index
    %c0_67 = arith.constant 0 : index
    %36 = vector.load %arg7[%c0_66, %c0_67] : memref<1x4xf32, #tpu.memory_space<vmem>>, vector<1x4xf32>
    %37 = vector.broadcast %36 : vector<1x4xf32> to vector<256x4xf32>
    %38 = arith.addf %35, %37 : vector<256x4xf32>
    %c16 = arith.constant 16 : index
    %39 = memref.load %arg8[%c16] : memref<18xf32, #tpu.memory_space<smem>>
    %40 = vector.broadcast %39 : f32 to vector<256x4xf32>
    %41 = arith.mulf %40, %38 : vector<256x4xf32>
    %c17_68 = arith.constant 17 : index
    %42 = memref.load %arg8[%c17_68] : memref<18xf32, #tpu.memory_space<smem>>
    %c0_69 = arith.constant 0 : index
    %c0_70 = arith.constant 0 : index
    %c0_71 = arith.constant 0 : index
    %c0_72 = arith.constant 0 : index
    %43 = vector.load %arg1[%c0_69, %c0_70, %c0_71, %c0_72] : memref<1x16x16x4xf32, #tpu.memory_space<vmem>>, vector<1x16x16x4xf32>
    %44 = vector.shape_cast %43 : vector<1x16x16x4xf32> to vector<16x16x4xf32>
    %45 = vector.shape_cast %44 : vector<16x16x4xf32> to vector<256x4xf32>
    %46 = vector.broadcast %42 : f32 to vector<256x4xf32>
    %47 = arith.mulf %46, %45 : vector<256x4xf32>
    %48 = arith.addf %41, %47 : vector<256x4xf32>
    %49 = vector.shape_cast %48 : vector<256x4xf32> to vector<1x16x16x4xf32>
    %c0_73 = arith.constant 0 : index
    %c0_74 = arith.constant 0 : index
    %c0_75 = arith.constant 0 : index
    %c0_76 = arith.constant 0 : index
    %50 = vector.load %arg9[%c0_73, %c0_74, %c0_75, %c0_76] : memref<1x16x16x4xf32, #tpu.memory_space<vmem>>, vector<1x16x16x4xf32>
    tpu.vector_store %arg9[%c0_73, %c0_74, %c0_75, %c0_76], %49 {strides = array<i32>} : memref<1x16x16x4xf32, #tpu.memory_space<vmem>>, vector<1x16x16x4xf32>,
    return
  }
  func.func @transform_0(%arg0: i32) -> (i32, i32, i32, i32) {
    %c0_i32 = arith.constant 0 : i32
    %c0_i32_0 = arith.constant 0 : i32
    %c0_i32_1 = arith.constant 0 : i32
    %c0_i32_2 = arith.constant 0 : i32
    return %arg0, %c0_i32, %c0_i32_0, %c0_i32_1 : i32, i32, i32, i32
  }
  func.func @transform_1(%arg0: i32) -> (i32, i32) {
    %c0_i32 = arith.constant 0 : i32
    %c0_i32_0 = arith.constant 0 : i32
    %c0_i32_1 = arith.constant 0 : i32
    return %c0_i32, %c0_i32_0 : i32, i32
  }
  func.func @transform_2(%arg0: i32) -> (i32, i32, i32) {
    %c0_i32 = arith.constant 0 : i32
    %c0_i32_0 = arith.constant 0 : i32
    %c0_i32_1 = arith.constant 0 : i32
    %c0_i32_2 = arith.constant 0 : i32
    return %c0_i32, %c0_i32_0, %c0_i32_1 : i32, i32, i32
  }
  func.func @transform_3(%arg0: i32) -> (i32, i32, i32) {
    %c0_i32 = arith.constant 0 : i32
    %c0_i32_0 = arith.constant 0 : i32
    %c0_i32_1 = arith.constant 0 : i32
    %c0_i32_2 = arith.constant 0 : i32
    return %c0_i32, %c0_i32_0, %c0_i32_1 : i32, i32, i32
  }
  func.func @transform_4(%arg0: i32) -> (i32, i32, i32) {
    %c0_i32 = arith.constant 0 : i32
    %c0_i32_0 = arith.constant 0 : i32
    %c0_i32_1 = arith.constant 0 : i32
    %c0_i32_2 = arith.constant 0 : i32
    return %c0_i32, %c0_i32_0, %c0_i32_1 : i32, i32, i32
  }
  func.func @transform_5(%arg0: i32) -> (i32, i32, i32) {
    %c0_i32 = arith.constant 0 : i32
    %c0_i32_0 = arith.constant 0 : i32
    %c0_i32_1 = arith.constant 0 : i32
    %c0_i32_2 = arith.constant 0 : i32
    return %c0_i32, %c0_i32_0, %c0_i32_1 : i32, i32, i32
  }
  func.func @transform_6(%arg0: i32) -> (i32, i32) {
    %c0_i32 = arith.constant 0 : i32
    %c0_i32_0 = arith.constant 0 : i32
    %c0_i32_1 = arith.constant 0 : i32
    return %c0_i32, %c0_i32_0 : i32, i32
  }
  func.func @transform_7(%arg0: i32) -> i32 {
    %c0_i32 = arith.constant 0 : i32
    %c0_i32_0 = arith.constant 0 : i32
    return %c0_i32 : i32
  }
  func.func @transform_8(%arg0: i32) -> (i32, i32, i32, i32) {
    %c0_i32 = arith.constant 0 : i32
    %c0_i32_0 = arith.constant 0 : i32
    %c0_i32_1 = arith.constant 0 : i32
    %c0_i32_2 = arith.constant 0 : i32
    return %arg0, %c0_i32, %c0_i32_0, %c0_i32_1 : i32, i32, i32, i32
  }
}

</mosaic_0001>

<llo_original>
// kernel: lfb_d_forward.1
$region0: #{lfb_d_forward.1}
  #allocation0 [shape = 'u32[]', space=smem, size = 0x4, offset = 0x4, fixed_abs, tag = 'smem constant byte address 0x4 - core index']
  #allocation1 [shape = 'u32[144,128]{1,0:T(1,128)}', space=vmem, size = 0x12000, scoped, tag = 'internal scratch']
  #allocation2 [shape = 'f32[18,32,4]{2,1,0:T(8,128)}', space=vmem, size = 0x48000, scoped, tag = 'scratch operand']
  #allocation3 [shape = 'f32[18,32,8]{2,1,0:T(8,128)}', space=vmem, size = 0x48000, scoped, tag = 'scratch operand']
  #allocation4 [shape = 'f32[256,4]{1,0:T(8,128)}', space=vmem, size = 0x20000, scoped, tag = 'scratch operand']
  #allocation5 [shape = 'f32[256,4]{1,0:T(8,128)}', space=vmem, size = 0x20000, scoped, tag = 'scratch operand']
  #allocation6 [shape = 'f32[256,8]{1,0:T(8,128)}', space=vmem, size = 0x20000, scoped, tag = 'scratch operand']
  %s0 = inlined_call_operand.vmem [shape: f32[2,16,16,4], index: 0, kind: input, shape index: {}]
  %s1 = inlined_call_operand.vmem [shape: bf16[36,8], index: 1, kind: input, shape index: {}]
  %s2 = inlined_call_operand.vmem [shape: f32[8,1,8], index: 2, kind: input, shape index: {}]
  %s3 = inlined_call_operand.vmem [shape: bf16[8,72,4], index: 3, kind: input, shape index: {}]
  %s4 = inlined_call_operand.vmem [shape: f32[8,1,4], index: 4, kind: input, shape index: {}]
  %s5 = inlined_call_operand.vmem [shape: bf16[8,36,12], index: 5, kind: input, shape index: {}]
  %s6 = inlined_call_operand.vmem [shape: f32[1,4], index: 6, kind: input, shape index: {}]
  %s7 = inlined_call_operand.vmem [shape: f32[18], index: 7, kind: input, shape index: {}]
  %s8 = inlined_call_operand.vmem [shape: f32[2,16,16,4], index: 8, kind: output, shape index: {}]
  %s9 = sld [smem:[#allocation0]]
  $region76: #{lfb_d_forward.1} parent=0
    _
  %s11 = ssub.s32 1, %s9
  %s12 = scalar_select 0, %s11, %s9
  $region1: #{lfb_d_forward.1} parent=0
    #allocation7 [shape = 'u8[512]{0}', space=smem, size = 0x200, scoped, tag = 'input window, operand 7, single buffered']
    #allocation8 [shape = 's32[2]{0}', space=sflag, size = 0x8, scoped, tag = 'scoped memory for lfb_d_forward.1']
    %13 = vsyncpa [#allocation8], 0
    loop: start=0, step=1, limit=4
    $region2: #{lfb_d_forward.1} parent=1 // loop_pre_header
      _
    $region3: #{lfb_d_forward.1} parent=1 // loop_header
      %s15 = sphi 0, %s19
      %p16 = scmp.ge.s32.totalorder %s15, 4
      %s25 = sphi 0, %s27
      %s28 = sphi 0, %s25
      %s29 = sphi 0, %s28
      %s45 = sphi 0, %s29
      %s49 = sphi 0, %s49
      %s51 = sphi 0, %s49
      %s52 = sphi 0, %s51
      %s66 = sphi 0, %s52
      %s70 = sphi 0, %s70
      %s72 = sphi 0, %s70
      %s73 = sphi 0, %s72
      %s87 = sphi 0, %s73
      %s91 = sphi 0, %s91
      %s93 = sphi 0, %s91
      %s94 = sphi 0, %s93
      %s108 = sphi 0, %s94
      %s112 = sphi 0, %s112
      %s114 = sphi 0, %s112
      %s115 = sphi 0, %s114
      %s129 = sphi 0, %s115
      %s133 = sphi 0, %s133
      %s135 = sphi 0, %s133
      %s136 = sphi 0, %s135
      %s150 = sphi 0, %s136
      %s154 = sphi 0, %s154
      %s156 = sphi 0, %s154
      %s157 = sphi 0, %s156
      %s171 = sphi 0, %s157
      %s175 = sphi 0, %s175
      %s177 = sphi 0, %s175
      %s178 = sphi 0, %s177
      %s192 = sphi 0, %s178
      %s198 = sphi 0, %s200
      %s201 = sphi 0, %s198
      %s202 = sphi 0, %s201
      %s218 = sphi 0, %s202
    $region4: #{lfb_d_forward.1} parent=1 // loop_header_branch
      %18 = sbr.rel (%p16) target = $region8
    $region5: #{lfb_d_forward.1} parent=1 // loop_body
      %s20 = ssub.s32 %s15, 1
      %s21 = ssub.s32 %s15, 2
      %s22 = sadd.s32 %s15, 1
      %s23 = ssub.s32 %s15, %s22
      %p24 = scmp.eq.s32.totalorder %s23, 0
      %s26 = sadd.s32 %s25, 1
      %s27 = scalar_select %p24, %s25, %s26
      %p30 = pneg %p24
      %p31 = scmp.eq.s32.totalorder %s15, 1
      %p32 = por %p30, %p31
      %p33 = scmp.ne.s32.totalorder %s25, %s28
      %p34 = scmp.eq.s32.totalorder %s15, 0
      %p35 = por %p33, %p34
      %p36 = scmp.ne.s32.totalorder %s25, %s28
      %p37 = scmp.eq.s32.totalorder %s20, 1
      %p38 = por %p36, %p37
      %p39 = scmp.ne.s32.totalorder %s28, %s29
      %p40 = scmp.eq.s32.totalorder %s20, 0
      %p41 = por %p39, %p40
      %p42 = scmp.ne.s32.totalorder %s28, %s29
      %p43 = scmp.eq.s32.totalorder %s21, 1
      %p44 = por %p42, %p43
      %p46 = scmp.ne.s32.totalorder %s29, %s45
      %p47 = scmp.eq.s32.totalorder %s21, 0
      %p48 = por %p46, %p47
      %s50 = sadd.s32 %s49, 1
      %p53 = scmp.eq.s32.totalorder %s15, 1
      %p54 = scmp.ne.s32.totalorder %s49, %s51
      %p55 = scmp.eq.s32.totalorder %s15, 0
      %p56 = por %p54, %p55
      %p57 = scmp.ne.s32.totalorder %s49, %s51
      %p58 = scmp.eq.s32.totalorder %s20, 1
      %p59 = por %p57, %p58
      %p60 = scmp.ne.s32.totalorder %s51, %s52
      %p61 = scmp.eq.s32.totalorder %s20, 0
      %p62 = por %p60, %p61
      %p63 = scmp.ne.s32.totalorder %s51, %s52
      %p64 = scmp.eq.s32.totalorder %s21, 1
      %p65 = por %p63, %p64
      %p67 = scmp.ne.s32.totalorder %s52, %s66
      %p68 = scmp.eq.s32.totalorder %s21, 0
      %p69 = por %p67, %p68
      %s71 = sadd.s32 %s70, 1
      %p74 = scmp.eq.s32.totalorder %s15, 1
      %p75 = scmp.ne.s32.totalorder %s70, %s72
      %p76 = scmp.eq.s32.totalorder %s15, 0
      %p77 = por %p75, %p76
      %p78 = scmp.ne.s32.totalorder %s70, %s72
      %p79 = scmp.eq.s32.totalorder %s20, 1
      %p80 = por %p78, %p79
      %p81 = scmp.ne.s32.totalorder %s72, %s73
      %p82 = scmp.eq.s32.totalorder %s20, 0
      %p83 = por %p81, %p82
      %p84 = scmp.ne.s32.totalorder %s72, %s73
      %p85 = scmp.eq.s32.totalorder %s21, 1
      %p86 = por %p84, %p85
      %p88 = scmp.ne.s32.totalorder %s73, %s87
      %p89 = scmp.eq.s32.totalorder %s21, 0
      %p90 = por %p88, %p89
      %s92 = sadd.s32 %s91, 1
      %p95 = scmp.eq.s32.totalorder %s15, 1
      %p96 = scmp.ne.s32.totalorder %s91, %s93
      %p97 = scmp.eq.s32.totalorder %s15, 0
      %p98 = por %p96, %p97
      %p99 = scmp.ne.s32.totalorder %s91, %s93
      %p100 = scmp.eq.s32.totalorder %s20, 1
      %p101 = por %p99, %p100
      %p102 = scmp.ne.s32.totalorder %s93, %s94
      %p103 = scmp.eq.s32.totalorder %s20, 0
      %p104 = por %p102, %p103
      %p105 = scmp.ne.s32.totalorder %s93, %s94
      %p106 = scmp.eq.s32.totalorder %s21, 1
      %p107 = por %p105, %p106
      %p109 = scmp.ne.s32.totalorder %s94, %s108
      %p110 = scmp.eq.s32.totalorder %s21, 0
      %p111 = por %p109, %p110
      %s113 = sadd.s32 %s112, 1
      %p116 = scmp.eq.s32.totalorder %s15, 1
      %p117 = scmp.ne.s32.totalorder %s112, %s114
      %p118 = scmp.eq.s32.totalorder %s15, 0
      %p119 = por %p117, %p118
      %p120 = scmp.ne.s32.totalorder %s112, %s114
      %p121 = scmp.eq.s32.totalorder %s20, 1
      %p122 = por %p120, %p121
      %p123 = scmp.ne.s32.totalorder %s114, %s115
      %p124 = scmp.eq.s32.totalorder %s20, 0
      %p125 = por %p123, %p124
      %p126 = scmp.ne.s32.totalorder %s114, %s115
      %p127 = scmp.eq.s32.totalorder %s21, 1
      %p128 = por %p126, %p127
      %p130 = scmp.ne.s32.totalorder %s115, %s129
      %p131 = scmp.eq.s32.totalorder %s21, 0
      %p132 = por %p130, %p131
      %s134 = sadd.s32 %s133, 1
      %p137 = scmp.eq.s32.totalorder %s15, 1
      %p138 = scmp.ne.s32.totalorder %s133, %s135
      %p139 = scmp.eq.s32.totalorder %s15, 0
      %p140 = por %p138, %p139
      %p141 = scmp.ne.s32.totalorder %s133, %s135
      %p142 = scmp.eq.s32.totalorder %s20, 1
      %p143 = por %p141, %p142
      %p144 = scmp.ne.s32.totalorder %s135, %s136
      %p145 = scmp.eq.s32.totalorder %s20, 0
      %p146 = por %p144, %p145
      %p147 = scmp.ne.s32.totalorder %s135, %s136
      %p148 = scmp.eq.s32.totalorder %s21, 1
      %p149 = por %p147, %p148
      %p151 = scmp.ne.s32.totalorder %s136, %s150
      %p152 = scmp.eq.s32.totalorder %s21, 0
      %p153 = por %p151, %p152
      %s155 = sadd.s32 %s154, 1
      %p158 = scmp.eq.s32.totalorder %s15, 1
      %p159 = scmp.ne.s32.totalorder %s154, %s156
      %p160 = scmp.eq.s32.totalorder %s15, 0
      %p161 = por %p159, %p160
      %p162 = scmp.ne.s32.totalorder %s154, %s156
      %p163 = scmp.eq.s32.totalorder %s20, 1
      %p164 = por %p162, %p163
      %p165 = scmp.ne.s32.totalorder %s156, %s157
      %p166 = scmp.eq.s32.totalorder %s20, 0
      %p167 = por %p165, %p166
      %p168 = scmp.ne.s32.totalorder %s156, %s157
      %p169 = scmp.eq.s32.totalorder %s21, 1
      %p170 = por %p168, %p169
      %p172 = scmp.ne.s32.totalorder %s157, %s171
      %p173 = scmp.eq.s32.totalorder %s21, 0
      %p174 = por %p172, %p173
      %s176 = sadd.s32 %s175, 1
      %p179 = scmp.eq.s32.totalorder %s15, 1
      %p180 = scmp.ne.s32.totalorder %s175, %s177
      %p181 = scmp.eq.s32.totalorder %s15, 0
      %p182 = por %p180, %p181
      %p183 = scmp.ne.s32.totalorder %s175, %s177
      %p184 = scmp.eq.s32.totalorder %s20, 1
      %p185 = por %p183, %p184
      %p186 = scmp.ne.s32.totalorder %s177, %s178
      %p187 = scmp.eq.s32.totalorder %s20, 0
      %p188 = por %p186, %p187
      %p189 = scmp.ne.s32.totalorder %s177, %s178
      %p190 = scmp.eq.s32.totalorder %s21, 1
      %p191 = por %p189, %p190
      %p193 = scmp.ne.s32.totalorder %s178, %s192
      %p194 = scmp.eq.s32.totalorder %s21, 0
      %p195 = por %p193, %p194
      %s196 = ssub.s32 %s15, %s22
      %p197 = scmp.eq.s32.totalorder %s196, 0
      %s199 = sadd.s32 %s198, 1
      %s200 = scalar_select %p197, %s198, %s199
      %p203 = pneg %p197
      %p204 = scmp.eq.s32.totalorder %s15, 1
      %p205 = por %p203, %p204
      %p206 = scmp.ne.s32.totalorder %s198, %s201
      %p207 = scmp.eq.s32.totalorder %s15, 0
      %p208 = por %p206, %p207
      %p209 = scmp.ne.s32.totalorder %s198, %s201
      %p210 = scmp.eq.s32.totalorder %s20, 1
      %p211 = por %p209, %p210
      %p212 = scmp.ne.s32.totalorder %s201, %s202
      %p213 = scmp.eq.s32.totalorder %s20, 0
      %p214 = por %p212, %p213
      %p215 = scmp.ne.s32.totalorder %s201, %s202
      %p216 = scmp.eq.s32.totalorder %s21, 1
      %p217 = por %p215, %p216
      %p219 = scmp.ne.s32.totalorder %s202, %s218
      %p220 = scmp.eq.s32.totalorder %s21, 0
      %p221 = por %p219, %p220
      %p222 = scmp.le.s32.totalorder 1, %s15
      %p223 = scmp.lt.s32.totalorder %s15, 3
      %p224 = pnand %p222, %p223
      %p225 = pneg %p224
      // Predicated region
      $region9: #{lfb_d_forward.1} parent=5 // pred_check
        _
      $region10: #{lfb_d_forward.1} parent=5 // pred_check_branch
        %227 = sbr.rel (%p224) target = $region12
      $region11: #{lfb_d_forward.1} parent=5 // pred_region
        %s228 = ssub.s32 %s15, 1
        // Predicated region
        $region13: #{lfb_d_forward.1} parent=11 // pred_check
          %p229 = pneg %p62
        $region14: #{lfb_d_forward.1} parent=11 // pred_check_branch
          %231 = sbr.rel (%p229) target = $region16
        $region15: #{lfb_d_forward.1} parent=11 // pred_region
          _
        $region16: #{lfb_d_forward.1} parent=11 // pred_fallthru
          _
        // Predicated region
        $region17: #{lfb_d_forward.1} parent=11 // pred_check
          %p232 = pneg %p83
        $region18: #{lfb_d_forward.1} parent=11 // pred_check_branch
          %234 = sbr.rel (%p232) target = $region20
        $region19: #{lfb_d_forward.1} parent=11 // pred_region
          _
        $region20: #{lfb_d_forward.1} parent=11 // pred_fallthru
          _
        // Predicated region
        $region21: #{lfb_d_forward.1} parent=11 // pred_check
          %p235 = pneg %p104
        $region22: #{lfb_d_forward.1} parent=11 // pred_check_branch
          %237 = sbr.rel (%p235) target = $region24
        $region23: #{lfb_d_forward.1} parent=11 // pred_region
          _
        $region24: #{lfb_d_forward.1} parent=11 // pred_fallthru
          _
        // Predicated region
        $region25: #{lfb_d_forward.1} parent=11 // pred_check
          %p238 = pneg %p125
        $region26: #{lfb_d_forward.1} parent=11 // pred_check_branch
          %240 = sbr.rel (%p238) target = $region28
        $region27: #{lfb_d_forward.1} parent=11 // pred_region
          _
        $region28: #{lfb_d_forward.1} parent=11 // pred_fallthru
          _
        // Predicated region
        $region29: #{lfb_d_forward.1} parent=11 // pred_check
          %p241 = pneg %p146
        $region30: #{lfb_d_forward.1} parent=11 // pred_check_branch
          %243 = sbr.rel (%p241) target = $region32
        $region31: #{lfb_d_forward.1} parent=11 // pred_region
          _
        $region32: #{lfb_d_forward.1} parent=11 // pred_fallthru
          _
        // Predicated region
        $region33: #{lfb_d_forward.1} parent=11 // pred_check
          %p244 = pneg %p167
        $region34: #{lfb_d_forward.1} parent=11 // pred_check_branch
          %246 = sbr.rel (%p244) target = $region36
        $region35: #{lfb_d_forward.1} parent=11 // pred_region
          _
        $region36: #{lfb_d_forward.1} parent=11 // pred_fallthru
          _
        // Predicated region
        $region37: #{lfb_d_forward.1} parent=11 // pred_check
          %p247 = pneg %p188
        $region38: #{lfb_d_forward.1} parent=11 // pred_check_branch
          %249 = sbr.rel (%p247) target = $region40
        $region39: #{lfb_d_forward.1} parent=11 // pred_region
          %s251 = ssub.s32 16, 16
          %252 = vsyncadd [#allocation8], %s251
          %s254 = sshll.u32 %s7, 4
          %s255 = int_to_ptr.vmem [resolvable:$true] %s254
          %257 = dma.vmem_to_smem %s255, 16, [#allocation7], [#allocation8]
        $region40: #{lfb_d_forward.1} parent=11 // pred_fallthru
          _
      $region12: #{lfb_d_forward.1} parent=5 // pred_fallthru
        _
      %p258 = scmp.lt.s32.totalorder %s15, 2
      // Predicated region
      $region41: #{lfb_d_forward.1} parent=5 // pred_check
        %p259 = pneg %p258
      $region42: #{lfb_d_forward.1} parent=5 // pred_check_branch
        %261 = sbr.rel (%p259) target = $region44
      $region43: #{lfb_d_forward.1} parent=5 // pred_region
        // Predicated region
        $region45: #{lfb_d_forward.1} parent=43 // pred_check
          %p262 = pneg %p35
        $region46: #{lfb_d_forward.1} parent=43 // pred_check_branch
          %264 = sbr.rel (%p262) target = $region48
        $region47: #{lfb_d_forward.1} parent=43 // pred_region
          %p265 = scmp.lt.s32.totalorder %s15, 1
          %s266 = scalar_select %p265, %s15, 1
          %s267 = smul.addr %s266, 32
          %s268 = smul.addr %s267, 8
          %s269 = scalar_lea.vmem %s0, %s268
        $region48: #{lfb_d_forward.1} parent=43 // pred_fallthru
          _
      $region44: #{lfb_d_forward.1} parent=5 // pred_fallthru
        _
      %p270 = scmp.le.s32.totalorder 1, %s15
      %p271 = scmp.lt.s32.totalorder %s15, 3
      %p272 = pnand %p270, %p271
      %p273 = pneg %p272
      // Predicated region
      $region49: #{lfb_d_forward.1} parent=5 // pred_check
        _
      $region50: #{lfb_d_forward.1} parent=5 // pred_check_branch
        %275 = sbr.rel (%p272) target = $region52
      $region51: #{lfb_d_forward.1} parent=5 // pred_region
        %s276 = ssub.s32 %s15, 1
        // Predicated region
        $region53: #{lfb_d_forward.1} parent=51 // pred_check
          %p277 = pneg %p188
        $region54: #{lfb_d_forward.1} parent=51 // pred_check_branch
          %279 = sbr.rel (%p277) target = $region56
        $region55: #{lfb_d_forward.1} parent=51 // pred_region
          %280 = dma.done [#allocation8], 16
        $region56: #{lfb_d_forward.1} parent=51 // pred_fallthru
          _
        %281 = sfence
        %p282 = scmp.lt.s32.totalorder %s20, 1
        %s283 = scalar_select %p282, %s20, 1
        %s284 = smul.addr %s283, 32
        %s285 = smul.addr %s284, 8
        %s286 = scalar_lea.vmem %s0, %s285
        %p287 = pneg %p41
        %p288 = pneg %p38
        %p289 = pneg %p62
        %p290 = pneg %p59
        %p291 = pneg %p83
        %p292 = pneg %p80
        %p293 = pneg %p104
        %p294 = pneg %p101
        %p295 = pneg %p125
        %p296 = pneg %p122
        %p297 = pneg %p146
        %p298 = pneg %p143
        %p299 = pneg %p167
        %p300 = pneg %p164
        %p301 = pneg %p188
        %p302 = pneg %p185
        %p303 = pneg %p214
        %p304 = pneg %p211
        %p305 = scmp.lt.s32.totalorder %s20, 1
        %s306 = scalar_select %p305, %s20, 1
        %s307 = smul.addr %s306, 32
        %s308 = smul.addr %s307, 8
        %s309 = scalar_lea.vmem %s8, %s308
        %p310 = scmp.lt.s32.totalorder %s20, 1
        %s311 = scalar_select %p310, %s20, 1
        %s312 = smul.addr %s311, 32
        %s313 = smul.addr %s312, 8
        %s314 = scalar_lea.vmem %s0, %s313
        %p315 = scmp.lt.s32.totalorder %s20, 1
        %s316 = scalar_select %p315, %s20, 1
        %s317 = smul.addr %s316, 32
        %s318 = smul.addr %s317, 8
        %s319 = scalar_lea.vmem %s8, %s318
        %vm321 = vcmask 31744
        %322 = vst.msk [vmem:[#allocation2] sm:$0xff] %vm321, 0.0
        %323 = vst.msk [vmem:[#allocation2 + $0x8] sm:$0xff] %vm321, 0.0
        %324 = vst.msk [vmem:[#allocation2 + $0x10] sm:$0xff] %vm321, 0.0
        %325 = vst.msk [vmem:[#allocation2 + $0x18] sm:$0xff] %vm321, 0.0
        %s326 = scalar_lea.vmem [#allocation2], 544
        %327 = vst.msk [vmem:[%s326] sm:$0xff] %vm321, 0.0
        %328 = vst.msk [vmem:[%s326 + $0x8] sm:$0xff] %vm321, 0.0
        %329 = vst.msk [vmem:[%s326 + $0x10] sm:$0xff] %vm321, 0.0
        %330 = vst.msk [vmem:[%s326 + $0x18] sm:$0xff] %vm321, 0.0
        %331 = vst.msk [vmem:[#allocation2] sm:$0xff] %vm321, 0.0
        %332 = vst.msk [vmem:[#allocation2 + $0x20] sm:$0xff] %vm321, 0.0
        %333 = vst.msk [vmem:[#allocation2 + $0x40] sm:$0xff] %vm321, 0.0
        %334 = vst.msk [vmem:[#allocation2 + $0x60] sm:$0xff] %vm321, 0.0
        %335 = vst.msk [vmem:[#allocation2 + $0x80] sm:$0xff] %vm321, 0.0
        %336 = vst.msk [vmem:[#allocation2 + $0xa0] sm:$0xff] %vm321, 0.0
        %337 = vst.msk [vmem:[#allocation2 + $0xc0] sm:$0xff] %vm321, 0.0
        %338 = vst.msk [vmem:[#allocation2 + $0xe0] sm:$0xff] %vm321, 0.0
        %339 = vst.msk [vmem:[#allocation2 + $0x100] sm:$0xff] %vm321, 0.0
        %340 = vst.msk [vmem:[#allocation2 + $0x120] sm:$0xff] %vm321, 0.0
        %341 = vst.msk [vmem:[#allocation2 + $0x140] sm:$0xff] %vm321, 0.0
        %342 = vst.msk [vmem:[#allocation2 + $0x160] sm:$0xff] %vm321, 0.0
        %343 = vst.msk [vmem:[#allocation2 + $0x180] sm:$0xff] %vm321, 0.0
        %344 = vst.msk [vmem:[#allocation2 + $0x1a0] sm:$0xff] %vm321, 0.0
        %345 = vst.msk [vmem:[#allocation2 + $0x1c0] sm:$0xff] %vm321, 0.0
        %346 = vst.msk [vmem:[#allocation2 + $0x1e0] sm:$0xff] %vm321, 0.0
        %347 = vst.msk [vmem:[#allocation2 + $0x200] sm:$0xff] %vm321, 0.0
        %348 = vst.msk [vmem:[#allocation2 + $0x220] sm:$0xff] %vm321, 0.0
        %349 = vst.msk [vmem:[#allocation2 + $0x18] sm:$0xff] %vm321, 0.0
        %350 = vst.msk [vmem:[#allocation2 + $0x38] sm:$0xff] %vm321, 0.0
        %351 = vst.msk [vmem:[#allocation2 + $0x58] sm:$0xff] %vm321, 0.0
        %352 = vst.msk [vmem:[#allocation2 + $0x78] sm:$0xff] %vm321, 0.0
        %353 = vst.msk [vmem:[#allocation2 + $0x98] sm:$0xff] %vm321, 0.0
        %354 = vst.msk [vmem:[#allocation2 + $0xb8] sm:$0xff] %vm321, 0.0
        %355 = vst.msk [vmem:[#allocation2 + $0xd8] sm:$0xff] %vm321, 0.0
        %356 = vst.msk [vmem:[#allocation2 + $0xf8] sm:$0xff] %vm321, 0.0
        %357 = vst.msk [vmem:[#allocation2 + $0x118] sm:$0xff] %vm321, 0.0
        %358 = vst.msk [vmem:[#allocation2 + $0x138] sm:$0xff] %vm321, 0.0
        %359 = vst.msk [vmem:[#allocation2 + $0x158] sm:$0xff] %vm321, 0.0
        %360 = vst.msk [vmem:[#allocation2 + $0x178] sm:$0xff] %vm321, 0.0
        %361 = vst.msk [vmem:[#allocation2 + $0x198] sm:$0xff] %vm321, 0.0
        %362 = vst.msk [vmem:[#allocation2 + $0x1b8] sm:$0xff] %vm321, 0.0
        %363 = vst.msk [vmem:[#allocation2 + $0x1d8] sm:$0xff] %vm321, 0.0
        %364 = vst.msk [vmem:[#allocation2 + $0x1f8] sm:$0xff] %vm321, 0.0
        %365 = vst.msk [vmem:[#allocation2 + $0x218] sm:$0xff] %vm321, 0.0
        %366 = vst.msk [vmem:[#allocation2 + $0x238] sm:$0xff] %vm321, 0.0
        %vm367 = vcmask 64512
        %368 = vst.msk [vmem:[#allocation3] sm:$0xff] %vm367, 0.0
        %369 = vst.msk [vmem:[#allocation3 + $0x8] sm:$0xff] %vm367, 0.0
        %370 = vst.msk [vmem:[#allocation3 + $0x10] sm:$0xff] %vm367, 0.0
        %371 = vst.msk [vmem:[#allocation3 + $0x18] sm:$0xff] %vm367, 0.0
        %s372 = scalar_lea.vmem [#allocation3], 544
        %373 = vst.msk [vmem:[%s372] sm:$0xff] %vm367, 0.0
        %374 = vst.msk [vmem:[%s372 + $0x8] sm:$0xff] %vm367, 0.0
        %375 = vst.msk [vmem:[%s372 + $0x10] sm:$0xff] %vm367, 0.0
        %376 = vst.msk [vmem:[%s372 + $0x18] sm:$0xff] %vm367, 0.0
        %377 = vst.msk [vmem:[#allocation3] sm:$0xff] %vm367, 0.0
        %378 = vst.msk [vmem:[#allocation3 + $0x20] sm:$0xff] %vm367, 0.0
        %379 = vst.msk [vmem:[#allocation3 + $0x40] sm:$0xff] %vm367, 0.0
        %380 = vst.msk [vmem:[#allocation3 + $0x60] sm:$0xff] %vm367, 0.0
        %381 = vst.msk [vmem:[#allocation3 + $0x80] sm:$0xff] %vm367, 0.0
        %382 = vst.msk [vmem:[#allocation3 + $0xa0] sm:$0xff] %vm367, 0.0
        %383 = vst.msk [vmem:[#allocation3 + $0xc0] sm:$0xff] %vm367, 0.0
        %384 = vst.msk [vmem:[#allocation3 + $0xe0] sm:$0xff] %vm367, 0.0
        %385 = vst.msk [vmem:[#allocation3 + $0x100] sm:$0xff] %vm367, 0.0
        %386 = vst.msk [vmem:[#allocation3 + $0x120] sm:$0xff] %vm367, 0.0
        %387 = vst.msk [vmem:[#allocation3 + $0x140] sm:$0xff] %vm367, 0.0
        %388 = vst.msk [vmem:[#allocation3 + $0x160] sm:$0xff] %vm367, 0.0
        %389 = vst.msk [vmem:[#allocation3 + $0x180] sm:$0xff] %vm367, 0.0
        %390 = vst.msk [vmem:[#allocation3 + $0x1a0] sm:$0xff] %vm367, 0.0
        %391 = vst.msk [vmem:[#allocation3 + $0x1c0] sm:$0xff] %vm367, 0.0
        %392 = vst.msk [vmem:[#allocation3 + $0x1e0] sm:$0xff] %vm367, 0.0
        %393 = vst.msk [vmem:[#allocation3 + $0x200] sm:$0xff] %vm367, 0.0
        %394 = vst.msk [vmem:[#allocation3 + $0x220] sm:$0xff] %vm367, 0.0
        %395 = vst.msk [vmem:[#allocation3 + $0x18] sm:$0xff] %vm367, 0.0
        %396 = vst.msk [vmem:[#allocation3 + $0x38] sm:$0xff] %vm367, 0.0
        %397 = vst.msk [vmem:[#allocation3 + $0x58] sm:$0xff] %vm367, 0.0
        %398 = vst.msk [vmem:[#allocation3 + $0x78] sm:$0xff] %vm367, 0.0
        %399 = vst.msk [vmem:[#allocation3 + $0x98] sm:$0xff] %vm367, 0.0
        %400 = vst.msk [vmem:[#allocation3 + $0xb8] sm:$0xff] %vm367, 0.0
        %401 = vst.msk [vmem:[#allocation3 + $0xd8] sm:$0xff] %vm367, 0.0
        %402 = vst.msk [vmem:[#allocation3 + $0xf8] sm:$0xff] %vm367, 0.0
        %403 = vst.msk [vmem:[#allocation3 + $0x118] sm:$0xff] %vm367, 0.0
        %404 = vst.msk [vmem:[#allocation3 + $0x138] sm:$0xff] %vm367, 0.0
        %405 = vst.msk [vmem:[#allocation3 + $0x158] sm:$0xff] %vm367, 0.0
        %406 = vst.msk [vmem:[#allocation3 + $0x178] sm:$0xff] %vm367, 0.0
        %407 = vst.msk [vmem:[#allocation3 + $0x198] sm:$0xff] %vm367, 0.0
        %408 = vst.msk [vmem:[#allocation3 + $0x1b8] sm:$0xff] %vm367, 0.0
        %409 = vst.msk [vmem:[#allocation3 + $0x1d8] sm:$0xff] %vm367, 0.0
        %410 = vst.msk [vmem:[#allocation3 + $0x1f8] sm:$0xff] %vm367, 0.0
        %411 = vst.msk [vmem:[#allocation3 + $0x218] sm:$0xff] %vm367, 0.0
        %412 = vst.msk [vmem:[#allocation3 + $0x238] sm:$0xff] %vm367, 0.0
        %v413 = vld [vmem:[%s314] sm:$0xff]
        %v414 = vld [vmem:[%s314 + $0x8] sm:$0xff]
        %v415 = vld [vmem:[%s314 + $0x10] sm:$0xff]
        %v416 = vld [vmem:[%s314 + $0x18] sm:$0xff]
        %v417 = vld [vmem:[%s314 + $0x20] sm:$0xff]
        %v418 = vld [vmem:[%s314 + $0x28] sm:$0xff]
        %v419 = vld [vmem:[%s314 + $0x30] sm:$0xff]
        %v420 = vld [vmem:[%s314 + $0x38] sm:$0xff]
        %v421 = vld [vmem:[%s314 + $0x40] sm:$0xff]
        %v422 = vld [vmem:[%s314 + $0x48] sm:$0xff]
        %v423 = vld [vmem:[%s314 + $0x50] sm:$0xff]
        %v424 = vld [vmem:[%s314 + $0x58] sm:$0xff]
        %v425 = vld [vmem:[%s314 + $0x60] sm:$0xff]
        %v426 = vld [vmem:[%s314 + $0x68] sm:$0xff]
        %v427 = vld [vmem:[%s314 + $0x70] sm:$0xff]
        %v428 = vld [vmem:[%s314 + $0x78] sm:$0xff]
        %v429 = vld [vmem:[%s314 + $0x80] sm:$0xff]
        %v430 = vld [vmem:[%s314 + $0x88] sm:$0xff]
        %v431 = vld [vmem:[%s314 + $0x90] sm:$0xff]
        %v432 = vld [vmem:[%s314 + $0x98] sm:$0xff]
        %v433 = vld [vmem:[%s314 + $0xa0] sm:$0xff]
        %v434 = vld [vmem:[%s314 + $0xa8] sm:$0xff]
        %v435 = vld [vmem:[%s314 + $0xb0] sm:$0xff]
        %v436 = vld [vmem:[%s314 + $0xb8] sm:$0xff]
        %v437 = vld [vmem:[%s314 + $0xc0] sm:$0xff]
        %v438 = vld [vmem:[%s314 + $0xc8] sm:$0xff]
        %v439 = vld [vmem:[%s314 + $0xd0] sm:$0xff]
        %v440 = vld [vmem:[%s314 + $0xd8] sm:$0xff]
        %v441 = vld [vmem:[%s314 + $0xe0] sm:$0xff]
        %v442 = vld [vmem:[%s314 + $0xe8] sm:$0xff]
        %v443 = vld [vmem:[%s314 + $0xf0] sm:$0xff]
        %v444 = vld [vmem:[%s314 + $0xf8] sm:$0xff]
        %445 = vst.msk [vmem:[#allocation4] sm:$0xff] %vm321, %v413
        %446 = vst.msk [vmem:[#allocation4 + $0x8] sm:$0xff] %vm321, %v414
        %447 = vst.msk [vmem:[#allocation4 + $0x10] sm:$0xff] %vm321, %v415
        %448 = vst.msk [vmem:[#allocation4 + $0x18] sm:$0xff] %vm321, %v416
        %449 = vst.msk [vmem:[#allocation4 + $0x20] sm:$0xff] %vm321, %v417
        %450 = vst.msk [vmem:[#allocation4 + $0x28] sm:$0xff] %vm321, %v418
        %451 = vst.msk [vmem:[#allocation4 + $0x30] sm:$0xff] %vm321, %v419
        %452 = vst.msk [vmem:[#allocation4 + $0x38] sm:$0xff] %vm321, %v420
        %453 = vst.msk [vmem:[#allocation4 + $0x40] sm:$0xff] %vm321, %v421
        %454 = vst.msk [vmem:[#allocation4 + $0x48] sm:$0xff] %vm321, %v422
        %455 = vst.msk [vmem:[#allocation4 + $0x50] sm:$0xff] %vm321, %v423
        %456 = vst.msk [vmem:[#allocation4 + $0x58] sm:$0xff] %vm321, %v424
        %457 = vst.msk [vmem:[#allocation4 + $0x60] sm:$0xff] %vm321, %v425
        %458 = vst.msk [vmem:[#allocation4 + $0x68] sm:$0xff] %vm321, %v426
        %459 = vst.msk [vmem:[#allocation4 + $0x70] sm:$0xff] %vm321, %v427
        %460 = vst.msk [vmem:[#allocation4 + $0x78] sm:$0xff] %vm321, %v428
        %461 = vst.msk [vmem:[#allocation4 + $0x80] sm:$0xff] %vm321, %v429
        %462 = vst.msk [vmem:[#allocation4 + $0x88] sm:$0xff] %vm321, %v430
        %463 = vst.msk [vmem:[#allocation4 + $0x90] sm:$0xff] %vm321, %v431
        %464 = vst.msk [vmem:[#allocation4 + $0x98] sm:$0xff] %vm321, %v432
        %465 = vst.msk [vmem:[#allocation4 + $0xa0] sm:$0xff] %vm321, %v433
        %466 = vst.msk [vmem:[#allocation4 + $0xa8] sm:$0xff] %vm321, %v434
        %467 = vst.msk [vmem:[#allocation4 + $0xb0] sm:$0xff] %vm321, %v435
        %468 = vst.msk [vmem:[#allocation4 + $0xb8] sm:$0xff] %vm321, %v436
        %469 = vst.msk [vmem:[#allocation4 + $0xc0] sm:$0xff] %vm321, %v437
        %470 = vst.msk [vmem:[#allocation4 + $0xc8] sm:$0xff] %vm321, %v438
        %471 = vst.msk [vmem:[#allocation4 + $0xd0] sm:$0xff] %vm321, %v439
        %472 = vst.msk [vmem:[#allocation4 + $0xd8] sm:$0xff] %vm321, %v440
        %473 = vst.msk [vmem:[#allocation4 + $0xe0] sm:$0xff] %vm321, %v441
        %474 = vst.msk [vmem:[#allocation4 + $0xe8] sm:$0xff] %vm321, %v442
        %475 = vst.msk [vmem:[#allocation4 + $0xf0] sm:$0xff] %vm321, %v443
        %476 = vst.msk [vmem:[#allocation4 + $0xf8] sm:$0xff] %vm321, %v444
        %477 = vst.msk [vmem:[#allocation5] sm:$0xff] %vm321, 0.0
        %478 = vst.msk [vmem:[#allocation5 + $0x8] sm:$0xff] %vm321, 0.0
        %479 = vst.msk [vmem:[#allocation5 + $0x10] sm:$0xff] %vm321, 0.0
        %480 = vst.msk [vmem:[#allocation5 + $0x18] sm:$0xff] %vm321, 0.0
        %481 = vst.msk [vmem:[#allocation5 + $0x20] sm:$0xff] %vm321, 0.0
        %482 = vst.msk [vmem:[#allocation5 + $0x28] sm:$0xff] %vm321, 0.0
        %483 = vst.msk [vmem:[#allocation5 + $0x30] sm:$0xff] %vm321, 0.0
        %484 = vst.msk [vmem:[#allocation5 + $0x38] sm:$0xff] %vm321, 0.0
        %485 = vst.msk [vmem:[#allocation5 + $0x40] sm:$0xff] %vm321, 0.0
        %486 = vst.msk [vmem:[#allocation5 + $0x48] sm:$0xff] %vm321, 0.0
        %487 = vst.msk [vmem:[#allocation5 + $0x50] sm:$0xff] %vm321, 0.0
        %488 = vst.msk [vmem:[#allocation5 + $0x58] sm:$0xff] %vm321, 0.0
        %489 = vst.msk [vmem:[#allocation5 + $0x60] sm:$0xff] %vm321, 0.0
        %490 = vst.msk [vmem:[#allocation5 + $0x68] sm:$0xff] %vm321, 0.0
        %491 = vst.msk [vmem:[#allocation5 + $0x70] sm:$0xff] %vm321, 0.0
        %492 = vst.msk [vmem:[#allocation5 + $0x78] sm:$0xff] %vm321, 0.0
        %493 = vst.msk [vmem:[#allocation5 + $0x80] sm:$0xff] %vm321, 0.0
        %494 = vst.msk [vmem:[#allocation5 + $0x88] sm:$0xff] %vm321, 0.0
        %495 = vst.msk [vmem:[#allocation5 + $0x90] sm:$0xff] %vm321, 0.0
        %496 = vst.msk [vmem:[#allocation5 + $0x98] sm:$0xff] %vm321, 0.0
        %497 = vst.msk [vmem:[#allocation5 + $0xa0] sm:$0xff] %vm321, 0.0
        %498 = vst.msk [vmem:[#allocation5 + $0xa8] sm:$0xff] %vm321, 0.0
        %499 = vst.msk [vmem:[#allocation5 + $0xb0] sm:$0xff] %vm321, 0.0
        %500 = vst.msk [vmem:[#allocation5 + $0xb8] sm:$0xff] %vm321, 0.0
        %501 = vst.msk [vmem:[#allocation5 + $0xc0] sm:$0xff] %vm321, 0.0
        %502 = vst.msk [vmem:[#allocation5 + $0xc8] sm:$0xff] %vm321, 0.0
        %503 = vst.msk [vmem:[#allocation5 + $0xd0] sm:$0xff] %vm321, 0.0
        %504 = vst.msk [vmem:[#allocation5 + $0xd8] sm:$0xff] %vm321, 0.0
        %505 = vst.msk [vmem:[#allocation5 + $0xe0] sm:$0xff] %vm321, 0.0
        %506 = vst.msk [vmem:[#allocation5 + $0xe8] sm:$0xff] %vm321, 0.0
        %507 = vst.msk [vmem:[#allocation5 + $0xf0] sm:$0xff] %vm321, 0.0
        %508 = vst.msk [vmem:[#allocation5 + $0xf8] sm:$0xff] %vm321, 0.0
        %s509 = scalar_lea.vmem [#allocation2], 32
        %510 = vst.msk [vmem:[%s509 + $0x8] sm:$0xff] %vm321, %v413
        %511 = vst.msk [vmem:[%s509 + $0x10] sm:$0xff] %vm321, %v414
        %512 = vst.msk [vmem:[%s509 + $0x28] sm:$0xff] %vm321, %v415
        %513 = vst.msk [vmem:[%s509 + $0x30] sm:$0xff] %vm321, %v416
        %514 = vst.msk [vmem:[%s509 + $0x48] sm:$0xff] %vm321, %v417
        %515 = vst.msk [vmem:[%s509 + $0x50] sm:$0xff] %vm321, %v418
        %516 = vst.msk [vmem:[%s509 + $0x68] sm:$0xff] %vm321, %v419
        %517 = vst.msk [vmem:[%s509 + $0x70] sm:$0xff] %vm321, %v420
        %518 = vst.msk [vmem:[%s509 + $0x88] sm:$0xff] %vm321, %v421
        %519 = vst.msk [vmem:[%s509 + $0x90] sm:$0xff] %vm321, %v422
        %520 = vst.msk [vmem:[%s509 + $0xa8] sm:$0xff] %vm321, %v423
        %521 = vst.msk [vmem:[%s509 + $0xb0] sm:$0xff] %vm321, %v424
        %522 = vst.msk [vmem:[%s509 + $0xc8] sm:$0xff] %vm321, %v425
        %523 = vst.msk [vmem:[%s509 + $0xd0] sm:$0xff] %vm321, %v426
        %524 = vst.msk [vmem:[%s509 + $0xe8] sm:$0xff] %vm321, %v427
        %525 = vst.msk [vmem:[%s509 + $0xf0] sm:$0xff] %vm321, %v428
        %526 = vst.msk [vmem:[%s509 + $0x108] sm:$0xff] %vm321, %v429
        %527 = vst.msk [vmem:[%s509 + $0x110] sm:$0xff] %vm321, %v430
        %528 = vst.msk [vmem:[%s509 + $0x128] sm:$0xff] %vm321, %v431
        %529 = vst.msk [vmem:[%s509 + $0x130] sm:$0xff] %vm321, %v432
        %530 = vst.msk [vmem:[%s509 + $0x148] sm:$0xff] %vm321, %v433
        %531 = vst.msk [vmem:[%s509 + $0x150] sm:$0xff] %vm321, %v434
        %532 = vst.msk [vmem:[%s509 + $0x168] sm:$0xff] %vm321, %v435
        %533 = vst.msk [vmem:[%s509 + $0x170] sm:$0xff] %vm321, %v436
        %534 = vst.msk [vmem:[%s509 + $0x188] sm:$0xff] %vm321, %v437
        %535 = vst.msk [vmem:[%s509 + $0x190] sm:$0xff] %vm321, %v438
        %536 = vst.msk [vmem:[%s509 + $0x1a8] sm:$0xff] %vm321, %v439
        %537 = vst.msk [vmem:[%s509 + $0x1b0] sm:$0xff] %vm321, %v440
        %538 = vst.msk [vmem:[%s509 + $0x1c8] sm:$0xff] %vm321, %v441
        %539 = vst.msk [vmem:[%s509 + $0x1d0] sm:$0xff] %vm321, %v442
        %540 = vst.msk [vmem:[%s509 + $0x1e8] sm:$0xff] %vm321, %v443
        %541 = vst.msk [vmem:[%s509 + $0x1f0] sm:$0xff] %vm321, %v444
        %v542 = vld [vmem:[#allocation2 + $0x7] sm:$0xff]
        %v543 = vld [vmem:[#allocation2 + $0xf] sm:$0xff]
        %v544 = vld [vmem:[#allocation2 + $0x27] sm:$0xff]
        %v545 = vld [vmem:[#allocation2 + $0x2f] sm:$0xff]
        %v546 = vld [vmem:[#allocation2 + $0x47] sm:$0xff]
        %v547 = vld [vmem:[#allocation2 + $0x4f] sm:$0xff]
        %v548 = vld [vmem:[#allocation2 + $0x67] sm:$0xff]
        %v549 = vld [vmem:[#allocation2 + $0x6f] sm:$0xff]
        %v550 = vld [vmem:[#allocation2 + $0x87] sm:$0xff]
        %v551 = vld [vmem:[#allocation2 + $0x8f] sm:$0xff]
        %v552 = vld [vmem:[#allocation2 + $0xa7] sm:$0xff]
        %v553 = vld [vmem:[#allocation2 + $0xaf] sm:$0xff]
        %v554 = vld [vmem:[#allocation2 + $0xc7] sm:$0xff]
        %v555 = vld [vmem:[#allocation2 + $0xcf] sm:$0xff]
        %v556 = vld [vmem:[#allocation2 + $0xe7] sm:$0xff]
        %v557 = vld [vmem:[#allocation2 + $0xef] sm:$0xff]
        %v558 = vld [vmem:[#allocation2 + $0x107] sm:$0xff]
        %v559 = vld [vmem:[#allocation2 + $0x10f] sm:$0xff]
        %v560 = vld [vmem:[#allocation2 + $0x127] sm:$0xff]
        %v561 = vld [vmem:[#allocation2 + $0x12f] sm:$0xff]
        %v562 = vld [vmem:[#allocation2 + $0x147] sm:$0xff]
        %v563 = vld [vmem:[#allocation2 + $0x14f] sm:$0xff]
        %v564 = vld [vmem:[#allocation2 + $0x167] sm:$0xff]
        %v565 = vld [vmem:[#allocation2 + $0x16f] sm:$0xff]
        %v566 = vld [vmem:[#allocation2 + $0x187] sm:$0xff]
        %v567 = vld [vmem:[#allocation2 + $0x18f] sm:$0xff]
        %v568 = vld [vmem:[#allocation2 + $0x1a7] sm:$0xff]
        %v569 = vld [vmem:[#allocation2 + $0x1af] sm:$0xff]
        %v570 = vld [vmem:[#allocation2 + $0x1c7] sm:$0xff]
        %v571 = vld [vmem:[#allocation2 + $0x1cf] sm:$0xff]
        %v572 = vld [vmem:[#allocation2 + $0x1e7] sm:$0xff]
        %v573 = vld [vmem:[#allocation2 + $0x1ef] sm:$0xff]
        %v574 = vld [vmem:[#allocation2 + $0x8] sm:$0xff]
        %v575 = vld [vmem:[#allocation2 + $0x10] sm:$0xff]
        %v576 = vld [vmem:[#allocation2 + $0x28] sm:$0xff]
        %v577 = vld [vmem:[#allocation2 + $0x30] sm:$0xff]
        %v578 = vld [vmem:[#allocation2 + $0x48] sm:$0xff]
        %v579 = vld [vmem:[#allocation2 + $0x50] sm:$0xff]
        %v580 = vld [vmem:[#allocation2 + $0x68] sm:$0xff]
        %v581 = vld [vmem:[#allocation2 + $0x70] sm:$0xff]
        %v582 = vld [vmem:[#allocation2 + $0x88] sm:$0xff]
        %v583 = vld [vmem:[#allocation2 + $0x90] sm:$0xff]
        %v584 = vld [vmem:[#allocation2 + $0xa8] sm:$0xff]
        %v585 = vld [vmem:[#allocation2 + $0xb0] sm:$0xff]
        %v586 = vld [vmem:[#allocation2 + $0xc8] sm:$0xff]
        %v587 = vld [vmem:[#allocation2 + $0xd0] sm:$0xff]
        %v588 = vld [vmem:[#allocation2 + $0xe8] sm:$0xff]
        %v589 = vld [vmem:[#allocation2 + $0xf0] sm:$0xff]
        %v590 = vld [vmem:[#allocation2 + $0x108] sm:$0xff]
        %v591 = vld [vmem:[#allocation2 + $0x110] sm:$0xff]
        %v592 = vld [vmem:[#allocation2 + $0x128] sm:$0xff]
        %v593 = vld [vmem:[#allocation2 + $0x130] sm:$0xff]
        %v594 = vld [vmem:[#allocation2 + $0x148] sm:$0xff]
        %v595 = vld [vmem:[#allocation2 + $0x150] sm:$0xff]
        %v596 = vld [vmem:[#allocation2 + $0x168] sm:$0xff]
        %v597 = vld [vmem:[#allocation2 + $0x170] sm:$0xff]
        %v598 = vld [vmem:[#allocation2 + $0x188] sm:$0xff]
        %v599 = vld [vmem:[#allocation2 + $0x190] sm:$0xff]
        %v600 = vld [vmem:[#allocation2 + $0x1a8] sm:$0xff]
        %v601 = vld [vmem:[#allocation2 + $0x1b0] sm:$0xff]
        %v602 = vld [vmem:[#allocation2 + $0x1c8] sm:$0xff]
        %v603 = vld [vmem:[#allocation2 + $0x1d0] sm:$0xff]
        %v604 = vld [vmem:[#allocation2 + $0x1e8] sm:$0xff]
        %v605 = vld [vmem:[#allocation2 + $0x1f0] sm:$0xff]
        %v606 = vld [vmem:[#allocation2 + $0x9] sm:$0xff]
        %v607 = vld [vmem:[#allocation2 + $0x11] sm:$0xff]
        %v608 = vld [vmem:[#allocation2 + $0x29] sm:$0xff]
        %v609 = vld [vmem:[#allocation2 + $0x31] sm:$0xff]
        %v610 = vld [vmem:[#allocation2 + $0x49] sm:$0xff]
        %v611 = vld [vmem:[#allocation2 + $0x51] sm:$0xff]
        %v612 = vld [vmem:[#allocation2 + $0x69] sm:$0xff]
        %v613 = vld [vmem:[#allocation2 + $0x71] sm:$0xff]
        %v614 = vld [vmem:[#allocation2 + $0x89] sm:$0xff]
        %v615 = vld [vmem:[#allocation2 + $0x91] sm:$0xff]
        %v616 = vld [vmem:[#allocation2 + $0xa9] sm:$0xff]
        %v617 = vld [vmem:[#allocation2 + $0xb1] sm:$0xff]
        %v618 = vld [vmem:[#allocation2 + $0xc9] sm:$0xff]
        %v619 = vld [vmem:[#allocation2 + $0xd1] sm:$0xff]
        %v620 = vld [vmem:[#allocation2 + $0xe9] sm:$0xff]
        %v621 = vld [vmem:[#allocation2 + $0xf1] sm:$0xff]
        %v622 = vld [vmem:[#allocation2 + $0x109] sm:$0xff]
        %v623 = vld [vmem:[#allocation2 + $0x111] sm:$0xff]
        %v624 = vld [vmem:[#allocation2 + $0x129] sm:$0xff]
        %v625 = vld [vmem:[#allocation2 + $0x131] sm:$0xff]
        %v626 = vld [vmem:[#allocation2 + $0x149] sm:$0xff]
        %v627 = vld [vmem:[#allocation2 + $0x151] sm:$0xff]
        %v628 = vld [vmem:[#allocation2 + $0x169] sm:$0xff]
        %v629 = vld [vmem:[#allocation2 + $0x171] sm:$0xff]
        %v630 = vld [vmem:[#allocation2 + $0x189] sm:$0xff]
        %v631 = vld [vmem:[#allocation2 + $0x191] sm:$0xff]
        %v632 = vld [vmem:[#allocation2 + $0x1a9] sm:$0xff]
        %v633 = vld [vmem:[#allocation2 + $0x1b1] sm:$0xff]
        %v634 = vld [vmem:[#allocation2 + $0x1c9] sm:$0xff]
        %v635 = vld [vmem:[#allocation2 + $0x1d1] sm:$0xff]
        %v636 = vld [vmem:[#allocation2 + $0x1e9] sm:$0xff]
        %v637 = vld [vmem:[#allocation2 + $0x1f1] sm:$0xff]
        %v638 = vld [vmem:[%s509 + $0x7] sm:$0xff]
        %v639 = vld [vmem:[%s509 + $0xf] sm:$0xff]
        %v640 = vld [vmem:[%s509 + $0x27] sm:$0xff]
        %v641 = vld [vmem:[%s509 + $0x2f] sm:$0xff]
        %v642 = vld [vmem:[%s509 + $0x47] sm:$0xff]
        %v643 = vld [vmem:[%s509 + $0x4f] sm:$0xff]
        %v644 = vld [vmem:[%s509 + $0x67] sm:$0xff]
        %v645 = vld [vmem:[%s509 + $0x6f] sm:$0xff]
        %v646 = vld [vmem:[%s509 + $0x87] sm:$0xff]
        %v647 = vld [vmem:[%s509 + $0x8f] sm:$0xff]
        %v648 = vld [vmem:[%s509 + $0xa7] sm:$0xff]
        %v649 = vld [vmem:[%s509 + $0xaf] sm:$0xff]
        %v650 = vld [vmem:[%s509 + $0xc7] sm:$0xff]
        %v651 = vld [vmem:[%s509 + $0xcf] sm:$0xff]
        %v652 = vld [vmem:[%s509 + $0xe7] sm:$0xff]
        %v653 = vld [vmem:[%s509 + $0xef] sm:$0xff]
        %v654 = vld [vmem:[%s509 + $0x107] sm:$0xff]
        %v655 = vld [vmem:[%s509 + $0x10f] sm:$0xff]
        %v656 = vld [vmem:[%s509 + $0x127] sm:$0xff]
        %v657 = vld [vmem:[%s509 + $0x12f] sm:$0xff]
        %v658 = vld [vmem:[%s509 + $0x147] sm:$0xff]
        %v659 = vld [vmem:[%s509 + $0x14f] sm:$0xff]
        %v660 = vld [vmem:[%s509 + $0x167] sm:$0xff]
        %v661 = vld [vmem:[%s509 + $0x16f] sm:$0xff]
        %v662 = vld [vmem:[%s509 + $0x187] sm:$0xff]
        %v663 = vld [vmem:[%s509 + $0x18f] sm:$0xff]
        %v664 = vld [vmem:[%s509 + $0x1a7] sm:$0xff]
        %v665 = vld [vmem:[%s509 + $0x1af] sm:$0xff]
        %v666 = vld [vmem:[%s509 + $0x1c7] sm:$0xff]
        %v667 = vld [vmem:[%s509 + $0x1cf] sm:$0xff]
        %v668 = vld [vmem:[%s509 + $0x1e7] sm:$0xff]
        %v669 = vld [vmem:[%s509 + $0x1ef] sm:$0xff]
        %v670 = vld [vmem:[%s509 + $0x8] sm:$0xff]
        %v671 = vld [vmem:[%s509 + $0x10] sm:$0xff]
        %v672 = vld [vmem:[%s509 + $0x28] sm:$0xff]
        %v673 = vld [vmem:[%s509 + $0x30] sm:$0xff]
        %v674 = vld [vmem:[%s509 + $0x48] sm:$0xff]
        %v675 = vld [vmem:[%s509 + $0x50] sm:$0xff]
        %v676 = vld [vmem:[%s509 + $0x68] sm:$0xff]
        %v677 = vld [vmem:[%s509 + $0x70] sm:$0xff]
        %v678 = vld [vmem:[%s509 + $0x88] sm:$0xff]
        %v679 = vld [vmem:[%s509 + $0x90] sm:$0xff]
        %v680 = vld [vmem:[%s509 + $0xa8] sm:$0xff]
        %v681 = vld [vmem:[%s509 + $0xb0] sm:$0xff]
        %v682 = vld [vmem:[%s509 + $0xc8] sm:$0xff]
        %v683 = vld [vmem:[%s509 + $0xd0] sm:$0xff]
        %v684 = vld [vmem:[%s509 + $0xe8] sm:$0xff]
        %v685 = vld [vmem:[%s509 + $0xf0] sm:$0xff]
        %v686 = vld [vmem:[%s509 + $0x108] sm:$0xff]
        %v687 = vld [vmem:[%s509 + $0x110] sm:$0xff]
        %v688 = vld [vmem:[%s509 + $0x128] sm:$0xff]
        %v689 = vld [vmem:[%s509 + $0x130] sm:$0xff]
        %v690 = vld [vmem:[%s509 + $0x148] sm:$0xff]
        %v691 = vld [vmem:[%s509 + $0x150] sm:$0xff]
        %v692 = vld [vmem:[%s509 + $0x168] sm:$0xff]
        %v693 = vld [vmem:[%s509 + $0x170] sm:$0xff]
        %v694 = vld [vmem:[%s509 + $0x188] sm:$0xff]
        %v695 = vld [vmem:[%s509 + $0x190] sm:$0xff]
        %v696 = vld [vmem:[%s509 + $0x1a8] sm:$0xff]
        %v697 = vld [vmem:[%s509 + $0x1b0] sm:$0xff]
        %v698 = vld [vmem:[%s509 + $0x1c8] sm:$0xff]
        %v699 = vld [vmem:[%s509 + $0x1d0] sm:$0xff]
        %v700 = vld [vmem:[%s509 + $0x1e8] sm:$0xff]
        %v701 = vld [vmem:[%s509 + $0x1f0] sm:$0xff]
        %v702 = vld [vmem:[%s509 + $0x9] sm:$0xff]
        %v703 = vld [vmem:[%s509 + $0x11] sm:$0xff]
        %v704 = vld [vmem:[%s509 + $0x29] sm:$0xff]
        %v705 = vld [vmem:[%s509 + $0x31] sm:$0xff]
        %v706 = vld [vmem:[%s509 + $0x49] sm:$0xff]
        %v707 = vld [vmem:[%s509 + $0x51] sm:$0xff]
        %v708 = vld [vmem:[%s509 + $0x69] sm:$0xff]
        %v709 = vld [vmem:[%s509 + $0x71] sm:$0xff]
        %v710 = vld [vmem:[%s509 + $0x89] sm:$0xff]
        %v711 = vld [vmem:[%s509 + $0x91] sm:$0xff]
        %v712 = vld [vmem:[%s509 + $0xa9] sm:$0xff]
        %v713 = vld [vmem:[%s509 + $0xb1] sm:$0xff]
        %v714 = vld [vmem:[%s509 + $0xc9] sm:$0xff]
        %v715 = vld [vmem:[%s509 + $0xd1] sm:$0xff]
        %v716 = vld [vmem:[%s509 + $0xe9] sm:$0xff]
        %v717 = vld [vmem:[%s509 + $0xf1] sm:$0xff]
        %v718 = vld [vmem:[%s509 + $0x109] sm:$0xff]
        %v719 = vld [vmem:[%s509 + $0x111] sm:$0xff]
        %v720 = vld [vmem:[%s509 + $0x129] sm:$0xff]
        %v721 = vld [vmem:[%s509 + $0x131] sm:$0xff]
        %v722 = vld [vmem:[%s509 + $0x149] sm:$0xff]
        %v723 = vld [vmem:[%s509 + $0x151] sm:$0xff]
        %v724 = vld [vmem:[%s509 + $0x169] sm:$0xff]
        %v725 = vld [vmem:[%s509 + $0x171] sm:$0xff]
        %v726 = vld [vmem:[%s509 + $0x189] sm:$0xff]
        %v727 = vld [vmem:[%s509 + $0x191] sm:$0xff]
        %v728 = vld [vmem:[%s509 + $0x1a9] sm:$0xff]
        %v729 = vld [vmem:[%s509 + $0x1b1] sm:$0xff]
        %v730 = vld [vmem:[%s509 + $0x1c9] sm:$0xff]
        %v731 = vld [vmem:[%s509 + $0x1d1] sm:$0xff]
        %v732 = vld [vmem:[%s509 + $0x1e9] sm:$0xff]
        %v733 = vld [vmem:[%s509 + $0x1f1] sm:$0xff]
        %s734 = scalar_lea.vmem [#allocation2], 64
        %v735 = vld [vmem:[%s734 + $0x7] sm:$0xff]
        %v736 = vld [vmem:[%s734 + $0xf] sm:$0xff]
        %v737 = vld [vmem:[%s734 + $0x27] sm:$0xff]
        %v738 = vld [vmem:[%s734 + $0x2f] sm:$0xff]
        %v739 = vld [vmem:[%s734 + $0x47] sm:$0xff]
        %v740 = vld [vmem:[%s734 + $0x4f] sm:$0xff]
        %v741 = vld [vmem:[%s734 + $0x67] sm:$0xff]
        %v742 = vld [vmem:[%s734 + $0x6f] sm:$0xff]
        %v743 = vld [vmem:[%s734 + $0x87] sm:$0xff]
        %v744 = vld [vmem:[%s734 + $0x8f] sm:$0xff]
        %v745 = vld [vmem:[%s734 + $0xa7] sm:$0xff]
        %v746 = vld [vmem:[%s734 + $0xaf] sm:$0xff]
        %v747 = vld [vmem:[%s734 + $0xc7] sm:$0xff]
        %v748 = vld [vmem:[%s734 + $0xcf] sm:$0xff]
        %v749 = vld [vmem:[%s734 + $0xe7] sm:$0xff]
        %v750 = vld [vmem:[%s734 + $0xef] sm:$0xff]
        %v751 = vld [vmem:[%s734 + $0x107] sm:$0xff]
        %v752 = vld [vmem:[%s734 + $0x10f] sm:$0xff]
        %v753 = vld [vmem:[%s734 + $0x127] sm:$0xff]
        %v754 = vld [vmem:[%s734 + $0x12f] sm:$0xff]
        %v755 = vld [vmem:[%s734 + $0x147] sm:$0xff]
        %v756 = vld [vmem:[%s734 + $0x14f] sm:$0xff]
        %v757 = vld [vmem:[%s734 + $0x167] sm:$0xff]
        %v758 = vld [vmem:[%s734 + $0x16f] sm:$0xff]
        %v759 = vld [vmem:[%s734 + $0x187] sm:$0xff]
        %v760 = vld [vmem:[%s734 + $0x18f] sm:$0xff]
        %v761 = vld [vmem:[%s734 + $0x1a7] sm:$0xff]
        %v762 = vld [vmem:[%s734 + $0x1af] sm:$0xff]
        %v763 = vld [vmem:[%s734 + $0x1c7] sm:$0xff]
        %v764 = vld [vmem:[%s734 + $0x1cf] sm:$0xff]
        %v765 = vld [vmem:[%s734 + $0x1e7] sm:$0xff]
        %v766 = vld [vmem:[%s734 + $0x1ef] sm:$0xff]
        %v767 = vld [vmem:[%s734 + $0x8] sm:$0xff]
        %v768 = vld [vmem:[%s734 + $0x10] sm:$0xff]
        %v769 = vld [vmem:[%s734 + $0x28] sm:$0xff]
        %v770 = vld [vmem:[%s734 + $0x30] sm:$0xff]
        %v771 = vld [vmem:[%s734 + $0x48] sm:$0xff]
        %v772 = vld [vmem:[%s734 + $0x50] sm:$0xff]
        %v773 = vld [vmem:[%s734 + $0x68] sm:$0xff]
        %v774 = vld [vmem:[%s734 + $0x70] sm:$0xff]
        %v775 = vld [vmem:[%s734 + $0x88] sm:$0xff]
        %v776 = vld [vmem:[%s734 + $0x90] sm:$0xff]
        %v777 = vld [vmem:[%s734 + $0xa8] sm:$0xff]
        %v778 = vld [vmem:[%s734 + $0xb0] sm:$0xff]
        %v779 = vld [vmem:[%s734 + $0xc8] sm:$0xff]
        %v780 = vld [vmem:[%s734 + $0xd0] sm:$0xff]
        %v781 = vld [vmem:[%s734 + $0xe8] sm:$0xff]
        %v782 = vld [vmem:[%s734 + $0xf0] sm:$0xff]
        %v783 = vld [vmem:[%s734 + $0x108] sm:$0xff]
        %v784 = vld [vmem:[%s734 + $0x110] sm:$0xff]
        %v785 = vld [vmem:[%s734 + $0x128] sm:$0xff]
        %v786 = vld [vmem:[%s734 + $0x130] sm:$0xff]
        %v787 = vld [vmem:[%s734 + $0x148] sm:$0xff]
        %v788 = vld [vmem:[%s734 + $0x150] sm:$0xff]
        %v789 = vld [vmem:[%s734 + $0x168] sm:$0xff]
        %v790 = vld [vmem:[%s734 + $0x170] sm:$0xff]
        %v791 = vld [vmem:[%s734 + $0x188] sm:$0xff]
        %v792 = vld [vmem:[%s734 + $0x190] sm:$0xff]
        %v793 = vld [vmem:[%s734 + $0x1a8] sm:$0xff]
        %v794 = vld [vmem:[%s734 + $0x1b0] sm:$0xff]
        %v795 = vld [vmem:[%s734 + $0x1c8] sm:$0xff]
        %v796 = vld [vmem:[%s734 + $0x1d0] sm:$0xff]
        %v797 = vld [vmem:[%s734 + $0x1e8] sm:$0xff]
        %v798 = vld [vmem:[%s734 + $0x1f0] sm:$0xff]
        %v799 = vld [vmem:[%s734 + $0x9] sm:$0xff]
        %v800 = vld [vmem:[%s734 + $0x11] sm:$0xff]
        %v801 = vld [vmem:[%s734 + $0x29] sm:$0xff]
        %v802 = vld [vmem:[%s734 + $0x31] sm:$0xff]
        %v803 = vld [vmem:[%s734 + $0x49] sm:$0xff]
        %v804 = vld [vmem:[%s734 + $0x51] sm:$0xff]
        %v805 = vld [vmem:[%s734 + $0x69] sm:$0xff]
        %v806 = vld [vmem:[%s734 + $0x71] sm:$0xff]
        %v807 = vld [vmem:[%s734 + $0x89] sm:$0xff]
        %v808 = vld [vmem:[%s734 + $0x91] sm:$0xff]
        %v809 = vld [vmem:[%s734 + $0xa9] sm:$0xff]
        %v810 = vld [vmem:[%s734 + $0xb1] sm:$0xff]
        %v811 = vld [vmem:[%s734 + $0xc9] sm:$0xff]
        %v812 = vld [vmem:[%s734 + $0xd1] sm:$0xff]
        %v813 = vld [vmem:[%s734 + $0xe9] sm:$0xff]
        %v814 = vld [vmem:[%s734 + $0xf1] sm:$0xff]
        %v815 = vld [vmem:[%s734 + $0x109] sm:$0xff]
        %v816 = vld [vmem:[%s734 + $0x111] sm:$0xff]
        %v817 = vld [vmem:[%s734 + $0x129] sm:$0xff]
        %v818 = vld [vmem:[%s734 + $0x131] sm:$0xff]
        %v819 = vld [vmem:[%s734 + $0x149] sm:$0xff]
        %v820 = vld [vmem:[%s734 + $0x151] sm:$0xff]
        %v821 = vld [vmem:[%s734 + $0x169] sm:$0xff]
        %v822 = vld [vmem:[%s734 + $0x171] sm:$0xff]
        %v823 = vld [vmem:[%s734 + $0x189] sm:$0xff]
        %v824 = vld [vmem:[%s734 + $0x191] sm:$0xff]
        %v825 = vld [vmem:[%s734 + $0x1a9] sm:$0xff]
        %v826 = vld [vmem:[%s734 + $0x1b1] sm:$0xff]
        %v827 = vld [vmem:[%s734 + $0x1c9] sm:$0xff]
        %v828 = vld [vmem:[%s734 + $0x1d1] sm:$0xff]
        %v829 = vld [vmem:[%s734 + $0x1e9] sm:$0xff]
        %v830 = vld [vmem:[%s734 + $0x1f1] sm:$0xff]
        %863 = vrot.lane.b32.xlu0 %v574, 4
        %v864 = vpop.permute.xlu0 %863
        %865 = vrot.lane.b32.xlu0 %v575, 4
        %v866 = vpop.permute.xlu0 %865
        %867 = vrot.lane.b32.xlu0 %v576, 4
        %v868 = vpop.permute.xlu0 %867
        %869 = vrot.lane.b32.xlu0 %v577, 4
        %v870 = vpop.permute.xlu0 %869
        %871 = vrot.lane.b32.xlu0 %v578, 4
        %v872 = vpop.permute.xlu0 %871
        %873 = vrot.lane.b32.xlu0 %v579, 4
        %v874 = vpop.permute.xlu0 %873
        %875 = vrot.lane.b32.xlu0 %v580, 4
        %v876 = vpop.permute.xlu0 %875
        %877 = vrot.lane.b32.xlu0 %v581, 4
        %v878 = vpop.permute.xlu0 %877
        %879 = vrot.lane.b32.xlu0 %v582, 4
        %v880 = vpop.permute.xlu0 %879
        %881 = vrot.lane.b32.xlu0 %v583, 4
        %v882 = vpop.permute.xlu0 %881
        %883 = vrot.lane.b32.xlu0 %v584, 4
        %v884 = vpop.permute.xlu0 %883
        %885 = vrot.lane.b32.xlu0 %v585, 4
        %v886 = vpop.permute.xlu0 %885
        %887 = vrot.lane.b32.xlu0 %v586, 4
        %v888 = vpop.permute.xlu0 %887
        %889 = vrot.lane.b32.xlu0 %v587, 4
        %v890 = vpop.permute.xlu0 %889
        %891 = vrot.lane.b32.xlu0 %v588, 4
        %v892 = vpop.permute.xlu0 %891
        %893 = vrot.lane.b32.xlu0 %v589, 4
        %v894 = vpop.permute.xlu0 %893
        %895 = vrot.lane.b32.xlu0 %v590, 4
        %v896 = vpop.permute.xlu0 %895
        %897 = vrot.lane.b32.xlu0 %v591, 4
        %v898 = vpop.permute.xlu0 %897
        %899 = vrot.lane.b32.xlu0 %v592, 4
        %v900 = vpop.permute.xlu0 %899
        %901 = vrot.lane.b32.xlu0 %v593, 4
        %v902 = vpop.permute.xlu0 %901
        %903 = vrot.lane.b32.xlu0 %v594, 4
        %v904 = vpop.permute.xlu0 %903
        %905 = vrot.lane.b32.xlu0 %v595, 4
        %v906 = vpop.permute.xlu0 %905
        %907 = vrot.lane.b32.xlu0 %v596, 4
        %v908 = vpop.permute.xlu0 %907
        %909 = vrot.lane.b32.xlu0 %v597, 4
        %v910 = vpop.permute.xlu0 %909
        %911 = vrot.lane.b32.xlu0 %v598, 4
        %v912 = vpop.permute.xlu0 %911
        %913 = vrot.lane.b32.xlu0 %v599, 4
        %v914 = vpop.permute.xlu0 %913
        %915 = vrot.lane.b32.xlu0 %v600, 4
        %v916 = vpop.permute.xlu0 %915
        %917 = vrot.lane.b32.xlu0 %v601, 4
        %v918 = vpop.permute.xlu0 %917
        %919 = vrot.lane.b32.xlu0 %v602, 4
        %v920 = vpop.permute.xlu0 %919
        %921 = vrot.lane.b32.xlu0 %v603, 4
        %v922 = vpop.permute.xlu0 %921
        %923 = vrot.lane.b32.xlu0 %v604, 4
        %v924 = vpop.permute.xlu0 %923
        %925 = vrot.lane.b32.xlu0 %v605, 4
        %v926 = vpop.permute.xlu0 %925
        %991 = vrot.lane.b32.xlu0 %v606, 8
        %v992 = vpop.permute.xlu0 %991
        %993 = vrot.lane.b32.xlu0 %v607, 8
        %v994 = vpop.permute.xlu0 %993
        %995 = vrot.lane.b32.xlu0 %v608, 8
        %v996 = vpop.permute.xlu0 %995
        %997 = vrot.lane.b32.xlu0 %v609, 8
        %v998 = vpop.permute.xlu0 %997
        %999 = vrot.lane.b32.xlu0 %v610, 8
        %v1000 = vpop.permute.xlu0 %999
        %1001 = vrot.lane.b32.xlu0 %v611, 8
        %v1002 = vpop.permute.xlu0 %1001
        %1003 = vrot.lane.b32.xlu0 %v612, 8
        %v1004 = vpop.permute.xlu0 %1003
        %1005 = vrot.lane.b32.xlu0 %v613, 8
        %v1006 = vpop.permute.xlu0 %1005
        %1007 = vrot.lane.b32.xlu0 %v614, 8
        %v1008 = vpop.permute.xlu0 %1007
        %1009 = vrot.lane.b32.xlu0 %v615, 8
        %v1010 = vpop.permute.xlu0 %1009
        %1011 = vrot.lane.b32.xlu0 %v616, 8
        %v1012 = vpop.permute.xlu0 %1011
        %1013 = vrot.lane.b32.xlu0 %v617, 8
        %v1014 = vpop.permute.xlu0 %1013
        %1015 = vrot.lane.b32.xlu0 %v618, 8
        %v1016 = vpop.permute.xlu0 %1015
        %1017 = vrot.lane.b32.xlu0 %v619, 8
        %v1018 = vpop.permute.xlu0 %1017
        %1019 = vrot.lane.b32.xlu0 %v620, 8
        %v1020 = vpop.permute.xlu0 %1019
        %1021 = vrot.lane.b32.xlu0 %v621, 8
        %v1022 = vpop.permute.xlu0 %1021
        %1023 = vrot.lane.b32.xlu0 %v622, 8
        %v1024 = vpop.permute.xlu0 %1023
        %1025 = vrot.lane.b32.xlu0 %v623, 8
        %v1026 = vpop.permute.xlu0 %1025
        %1027 = vrot.lane.b32.xlu0 %v624, 8
        %v1028 = vpop.permute.xlu0 %1027
        %1029 = vrot.lane.b32.xlu0 %v625, 8
        %v1030 = vpop.permute.xlu0 %1029
        %1031 = vrot.lane.b32.xlu0 %v626, 8
        %v1032 = vpop.permute.xlu0 %1031
        %1033 = vrot.lane.b32.xlu0 %v627, 8
        %v1034 = vpop.permute.xlu0 %1033
        %1035 = vrot.lane.b32.xlu0 %v628, 8
        %v1036 = vpop.permute.xlu0 %1035
        %1037 = vrot.lane.b32.xlu0 %v629, 8
        %v1038 = vpop.permute.xlu0 %1037
        %1039 = vrot.lane.b32.xlu0 %v630, 8
        %v1040 = vpop.permute.xlu0 %1039
        %1041 = vrot.lane.b32.xlu0 %v631, 8
        %v1042 = vpop.permute.xlu0 %1041
        %1043 = vrot.lane.b32.xlu0 %v632, 8
        %v1044 = vpop.permute.xlu0 %1043
        %1045 = vrot.lane.b32.xlu0 %v633, 8
        %v1046 = vpop.permute.xlu0 %1045
        %1047 = vrot.lane.b32.xlu0 %v634, 8
        %v1048 = vpop.permute.xlu0 %1047
        %1049 = vrot.lane.b32.xlu0 %v635, 8
        %v1050 = vpop.permute.xlu0 %1049
        %1051 = vrot.lane.b32.xlu0 %v636, 8
        %v1052 = vpop.permute.xlu0 %1051
        %1053 = vrot.lane.b32.xlu0 %v637, 8
        %v1054 = vpop.permute.xlu0 %1053
        %1119 = vrot.lane.b32.xlu0 %v638, 12
        %v1120 = vpop.permute.xlu0 %1119
        %1121 = vrot.lane.b32.xlu0 %v639, 12
        %v1122 = vpop.permute.xlu0 %1121
        %1123 = vrot.lane.b32.xlu0 %v640, 12
        %v1124 = vpop.permute.xlu0 %1123
        %1125 = vrot.lane.b32.xlu0 %v641, 12
        %v1126 = vpop.permute.xlu0 %1125
        %1127 = vrot.lane.b32.xlu0 %v642, 12
        %v1128 = vpop.permute.xlu0 %1127
        %1129 = vrot.lane.b32.xlu0 %v643, 12
        %v1130 = vpop.permute.xlu0 %1129
        %1131 = vrot.lane.b32.xlu0 %v644, 12
        %v1132 = vpop.permute.xlu0 %1131
        %1133 = vrot.lane.b32.xlu0 %v645, 12
        %v1134 = vpop.permute.xlu0 %1133
        %1135 = vrot.lane.b32.xlu0 %v646, 12
        %v1136 = vpop.permute.xlu0 %1135
        %1137 = vrot.lane.b32.xlu0 %v647, 12
        %v1138 = vpop.permute.xlu0 %1137
        %1139 = vrot.lane.b32.xlu0 %v648, 12
        %v1140 = vpop.permute.xlu0 %1139
        %1141 = vrot.lane.b32.xlu0 %v649, 12
        %v1142 = vpop.permute.xlu0 %1141
        %1143 = vrot.lane.b32.xlu0 %v650, 12
        %v1144 = vpop.permute.xlu0 %1143
        %1145 = vrot.lane.b32.xlu0 %v651, 12
        %v1146 = vpop.permute.xlu0 %1145
        %1147 = vrot.lane.b32.xlu0 %v652, 12
        %v1148 = vpop.permute.xlu0 %1147
        %1149 = vrot.lane.b32.xlu0 %v653, 12
        %v1150 = vpop.permute.xlu0 %1149
        %1151 = vrot.lane.b32.xlu0 %v654, 12
        %v1152 = vpop.permute.xlu0 %1151
        %1153 = vrot.lane.b32.xlu0 %v655, 12
        %v1154 = vpop.permute.xlu0 %1153
        %1155 = vrot.lane.b32.xlu0 %v656, 12
        %v1156 = vpop.permute.xlu0 %1155
        %1157 = vrot.lane.b32.xlu0 %v657, 12
        %v1158 = vpop.permute.xlu0 %1157
        %1159 = vrot.lane.b32.xlu0 %v658, 12
        %v1160 = vpop.permute.xlu0 %1159
        %1161 = vrot.lane.b32.xlu0 %v659, 12
        %v1162 = vpop.permute.xlu0 %1161
        %1163 = vrot.lane.b32.xlu0 %v660, 12
        %v1164 = vpop.permute.xlu0 %1163
        %1165 = vrot.lane.b32.xlu0 %v661, 12
        %v1166 = vpop.permute.xlu0 %1165
        %1167 = vrot.lane.b32.xlu0 %v662, 12
        %v1168 = vpop.permute.xlu0 %1167
        %1169 = vrot.lane.b32.xlu0 %v663, 12
        %v1170 = vpop.permute.xlu0 %1169
        %1171 = vrot.lane.b32.xlu0 %v664, 12
        %v1172 = vpop.permute.xlu0 %1171
        %1173 = vrot.lane.b32.xlu0 %v665, 12
        %v1174 = vpop.permute.xlu0 %1173
        %1175 = vrot.lane.b32.xlu0 %v666, 12
        %v1176 = vpop.permute.xlu0 %1175
        %1177 = vrot.lane.b32.xlu0 %v667, 12
        %v1178 = vpop.permute.xlu0 %1177
        %1179 = vrot.lane.b32.xlu0 %v668, 12
        %v1180 = vpop.permute.xlu0 %1179
        %1181 = vrot.lane.b32.xlu0 %v669, 12
        %v1182 = vpop.permute.xlu0 %1181
        %1247 = vrot.lane.b32.xlu0 %v670, 16
        %v1248 = vpop.permute.xlu0 %1247
        %1249 = vrot.lane.b32.xlu0 %v671, 16
        %v1250 = vpop.permute.xlu0 %1249
        %1251 = vrot.lane.b32.xlu0 %v672, 16
        %v1252 = vpop.permute.xlu0 %1251
        %1253 = vrot.lane.b32.xlu0 %v673, 16
        %v1254 = vpop.permute.xlu0 %1253
        %1255 = vrot.lane.b32.xlu0 %v674, 16
        %v1256 = vpop.permute.xlu0 %1255
        %1257 = vrot.lane.b32.xlu0 %v675, 16
        %v1258 = vpop.permute.xlu0 %1257
        %1259 = vrot.lane.b32.xlu0 %v676, 16
        %v1260 = vpop.permute.xlu0 %1259
        %1261 = vrot.lane.b32.xlu0 %v677, 16
        %v1262 = vpop.permute.xlu0 %1261
        %1263 = vrot.lane.b32.xlu0 %v678, 16
        %v1264 = vpop.permute.xlu0 %1263
        %1265 = vrot.lane.b32.xlu0 %v679, 16
        %v1266 = vpop.permute.xlu0 %1265
        %1267 = vrot.lane.b32.xlu0 %v680, 16
        %v1268 = vpop.permute.xlu0 %1267
        %1269 = vrot.lane.b32.xlu0 %v681, 16
        %v1270 = vpop.permute.xlu0 %1269
        %1271 = vrot.lane.b32.xlu0 %v682, 16
        %v1272 = vpop.permute.xlu0 %1271
        %1273 = vrot.lane.b32.xlu0 %v683, 16
        %v1274 = vpop.permute.xlu0 %1273
        %1275 = vrot.lane.b32.xlu0 %v684, 16
        %v1276 = vpop.permute.xlu0 %1275
        %1277 = vrot.lane.b32.xlu0 %v685, 16
        %v1278 = vpop.permute.xlu0 %1277
        %1279 = vrot.lane.b32.xlu0 %v686, 16
        %v1280 = vpop.permute.xlu0 %1279
        %1281 = vrot.lane.b32.xlu0 %v687, 16
        %v1282 = vpop.permute.xlu0 %1281
        %1283 = vrot.lane.b32.xlu0 %v688, 16
        %v1284 = vpop.permute.xlu0 %1283
        %1285 = vrot.lane.b32.xlu0 %v689, 16
        %v1286 = vpop.permute.xlu0 %1285
        %1287 = vrot.lane.b32.xlu0 %v690, 16
        %v1288 = vpop.permute.xlu0 %1287
        %1289 = vrot.lane.b32.xlu0 %v691, 16
        %v1290 = vpop.permute.xlu0 %1289
        %1291 = vrot.lane.b32.xlu0 %v692, 16
        %v1292 = vpop.permute.xlu0 %1291
        %1293 = vrot.lane.b32.xlu0 %v693, 16
        %v1294 = vpop.permute.xlu0 %1293
        %1295 = vrot.lane.b32.xlu0 %v694, 16
        %v1296 = vpop.permute.xlu0 %1295
        %1297 = vrot.lane.b32.xlu0 %v695, 16
        %v1298 = vpop.permute.xlu0 %1297
        %1299 = vrot.lane.b32.xlu0 %v696, 16
        %v1300 = vpop.permute.xlu0 %1299
        %1301 = vrot.lane.b32.xlu0 %v697, 16
        %v1302 = vpop.permute.xlu0 %1301
        %1303 = vrot.lane.b32.xlu0 %v698, 16
        %v1304 = vpop.permute.xlu0 %1303
        %1305 = vrot.lane.b32.xlu0 %v699, 16
        %v1306 = vpop.permute.xlu0 %1305
        %1307 = vrot.lane.b32.xlu0 %v700, 16
        %v1308 = vpop.permute.xlu0 %1307
        %1309 = vrot.lane.b32.xlu0 %v701, 16
        %v1310 = vpop.permute.xlu0 %1309
        %1375 = vrot.lane.b32.xlu0 %v702, 20
        %v1376 = vpop.permute.xlu0 %1375
        %1377 = vrot.lane.b32.xlu0 %v703, 20
        %v1378 = vpop.permute.xlu0 %1377
        %1379 = vrot.lane.b32.xlu0 %v704, 20
        %v1380 = vpop.permute.xlu0 %1379
        %1381 = vrot.lane.b32.xlu0 %v705, 20
        %v1382 = vpop.permute.xlu0 %1381
        %1383 = vrot.lane.b32.xlu0 %v706, 20
        %v1384 = vpop.permute.xlu0 %1383
        %1385 = vrot.lane.b32.xlu0 %v707, 20
        %v1386 = vpop.permute.xlu0 %1385
        %1387 = vrot.lane.b32.xlu0 %v708, 20
        %v1388 = vpop.permute.xlu0 %1387
        %1389 = vrot.lane.b32.xlu0 %v709, 20
        %v1390 = vpop.permute.xlu0 %1389
        %1391 = vrot.lane.b32.xlu0 %v710, 20
        %v1392 = vpop.permute.xlu0 %1391
        %1393 = vrot.lane.b32.xlu0 %v711, 20
        %v1394 = vpop.permute.xlu0 %1393
        %1395 = vrot.lane.b32.xlu0 %v712, 20
        %v1396 = vpop.permute.xlu0 %1395
        %1397 = vrot.lane.b32.xlu0 %v713, 20
        %v1398 = vpop.permute.xlu0 %1397
        %1399 = vrot.lane.b32.xlu0 %v714, 20
        %v1400 = vpop.permute.xlu0 %1399
        %1401 = vrot.lane.b32.xlu0 %v715, 20
        %v1402 = vpop.permute.xlu0 %1401
        %1403 = vrot.lane.b32.xlu0 %v716, 20
        %v1404 = vpop.permute.xlu0 %1403
        %1405 = vrot.lane.b32.xlu0 %v717, 20
        %v1406 = vpop.permute.xlu0 %1405
        %1407 = vrot.lane.b32.xlu0 %v718, 20
        %v1408 = vpop.permute.xlu0 %1407
        %1409 = vrot.lane.b32.xlu0 %v719, 20
        %v1410 = vpop.permute.xlu0 %1409
        %1411 = vrot.lane.b32.xlu0 %v720, 20
        %v1412 = vpop.permute.xlu0 %1411
        %1413 = vrot.lane.b32.xlu0 %v721, 20
        %v1414 = vpop.permute.xlu0 %1413
        %1415 = vrot.lane.b32.xlu0 %v722, 20
        %v1416 = vpop.permute.xlu0 %1415
        %1417 = vrot.lane.b32.xlu0 %v723, 20
        %v1418 = vpop.permute.xlu0 %1417
        %1419 = vrot.lane.b32.xlu0 %v724, 20
        %v1420 = vpop.permute.xlu0 %1419
        %1421 = vrot.lane.b32.xlu0 %v725, 20
        %v1422 = vpop.permute.xlu0 %1421
        %1423 = vrot.lane.b32.xlu0 %v726, 20
        %v1424 = vpop.permute.xlu0 %1423
        %1425 = vrot.lane.b32.xlu0 %v727, 20
        %v1426 = vpop.permute.xlu0 %1425
        %1427 = vrot.lane.b32.xlu0 %v728, 20
        %v1428 = vpop.permute.xlu0 %1427
        %1429 = vrot.lane.b32.xlu0 %v729, 20
        %v1430 = vpop.permute.xlu0 %1429
        %1431 = vrot.lane.b32.xlu0 %v730, 20
        %v1432 = vpop.permute.xlu0 %1431
        %1433 = vrot.lane.b32.xlu0 %v731, 20
        %v1434 = vpop.permute.xlu0 %1433
        %1435 = vrot.lane.b32.xlu0 %v732, 20
        %v1436 = vpop.permute.xlu0 %1435
        %1437 = vrot.lane.b32.xlu0 %v733, 20
        %v1438 = vpop.permute.xlu0 %1437
        %1503 = vrot.lane.b32.xlu0 %v735, 24
        %v1504 = vpop.permute.xlu0 %1503
        %1505 = vrot.lane.b32.xlu0 %v736, 24
        %v1506 = vpop.permute.xlu0 %1505
        %1507 = vrot.lane.b32.xlu0 %v737, 24
        %v1508 = vpop.permute.xlu0 %1507
        %1509 = vrot.lane.b32.xlu0 %v738, 24
        %v1510 = vpop.permute.xlu0 %1509
        %1511 = vrot.lane.b32.xlu0 %v739, 24
        %v1512 = vpop.permute.xlu0 %1511
        %1513 = vrot.lane.b32.xlu0 %v740, 24
        %v1514 = vpop.permute.xlu0 %1513
        %1515 = vrot.lane.b32.xlu0 %v741, 24
        %v1516 = vpop.permute.xlu0 %1515
        %1517 = vrot.lane.b32.xlu0 %v742, 24
        %v1518 = vpop.permute.xlu0 %1517
        %1519 = vrot.lane.b32.xlu0 %v743, 24
        %v1520 = vpop.permute.xlu0 %1519
        %1521 = vrot.lane.b32.xlu0 %v744, 24
        %v1522 = vpop.permute.xlu0 %1521
        %1523 = vrot.lane.b32.xlu0 %v745, 24
        %v1524 = vpop.permute.xlu0 %1523
        %1525 = vrot.lane.b32.xlu0 %v746, 24
        %v1526 = vpop.permute.xlu0 %1525
        %1527 = vrot.lane.b32.xlu0 %v747, 24
        %v1528 = vpop.permute.xlu0 %1527
        %1529 = vrot.lane.b32.xlu0 %v748, 24
        %v1530 = vpop.permute.xlu0 %1529
        %1531 = vrot.lane.b32.xlu0 %v749, 24
        %v1532 = vpop.permute.xlu0 %1531
        %1533 = vrot.lane.b32.xlu0 %v750, 24
        %v1534 = vpop.permute.xlu0 %1533
        %1535 = vrot.lane.b32.xlu0 %v751, 24
        %v1536 = vpop.permute.xlu0 %1535
        %1537 = vrot.lane.b32.xlu0 %v752, 24
        %v1538 = vpop.permute.xlu0 %1537
        %1539 = vrot.lane.b32.xlu0 %v753, 24
        %v1540 = vpop.permute.xlu0 %1539
        %1541 = vrot.lane.b32.xlu0 %v754, 24
        %v1542 = vpop.permute.xlu0 %1541
        %1543 = vrot.lane.b32.xlu0 %v755, 24
        %v1544 = vpop.permute.xlu0 %1543
        %1545 = vrot.lane.b32.xlu0 %v756, 24
        %v1546 = vpop.permute.xlu0 %1545
        %1547 = vrot.lane.b32.xlu0 %v757, 24
        %v1548 = vpop.permute.xlu0 %1547
        %1549 = vrot.lane.b32.xlu0 %v758, 24
        %v1550 = vpop.permute.xlu0 %1549
        %1551 = vrot.lane.b32.xlu0 %v759, 24
        %v1552 = vpop.permute.xlu0 %1551
        %1553 = vrot.lane.b32.xlu0 %v760, 24
        %v1554 = vpop.permute.xlu0 %1553
        %1555 = vrot.lane.b32.xlu0 %v761, 24
        %v1556 = vpop.permute.xlu0 %1555
        %1557 = vrot.lane.b32.xlu0 %v762, 24
        %v1558 = vpop.permute.xlu0 %1557
        %1559 = vrot.lane.b32.xlu0 %v763, 24
        %v1560 = vpop.permute.xlu0 %1559
        %1561 = vrot.lane.b32.xlu0 %v764, 24
        %v1562 = vpop.permute.xlu0 %1561
        %1563 = vrot.lane.b32.xlu0 %v765, 24
        %v1564 = vpop.permute.xlu0 %1563
        %1565 = vrot.lane.b32.xlu0 %v766, 24
        %v1566 = vpop.permute.xlu0 %1565
        %1631 = vrot.lane.b32.xlu0 %v767, 28
        %v1632 = vpop.permute.xlu0 %1631
        %1633 = vrot.lane.b32.xlu0 %v768, 28
        %v1634 = vpop.permute.xlu0 %1633
        %1635 = vrot.lane.b32.xlu0 %v769, 28
        %v1636 = vpop.permute.xlu0 %1635
        %1637 = vrot.lane.b32.xlu0 %v770, 28
        %v1638 = vpop.permute.xlu0 %1637
        %1639 = vrot.lane.b32.xlu0 %v771, 28
        %v1640 = vpop.permute.xlu0 %1639
        %1641 = vrot.lane.b32.xlu0 %v772, 28
        %v1642 = vpop.permute.xlu0 %1641
        %1643 = vrot.lane.b32.xlu0 %v773, 28
        %v1644 = vpop.permute.xlu0 %1643
        %1645 = vrot.lane.b32.xlu0 %v774, 28
        %v1646 = vpop.permute.xlu0 %1645
        %1647 = vrot.lane.b32.xlu0 %v775, 28
        %v1648 = vpop.permute.xlu0 %1647
        %1649 = vrot.lane.b32.xlu0 %v776, 28
        %v1650 = vpop.permute.xlu0 %1649
        %1651 = vrot.lane.b32.xlu0 %v777, 28
        %v1652 = vpop.permute.xlu0 %1651
        %1653 = vrot.lane.b32.xlu0 %v778, 28
        %v1654 = vpop.permute.xlu0 %1653
        %1655 = vrot.lane.b32.xlu0 %v779, 28
        %v1656 = vpop.permute.xlu0 %1655
        %1657 = vrot.lane.b32.xlu0 %v780, 28
        %v1658 = vpop.permute.xlu0 %1657
        %1659 = vrot.lane.b32.xlu0 %v781, 28
        %v1660 = vpop.permute.xlu0 %1659
        %1661 = vrot.lane.b32.xlu0 %v782, 28
        %v1662 = vpop.permute.xlu0 %1661
        %1663 = vrot.lane.b32.xlu0 %v783, 28
        %v1664 = vpop.permute.xlu0 %1663
        %1665 = vrot.lane.b32.xlu0 %v784, 28
        %v1666 = vpop.permute.xlu0 %1665
        %1667 = vrot.lane.b32.xlu0 %v785, 28
        %v1668 = vpop.permute.xlu0 %1667
        %1669 = vrot.lane.b32.xlu0 %v786, 28
        %v1670 = vpop.permute.xlu0 %1669
        %1671 = vrot.lane.b32.xlu0 %v787, 28
        %v1672 = vpop.permute.xlu0 %1671
        %1673 = vrot.lane.b32.xlu0 %v788, 28
        %v1674 = vpop.permute.xlu0 %1673
        %1675 = vrot.lane.b32.xlu0 %v789, 28
        %v1676 = vpop.permute.xlu0 %1675
        %1677 = vrot.lane.b32.xlu0 %v790, 28
        %v1678 = vpop.permute.xlu0 %1677
        %1679 = vrot.lane.b32.xlu0 %v791, 28
        %v1680 = vpop.permute.xlu0 %1679
        %1681 = vrot.lane.b32.xlu0 %v792, 28
        %v1682 = vpop.permute.xlu0 %1681
        %1683 = vrot.lane.b32.xlu0 %v793, 28
        %v1684 = vpop.permute.xlu0 %1683
        %1685 = vrot.lane.b32.xlu0 %v794, 28
        %v1686 = vpop.permute.xlu0 %1685
        %1687 = vrot.lane.b32.xlu0 %v795, 28
        %v1688 = vpop.permute.xlu0 %1687
        %1689 = vrot.lane.b32.xlu0 %v796, 28
        %v1690 = vpop.permute.xlu0 %1689
        %1691 = vrot.lane.b32.xlu0 %v797, 28
        %v1692 = vpop.permute.xlu0 %1691
        %1693 = vrot.lane.b32.xlu0 %v798, 28
        %v1694 = vpop.permute.xlu0 %1693
        %1759 = vrot.lane.b32.xlu0 %v799, 32
        %v1760 = vpop.permute.xlu0 %1759
        %1761 = vrot.lane.b32.xlu0 %v800, 32
        %v1762 = vpop.permute.xlu0 %1761
        %1763 = vrot.lane.b32.xlu0 %v801, 32
        %v1764 = vpop.permute.xlu0 %1763
        %1765 = vrot.lane.b32.xlu0 %v802, 32
        %v1766 = vpop.permute.xlu0 %1765
        %1767 = vrot.lane.b32.xlu0 %v803, 32
        %v1768 = vpop.permute.xlu0 %1767
        %1769 = vrot.lane.b32.xlu0 %v804, 32
        %v1770 = vpop.permute.xlu0 %1769
        %1771 = vrot.lane.b32.xlu0 %v805, 32
        %v1772 = vpop.permute.xlu0 %1771
        %1773 = vrot.lane.b32.xlu0 %v806, 32
        %v1774 = vpop.permute.xlu0 %1773
        %1775 = vrot.lane.b32.xlu0 %v807, 32
        %v1776 = vpop.permute.xlu0 %1775
        %1777 = vrot.lane.b32.xlu0 %v808, 32
        %v1778 = vpop.permute.xlu0 %1777
        %1779 = vrot.lane.b32.xlu0 %v809, 32
        %v1780 = vpop.permute.xlu0 %1779
        %1781 = vrot.lane.b32.xlu0 %v810, 32
        %v1782 = vpop.permute.xlu0 %1781
        %1783 = vrot.lane.b32.xlu0 %v811, 32
        %v1784 = vpop.permute.xlu0 %1783
        %1785 = vrot.lane.b32.xlu0 %v812, 32
        %v1786 = vpop.permute.xlu0 %1785
        %1787 = vrot.lane.b32.xlu0 %v813, 32
        %v1788 = vpop.permute.xlu0 %1787
        %1789 = vrot.lane.b32.xlu0 %v814, 32
        %v1790 = vpop.permute.xlu0 %1789
        %1791 = vrot.lane.b32.xlu0 %v815, 32
        %v1792 = vpop.permute.xlu0 %1791
        %1793 = vrot.lane.b32.xlu0 %v816, 32
        %v1794 = vpop.permute.xlu0 %1793
        %1795 = vrot.lane.b32.xlu0 %v817, 32
        %v1796 = vpop.permute.xlu0 %1795
        %1797 = vrot.lane.b32.xlu0 %v818, 32
        %v1798 = vpop.permute.xlu0 %1797
        %1799 = vrot.lane.b32.xlu0 %v819, 32
        %v1800 = vpop.permute.xlu0 %1799
        %1801 = vrot.lane.b32.xlu0 %v820, 32
        %v1802 = vpop.permute.xlu0 %1801
        %1803 = vrot.lane.b32.xlu0 %v821, 32
        %v1804 = vpop.permute.xlu0 %1803
        %1805 = vrot.lane.b32.xlu0 %v822, 32
        %v1806 = vpop.permute.xlu0 %1805
        %1807 = vrot.lane.b32.xlu0 %v823, 32
        %v1808 = vpop.permute.xlu0 %1807
        %1809 = vrot.lane.b32.xlu0 %v824, 32
        %v1810 = vpop.permute.xlu0 %1809
        %1811 = vrot.lane.b32.xlu0 %v825, 32
        %v1812 = vpop.permute.xlu0 %1811
        %1813 = vrot.lane.b32.xlu0 %v826, 32
        %v1814 = vpop.permute.xlu0 %1813
        %1815 = vrot.lane.b32.xlu0 %v827, 32
        %v1816 = vpop.permute.xlu0 %1815
        %1817 = vrot.lane.b32.xlu0 %v828, 32
        %v1818 = vpop.permute.xlu0 %1817
        %1819 = vrot.lane.b32.xlu0 %v829, 32
        %v1820 = vpop.permute.xlu0 %1819
        %1821 = vrot.lane.b32.xlu0 %v830, 32
        %v1822 = vpop.permute.xlu0 %1821
        %v1855 = vsel %vm321, %v542, %v864
        %v1856 = vsel %vm321, %v543, %v866
        %v1857 = vsel %vm321, %v544, %v868
        %v1858 = vsel %vm321, %v545, %v870
        %v1859 = vsel %vm321, %v546, %v872
        %v1860 = vsel %vm321, %v547, %v874
        %v1861 = vsel %vm321, %v548, %v876
        %v1862 = vsel %vm321, %v549, %v878
        %v1863 = vsel %vm321, %v550, %v880
        %v1864 = vsel %vm321, %v551, %v882
        %v1865 = vsel %vm321, %v552, %v884
        %v1866 = vsel %vm321, %v553, %v886
        %v1867 = vsel %vm321, %v554, %v888
        %v1868 = vsel %vm321, %v555, %v890
        %v1869 = vsel %vm321, %v556, %v892
        %v1870 = vsel %vm321, %v557, %v894
        %v1871 = vsel %vm321, %v558, %v896
        %v1872 = vsel %vm321, %v559, %v898
        %v1873 = vsel %vm321, %v560, %v900
        %v1874 = vsel %vm321, %v561, %v902
        %v1875 = vsel %vm321, %v562, %v904
        %v1876 = vsel %vm321, %v563, %v906
        %v1877 = vsel %vm321, %v564, %v908
        %v1878 = vsel %vm321, %v565, %v910
        %v1879 = vsel %vm321, %v566, %v912
        %v1880 = vsel %vm321, %v567, %v914
        %v1881 = vsel %vm321, %v568, %v916
        %v1882 = vsel %vm321, %v569, %v918
        %v1883 = vsel %vm321, %v570, %v920
        %v1884 = vsel %vm321, %v571, %v922
        %v1885 = vsel %vm321, %v572, %v924
        %v1886 = vsel %vm321, %v573, %v926
        %v1887 = vsel %vm367, %v1855, %v992
        %v1888 = vsel %vm367, %v1856, %v994
        %v1889 = vsel %vm367, %v1857, %v996
        %v1890 = vsel %vm367, %v1858, %v998
        %v1891 = vsel %vm367, %v1859, %v1000
        %v1892 = vsel %vm367, %v1860, %v1002
        %v1893 = vsel %vm367, %v1861, %v1004
        %v1894 = vsel %vm367, %v1862, %v1006
        %v1895 = vsel %vm367, %v1863, %v1008
        %v1896 = vsel %vm367, %v1864, %v1010
        %v1897 = vsel %vm367, %v1865, %v1012
        %v1898 = vsel %vm367, %v1866, %v1014
        %v1899 = vsel %vm367, %v1867, %v1016
        %v1900 = vsel %vm367, %v1868, %v1018
        %v1901 = vsel %vm367, %v1869, %v1020
        %v1902 = vsel %vm367, %v1870, %v1022
        %v1903 = vsel %vm367, %v1871, %v1024
        %v1904 = vsel %vm367, %v1872, %v1026
        %v1905 = vsel %vm367, %v1873, %v1028
        %v1906 = vsel %vm367, %v1874, %v1030
        %v1907 = vsel %vm367, %v1875, %v1032
        %v1908 = vsel %vm367, %v1876, %v1034
        %v1909 = vsel %vm367, %v1877, %v1036
        %v1910 = vsel %vm367, %v1878, %v1038
        %v1911 = vsel %vm367, %v1879, %v1040
        %v1912 = vsel %vm367, %v1880, %v1042
        %v1913 = vsel %vm367, %v1881, %v1044
        %v1914 = vsel %vm367, %v1882, %v1046
        %v1915 = vsel %vm367, %v1883, %v1048
        %v1916 = vsel %vm367, %v1884, %v1050
        %v1917 = vsel %vm367, %v1885, %v1052
        %v1918 = vsel %vm367, %v1886, %v1054
        %vm1919 = vcmask 97280
        %v1920 = vsel %vm1919, %v1887, %v1120
        %v1921 = vsel %vm1919, %v1888, %v1122
        %v1922 = vsel %vm1919, %v1889, %v1124
        %v1923 = vsel %vm1919, %v1890, %v1126
        %v1924 = vsel %vm1919, %v1891, %v1128
        %v1925 = vsel %vm1919, %v1892, %v1130
        %v1926 = vsel %vm1919, %v1893, %v1132
        %v1927 = vsel %vm1919, %v1894, %v1134
        %v1928 = vsel %vm1919, %v1895, %v1136
        %v1929 = vsel %vm1919, %v1896, %v1138
        %v1930 = vsel %vm1919, %v1897, %v1140
        %v1931 = vsel %vm1919, %v1898, %v1142
        %v1932 = vsel %vm1919, %v1899, %v1144
        %v1933 = vsel %vm1919, %v1900, %v1146
        %v1934 = vsel %vm1919, %v1901, %v1148
        %v1935 = vsel %vm1919, %v1902, %v1150
        %v1936 = vsel %vm1919, %v1903, %v1152
        %v1937 = vsel %vm1919, %v1904, %v1154
        %v1938 = vsel %vm1919, %v1905, %v1156
        %v1939 = vsel %vm1919, %v1906, %v1158
        %v1940 = vsel %vm1919, %v1907, %v1160
        %v1941 = vsel %vm1919, %v1908, %v1162
        %v1942 = vsel %vm1919, %v1909, %v1164
        %v1943 = vsel %vm1919, %v1910, %v1166
        %v1944 = vsel %vm1919, %v1911, %v1168
        %v1945 = vsel %vm1919, %v1912, %v1170
        %v1946 = vsel %vm1919, %v1913, %v1172
        %v1947 = vsel %vm1919, %v1914, %v1174
        %v1948 = vsel %vm1919, %v1915, %v1176
        %v1949 = vsel %vm1919, %v1916, %v1178
        %v1950 = vsel %vm1919, %v1917, %v1180
        %v1951 = vsel %vm1919, %v1918, %v1182
        %vm1952 = vcmask 130048
        %v1953 = vsel %vm1952, %v1920, %v1248
        %v1954 = vsel %vm1952, %v1921, %v1250
        %v1955 = vsel %vm1952, %v1922, %v1252
        %v1956 = vsel %vm1952, %v1923, %v1254
        %v1957 = vsel %vm1952, %v1924, %v1256
        %v1958 = vsel %vm1952, %v1925, %v1258
        %v1959 = vsel %vm1952, %v1926, %v1260
        %v1960 = vsel %vm1952, %v1927, %v1262
        %v1961 = vsel %vm1952, %v1928, %v1264
        %v1962 = vsel %vm1952, %v1929, %v1266
        %v1963 = vsel %vm1952, %v1930, %v1268
        %v1964 = vsel %vm1952, %v1931, %v1270
        %v1965 = vsel %vm1952, %v1932, %v1272
        %v1966 = vsel %vm1952, %v1933, %v1274
        %v1967 = vsel %vm1952, %v1934, %v1276
        %v1968 = vsel %vm1952, %v1935, %v1278
        %v1969 = vsel %vm1952, %v1936, %v1280
        %v1970 = vsel %vm1952, %v1937, %v1282
        %v1971 = vsel %vm1952, %v1938, %v1284
        %v1972 = vsel %vm1952, %v1939, %v1286
        %v1973 = vsel %vm1952, %v1940, %v1288
        %v1974 = vsel %vm1952, %v1941, %v1290
        %v1975 = vsel %vm1952, %v1942, %v1292
        %v1976 = vsel %vm1952, %v1943, %v1294
        %v1977 = vsel %vm1952, %v1944, %v1296
        %v1978 = vsel %vm1952, %v1945, %v1298
        %v1979 = vsel %vm1952, %v1946, %v1300
        %v1980 = vsel %vm1952, %v1947, %v1302
        %v1981 = vsel %vm1952, %v1948, %v1304
        %v1982 = vsel %vm1952, %v1949, %v1306
        %v1983 = vsel %vm1952, %v1950, %v1308
        %v1984 = vsel %vm1952, %v1951, %v1310
        %vm1985 = vcmask 162816
        %v1986 = vsel %vm1985, %v1953, %v1376
        %v1987 = vsel %vm1985, %v1954, %v1378
        %v1988 = vsel %vm1985, %v1955, %v1380
        %v1989 = vsel %vm1985, %v1956, %v1382
        %v1990 = vsel %vm1985, %v1957, %v1384
        %v1991 = vsel %vm1985, %v1958, %v1386
        %v1992 = vsel %vm1985, %v1959, %v1388
        %v1993 = vsel %vm1985, %v1960, %v1390
        %v1994 = vsel %vm1985, %v1961, %v1392
        %v1995 = vsel %vm1985, %v1962, %v1394
        %v1996 = vsel %vm1985, %v1963, %v1396
        %v1997 = vsel %vm1985, %v1964, %v1398
        %v1998 = vsel %vm1985, %v1965, %v1400
        %v1999 = vsel %vm1985, %v1966, %v1402
        %v2000 = vsel %vm1985, %v1967, %v1404
        %v2001 = vsel %vm1985, %v1968, %v1406
        %v2002 = vsel %vm1985, %v1969, %v1408
        %v2003 = vsel %vm1985, %v1970, %v1410
        %v2004 = vsel %vm1985, %v1971, %v1412
        %v2005 = vsel %vm1985, %v1972, %v1414
        %v2006 = vsel %vm1985, %v1973, %v1416
        %v2007 = vsel %vm1985, %v1974, %v1418
        %v2008 = vsel %vm1985, %v1975, %v1420
        %v2009 = vsel %vm1985, %v1976, %v1422
        %v2010 = vsel %vm1985, %v1977, %v1424
        %v2011 = vsel %vm1985, %v1978, %v1426
        %v2012 = vsel %vm1985, %v1979, %v1428
        %v2013 = vsel %vm1985, %v1980, %v1430
        %v2014 = vsel %vm1985, %v1981, %v1432
        %v2015 = vsel %vm1985, %v1982, %v1434
        %v2016 = vsel %vm1985, %v1983, %v1436
        %v2017 = vsel %vm1985, %v1984, %v1438
        %vm2018 = vcmask 195584
        %v2019 = vsel %vm2018, %v1986, %v1504
        %v2020 = vsel %vm2018, %v1987, %v1506
        %v2021 = vsel %vm2018, %v1988, %v1508
        %v2022 = vsel %vm2018, %v1989, %v1510
        %v2023 = vsel %vm2018, %v1990, %v1512
        %v2024 = vsel %vm2018, %v1991, %v1514
        %v2025 = vsel %vm2018, %v1992, %v1516
        %v2026 = vsel %vm2018, %v1993, %v1518
        %v2027 = vsel %vm2018, %v1994, %v1520
        %v2028 = vsel %vm2018, %v1995, %v1522
        %v2029 = vsel %vm2018, %v1996, %v1524
        %v2030 = vsel %vm2018, %v1997, %v1526
        %v2031 = vsel %vm2018, %v1998, %v1528
        %v2032 = vsel %vm2018, %v1999, %v1530
        %v2033 = vsel %vm2018, %v2000, %v1532
        %v2034 = vsel %vm2018, %v2001, %v1534
        %v2035 = vsel %vm2018, %v2002, %v1536
        %v2036 = vsel %vm2018, %v2003, %v1538
        %v2037 = vsel %vm2018, %v2004, %v1540
        %v2038 = vsel %vm2018, %v2005, %v1542
        %v2039 = vsel %vm2018, %v2006, %v1544
        %v2040 = vsel %vm2018, %v2007, %v1546
        %v2041 = vsel %vm2018, %v2008, %v1548
        %v2042 = vsel %vm2018, %v2009, %v1550
        %v2043 = vsel %vm2018, %v2010, %v1552
        %v2044 = vsel %vm2018, %v2011, %v1554
        %v2045 = vsel %vm2018, %v2012, %v1556
        %v2046 = vsel %vm2018, %v2013, %v1558
        %v2047 = vsel %vm2018, %v2014, %v1560
        %v2048 = vsel %vm2018, %v2015, %v1562
        %v2049 = vsel %vm2018, %v2016, %v1564
        %v2050 = vsel %vm2018, %v2017, %v1566
        %vm2051 = vcmask 228352
        %v2052 = vsel %vm2051, %v2019, %v1632
        %v2053 = vsel %vm2051, %v2020, %v1634
        %v2054 = vsel %vm2051, %v2021, %v1636
        %v2055 = vsel %vm2051, %v2022, %v1638
        %v2056 = vsel %vm2051, %v2023, %v1640
        %v2057 = vsel %vm2051, %v2024, %v1642
        %v2058 = vsel %vm2051, %v2025, %v1644
        %v2059 = vsel %vm2051, %v2026, %v1646
        %v2060 = vsel %vm2051, %v2027, %v1648
        %v2061 = vsel %vm2051, %v2028, %v1650
        %v2062 = vsel %vm2051, %v2029, %v1652
        %v2063 = vsel %vm2051, %v2030, %v1654
        %v2064 = vsel %vm2051, %v2031, %v1656
        %v2065 = vsel %vm2051, %v2032, %v1658
        %v2066 = vsel %vm2051, %v2033, %v1660
        %v2067 = vsel %vm2051, %v2034, %v1662
        %v2068 = vsel %vm2051, %v2035, %v1664
        %v2069 = vsel %vm2051, %v2036, %v1666
        %v2070 = vsel %vm2051, %v2037, %v1668
        %v2071 = vsel %vm2051, %v2038, %v1670
        %v2072 = vsel %vm2051, %v2039, %v1672
        %v2073 = vsel %vm2051, %v2040, %v1674
        %v2074 = vsel %vm2051, %v2041, %v1676
        %v2075 = vsel %vm2051, %v2042, %v1678
        %v2076 = vsel %vm2051, %v2043, %v1680
        %v2077 = vsel %vm2051, %v2044, %v1682
        %v2078 = vsel %vm2051, %v2045, %v1684
        %v2079 = vsel %vm2051, %v2046, %v1686
        %v2080 = vsel %vm2051, %v2047, %v1688
        %v2081 = vsel %vm2051, %v2048, %v1690
        %v2082 = vsel %vm2051, %v2049, %v1692
        %v2083 = vsel %vm2051, %v2050, %v1694
        %vm2084 = vcmask 261120
        %v2085 = vsel %vm2084, %v2052, %v1760
        %v2086 = vsel %vm2084, %v2053, %v1762
        %v2087 = vsel %vm2084, %v2054, %v1764
        %v2088 = vsel %vm2084, %v2055, %v1766
        %v2089 = vsel %vm2084, %v2056, %v1768
        %v2090 = vsel %vm2084, %v2057, %v1770
        %v2091 = vsel %vm2084, %v2058, %v1772
        %v2092 = vsel %vm2084, %v2059, %v1774
        %v2093 = vsel %vm2084, %v2060, %v1776
        %v2094 = vsel %vm2084, %v2061, %v1778
        %v2095 = vsel %vm2084, %v2062, %v1780
        %v2096 = vsel %vm2084, %v2063, %v1782
        %v2097 = vsel %vm2084, %v2064, %v1784
        %v2098 = vsel %vm2084, %v2065, %v1786
        %v2099 = vsel %vm2084, %v2066, %v1788
        %v2100 = vsel %vm2084, %v2067, %v1790
        %v2101 = vsel %vm2084, %v2068, %v1792
        %v2102 = vsel %vm2084, %v2069, %v1794
        %v2103 = vsel %vm2084, %v2070, %v1796
        %v2104 = vsel %vm2084, %v2071, %v1798
        %v2105 = vsel %vm2084, %v2072, %v1800
        %v2106 = vsel %vm2084, %v2073, %v1802
        %v2107 = vsel %vm2084, %v2074, %v1804
        %v2108 = vsel %vm2084, %v2075, %v1806
        %v2109 = vsel %vm2084, %v2076, %v1808
        %v2110 = vsel %vm2084, %v2077, %v1810
        %v2111 = vsel %vm2084, %v2078, %v1812
        %v2112 = vsel %vm2084, %v2079, %v1814
        %v2113 = vsel %vm2084, %v2080, %v1816
        %v2114 = vsel %vm2084, %v2081, %v1818
        %v2115 = vsel %vm2084, %v2082, %v1820
        %v2116 = vsel %vm2084, %v2083, %v1822
        %v2117 = vpack.c.bf16 %v2086, %v2085
        %v2118 = vpack.c.bf16 %v2088, %v2087
        %v2119 = vpack.c.bf16 %v2090, %v2089
        %v2120 = vpack.c.bf16 %v2092, %v2091
        %v2121 = vpack.c.bf16 %v2094, %v2093
        %v2122 = vpack.c.bf16 %v2096, %v2095
        %v2123 = vpack.c.bf16 %v2098, %v2097
        %v2124 = vpack.c.bf16 %v2100, %v2099
        %v2125 = vpack.c.bf16 %v2102, %v2101
        %v2126 = vpack.c.bf16 %v2104, %v2103
        %v2127 = vpack.c.bf16 %v2106, %v2105
        %v2128 = vpack.c.bf16 %v2108, %v2107
        %v2129 = vpack.c.bf16 %v2110, %v2109
        %v2130 = vpack.c.bf16 %v2112, %v2111
        %v2131 = vpack.c.bf16 %v2114, %v2113
        %v2132 = vpack.c.bf16 %v2116, %v2115
        %v2133 = vld [vmem:[%s1] sm:$0xf]
        %v2134 = vld [vmem:[%s1 + $0x4] sm:$0xf]
        %v2135 = vld [vmem:[%s1 + $0x8] sm:$0xf]
        %v2136 = vld [vmem:[%s1 + $0xc] sm:$0xf]
        %v2137 = vld [vmem:[%s1 + $0x10] sm:$0x3]
        %v2143 = vunpack.c.l.b16 %v2133
        %v2144 = vunpack.c.l.b16 %v2134
        %v2145 = vunpack.c.l.b16 %v2135
        %v2146 = vunpack.c.l.b16 %v2136
        %v2147 = vunpack.c.l.b16 %v2137
        %v2148 = vpack.c.b16 %v2144, %v2143
        %v2149 = vpack.c.b16 %v2146, %v2145
        %v2150 = vpack.c.b16 %v2147, %v2147
        %vm2153 = vcmask 293888
        %v2155 = vsel %vm2153, %v2117, 0
        %v2158 = vsel %vm2153, %v2118, 0
        %v2161 = vsel %vm2153, %v2119, 0
        %v2164 = vsel %vm2153, %v2120, 0
        %v2167 = vsel %vm2153, %v2121, 0
        %v2170 = vsel %vm2153, %v2122, 0
        %v2173 = vsel %vm2153, %v2123, 0
        %v2176 = vsel %vm2153, %v2124, 0
        %v2179 = vsel %vm2153, %v2125, 0
        %v2182 = vsel %vm2153, %v2126, 0
        %v2185 = vsel %vm2153, %v2127, 0
        %v2188 = vsel %vm2153, %v2128, 0
        %v2191 = vsel %vm2153, %v2129, 0
        %v2194 = vsel %vm2153, %v2130, 0
        %v2197 = vsel %vm2153, %v2131, 0
        %v2200 = vsel %vm2153, %v2132, 0
        %vm2202 = vcmask 1041408
        %v2204 = vsel %vm2202, %v2150, 0
        %2206 = vmatprep.subr.bf16.mxu0 0
        %2207 = vmatpush1.bf16.msra.mxu0 0
        %2208 = vmatprep.subr.bf16.mxu0 0
        %2209 = vmatpush1.bf16.msra.mxu0 0
        %2210 = vmatprep.subr.bf16.mxu0 0
        %2211 = vmatpush1.bf16.msra.mxu0 0
        %2212 = vmatprep.subr.bf16.mxu0 0
        %2213 = vmatpush1.bf16.msra.mxu0 0
        %2214 = vmatprep.subr.bf16.mxu0 0
        %2215 = vmatpush1.bf16.msra.mxu0 0
        %2216 = vmatprep.subr.bf16.mxu0 0
        %2217 = vmatpush1.bf16.msra.mxu0 %v2204
        %2218 = vmatprep.subr.bf16.mxu0 0
        %2219 = vmatpush1.bf16.msra.mxu0 %v2149
        %2220 = vmatprep.subr.bf16.mxu0 0
        %2221 = vmatpush1.bf16.msra.mxu0 %v2148
        %2222 = vmatprep.subr.bf16.mxu0 0
        %2223 = vmatpush2.bf16.msra.mxu0 0
        %2224 = vmatprep.subr.bf16.mxu0 0
        %2225 = vmatpush2.bf16.msra.mxu0 0
        %2226 = vmatprep.subr.bf16.mxu0 0
        %2227 = vmatpush2.bf16.msra.mxu0 0
        %2228 = vmatprep.subr.bf16.mxu0 0
        %2229 = vmatpush2.bf16.msra.mxu0 0
        %2230 = vmatprep.subr.bf16.mxu0 0
        %2231 = vmatpush2.bf16.msra.mxu0 0
        %2232 = vmatprep.subr.bf16.mxu0 0
        %2233 = vmatpush2.bf16.msra.mxu0 0
        %2234 = vmatprep.subr.bf16.mxu0 0
        %2235 = vmatpush2.bf16.msra.mxu0 0
        %2236 = vmatprep.subr.bf16.mxu0 0
        %2237 = vmatpush2.bf16.msra.mxu0 0
        %2238 = vmatprep.mubr.bf16.mxu0 0
        %2239 = vmatmul.mubr.bf16.gmra.mxu0 %v2155
        %v2240 = vpop.f32.mrf.mxu0
        %v2241 = vadd.f32 0.0, %v2240
        %v2242 = vpop.f32.mrf.mxu0
        %v2243 = vpop.f32.mrf.mxu0
        %v2244 = vadd.f32 0.0, %v2243
        %v2245 = vpop.f32.mrf.mxu0
        %2246 = vmatprep.mubr.bf16.mxu0 0
        %2247 = vmatmul.mubr.bf16.gmra.mxu0 %v2158
        %v2248 = vpop.f32.mrf.mxu0
        %v2249 = vadd.f32 0.0, %v2248
        %v2250 = vpop.f32.mrf.mxu0
        %v2251 = vpop.f32.mrf.mxu0
        %v2252 = vadd.f32 0.0, %v2251
        %v2253 = vpop.f32.mrf.mxu0
        %2254 = vmatprep.mubr.bf16.mxu0 0
        %2255 = vmatmul.mubr.bf16.gmra.mxu0 %v2161
        %v2256 = vpop.f32.mrf.mxu0
        %v2257 = vadd.f32 0.0, %v2256
        %v2258 = vpop.f32.mrf.mxu0
        %v2259 = vpop.f32.mrf.mxu0
        %v2260 = vadd.f32 0.0, %v2259
        %v2261 = vpop.f32.mrf.mxu0
        %2262 = vmatprep.mubr.bf16.mxu0 0
        %2263 = vmatmul.mubr.bf16.gmra.mxu0 %v2164
        %v2264 = vpop.f32.mrf.mxu0
        %v2265 = vadd.f32 0.0, %v2264
        %v2266 = vpop.f32.mrf.mxu0
        %v2267 = vpop.f32.mrf.mxu0
        %v2268 = vadd.f32 0.0, %v2267
        %v2269 = vpop.f32.mrf.mxu0
        %2270 = vmatprep.mubr.bf16.mxu0 0
        %2271 = vmatmul.mubr.bf16.gmra.mxu0 %v2167
        %v2272 = vpop.f32.mrf.mxu0
        %v2273 = vadd.f32 0.0, %v2272
        %v2274 = vpop.f32.mrf.mxu0
        %v2275 = vpop.f32.mrf.mxu0
        %v2276 = vadd.f32 0.0, %v2275
        %v2277 = vpop.f32.mrf.mxu0
        %2278 = vmatprep.mubr.bf16.mxu0 0
        %2279 = vmatmul.mubr.bf16.gmra.mxu0 %v2170
        %v2280 = vpop.f32.mrf.mxu0
        %v2281 = vadd.f32 0.0, %v2280
        %v2282 = vpop.f32.mrf.mxu0
        %v2283 = vpop.f32.mrf.mxu0
        %v2284 = vadd.f32 0.0, %v2283
        %v2285 = vpop.f32.mrf.mxu0
        %2286 = vmatprep.mubr.bf16.mxu0 0
        %2287 = vmatmul.mubr.bf16.gmra.mxu0 %v2173
        %v2288 = vpop.f32.mrf.mxu0
        %v2289 = vadd.f32 0.0, %v2288
        %v2290 = vpop.f32.mrf.mxu0
        %v2291 = vpop.f32.mrf.mxu0
        %v2292 = vadd.f32 0.0, %v2291
        %v2293 = vpop.f32.mrf.mxu0
        %2294 = vmatprep.mubr.bf16.mxu0 0
        %2295 = vmatmul.mubr.bf16.gmra.mxu0 %v2176
        %v2296 = vpop.f32.mrf.mxu0
        %v2297 = vadd.f32 0.0, %v2296
        %v2298 = vpop.f32.mrf.mxu0
        %v2299 = vpop.f32.mrf.mxu0
        %v2300 = vadd.f32 0.0, %v2299
        %v2301 = vpop.f32.mrf.mxu0
        %2302 = vmatprep.mubr.bf16.mxu0 0
        %2303 = vmatmul.mubr.bf16.gmra.mxu0 %v2179
        %v2304 = vpop.f32.mrf.mxu0
        %v2305 = vadd.f32 0.0, %v2304
        %v2306 = vpop.f32.mrf.mxu0
        %v2307 = vpop.f32.mrf.mxu0
        %v2308 = vadd.f32 0.0, %v2307
        %v2309 = vpop.f32.mrf.mxu0
        %2310 = vmatprep.mubr.bf16.mxu0 0
        %2311 = vmatmul.mubr.bf16.gmra.mxu0 %v2182
        %v2312 = vpop.f32.mrf.mxu0
        %v2313 = vadd.f32 0.0, %v2312
        %v2314 = vpop.f32.mrf.mxu0
        %v2315 = vpop.f32.mrf.mxu0
        %v2316 = vadd.f32 0.0, %v2315
        %v2317 = vpop.f32.mrf.mxu0
        %2318 = vmatprep.mubr.bf16.mxu0 0
        %2319 = vmatmul.mubr.bf16.gmra.mxu0 %v2185
        %v2320 = vpop.f32.mrf.mxu0
        %v2321 = vadd.f32 0.0, %v2320
        %v2322 = vpop.f32.mrf.mxu0
        %v2323 = vpop.f32.mrf.mxu0
        %v2324 = vadd.f32 0.0, %v2323
        %v2325 = vpop.f32.mrf.mxu0
        %2326 = vmatprep.mubr.bf16.mxu0 0
        %2327 = vmatmul.mubr.bf16.gmra.mxu0 %v2188
        %v2328 = vpop.f32.mrf.mxu0
        %v2329 = vadd.f32 0.0, %v2328
        %v2330 = vpop.f32.mrf.mxu0
        %v2331 = vpop.f32.mrf.mxu0
        %v2332 = vadd.f32 0.0, %v2331
        %v2333 = vpop.f32.mrf.mxu0
        %2334 = vmatprep.mubr.bf16.mxu0 0
        %2335 = vmatmul.mubr.bf16.gmra.mxu0 %v2191
        %v2336 = vpop.f32.mrf.mxu0
        %v2337 = vadd.f32 0.0, %v2336
        %v2338 = vpop.f32.mrf.mxu0
        %v2339 = vpop.f32.mrf.mxu0
        %v2340 = vadd.f32 0.0, %v2339
        %v2341 = vpop.f32.mrf.mxu0
        %2342 = vmatprep.mubr.bf16.mxu0 0
        %2343 = vmatmul.mubr.bf16.gmra.mxu0 %v2194
        %v2344 = vpop.f32.mrf.mxu0
        %v2345 = vadd.f32 0.0, %v2344
        %v2346 = vpop.f32.mrf.mxu0
        %v2347 = vpop.f32.mrf.mxu0
        %v2348 = vadd.f32 0.0, %v2347
        %v2349 = vpop.f32.mrf.mxu0
        %2350 = vmatprep.mubr.bf16.mxu0 0
        %2351 = vmatmul.mubr.bf16.gmra.mxu0 %v2197
        %v2352 = vpop.f32.mrf.mxu0
        %v2353 = vadd.f32 0.0, %v2352
        %v2354 = vpop.f32.mrf.mxu0
        %v2355 = vpop.f32.mrf.mxu0
        %v2356 = vadd.f32 0.0, %v2355
        %v2357 = vpop.f32.mrf.mxu0
        %2358 = vmatprep.mubr.bf16.mxu0 0
        %2359 = vmatmul.mubr.bf16.gmra.mxu0 %v2200
        %v2360 = vpop.f32.mrf.mxu0
        %v2361 = vadd.f32 0.0, %v2360
        %v2362 = vpop.f32.mrf.mxu0
        %v2363 = vpop.f32.mrf.mxu0
        %v2364 = vadd.f32 0.0, %v2363
        %v2365 = vpop.f32.mrf.mxu0
        %2366 = vdwg.mxu0
        %2367 = vst.msk [vmem:[#allocation6] sm:$0xff] %vm367, %v2241
        %2368 = vst.msk [vmem:[#allocation6 + $0x8] sm:$0xff] %vm367, %v2244
        %2369 = vst.msk [vmem:[#allocation6 + $0x10] sm:$0xff] %vm367, %v2249
        %2370 = vst.msk [vmem:[#allocation6 + $0x18] sm:$0xff] %vm367, %v2252
        %2371 = vst.msk [vmem:[#allocation6 + $0x20] sm:$0xff] %vm367, %v2257
        %2372 = vst.msk [vmem:[#allocation6 + $0x28] sm:$0xff] %vm367, %v2260
        %2373 = vst.msk [vmem:[#allocation6 + $0x30] sm:$0xff] %vm367, %v2265
        %2374 = vst.msk [vmem:[#allocation6 + $0x38] sm:$0xff] %vm367, %v2268
        %2375 = vst.msk [vmem:[#allocation6 + $0x40] sm:$0xff] %vm367, %v2273
        %2376 = vst.msk [vmem:[#allocation6 + $0x48] sm:$0xff] %vm367, %v2276
        %2377 = vst.msk [vmem:[#allocation6 + $0x50] sm:$0xff] %vm367, %v2281
        %2378 = vst.msk [vmem:[#allocation6 + $0x58] sm:$0xff] %vm367, %v2284
        %2379 = vst.msk [vmem:[#allocation6 + $0x60] sm:$0xff] %vm367, %v2289
        %2380 = vst.msk [vmem:[#allocation6 + $0x68] sm:$0xff] %vm367, %v2292
        %2381 = vst.msk [vmem:[#allocation6 + $0x70] sm:$0xff] %vm367, %v2297
        %2382 = vst.msk [vmem:[#allocation6 + $0x78] sm:$0xff] %vm367, %v2300
        %2383 = vst.msk [vmem:[#allocation6 + $0x80] sm:$0xff] %vm367, %v2305
        %2384 = vst.msk [vmem:[#allocation6 + $0x88] sm:$0xff] %vm367, %v2308
        %2385 = vst.msk [vmem:[#allocation6 + $0x90] sm:$0xff] %vm367, %v2313
        %2386 = vst.msk [vmem:[#allocation6 + $0x98] sm:$0xff] %vm367, %v2316
        %2387 = vst.msk [vmem:[#allocation6 + $0xa0] sm:$0xff] %vm367, %v2321
        %2388 = vst.msk [vmem:[#allocation6 + $0xa8] sm:$0xff] %vm367, %v2324
        %2389 = vst.msk [vmem:[#allocation6 + $0xb0] sm:$0xff] %vm367, %v2329
        %2390 = vst.msk [vmem:[#allocation6 + $0xb8] sm:$0xff] %vm367, %v2332
        %2391 = vst.msk [vmem:[#allocation6 + $0xc0] sm:$0xff] %vm367, %v2337
        %2392 = vst.msk [vmem:[#allocation6 + $0xc8] sm:$0xff] %vm367, %v2340
        %2393 = vst.msk [vmem:[#allocation6 + $0xd0] sm:$0xff] %vm367, %v2345
        %2394 = vst.msk [vmem:[#allocation6 + $0xd8] sm:$0xff] %vm367, %v2348
        %2395 = vst.msk [vmem:[#allocation6 + $0xe0] sm:$0xff] %vm367, %v2353
        %2396 = vst.msk [vmem:[#allocation6 + $0xe8] sm:$0xff] %vm367, %v2356
        %2397 = vst.msk [vmem:[#allocation6 + $0xf0] sm:$0xff] %vm367, %v2361
        %2398 = vst.msk [vmem:[#allocation6 + $0xf8] sm:$0xff] %vm367, %v2364
        loop: start=0, step=1, limit=8
        $region57: #{lfb_d_forward.1} parent=51 // loop_pre_header
          _
        $region58: #{lfb_d_forward.1} parent=51 // loop_header
          %s2400 = sphi 0, %s2404
          %p2401 = scmp.ge.s32.totalorder %s2400, 8
        $region59: #{lfb_d_forward.1} parent=51 // loop_header_branch
          %2403 = sbr.rel (%p2401) target = $region63
        $region60: #{lfb_d_forward.1} parent=51 // loop_body
          %v2405 = vld [vmem:[#allocation6] sm:$0xff]
          %v2406 = vld [vmem:[#allocation6 + $0x8] sm:$0xff]
          %v2407 = vld [vmem:[#allocation6 + $0x10] sm:$0xff]
          %v2408 = vld [vmem:[#allocation6 + $0x18] sm:$0xff]
          %v2409 = vld [vmem:[#allocation6 + $0x20] sm:$0xff]
          %v2410 = vld [vmem:[#allocation6 + $0x28] sm:$0xff]
          %v2411 = vld [vmem:[#allocation6 + $0x30] sm:$0xff]
          %v2412 = vld [vmem:[#allocation6 + $0x38] sm:$0xff]
          %v2413 = vld [vmem:[#allocation6 + $0x40] sm:$0xff]
          %v2414 = vld [vmem:[#allocation6 + $0x48] sm:$0xff]
          %v2415 = vld [vmem:[#allocation6 + $0x50] sm:$0xff]
          %v2416 = vld [vmem:[#allocation6 + $0x58] sm:$0xff]
          %v2417 = vld [vmem:[#allocation6 + $0x60] sm:$0xff]
          %v2418 = vld [vmem:[#allocation6 + $0x68] sm:$0xff]
          %v2419 = vld [vmem:[#allocation6 + $0x70] sm:$0xff]
          %v2420 = vld [vmem:[#allocation6 + $0x78] sm:$0xff]
          %v2421 = vld [vmem:[#allocation6 + $0x80] sm:$0xff]
          %v2422 = vld [vmem:[#allocation6 + $0x88] sm:$0xff]
          %v2423 = vld [vmem:[#allocation6 + $0x90] sm:$0xff]
          %v2424 = vld [vmem:[#allocation6 + $0x98] sm:$0xff]
          %v2425 = vld [vmem:[#allocation6 + $0xa0] sm:$0xff]
          %v2426 = vld [vmem:[#allocation6 + $0xa8] sm:$0xff]
          %v2427 = vld [vmem:[#allocation6 + $0xb0] sm:$0xff]
          %v2428 = vld [vmem:[#allocation6 + $0xb8] sm:$0xff]
          %v2429 = vld [vmem:[#allocation6 + $0xc0] sm:$0xff]
          %v2430 = vld [vmem:[#allocation6 + $0xc8] sm:$0xff]
          %v2431 = vld [vmem:[#allocation6 + $0xd0] sm:$0xff]
          %v2432 = vld [vmem:[#allocation6 + $0xd8] sm:$0xff]
          %v2433 = vld [vmem:[#allocation6 + $0xe0] sm:$0xff]
          %v2434 = vld [vmem:[#allocation6 + $0xe8] sm:$0xff]
          %v2435 = vld [vmem:[#allocation6 + $0xf0] sm:$0xff]
          %v2436 = vld [vmem:[#allocation6 + $0xf8] sm:$0xff]
          %s2437 = scalar_lea.vmem %s2, %s2400
          %v2438 = vld [vmem:[%s2437] sm:$0x1]
          %v2440 = vlaneseq
          %v2441 = vshrl.u32 %v2440, 7
          %v2442 = vsub.s32 0, %v2441
          %v2443 = vrot.slane %v2438, %v2442
          %v2445 = vadd.f32 %v2405, %v2443
          %v2446 = vadd.f32 %v2406, %v2443
          %v2447 = vadd.f32 %v2407, %v2443
          %v2448 = vadd.f32 %v2408, %v2443
          %v2449 = vadd.f32 %v2409, %v2443
          %v2450 = vadd.f32 %v2410, %v2443
          %v2451 = vadd.f32 %v2411, %v2443
          %v2452 = vadd.f32 %v2412, %v2443
          %v2453 = vadd.f32 %v2413, %v2443
          %v2454 = vadd.f32 %v2414, %v2443
          %v2455 = vadd.f32 %v2415, %v2443
          %v2456 = vadd.f32 %v2416, %v2443
          %v2457 = vadd.f32 %v2417, %v2443
          %v2458 = vadd.f32 %v2418, %v2443
          %v2459 = vadd.f32 %v2419, %v2443
          %v2460 = vadd.f32 %v2420, %v2443
          %v2461 = vadd.f32 %v2421, %v2443
          %v2462 = vadd.f32 %v2422, %v2443
          %v2463 = vadd.f32 %v2423, %v2443
          %v2464 = vadd.f32 %v2424, %v2443
          %v2465 = vadd.f32 %v2425, %v2443
          %v2466 = vadd.f32 %v2426, %v2443
          %v2467 = vadd.f32 %v2427, %v2443
          %v2468 = vadd.f32 %v2428, %v2443
          %v2469 = vadd.f32 %v2429, %v2443
          %v2470 = vadd.f32 %v2430, %v2443
          %v2471 = vadd.f32 %v2431, %v2443
          %v2472 = vadd.f32 %v2432, %v2443
          %v2473 = vadd.f32 %v2433, %v2443
          %v2474 = vadd.f32 %v2434, %v2443
          %v2475 = vadd.f32 %v2435, %v2443
          %v2476 = vadd.f32 %v2436, %v2443
          %v2477 = vmax.f32 %v2445, 0.0
          %v2478 = vmax.f32 %v2446, 0.0
          %v2479 = vmax.f32 %v2447, 0.0
          %v2480 = vmax.f32 %v2448, 0.0
          %v2481 = vmax.f32 %v2449, 0.0
          %v2482 = vmax.f32 %v2450, 0.0
          %v2483 = vmax.f32 %v2451, 0.0
          %v2484 = vmax.f32 %v2452, 0.0
          %v2485 = vmax.f32 %v2453, 0.0
          %v2486 = vmax.f32 %v2454, 0.0
          %v2487 = vmax.f32 %v2455, 0.0
          %v2488 = vmax.f32 %v2456, 0.0
          %v2489 = vmax.f32 %v2457, 0.0
          %v2490 = vmax.f32 %v2458, 0.0
          %v2491 = vmax.f32 %v2459, 0.0
          %v2492 = vmax.f32 %v2460, 0.0
          %v2493 = vmax.f32 %v2461, 0.0
          %v2494 = vmax.f32 %v2462, 0.0
          %v2495 = vmax.f32 %v2463, 0.0
          %v2496 = vmax.f32 %v2464, 0.0
          %v2497 = vmax.f32 %v2465, 0.0
          %v2498 = vmax.f32 %v2466, 0.0
          %v2499 = vmax.f32 %v2467, 0.0
          %v2500 = vmax.f32 %v2468, 0.0
          %v2501 = vmax.f32 %v2469, 0.0
          %v2502 = vmax.f32 %v2470, 0.0
          %v2503 = vmax.f32 %v2471, 0.0
          %v2504 = vmax.f32 %v2472, 0.0
          %v2505 = vmax.f32 %v2473, 0.0
          %v2506 = vmax.f32 %v2474, 0.0
          %v2507 = vmax.f32 %v2475, 0.0
          %v2508 = vmax.f32 %v2476, 0.0
          %s2509 = scalar_lea.vmem [#allocation3], 32
          %2510 = vst.msk [vmem:[%s2509 + $0x8] sm:$0xff] %vm367, %v2477
          %2511 = vst.msk [vmem:[%s2509 + $0x10] sm:$0xff] %vm367, %v2478
          %2512 = vst.msk [vmem:[%s2509 + $0x28] sm:$0xff] %vm367, %v2479
          %2513 = vst.msk [vmem:[%s2509 + $0x30] sm:$0xff] %vm367, %v2480
          %2514 = vst.msk [vmem:[%s2509 + $0x48] sm:$0xff] %vm367, %v2481
          %2515 = vst.msk [vmem:[%s2509 + $0x50] sm:$0xff] %vm367, %v2482
          %2516 = vst.msk [vmem:[%s2509 + $0x68] sm:$0xff] %vm367, %v2483
          %2517 = vst.msk [vmem:[%s2509 + $0x70] sm:$0xff] %vm367, %v2484
          %2518 = vst.msk [vmem:[%s2509 + $0x88] sm:$0xff] %vm367, %v2485
          %2519 = vst.msk [vmem:[%s2509 + $0x90] sm:$0xff] %vm367, %v2486
          %2520 = vst.msk [vmem:[%s2509 + $0xa8] sm:$0xff] %vm367, %v2487
          %2521 = vst.msk [vmem:[%s2509 + $0xb0] sm:$0xff] %vm367, %v2488
          %2522 = vst.msk [vmem:[%s2509 + $0xc8] sm:$0xff] %vm367, %v2489
          %2523 = vst.msk [vmem:[%s2509 + $0xd0] sm:$0xff] %vm367, %v2490
          %2524 = vst.msk [vmem:[%s2509 + $0xe8] sm:$0xff] %vm367, %v2491
          %2525 = vst.msk [vmem:[%s2509 + $0xf0] sm:$0xff] %vm367, %v2492
          %2526 = vst.msk [vmem:[%s2509 + $0x108] sm:$0xff] %vm367, %v2493
          %2527 = vst.msk [vmem:[%s2509 + $0x110] sm:$0xff] %vm367, %v2494
          %2528 = vst.msk [vmem:[%s2509 + $0x128] sm:$0xff] %vm367, %v2495
          %2529 = vst.msk [vmem:[%s2509 + $0x130] sm:$0xff] %vm367, %v2496
          %2530 = vst.msk [vmem:[%s2509 + $0x148] sm:$0xff] %vm367, %v2497
          %2531 = vst.msk [vmem:[%s2509 + $0x150] sm:$0xff] %vm367, %v2498
          %2532 = vst.msk [vmem:[%s2509 + $0x168] sm:$0xff] %vm367, %v2499
          %2533 = vst.msk [vmem:[%s2509 + $0x170] sm:$0xff] %vm367, %v2500
          %2534 = vst.msk [vmem:[%s2509 + $0x188] sm:$0xff] %vm367, %v2501
          %2535 = vst.msk [vmem:[%s2509 + $0x190] sm:$0xff] %vm367, %v2502
          %2536 = vst.msk [vmem:[%s2509 + $0x1a8] sm:$0xff] %vm367, %v2503
          %2537 = vst.msk [vmem:[%s2509 + $0x1b0] sm:$0xff] %vm367, %v2504
          %2538 = vst.msk [vmem:[%s2509 + $0x1c8] sm:$0xff] %vm367, %v2505
          %2539 = vst.msk [vmem:[%s2509 + $0x1d0] sm:$0xff] %vm367, %v2506
          %2540 = vst.msk [vmem:[%s2509 + $0x1e8] sm:$0xff] %vm367, %v2507
          %2541 = vst.msk [vmem:[%s2509 + $0x1f0] sm:$0xff] %vm367, %v2508
          %v2542 = vld [vmem:[#allocation3 + $0x7] sm:$0xff]
          %v2543 = vld [vmem:[#allocation3 + $0xf] sm:$0xff]
          %v2544 = vld [vmem:[#allocation3 + $0x27] sm:$0xff]
          %v2545 = vld [vmem:[#allocation3 + $0x2f] sm:$0xff]
          %v2546 = vld [vmem:[#allocation3 + $0x47] sm:$0xff]
          %v2547 = vld [vmem:[#allocation3 + $0x4f] sm:$0xff]
          %v2548 = vld [vmem:[#allocation3 + $0x67] sm:$0xff]
          %v2549 = vld [vmem:[#allocation3 + $0x6f] sm:$0xff]
          %v2550 = vld [vmem:[#allocation3 + $0x87] sm:$0xff]
          %v2551 = vld [vmem:[#allocation3 + $0x8f] sm:$0xff]
          %v2552 = vld [vmem:[#allocation3 + $0xa7] sm:$0xff]
          %v2553 = vld [vmem:[#allocation3 + $0xaf] sm:$0xff]
          %v2554 = vld [vmem:[#allocation3 + $0xc7] sm:$0xff]
          %v2555 = vld [vmem:[#allocation3 + $0xcf] sm:$0xff]
          %v2556 = vld [vmem:[#allocation3 + $0xe7] sm:$0xff]
          %v2557 = vld [vmem:[#allocation3 + $0xef] sm:$0xff]
          %v2558 = vld [vmem:[#allocation3 + $0x107] sm:$0xff]
          %v2559 = vld [vmem:[#allocation3 + $0x10f] sm:$0xff]
          %v2560 = vld [vmem:[#allocation3 + $0x127] sm:$0xff]
          %v2561 = vld [vmem:[#allocation3 + $0x12f] sm:$0xff]
          %v2562 = vld [vmem:[#allocation3 + $0x147] sm:$0xff]
          %v2563 = vld [vmem:[#allocation3 + $0x14f] sm:$0xff]
          %v2564 = vld [vmem:[#allocation3 + $0x167] sm:$0xff]
          %v2565 = vld [vmem:[#allocation3 + $0x16f] sm:$0xff]
          %v2566 = vld [vmem:[#allocation3 + $0x187] sm:$0xff]
          %v2567 = vld [vmem:[#allocation3 + $0x18f] sm:$0xff]
          %v2568 = vld [vmem:[#allocation3 + $0x1a7] sm:$0xff]
          %v2569 = vld [vmem:[#allocation3 + $0x1af] sm:$0xff]
          %v2570 = vld [vmem:[#allocation3 + $0x1c7] sm:$0xff]
          %v2571 = vld [vmem:[#allocation3 + $0x1cf] sm:$0xff]
          %v2572 = vld [vmem:[#allocation3 + $0x1e7] sm:$0xff]
          %v2573 = vld [vmem:[#allocation3 + $0x1ef] sm:$0xff]
          %v2574 = vld [vmem:[#allocation3 + $0x8] sm:$0xff]
          %v2575 = vld [vmem:[#allocation3 + $0x10] sm:$0xff]
          %v2576 = vld [vmem:[#allocation3 + $0x28] sm:$0xff]
          %v2577 = vld [vmem:[#allocation3 + $0x30] sm:$0xff]
          %v2578 = vld [vmem:[#allocation3 + $0x48] sm:$0xff]
          %v2579 = vld [vmem:[#allocation3 + $0x50] sm:$0xff]
          %v2580 = vld [vmem:[#allocation3 + $0x68] sm:$0xff]
          %v2581 = vld [vmem:[#allocation3 + $0x70] sm:$0xff]
          %v2582 = vld [vmem:[#allocation3 + $0x88] sm:$0xff]
          %v2583 = vld [vmem:[#allocation3 + $0x90] sm:$0xff]
          %v2584 = vld [vmem:[#allocation3 + $0xa8] sm:$0xff]
          %v2585 = vld [vmem:[#allocation3 + $0xb0] sm:$0xff]
          %v2586 = vld [vmem:[#allocation3 + $0xc8] sm:$0xff]
          %v2587 = vld [vmem:[#allocation3 + $0xd0] sm:$0xff]
          %v2588 = vld [vmem:[#allocation3 + $0xe8] sm:$0xff]
          %v2589 = vld [vmem:[#allocation3 + $0xf0] sm:$0xff]
          %v2590 = vld [vmem:[#allocation3 + $0x108] sm:$0xff]
          %v2591 = vld [vmem:[#allocation3 + $0x110] sm:$0xff]
          %v2592 = vld [vmem:[#allocation3 + $0x128] sm:$0xff]
          %v2593 = vld [vmem:[#allocation3 + $0x130] sm:$0xff]
          %v2594 = vld [vmem:[#allocation3 + $0x148] sm:$0xff]
          %v2595 = vld [vmem:[#allocation3 + $0x150] sm:$0xff]
          %v2596 = vld [vmem:[#allocation3 + $0x168] sm:$0xff]
          %v2597 = vld [vmem:[#allocation3 + $0x170] sm:$0xff]
          %v2598 = vld [vmem:[#allocation3 + $0x188] sm:$0xff]
          %v2599 = vld [vmem:[#allocation3 + $0x190] sm:$0xff]
          %v2600 = vld [vmem:[#allocation3 + $0x1a8] sm:$0xff]
          %v2601 = vld [vmem:[#allocation3 + $0x1b0] sm:$0xff]
          %v2602 = vld [vmem:[#allocation3 + $0x1c8] sm:$0xff]
          %v2603 = vld [vmem:[#allocation3 + $0x1d0] sm:$0xff]
          %v2604 = vld [vmem:[#allocation3 + $0x1e8] sm:$0xff]
          %v2605 = vld [vmem:[#allocation3 + $0x1f0] sm:$0xff]
          %v2606 = vld [vmem:[#allocation3 + $0x9] sm:$0xff]
          %v2607 = vld [vmem:[#allocation3 + $0x11] sm:$0xff]
          %v2608 = vld [vmem:[#allocation3 + $0x29] sm:$0xff]
          %v2609 = vld [vmem:[#allocation3 + $0x31] sm:$0xff]
          %v2610 = vld [vmem:[#allocation3 + $0x49] sm:$0xff]
          %v2611 = vld [vmem:[#allocation3 + $0x51] sm:$0xff]
          %v2612 = vld [vmem:[#allocation3 + $0x69] sm:$0xff]
          %v2613 = vld [vmem:[#allocation3 + $0x71] sm:$0xff]
          %v2614 = vld [vmem:[#allocation3 + $0x89] sm:$0xff]
          %v2615 = vld [vmem:[#allocation3 + $0x91] sm:$0xff]
          %v2616 = vld [vmem:[#allocation3 + $0xa9] sm:$0xff]
          %v2617 = vld [vmem:[#allocation3 + $0xb1] sm:$0xff]
          %v2618 = vld [vmem:[#allocation3 + $0xc9] sm:$0xff]
          %v2619 = vld [vmem:[#allocation3 + $0xd1] sm:$0xff]
          %v2620 = vld [vmem:[#allocation3 + $0xe9] sm:$0xff]
          %v2621 = vld [vmem:[#allocation3 + $0xf1] sm:$0xff]
          %v2622 = vld [vmem:[#allocation3 + $0x109] sm:$0xff]
          %v2623 = vld [vmem:[#allocation3 + $0x111] sm:$0xff]
          %v2624 = vld [vmem:[#allocation3 + $0x129] sm:$0xff]
          %v2625 = vld [vmem:[#allocation3 + $0x131] sm:$0xff]
          %v2626 = vld [vmem:[#allocation3 + $0x149] sm:$0xff]
          %v2627 = vld [vmem:[#allocation3 + $0x151] sm:$0xff]
          %v2628 = vld [vmem:[#allocation3 + $0x169] sm:$0xff]
          %v2629 = vld [vmem:[#allocation3 + $0x171] sm:$0xff]
          %v2630 = vld [vmem:[#allocation3 + $0x189] sm:$0xff]
          %v2631 = vld [vmem:[#allocation3 + $0x191] sm:$0xff]
          %v2632 = vld [vmem:[#allocation3 + $0x1a9] sm:$0xff]
          %v2633 = vld [vmem:[#allocation3 + $0x1b1] sm:$0xff]
          %v2634 = vld [vmem:[#allocation3 + $0x1c9] sm:$0xff]
          %v2635 = vld [vmem:[#allocation3 + $0x1d1] sm:$0xff]
          %v2636 = vld [vmem:[#allocation3 + $0x1e9] sm:$0xff]
          %v2637 = vld [vmem:[#allocation3 + $0x1f1] sm:$0xff]
          %v2638 = vld [vmem:[%s2509 + $0x7] sm:$0xff]
          %v2639 = vld [vmem:[%s2509 + $0xf] sm:$0xff]
          %v2640 = vld [vmem:[%s2509 + $0x27] sm:$0xff]
          %v2641 = vld [vmem:[%s2509 + $0x2f] sm:$0xff]
          %v2642 = vld [vmem:[%s2509 + $0x47] sm:$0xff]
          %v2643 = vld [vmem:[%s2509 + $0x4f] sm:$0xff]
          %v2644 = vld [vmem:[%s2509 + $0x67] sm:$0xff]
          %v2645 = vld [vmem:[%s2509 + $0x6f] sm:$0xff]
          %v2646 = vld [vmem:[%s2509 + $0x87] sm:$0xff]
          %v2647 = vld [vmem:[%s2509 + $0x8f] sm:$0xff]
          %v2648 = vld [vmem:[%s2509 + $0xa7] sm:$0xff]
          %v2649 = vld [vmem:[%s2509 + $0xaf] sm:$0xff]
          %v2650 = vld [vmem:[%s2509 + $0xc7] sm:$0xff]
          %v2651 = vld [vmem:[%s2509 + $0xcf] sm:$0xff]
          %v2652 = vld [vmem:[%s2509 + $0xe7] sm:$0xff]
          %v2653 = vld [vmem:[%s2509 + $0xef] sm:$0xff]
          %v2654 = vld [vmem:[%s2509 + $0x107] sm:$0xff]
          %v2655 = vld [vmem:[%s2509 + $0x10f] sm:$0xff]
          %v2656 = vld [vmem:[%s2509 + $0x127] sm:$0xff]
          %v2657 = vld [vmem:[%s2509 + $0x12f] sm:$0xff]
          %v2658 = vld [vmem:[%s2509 + $0x147] sm:$0xff]
          %v2659 = vld [vmem:[%s2509 + $0x14f] sm:$0xff]
          %v2660 = vld [vmem:[%s2509 + $0x167] sm:$0xff]
          %v2661 = vld [vmem:[%s2509 + $0x16f] sm:$0xff]
          %v2662 = vld [vmem:[%s2509 + $0x187] sm:$0xff]
          %v2663 = vld [vmem:[%s2509 + $0x18f] sm:$0xff]
          %v2664 = vld [vmem:[%s2509 + $0x1a7] sm:$0xff]
          %v2665 = vld [vmem:[%s2509 + $0x1af] sm:$0xff]
          %v2666 = vld [vmem:[%s2509 + $0x1c7] sm:$0xff]
          %v2667 = vld [vmem:[%s2509 + $0x1cf] sm:$0xff]
          %v2668 = vld [vmem:[%s2509 + $0x1e7] sm:$0xff]
          %v2669 = vld [vmem:[%s2509 + $0x1ef] sm:$0xff]
          %v2670 = vld [vmem:[%s2509 + $0x8] sm:$0xff]
          %v2671 = vld [vmem:[%s2509 + $0x10] sm:$0xff]
          %v2672 = vld [vmem:[%s2509 + $0x28] sm:$0xff]
          %v2673 = vld [vmem:[%s2509 + $0x30] sm:$0xff]
          %v2674 = vld [vmem:[%s2509 + $0x48] sm:$0xff]
          %v2675 = vld [vmem:[%s2509 + $0x50] sm:$0xff]
          %v2676 = vld [vmem:[%s2509 + $0x68] sm:$0xff]
          %v2677 = vld [vmem:[%s2509 + $0x70] sm:$0xff]
          %v2678 = vld [vmem:[%s2509 + $0x88] sm:$0xff]
          %v2679 = vld [vmem:[%s2509 + $0x90] sm:$0xff]
          %v2680 = vld [vmem:[%s2509 + $0xa8] sm:$0xff]
          %v2681 = vld [vmem:[%s2509 + $0xb0] sm:$0xff]
          %v2682 = vld [vmem:[%s2509 + $0xc8] sm:$0xff]
          %v2683 = vld [vmem:[%s2509 + $0xd0] sm:$0xff]
          %v2684 = vld [vmem:[%s2509 + $0xe8] sm:$0xff]
          %v2685 = vld [vmem:[%s2509 + $0xf0] sm:$0xff]
          %v2686 = vld [vmem:[%s2509 + $0x108] sm:$0xff]
          %v2687 = vld [vmem:[%s2509 + $0x110] sm:$0xff]
          %v2688 = vld [vmem:[%s2509 + $0x128] sm:$0xff]
          %v2689 = vld [vmem:[%s2509 + $0x130] sm:$0xff]
          %v2690 = vld [vmem:[%s2509 + $0x148] sm:$0xff]
          %v2691 = vld [vmem:[%s2509 + $0x150] sm:$0xff]
          %v2692 = vld [vmem:[%s2509 + $0x168] sm:$0xff]
          %v2693 = vld [vmem:[%s2509 + $0x170] sm:$0xff]
          %v2694 = vld [vmem:[%s2509 + $0x188] sm:$0xff]
          %v2695 = vld [vmem:[%s2509 + $0x190] sm:$0xff]
          %v2696 = vld [vmem:[%s2509 + $0x1a8] sm:$0xff]
          %v2697 = vld [vmem:[%s2509 + $0x1b0] sm:$0xff]
          %v2698 = vld [vmem:[%s2509 + $0x1c8] sm:$0xff]
          %v2699 = vld [vmem:[%s2509 + $0x1d0] sm:$0xff]
          %v2700 = vld [vmem:[%s2509 + $0x1e8] sm:$0xff]
          %v2701 = vld [vmem:[%s2509 + $0x1f0] sm:$0xff]
          %v2702 = vld [vmem:[%s2509 + $0x9] sm:$0xff]
          %v2703 = vld [vmem:[%s2509 + $0x11] sm:$0xff]
          %v2704 = vld [vmem:[%s2509 + $0x29] sm:$0xff]
          %v2705 = vld [vmem:[%s2509 + $0x31] sm:$0xff]
          %v2706 = vld [vmem:[%s2509 + $0x49] sm:$0xff]
          %v2707 = vld [vmem:[%s2509 + $0x51] sm:$0xff]
          %v2708 = vld [vmem:[%s2509 + $0x69] sm:$0xff]
          %v2709 = vld [vmem:[%s2509 + $0x71] sm:$0xff]
          %v2710 = vld [vmem:[%s2509 + $0x89] sm:$0xff]
          %v2711 = vld [vmem:[%s2509 + $0x91] sm:$0xff]
          %v2712 = vld [vmem:[%s2509 + $0xa9] sm:$0xff]
          %v2713 = vld [vmem:[%s2509 + $0xb1] sm:$0xff]
          %v2714 = vld [vmem:[%s2509 + $0xc9] sm:$0xff]
          %v2715 = vld [vmem:[%s2509 + $0xd1] sm:$0xff]
          %v2716 = vld [vmem:[%s2509 + $0xe9] sm:$0xff]
          %v2717 = vld [vmem:[%s2509 + $0xf1] sm:$0xff]
          %v2718 = vld [vmem:[%s2509 + $0x109] sm:$0xff]
          %v2719 = vld [vmem:[%s2509 + $0x111] sm:$0xff]
          %v2720 = vld [vmem:[%s2509 + $0x129] sm:$0xff]
          %v2721 = vld [vmem:[%s2509 + $0x131] sm:$0xff]
          %v2722 = vld [vmem:[%s2509 + $0x149] sm:$0xff]
          %v2723 = vld [vmem:[%s2509 + $0x151] sm:$0xff]
          %v2724 = vld [vmem:[%s2509 + $0x169] sm:$0xff]
          %v2725 = vld [vmem:[%s2509 + $0x171] sm:$0xff]
          %v2726 = vld [vmem:[%s2509 + $0x189] sm:$0xff]
          %v2727 = vld [vmem:[%s2509 + $0x191] sm:$0xff]
          %v2728 = vld [vmem:[%s2509 + $0x1a9] sm:$0xff]
          %v2729 = vld [vmem:[%s2509 + $0x1b1] sm:$0xff]
          %v2730 = vld [vmem:[%s2509 + $0x1c9] sm:$0xff]
          %v2731 = vld [vmem:[%s2509 + $0x1d1] sm:$0xff]
          %v2732 = vld [vmem:[%s2509 + $0x1e9] sm:$0xff]
          %v2733 = vld [vmem:[%s2509 + $0x1f1] sm:$0xff]
          %s2734 = scalar_lea.vmem [#allocation3], 64
          %v2735 = vld [vmem:[%s2734 + $0x7] sm:$0xff]
          %v2736 = vld [vmem:[%s2734 + $0xf] sm:$0xff]
          %v2737 = vld [vmem:[%s2734 + $0x27] sm:$0xff]
          %v2738 = vld [vmem:[%s2734 + $0x2f] sm:$0xff]
          %v2739 = vld [vmem:[%s2734 + $0x47] sm:$0xff]
          %v2740 = vld [vmem:[%s2734 + $0x4f] sm:$0xff]
          %v2741 = vld [vmem:[%s2734 + $0x67] sm:$0xff]
          %v2742 = vld [vmem:[%s2734 + $0x6f] sm:$0xff]
          %v2743 = vld [vmem:[%s2734 + $0x87] sm:$0xff]
          %v2744 = vld [vmem:[%s2734 + $0x8f] sm:$0xff]
          %v2745 = vld [vmem:[%s2734 + $0xa7] sm:$0xff]
          %v2746 = vld [vmem:[%s2734 + $0xaf] sm:$0xff]
          %v2747 = vld [vmem:[%s2734 + $0xc7] sm:$0xff]
          %v2748 = vld [vmem:[%s2734 + $0xcf] sm:$0xff]
          %v2749 = vld [vmem:[%s2734 + $0xe7] sm:$0xff]
          %v2750 = vld [vmem:[%s2734 + $0xef] sm:$0xff]
          %v2751 = vld [vmem:[%s2734 + $0x107] sm:$0xff]
          %v2752 = vld [vmem:[%s2734 + $0x10f] sm:$0xff]
          %v2753 = vld [vmem:[%s2734 + $0x127] sm:$0xff]
          %v2754 = vld [vmem:[%s2734 + $0x12f] sm:$0xff]
          %v2755 = vld [vmem:[%s2734 + $0x147] sm:$0xff]
          %v2756 = vld [vmem:[%s2734 + $0x14f] sm:$0xff]
          %v2757 = vld [vmem:[%s2734 + $0x167] sm:$0xff]
          %v2758 = vld [vmem:[%s2734 + $0x16f] sm:$0xff]
          %v2759 = vld [vmem:[%s2734 + $0x187] sm:$0xff]
          %v2760 = vld [vmem:[%s2734 + $0x18f] sm:$0xff]
          %v2761 = vld [vmem:[%s2734 + $0x1a7] sm:$0xff]
          %v2762 = vld [vmem:[%s2734 + $0x1af] sm:$0xff]
          %v2763 = vld [vmem:[%s2734 + $0x1c7] sm:$0xff]
          %v2764 = vld [vmem:[%s2734 + $0x1cf] sm:$0xff]
          %v2765 = vld [vmem:[%s2734 + $0x1e7] sm:$0xff]
          %v2766 = vld [vmem:[%s2734 + $0x1ef] sm:$0xff]
          %v2767 = vld [vmem:[%s2734 + $0x8] sm:$0xff]
          %v2768 = vld [vmem:[%s2734 + $0x10] sm:$0xff]
          %v2769 = vld [vmem:[%s2734 + $0x28] sm:$0xff]
          %v2770 = vld [vmem:[%s2734 + $0x30] sm:$0xff]
          %v2771 = vld [vmem:[%s2734 + $0x48] sm:$0xff]
          %v2772 = vld [vmem:[%s2734 + $0x50] sm:$0xff]
          %v2773 = vld [vmem:[%s2734 + $0x68] sm:$0xff]
          %v2774 = vld [vmem:[%s2734 + $0x70] sm:$0xff]
          %v2775 = vld [vmem:[%s2734 + $0x88] sm:$0xff]
          %v2776 = vld [vmem:[%s2734 + $0x90] sm:$0xff]
          %v2777 = vld [vmem:[%s2734 + $0xa8] sm:$0xff]
          %v2778 = vld [vmem:[%s2734 + $0xb0] sm:$0xff]
          %v2779 = vld [vmem:[%s2734 + $0xc8] sm:$0xff]
          %v2780 = vld [vmem:[%s2734 + $0xd0] sm:$0xff]
          %v2781 = vld [vmem:[%s2734 + $0xe8] sm:$0xff]
          %v2782 = vld [vmem:[%s2734 + $0xf0] sm:$0xff]
          %v2783 = vld [vmem:[%s2734 + $0x108] sm:$0xff]
          %v2784 = vld [vmem:[%s2734 + $0x110] sm:$0xff]
          %v2785 = vld [vmem:[%s2734 + $0x128] sm:$0xff]
          %v2786 = vld [vmem:[%s2734 + $0x130] sm:$0xff]
          %v2787 = vld [vmem:[%s2734 + $0x148] sm:$0xff]
          %v2788 = vld [vmem:[%s2734 + $0x150] sm:$0xff]
          %v2789 = vld [vmem:[%s2734 + $0x168] sm:$0xff]
          %v2790 = vld [vmem:[%s2734 + $0x170] sm:$0xff]
          %v2791 = vld [vmem:[%s2734 + $0x188] sm:$0xff]
          %v2792 = vld [vmem:[%s2734 + $0x190] sm:$0xff]
          %v2793 = vld [vmem:[%s2734 + $0x1a8] sm:$0xff]
          %v2794 = vld [vmem:[%s2734 + $0x1b0] sm:$0xff]
          %v2795 = vld [vmem:[%s2734 + $0x1c8] sm:$0xff]
          %v2796 = vld [vmem:[%s2734 + $0x1d0] sm:$0xff]
          %v2797 = vld [vmem:[%s2734 + $0x1e8] sm:$0xff]
          %v2798 = vld [vmem:[%s2734 + $0x1f0] sm:$0xff]
          %v2799 = vld [vmem:[%s2734 + $0x9] sm:$0xff]
          %v2800 = vld [vmem:[%s2734 + $0x11] sm:$0xff]
          %v2801 = vld [vmem:[%s2734 + $0x29] sm:$0xff]
          %v2802 = vld [vmem:[%s2734 + $0x31] sm:$0xff]
          %v2803 = vld [vmem:[%s2734 + $0x49] sm:$0xff]
          %v2804 = vld [vmem:[%s2734 + $0x51] sm:$0xff]
          %v2805 = vld [vmem:[%s2734 + $0x69] sm:$0xff]
          %v2806 = vld [vmem:[%s2734 + $0x71] sm:$0xff]
          %v2807 = vld [vmem:[%s2734 + $0x89] sm:$0xff]
          %v2808 = vld [vmem:[%s2734 + $0x91] sm:$0xff]
          %v2809 = vld [vmem:[%s2734 + $0xa9] sm:$0xff]
          %v2810 = vld [vmem:[%s2734 + $0xb1] sm:$0xff]
          %v2811 = vld [vmem:[%s2734 + $0xc9] sm:$0xff]
          %v2812 = vld [vmem:[%s2734 + $0xd1] sm:$0xff]
          %v2813 = vld [vmem:[%s2734 + $0xe9] sm:$0xff]
          %v2814 = vld [vmem:[%s2734 + $0xf1] sm:$0xff]
          %v2815 = vld [vmem:[%s2734 + $0x109] sm:$0xff]
          %v2816 = vld [vmem:[%s2734 + $0x111] sm:$0xff]
          %v2817 = vld [vmem:[%s2734 + $0x129] sm:$0xff]
          %v2818 = vld [vmem:[%s2734 + $0x131] sm:$0xff]
          %v2819 = vld [vmem:[%s2734 + $0x149] sm:$0xff]
          %v2820 = vld [vmem:[%s2734 + $0x151] sm:$0xff]
          %v2821 = vld [vmem:[%s2734 + $0x169] sm:$0xff]
          %v2822 = vld [vmem:[%s2734 + $0x171] sm:$0xff]
          %v2823 = vld [vmem:[%s2734 + $0x189] sm:$0xff]
          %v2824 = vld [vmem:[%s2734 + $0x191] sm:$0xff]
          %v2825 = vld [vmem:[%s2734 + $0x1a9] sm:$0xff]
          %v2826 = vld [vmem:[%s2734 + $0x1b1] sm:$0xff]
          %v2827 = vld [vmem:[%s2734 + $0x1c9] sm:$0xff]
          %v2828 = vld [vmem:[%s2734 + $0x1d1] sm:$0xff]
          %v2829 = vld [vmem:[%s2734 + $0x1e9] sm:$0xff]
          %v2830 = vld [vmem:[%s2734 + $0x1f1] sm:$0xff]
          %2863 = vrot.lane.b32.xlu0 %v2574, 8
          %v2864 = vpop.permute.xlu0 %2863
          %2865 = vrot.lane.b32.xlu0 %v2575, 8
          %v2866 = vpop.permute.xlu0 %2865
          %2867 = vrot.lane.b32.xlu0 %v2576, 8
          %v2868 = vpop.permute.xlu0 %2867
          %2869 = vrot.lane.b32.xlu0 %v2577, 8
          %v2870 = vpop.permute.xlu0 %2869
          %2871 = vrot.lane.b32.xlu0 %v2578, 8
          %v2872 = vpop.permute.xlu0 %2871
          %2873 = vrot.lane.b32.xlu0 %v2579, 8
          %v2874 = vpop.permute.xlu0 %2873
          %2875 = vrot.lane.b32.xlu0 %v2580, 8
          %v2876 = vpop.permute.xlu0 %2875
          %2877 = vrot.lane.b32.xlu0 %v2581, 8
          %v2878 = vpop.permute.xlu0 %2877
          %2879 = vrot.lane.b32.xlu0 %v2582, 8
          %v2880 = vpop.permute.xlu0 %2879
          %2881 = vrot.lane.b32.xlu0 %v2583, 8
          %v2882 = vpop.permute.xlu0 %2881
          %2883 = vrot.lane.b32.xlu0 %v2584, 8
          %v2884 = vpop.permute.xlu0 %2883
          %2885 = vrot.lane.b32.xlu0 %v2585, 8
          %v2886 = vpop.permute.xlu0 %2885
          %2887 = vrot.lane.b32.xlu0 %v2586, 8
          %v2888 = vpop.permute.xlu0 %2887
          %2889 = vrot.lane.b32.xlu0 %v2587, 8
          %v2890 = vpop.permute.xlu0 %2889
          %2891 = vrot.lane.b32.xlu0 %v2588, 8
          %v2892 = vpop.permute.xlu0 %2891
          %2893 = vrot.lane.b32.xlu0 %v2589, 8
          %v2894 = vpop.permute.xlu0 %2893
          %2895 = vrot.lane.b32.xlu0 %v2590, 8
          %v2896 = vpop.permute.xlu0 %2895
          %2897 = vrot.lane.b32.xlu0 %v2591, 8
          %v2898 = vpop.permute.xlu0 %2897
          %2899 = vrot.lane.b32.xlu0 %v2592, 8
          %v2900 = vpop.permute.xlu0 %2899
          %2901 = vrot.lane.b32.xlu0 %v2593, 8
          %v2902 = vpop.permute.xlu0 %2901
          %2903 = vrot.lane.b32.xlu0 %v2594, 8
          %v2904 = vpop.permute.xlu0 %2903
          %2905 = vrot.lane.b32.xlu0 %v2595, 8
          %v2906 = vpop.permute.xlu0 %2905
          %2907 = vrot.lane.b32.xlu0 %v2596, 8
          %v2908 = vpop.permute.xlu0 %2907
          %2909 = vrot.lane.b32.xlu0 %v2597, 8
          %v2910 = vpop.permute.xlu0 %2909
          %2911 = vrot.lane.b32.xlu0 %v2598, 8
          %v2912 = vpop.permute.xlu0 %2911
          %2913 = vrot.lane.b32.xlu0 %v2599, 8
          %v2914 = vpop.permute.xlu0 %2913
          %2915 = vrot.lane.b32.xlu0 %v2600, 8
          %v2916 = vpop.permute.xlu0 %2915
          %2917 = vrot.lane.b32.xlu0 %v2601, 8
          %v2918 = vpop.permute.xlu0 %2917
          %2919 = vrot.lane.b32.xlu0 %v2602, 8
          %v2920 = vpop.permute.xlu0 %2919
          %2921 = vrot.lane.b32.xlu0 %v2603, 8
          %v2922 = vpop.permute.xlu0 %2921
          %2923 = vrot.lane.b32.xlu0 %v2604, 8
          %v2924 = vpop.permute.xlu0 %2923
          %2925 = vrot.lane.b32.xlu0 %v2605, 8
          %v2926 = vpop.permute.xlu0 %2925
          %2991 = vrot.lane.b32.xlu0 %v2606, 16
          %v2992 = vpop.permute.xlu0 %2991
          %2993 = vrot.lane.b32.xlu0 %v2607, 16
          %v2994 = vpop.permute.xlu0 %2993
          %2995 = vrot.lane.b32.xlu0 %v2608, 16
          %v2996 = vpop.permute.xlu0 %2995
          %2997 = vrot.lane.b32.xlu0 %v2609, 16
          %v2998 = vpop.permute.xlu0 %2997
          %2999 = vrot.lane.b32.xlu0 %v2610, 16
          %v3000 = vpop.permute.xlu0 %2999
          %3001 = vrot.lane.b32.xlu0 %v2611, 16
          %v3002 = vpop.permute.xlu0 %3001
          %3003 = vrot.lane.b32.xlu0 %v2612, 16
          %v3004 = vpop.permute.xlu0 %3003
          %3005 = vrot.lane.b32.xlu0 %v2613, 16
          %v3006 = vpop.permute.xlu0 %3005
          %3007 = vrot.lane.b32.xlu0 %v2614, 16
          %v3008 = vpop.permute.xlu0 %3007
          %3009 = vrot.lane.b32.xlu0 %v2615, 16
          %v3010 = vpop.permute.xlu0 %3009
          %3011 = vrot.lane.b32.xlu0 %v2616, 16
          %v3012 = vpop.permute.xlu0 %3011
          %3013 = vrot.lane.b32.xlu0 %v2617, 16
          %v3014 = vpop.permute.xlu0 %3013
          %3015 = vrot.lane.b32.xlu0 %v2618, 16
          %v3016 = vpop.permute.xlu0 %3015
          %3017 = vrot.lane.b32.xlu0 %v2619, 16
          %v3018 = vpop.permute.xlu0 %3017
          %3019 = vrot.lane.b32.xlu0 %v2620, 16
          %v3020 = vpop.permute.xlu0 %3019
          %3021 = vrot.lane.b32.xlu0 %v2621, 16
          %v3022 = vpop.permute.xlu0 %3021
          %3023 = vrot.lane.b32.xlu0 %v2622, 16
          %v3024 = vpop.permute.xlu0 %3023
          %3025 = vrot.lane.b32.xlu0 %v2623, 16
          %v3026 = vpop.permute.xlu0 %3025
          %3027 = vrot.lane.b32.xlu0 %v2624, 16
          %v3028 = vpop.permute.xlu0 %3027
          %3029 = vrot.lane.b32.xlu0 %v2625, 16
          %v3030 = vpop.permute.xlu0 %3029
          %3031 = vrot.lane.b32.xlu0 %v2626, 16
          %v3032 = vpop.permute.xlu0 %3031
          %3033 = vrot.lane.b32.xlu0 %v2627, 16
          %v3034 = vpop.permute.xlu0 %3033
          %3035 = vrot.lane.b32.xlu0 %v2628, 16
          %v3036 = vpop.permute.xlu0 %3035
          %3037 = vrot.lane.b32.xlu0 %v2629, 16
          %v3038 = vpop.permute.xlu0 %3037
          %3039 = vrot.lane.b32.xlu0 %v2630, 16
          %v3040 = vpop.permute.xlu0 %3039
          %3041 = vrot.lane.b32.xlu0 %v2631, 16
          %v3042 = vpop.permute.xlu0 %3041
          %3043 = vrot.lane.b32.xlu0 %v2632, 16
          %v3044 = vpop.permute.xlu0 %3043
          %3045 = vrot.lane.b32.xlu0 %v2633, 16
          %v3046 = vpop.permute.xlu0 %3045
          %3047 = vrot.lane.b32.xlu0 %v2634, 16
          %v3048 = vpop.permute.xlu0 %3047
          %3049 = vrot.lane.b32.xlu0 %v2635, 16
          %v3050 = vpop.permute.xlu0 %3049
          %3051 = vrot.lane.b32.xlu0 %v2636, 16
          %v3052 = vpop.permute.xlu0 %3051
          %3053 = vrot.lane.b32.xlu0 %v2637, 16
          %v3054 = vpop.permute.xlu0 %3053
          %3119 = vrot.lane.b32.xlu0 %v2638, 24
          %v3120 = vpop.permute.xlu0 %3119
          %3121 = vrot.lane.b32.xlu0 %v2639, 24
          %v3122 = vpop.permute.xlu0 %3121
          %3123 = vrot.lane.b32.xlu0 %v2640, 24
          %v3124 = vpop.permute.xlu0 %3123
          %3125 = vrot.lane.b32.xlu0 %v2641, 24
          %v3126 = vpop.permute.xlu0 %3125
          %3127 = vrot.lane.b32.xlu0 %v2642, 24
          %v3128 = vpop.permute.xlu0 %3127
          %3129 = vrot.lane.b32.xlu0 %v2643, 24
          %v3130 = vpop.permute.xlu0 %3129
          %3131 = vrot.lane.b32.xlu0 %v2644, 24
          %v3132 = vpop.permute.xlu0 %3131
          %3133 = vrot.lane.b32.xlu0 %v2645, 24
          %v3134 = vpop.permute.xlu0 %3133
          %3135 = vrot.lane.b32.xlu0 %v2646, 24
          %v3136 = vpop.permute.xlu0 %3135
          %3137 = vrot.lane.b32.xlu0 %v2647, 24
          %v3138 = vpop.permute.xlu0 %3137
          %3139 = vrot.lane.b32.xlu0 %v2648, 24
          %v3140 = vpop.permute.xlu0 %3139
          %3141 = vrot.lane.b32.xlu0 %v2649, 24
          %v3142 = vpop.permute.xlu0 %3141
          %3143 = vrot.lane.b32.xlu0 %v2650, 24
          %v3144 = vpop.permute.xlu0 %3143
          %3145 = vrot.lane.b32.xlu0 %v2651, 24
          %v3146 = vpop.permute.xlu0 %3145
          %3147 = vrot.lane.b32.xlu0 %v2652, 24
          %v3148 = vpop.permute.xlu0 %3147
          %3149 = vrot.lane.b32.xlu0 %v2653, 24
          %v3150 = vpop.permute.xlu0 %3149
          %3151 = vrot.lane.b32.xlu0 %v2654, 24
          %v3152 = vpop.permute.xlu0 %3151
          %3153 = vrot.lane.b32.xlu0 %v2655, 24
          %v3154 = vpop.permute.xlu0 %3153
          %3155 = vrot.lane.b32.xlu0 %v2656, 24
          %v3156 = vpop.permute.xlu0 %3155
          %3157 = vrot.lane.b32.xlu0 %v2657, 24
          %v3158 = vpop.permute.xlu0 %3157
          %3159 = vrot.lane.b32.xlu0 %v2658, 24
          %v3160 = vpop.permute.xlu0 %3159
          %3161 = vrot.lane.b32.xlu0 %v2659, 24
          %v3162 = vpop.permute.xlu0 %3161
          %3163 = vrot.lane.b32.xlu0 %v2660, 24
          %v3164 = vpop.permute.xlu0 %3163
          %3165 = vrot.lane.b32.xlu0 %v2661, 24
          %v3166 = vpop.permute.xlu0 %3165
          %3167 = vrot.lane.b32.xlu0 %v2662, 24
          %v3168 = vpop.permute.xlu0 %3167
          %3169 = vrot.lane.b32.xlu0 %v2663, 24
          %v3170 = vpop.permute.xlu0 %3169
          %3171 = vrot.lane.b32.xlu0 %v2664, 24
          %v3172 = vpop.permute.xlu0 %3171
          %3173 = vrot.lane.b32.xlu0 %v2665, 24
          %v3174 = vpop.permute.xlu0 %3173
          %3175 = vrot.lane.b32.xlu0 %v2666, 24
          %v3176 = vpop.permute.xlu0 %3175
          %3177 = vrot.lane.b32.xlu0 %v2667, 24
          %v3178 = vpop.permute.xlu0 %3177
          %3179 = vrot.lane.b32.xlu0 %v2668, 24
          %v3180 = vpop.permute.xlu0 %3179
          %3181 = vrot.lane.b32.xlu0 %v2669, 24
          %v3182 = vpop.permute.xlu0 %3181
          %3247 = vrot.lane.b32.xlu0 %v2670, 32
          %v3248 = vpop.permute.xlu0 %3247
          %3249 = vrot.lane.b32.xlu0 %v2671, 32
          %v3250 = vpop.permute.xlu0 %3249
          %3251 = vrot.lane.b32.xlu0 %v2672, 32
          %v3252 = vpop.permute.xlu0 %3251
          %3253 = vrot.lane.b32.xlu0 %v2673, 32
          %v3254 = vpop.permute.xlu0 %3253
          %3255 = vrot.lane.b32.xlu0 %v2674, 32
          %v3256 = vpop.permute.xlu0 %3255
          %3257 = vrot.lane.b32.xlu0 %v2675, 32
          %v3258 = vpop.permute.xlu0 %3257
          %3259 = vrot.lane.b32.xlu0 %v2676, 32
          %v3260 = vpop.permute.xlu0 %3259
          %3261 = vrot.lane.b32.xlu0 %v2677, 32
          %v3262 = vpop.permute.xlu0 %3261
          %3263 = vrot.lane.b32.xlu0 %v2678, 32
          %v3264 = vpop.permute.xlu0 %3263
          %3265 = vrot.lane.b32.xlu0 %v2679, 32
          %v3266 = vpop.permute.xlu0 %3265
          %3267 = vrot.lane.b32.xlu0 %v2680, 32
          %v3268 = vpop.permute.xlu0 %3267
          %3269 = vrot.lane.b32.xlu0 %v2681, 32
          %v3270 = vpop.permute.xlu0 %3269
          %3271 = vrot.lane.b32.xlu0 %v2682, 32
          %v3272 = vpop.permute.xlu0 %3271
          %3273 = vrot.lane.b32.xlu0 %v2683, 32
          %v3274 = vpop.permute.xlu0 %3273
          %3275 = vrot.lane.b32.xlu0 %v2684, 32
          %v3276 = vpop.permute.xlu0 %3275
          %3277 = vrot.lane.b32.xlu0 %v2685, 32
          %v3278 = vpop.permute.xlu0 %3277
          %3279 = vrot.lane.b32.xlu0 %v2686, 32
          %v3280 = vpop.permute.xlu0 %3279
          %3281 = vrot.lane.b32.xlu0 %v2687, 32
          %v3282 = vpop.permute.xlu0 %3281
          %3283 = vrot.lane.b32.xlu0 %v2688, 32
          %v3284 = vpop.permute.xlu0 %3283
          %3285 = vrot.lane.b32.xlu0 %v2689, 32
          %v3286 = vpop.permute.xlu0 %3285
          %3287 = vrot.lane.b32.xlu0 %v2690, 32
          %v3288 = vpop.permute.xlu0 %3287
          %3289 = vrot.lane.b32.xlu0 %v2691, 32
          %v3290 = vpop.permute.xlu0 %3289
          %3291 = vrot.lane.b32.xlu0 %v2692, 32
          %v3292 = vpop.permute.xlu0 %3291
          %3293 = vrot.lane.b32.xlu0 %v2693, 32
          %v3294 = vpop.permute.xlu0 %3293
          %3295 = vrot.lane.b32.xlu0 %v2694, 32
          %v3296 = vpop.permute.xlu0 %3295
          %3297 = vrot.lane.b32.xlu0 %v2695, 32
          %v3298 = vpop.permute.xlu0 %3297
          %3299 = vrot.lane.b32.xlu0 %v2696, 32
          %v3300 = vpop.permute.xlu0 %3299
          %3301 = vrot.lane.b32.xlu0 %v2697, 32
          %v3302 = vpop.permute.xlu0 %3301
          %3303 = vrot.lane.b32.xlu0 %v2698, 32
          %v3304 = vpop.permute.xlu0 %3303
          %3305 = vrot.lane.b32.xlu0 %v2699, 32
          %v3306 = vpop.permute.xlu0 %3305
          %3307 = vrot.lane.b32.xlu0 %v2700, 32
          %v3308 = vpop.permute.xlu0 %3307
          %3309 = vrot.lane.b32.xlu0 %v2701, 32
          %v3310 = vpop.permute.xlu0 %3309
          %3375 = vrot.lane.b32.xlu0 %v2702, 40
          %v3376 = vpop.permute.xlu0 %3375
          %3377 = vrot.lane.b32.xlu0 %v2703, 40
          %v3378 = vpop.permute.xlu0 %3377
          %3379 = vrot.lane.b32.xlu0 %v2704, 40
          %v3380 = vpop.permute.xlu0 %3379
          %3381 = vrot.lane.b32.xlu0 %v2705, 40
          %v3382 = vpop.permute.xlu0 %3381
          %3383 = vrot.lane.b32.xlu0 %v2706, 40
          %v3384 = vpop.permute.xlu0 %3383
          %3385 = vrot.lane.b32.xlu0 %v2707, 40
          %v3386 = vpop.permute.xlu0 %3385
          %3387 = vrot.lane.b32.xlu0 %v2708, 40
          %v3388 = vpop.permute.xlu0 %3387
          %3389 = vrot.lane.b32.xlu0 %v2709, 40
          %v3390 = vpop.permute.xlu0 %3389
          %3391 = vrot.lane.b32.xlu0 %v2710, 40
          %v3392 = vpop.permute.xlu0 %3391
          %3393 = vrot.lane.b32.xlu0 %v2711, 40
          %v3394 = vpop.permute.xlu0 %3393
          %3395 = vrot.lane.b32.xlu0 %v2712, 40
          %v3396 = vpop.permute.xlu0 %3395
          %3397 = vrot.lane.b32.xlu0 %v2713, 40
          %v3398 = vpop.permute.xlu0 %3397
          %3399 = vrot.lane.b32.xlu0 %v2714, 40
          %v3400 = vpop.permute.xlu0 %3399
          %3401 = vrot.lane.b32.xlu0 %v2715, 40
          %v3402 = vpop.permute.xlu0 %3401
          %3403 = vrot.lane.b32.xlu0 %v2716, 40
          %v3404 = vpop.permute.xlu0 %3403
          %3405 = vrot.lane.b32.xlu0 %v2717, 40
          %v3406 = vpop.permute.xlu0 %3405
          %3407 = vrot.lane.b32.xlu0 %v2718, 40
          %v3408 = vpop.permute.xlu0 %3407
          %3409 = vrot.lane.b32.xlu0 %v2719, 40
          %v3410 = vpop.permute.xlu0 %3409
          %3411 = vrot.lane.b32.xlu0 %v2720, 40
          %v3412 = vpop.permute.xlu0 %3411
          %3413 = vrot.lane.b32.xlu0 %v2721, 40
          %v3414 = vpop.permute.xlu0 %3413
          %3415 = vrot.lane.b32.xlu0 %v2722, 40
          %v3416 = vpop.permute.xlu0 %3415
          %3417 = vrot.lane.b32.xlu0 %v2723, 40
          %v3418 = vpop.permute.xlu0 %3417
          %3419 = vrot.lane.b32.xlu0 %v2724, 40
          %v3420 = vpop.permute.xlu0 %3419
          %3421 = vrot.lane.b32.xlu0 %v2725, 40
          %v3422 = vpop.permute.xlu0 %3421
          %3423 = vrot.lane.b32.xlu0 %v2726, 40
          %v3424 = vpop.permute.xlu0 %3423
          %3425 = vrot.lane.b32.xlu0 %v2727, 40
          %v3426 = vpop.permute.xlu0 %3425
          %3427 = vrot.lane.b32.xlu0 %v2728, 40
          %v3428 = vpop.permute.xlu0 %3427
          %3429 = vrot.lane.b32.xlu0 %v2729, 40
          %v3430 = vpop.permute.xlu0 %3429
          %3431 = vrot.lane.b32.xlu0 %v2730, 40
          %v3432 = vpop.permute.xlu0 %3431
          %3433 = vrot.lane.b32.xlu0 %v2731, 40
          %v3434 = vpop.permute.xlu0 %3433
          %3435 = vrot.lane.b32.xlu0 %v2732, 40
          %v3436 = vpop.permute.xlu0 %3435
          %3437 = vrot.lane.b32.xlu0 %v2733, 40
          %v3438 = vpop.permute.xlu0 %3437
          %3503 = vrot.lane.b32.xlu0 %v2735, 48
          %v3504 = vpop.permute.xlu0 %3503
          %3505 = vrot.lane.b32.xlu0 %v2736, 48
          %v3506 = vpop.permute.xlu0 %3505
          %3507 = vrot.lane.b32.xlu0 %v2737, 48
          %v3508 = vpop.permute.xlu0 %3507
          %3509 = vrot.lane.b32.xlu0 %v2738, 48
          %v3510 = vpop.permute.xlu0 %3509
          %3511 = vrot.lane.b32.xlu0 %v2739, 48
          %v3512 = vpop.permute.xlu0 %3511
          %3513 = vrot.lane.b32.xlu0 %v2740, 48
          %v3514 = vpop.permute.xlu0 %3513
          %3515 = vrot.lane.b32.xlu0 %v2741, 48
          %v3516 = vpop.permute.xlu0 %3515
          %3517 = vrot.lane.b32.xlu0 %v2742, 48
          %v3518 = vpop.permute.xlu0 %3517
          %3519 = vrot.lane.b32.xlu0 %v2743, 48
          %v3520 = vpop.permute.xlu0 %3519
          %3521 = vrot.lane.b32.xlu0 %v2744, 48
          %v3522 = vpop.permute.xlu0 %3521
          %3523 = vrot.lane.b32.xlu0 %v2745, 48
          %v3524 = vpop.permute.xlu0 %3523
          %3525 = vrot.lane.b32.xlu0 %v2746, 48
          %v3526 = vpop.permute.xlu0 %3525
          %3527 = vrot.lane.b32.xlu0 %v2747, 48
          %v3528 = vpop.permute.xlu0 %3527
          %3529 = vrot.lane.b32.xlu0 %v2748, 48
          %v3530 = vpop.permute.xlu0 %3529
          %3531 = vrot.lane.b32.xlu0 %v2749, 48
          %v3532 = vpop.permute.xlu0 %3531
          %3533 = vrot.lane.b32.xlu0 %v2750, 48
          %v3534 = vpop.permute.xlu0 %3533
          %3535 = vrot.lane.b32.xlu0 %v2751, 48
          %v3536 = vpop.permute.xlu0 %3535
          %3537 = vrot.lane.b32.xlu0 %v2752, 48
          %v3538 = vpop.permute.xlu0 %3537
          %3539 = vrot.lane.b32.xlu0 %v2753, 48
          %v3540 = vpop.permute.xlu0 %3539
          %3541 = vrot.lane.b32.xlu0 %v2754, 48
          %v3542 = vpop.permute.xlu0 %3541
          %3543 = vrot.lane.b32.xlu0 %v2755, 48
          %v3544 = vpop.permute.xlu0 %3543
          %3545 = vrot.lane.b32.xlu0 %v2756, 48
          %v3546 = vpop.permute.xlu0 %3545
          %3547 = vrot.lane.b32.xlu0 %v2757, 48
          %v3548 = vpop.permute.xlu0 %3547
          %3549 = vrot.lane.b32.xlu0 %v2758, 48
          %v3550 = vpop.permute.xlu0 %3549
          %3551 = vrot.lane.b32.xlu0 %v2759, 48
          %v3552 = vpop.permute.xlu0 %3551
          %3553 = vrot.lane.b32.xlu0 %v2760, 48
          %v3554 = vpop.permute.xlu0 %3553
          %3555 = vrot.lane.b32.xlu0 %v2761, 48
          %v3556 = vpop.permute.xlu0 %3555
          %3557 = vrot.lane.b32.xlu0 %v2762, 48
          %v3558 = vpop.permute.xlu0 %3557
          %3559 = vrot.lane.b32.xlu0 %v2763, 48
          %v3560 = vpop.permute.xlu0 %3559
          %3561 = vrot.lane.b32.xlu0 %v2764, 48
          %v3562 = vpop.permute.xlu0 %3561
          %3563 = vrot.lane.b32.xlu0 %v2765, 48
          %v3564 = vpop.permute.xlu0 %3563
          %3565 = vrot.lane.b32.xlu0 %v2766, 48
          %v3566 = vpop.permute.xlu0 %3565
          %3631 = vrot.lane.b32.xlu0 %v2767, 56
          %v3632 = vpop.permute.xlu0 %3631
          %3633 = vrot.lane.b32.xlu0 %v2768, 56
          %v3634 = vpop.permute.xlu0 %3633
          %3635 = vrot.lane.b32.xlu0 %v2769, 56
          %v3636 = vpop.permute.xlu0 %3635
          %3637 = vrot.lane.b32.xlu0 %v2770, 56
          %v3638 = vpop.permute.xlu0 %3637
          %3639 = vrot.lane.b32.xlu0 %v2771, 56
          %v3640 = vpop.permute.xlu0 %3639
          %3641 = vrot.lane.b32.xlu0 %v2772, 56
          %v3642 = vpop.permute.xlu0 %3641
          %3643 = vrot.lane.b32.xlu0 %v2773, 56
          %v3644 = vpop.permute.xlu0 %3643
          %3645 = vrot.lane.b32.xlu0 %v2774, 56
          %v3646 = vpop.permute.xlu0 %3645
          %3647 = vrot.lane.b32.xlu0 %v2775, 56
          %v3648 = vpop.permute.xlu0 %3647
          %3649 = vrot.lane.b32.xlu0 %v2776, 56
          %v3650 = vpop.permute.xlu0 %3649
          %3651 = vrot.lane.b32.xlu0 %v2777, 56
          %v3652 = vpop.permute.xlu0 %3651
          %3653 = vrot.lane.b32.xlu0 %v2778, 56
          %v3654 = vpop.permute.xlu0 %3653
          %3655 = vrot.lane.b32.xlu0 %v2779, 56
          %v3656 = vpop.permute.xlu0 %3655
          %3657 = vrot.lane.b32.xlu0 %v2780, 56
          %v3658 = vpop.permute.xlu0 %3657
          %3659 = vrot.lane.b32.xlu0 %v2781, 56
          %v3660 = vpop.permute.xlu0 %3659
          %3661 = vrot.lane.b32.xlu0 %v2782, 56
          %v3662 = vpop.permute.xlu0 %3661
          %3663 = vrot.lane.b32.xlu0 %v2783, 56
          %v3664 = vpop.permute.xlu0 %3663
          %3665 = vrot.lane.b32.xlu0 %v2784, 56
          %v3666 = vpop.permute.xlu0 %3665
          %3667 = vrot.lane.b32.xlu0 %v2785, 56
          %v3668 = vpop.permute.xlu0 %3667
          %3669 = vrot.lane.b32.xlu0 %v2786, 56
          %v3670 = vpop.permute.xlu0 %3669
          %3671 = vrot.lane.b32.xlu0 %v2787, 56
          %v3672 = vpop.permute.xlu0 %3671
          %3673 = vrot.lane.b32.xlu0 %v2788, 56
          %v3674 = vpop.permute.xlu0 %3673
          %3675 = vrot.lane.b32.xlu0 %v2789, 56
          %v3676 = vpop.permute.xlu0 %3675
          %3677 = vrot.lane.b32.xlu0 %v2790, 56
          %v3678 = vpop.permute.xlu0 %3677
          %3679 = vrot.lane.b32.xlu0 %v2791, 56
          %v3680 = vpop.permute.xlu0 %3679
          %3681 = vrot.lane.b32.xlu0 %v2792, 56
          %v3682 = vpop.permute.xlu0 %3681
          %3683 = vrot.lane.b32.xlu0 %v2793, 56
          %v3684 = vpop.permute.xlu0 %3683
          %3685 = vrot.lane.b32.xlu0 %v2794, 56
          %v3686 = vpop.permute.xlu0 %3685
          %3687 = vrot.lane.b32.xlu0 %v2795, 56
          %v3688 = vpop.permute.xlu0 %3687
          %3689 = vrot.lane.b32.xlu0 %v2796, 56
          %v3690 = vpop.permute.xlu0 %3689
          %3691 = vrot.lane.b32.xlu0 %v2797, 56
          %v3692 = vpop.permute.xlu0 %3691
          %3693 = vrot.lane.b32.xlu0 %v2798, 56
          %v3694 = vpop.permute.xlu0 %3693
          %3759 = vrot.lane.b32.xlu0 %v2799, 64
          %v3760 = vpop.permute.xlu0 %3759
          %3761 = vrot.lane.b32.xlu0 %v2800, 64
          %v3762 = vpop.permute.xlu0 %3761
          %3763 = vrot.lane.b32.xlu0 %v2801, 64
          %v3764 = vpop.permute.xlu0 %3763
          %3765 = vrot.lane.b32.xlu0 %v2802, 64
          %v3766 = vpop.permute.xlu0 %3765
          %3767 = vrot.lane.b32.xlu0 %v2803, 64
          %v3768 = vpop.permute.xlu0 %3767
          %3769 = vrot.lane.b32.xlu0 %v2804, 64
          %v3770 = vpop.permute.xlu0 %3769
          %3771 = vrot.lane.b32.xlu0 %v2805, 64
          %v3772 = vpop.permute.xlu0 %3771
          %3773 = vrot.lane.b32.xlu0 %v2806, 64
          %v3774 = vpop.permute.xlu0 %3773
          %3775 = vrot.lane.b32.xlu0 %v2807, 64
          %v3776 = vpop.permute.xlu0 %3775
          %3777 = vrot.lane.b32.xlu0 %v2808, 64
          %v3778 = vpop.permute.xlu0 %3777
          %3779 = vrot.lane.b32.xlu0 %v2809, 64
          %v3780 = vpop.permute.xlu0 %3779
          %3781 = vrot.lane.b32.xlu0 %v2810, 64
          %v3782 = vpop.permute.xlu0 %3781
          %3783 = vrot.lane.b32.xlu0 %v2811, 64
          %v3784 = vpop.permute.xlu0 %3783
          %3785 = vrot.lane.b32.xlu0 %v2812, 64
          %v3786 = vpop.permute.xlu0 %3785
          %3787 = vrot.lane.b32.xlu0 %v2813, 64
          %v3788 = vpop.permute.xlu0 %3787
          %3789 = vrot.lane.b32.xlu0 %v2814, 64
          %v3790 = vpop.permute.xlu0 %3789
          %3791 = vrot.lane.b32.xlu0 %v2815, 64
          %v3792 = vpop.permute.xlu0 %3791
          %3793 = vrot.lane.b32.xlu0 %v2816, 64
          %v3794 = vpop.permute.xlu0 %3793
          %3795 = vrot.lane.b32.xlu0 %v2817, 64
          %v3796 = vpop.permute.xlu0 %3795
          %3797 = vrot.lane.b32.xlu0 %v2818, 64
          %v3798 = vpop.permute.xlu0 %3797
          %3799 = vrot.lane.b32.xlu0 %v2819, 64
          %v3800 = vpop.permute.xlu0 %3799
          %3801 = vrot.lane.b32.xlu0 %v2820, 64
          %v3802 = vpop.permute.xlu0 %3801
          %3803 = vrot.lane.b32.xlu0 %v2821, 64
          %v3804 = vpop.permute.xlu0 %3803
          %3805 = vrot.lane.b32.xlu0 %v2822, 64
          %v3806 = vpop.permute.xlu0 %3805
          %3807 = vrot.lane.b32.xlu0 %v2823, 64
          %v3808 = vpop.permute.xlu0 %3807
          %3809 = vrot.lane.b32.xlu0 %v2824, 64
          %v3810 = vpop.permute.xlu0 %3809
          %3811 = vrot.lane.b32.xlu0 %v2825, 64
          %v3812 = vpop.permute.xlu0 %3811
          %3813 = vrot.lane.b32.xlu0 %v2826, 64
          %v3814 = vpop.permute.xlu0 %3813
          %3815 = vrot.lane.b32.xlu0 %v2827, 64
          %v3816 = vpop.permute.xlu0 %3815
          %3817 = vrot.lane.b32.xlu0 %v2828, 64
          %v3818 = vpop.permute.xlu0 %3817
          %3819 = vrot.lane.b32.xlu0 %v2829, 64
          %v3820 = vpop.permute.xlu0 %3819
          %3821 = vrot.lane.b32.xlu0 %v2830, 64
          %v3822 = vpop.permute.xlu0 %3821
          %v3855 = vsel %vm367, %v2542, %v2864
          %v3856 = vsel %vm367, %v2543, %v2866
          %v3857 = vsel %vm367, %v2544, %v2868
          %v3858 = vsel %vm367, %v2545, %v2870
          %v3859 = vsel %vm367, %v2546, %v2872
          %v3860 = vsel %vm367, %v2547, %v2874
          %v3861 = vsel %vm367, %v2548, %v2876
          %v3862 = vsel %vm367, %v2549, %v2878
          %v3863 = vsel %vm367, %v2550, %v2880
          %v3864 = vsel %vm367, %v2551, %v2882
          %v3865 = vsel %vm367, %v2552, %v2884
          %v3866 = vsel %vm367, %v2553, %v2886
          %v3867 = vsel %vm367, %v2554, %v2888
          %v3868 = vsel %vm367, %v2555, %v2890
          %v3869 = vsel %vm367, %v2556, %v2892
          %v3870 = vsel %vm367, %v2557, %v2894
          %v3871 = vsel %vm367, %v2558, %v2896
          %v3872 = vsel %vm367, %v2559, %v2898
          %v3873 = vsel %vm367, %v2560, %v2900
          %v3874 = vsel %vm367, %v2561, %v2902
          %v3875 = vsel %vm367, %v2562, %v2904
          %v3876 = vsel %vm367, %v2563, %v2906
          %v3877 = vsel %vm367, %v2564, %v2908
          %v3878 = vsel %vm367, %v2565, %v2910
          %v3879 = vsel %vm367, %v2566, %v2912
          %v3880 = vsel %vm367, %v2567, %v2914
          %v3881 = vsel %vm367, %v2568, %v2916
          %v3882 = vsel %vm367, %v2569, %v2918
          %v3883 = vsel %vm367, %v2570, %v2920
          %v3884 = vsel %vm367, %v2571, %v2922
          %v3885 = vsel %vm367, %v2572, %v2924
          %v3886 = vsel %vm367, %v2573, %v2926
          %v3887 = vsel %vm1952, %v3855, %v2992
          %v3888 = vsel %vm1952, %v3856, %v2994
          %v3889 = vsel %vm1952, %v3857, %v2996
          %v3890 = vsel %vm1952, %v3858, %v2998
          %v3891 = vsel %vm1952, %v3859, %v3000
          %v3892 = vsel %vm1952, %v3860, %v3002
          %v3893 = vsel %vm1952, %v3861, %v3004
          %v3894 = vsel %vm1952, %v3862, %v3006
          %v3895 = vsel %vm1952, %v3863, %v3008
          %v3896 = vsel %vm1952, %v3864, %v3010
          %v3897 = vsel %vm1952, %v3865, %v3012
          %v3898 = vsel %vm1952, %v3866, %v3014
          %v3899 = vsel %vm1952, %v3867, %v3016
          %v3900 = vsel %vm1952, %v3868, %v3018
          %v3901 = vsel %vm1952, %v3869, %v3020
          %v3902 = vsel %vm1952, %v3870, %v3022
          %v3903 = vsel %vm1952, %v3871, %v3024
          %v3904 = vsel %vm1952, %v3872, %v3026
          %v3905 = vsel %vm1952, %v3873, %v3028
          %v3906 = vsel %vm1952, %v3874, %v3030
          %v3907 = vsel %vm1952, %v3875, %v3032
          %v3908 = vsel %vm1952, %v3876, %v3034
          %v3909 = vsel %vm1952, %v3877, %v3036
          %v3910 = vsel %vm1952, %v3878, %v3038
          %v3911 = vsel %vm1952, %v3879, %v3040
          %v3912 = vsel %vm1952, %v3880, %v3042
          %v3913 = vsel %vm1952, %v3881, %v3044
          %v3914 = vsel %vm1952, %v3882, %v3046
          %v3915 = vsel %vm1952, %v3883, %v3048
          %v3916 = vsel %vm1952, %v3884, %v3050
          %v3917 = vsel %vm1952, %v3885, %v3052
          %v3918 = vsel %vm1952, %v3886, %v3054
          %v3919 = vsel %vm2018, %v3887, %v3120
          %v3920 = vsel %vm2018, %v3888, %v3122
          %v3921 = vsel %vm2018, %v3889, %v3124
          %v3922 = vsel %vm2018, %v3890, %v3126
          %v3923 = vsel %vm2018, %v3891, %v3128
          %v3924 = vsel %vm2018, %v3892, %v3130
          %v3925 = vsel %vm2018, %v3893, %v3132
          %v3926 = vsel %vm2018, %v3894, %v3134
          %v3927 = vsel %vm2018, %v3895, %v3136
          %v3928 = vsel %vm2018, %v3896, %v3138
          %v3929 = vsel %vm2018, %v3897, %v3140
          %v3930 = vsel %vm2018, %v3898, %v3142
          %v3931 = vsel %vm2018, %v3899, %v3144
          %v3932 = vsel %vm2018, %v3900, %v3146
          %v3933 = vsel %vm2018, %v3901, %v3148
          %v3934 = vsel %vm2018, %v3902, %v3150
          %v3935 = vsel %vm2018, %v3903, %v3152
          %v3936 = vsel %vm2018, %v3904, %v3154
          %v3937 = vsel %vm2018, %v3905, %v3156
          %v3938 = vsel %vm2018, %v3906, %v3158
          %v3939 = vsel %vm2018, %v3907, %v3160
          %v3940 = vsel %vm2018, %v3908, %v3162
          %v3941 = vsel %vm2018, %v3909, %v3164
          %v3942 = vsel %vm2018, %v3910, %v3166
          %v3943 = vsel %vm2018, %v3911, %v3168
          %v3944 = vsel %vm2018, %v3912, %v3170
          %v3945 = vsel %vm2018, %v3913, %v3172
          %v3946 = vsel %vm2018, %v3914, %v3174
          %v3947 = vsel %vm2018, %v3915, %v3176
          %v3948 = vsel %vm2018, %v3916, %v3178
          %v3949 = vsel %vm2018, %v3917, %v3180
          %v3950 = vsel %vm2018, %v3918, %v3182
          %v3951 = vsel %vm2084, %v3919, %v3248
          %v3952 = vsel %vm2084, %v3920, %v3250
          %v3953 = vsel %vm2084, %v3921, %v3252
          %v3954 = vsel %vm2084, %v3922, %v3254
          %v3955 = vsel %vm2084, %v3923, %v3256
          %v3956 = vsel %vm2084, %v3924, %v3258
          %v3957 = vsel %vm2084, %v3925, %v3260
          %v3958 = vsel %vm2084, %v3926, %v3262
          %v3959 = vsel %vm2084, %v3927, %v3264
          %v3960 = vsel %vm2084, %v3928, %v3266
          %v3961 = vsel %vm2084, %v3929, %v3268
          %v3962 = vsel %vm2084, %v3930, %v3270
          %v3963 = vsel %vm2084, %v3931, %v3272
          %v3964 = vsel %vm2084, %v3932, %v3274
          %v3965 = vsel %vm2084, %v3933, %v3276
          %v3966 = vsel %vm2084, %v3934, %v3278
          %v3967 = vsel %vm2084, %v3935, %v3280
          %v3968 = vsel %vm2084, %v3936, %v3282
          %v3969 = vsel %vm2084, %v3937, %v3284
          %v3970 = vsel %vm2084, %v3938, %v3286
          %v3971 = vsel %vm2084, %v3939, %v3288
          %v3972 = vsel %vm2084, %v3940, %v3290
          %v3973 = vsel %vm2084, %v3941, %v3292
          %v3974 = vsel %vm2084, %v3942, %v3294
          %v3975 = vsel %vm2084, %v3943, %v3296
          %v3976 = vsel %vm2084, %v3944, %v3298
          %v3977 = vsel %vm2084, %v3945, %v3300
          %v3978 = vsel %vm2084, %v3946, %v3302
          %v3979 = vsel %vm2084, %v3947, %v3304
          %v3980 = vsel %vm2084, %v3948, %v3306
          %v3981 = vsel %vm2084, %v3949, %v3308
          %v3982 = vsel %vm2084, %v3950, %v3310
          %vm3983 = vcmask 326656
          %v3984 = vsel %vm3983, %v3951, %v3376
          %v3985 = vsel %vm3983, %v3952, %v3378
          %v3986 = vsel %vm3983, %v3953, %v3380
          %v3987 = vsel %vm3983, %v3954, %v3382
          %v3988 = vsel %vm3983, %v3955, %v3384
          %v3989 = vsel %vm3983, %v3956, %v3386
          %v3990 = vsel %vm3983, %v3957, %v3388
          %v3991 = vsel %vm3983, %v3958, %v3390
          %v3992 = vsel %vm3983, %v3959, %v3392
          %v3993 = vsel %vm3983, %v3960, %v3394
          %v3994 = vsel %vm3983, %v3961, %v3396
          %v3995 = vsel %vm3983, %v3962, %v3398
          %v3996 = vsel %vm3983, %v3963, %v3400
          %v3997 = vsel %vm3983, %v3964, %v3402
          %v3998 = vsel %vm3983, %v3965, %v3404
          %v3999 = vsel %vm3983, %v3966, %v3406
          %v4000 = vsel %vm3983, %v3967, %v3408
          %v4001 = vsel %vm3983, %v3968, %v3410
          %v4002 = vsel %vm3983, %v3969, %v3412
          %v4003 = vsel %vm3983, %v3970, %v3414
          %v4004 = vsel %vm3983, %v3971, %v3416
          %v4005 = vsel %vm3983, %v3972, %v3418
          %v4006 = vsel %vm3983, %v3973, %v3420
          %v4007 = vsel %vm3983, %v3974, %v3422
          %v4008 = vsel %vm3983, %v3975, %v3424
          %v4009 = vsel %vm3983, %v3976, %v3426
          %v4010 = vsel %vm3983, %v3977, %v3428
          %v4011 = vsel %vm3983, %v3978, %v3430
          %v4012 = vsel %vm3983, %v3979, %v3432
          %v4013 = vsel %vm3983, %v3980, %v3434
          %v4014 = vsel %vm3983, %v3981, %v3436
          %v4015 = vsel %vm3983, %v3982, %v3438
          %vm4016 = vcmask 392192
          %v4017 = vsel %vm4016, %v3984, %v3504
          %v4018 = vsel %vm4016, %v3985, %v3506
          %v4019 = vsel %vm4016, %v3986, %v3508
          %v4020 = vsel %vm4016, %v3987, %v3510
          %v4021 = vsel %vm4016, %v3988, %v3512
          %v4022 = vsel %vm4016, %v3989, %v3514
          %v4023 = vsel %vm4016, %v3990, %v3516
          %v4024 = vsel %vm4016, %v3991, %v3518
          %v4025 = vsel %vm4016, %v3992, %v3520
          %v4026 = vsel %vm4016, %v3993, %v3522
          %v4027 = vsel %vm4016, %v3994, %v3524
          %v4028 = vsel %vm4016, %v3995, %v3526
          %v4029 = vsel %vm4016, %v3996, %v3528
          %v4030 = vsel %vm4016, %v3997, %v3530
          %v4031 = vsel %vm4016, %v3998, %v3532
          %v4032 = vsel %vm4016, %v3999, %v3534
          %v4033 = vsel %vm4016, %v4000, %v3536
          %v4034 = vsel %vm4016, %v4001, %v3538
          %v4035 = vsel %vm4016, %v4002, %v3540
          %v4036 = vsel %vm4016, %v4003, %v3542
          %v4037 = vsel %vm4016, %v4004, %v3544
          %v4038 = vsel %vm4016, %v4005, %v3546
          %v4039 = vsel %vm4016, %v4006, %v3548
          %v4040 = vsel %vm4016, %v4007, %v3550
          %v4041 = vsel %vm4016, %v4008, %v3552
          %v4042 = vsel %vm4016, %v4009, %v3554
          %v4043 = vsel %vm4016, %v4010, %v3556
          %v4044 = vsel %vm4016, %v4011, %v3558
          %v4045 = vsel %vm4016, %v4012, %v3560
          %v4046 = vsel %vm4016, %v4013, %v3562
          %v4047 = vsel %vm4016, %v4014, %v3564
          %v4048 = vsel %vm4016, %v4015, %v3566
          %vm4049 = vcmask 457728
          %v4050 = vsel %vm4049, %v4017, %v3632
          %v4051 = vsel %vm4049, %v4018, %v3634
          %v4052 = vsel %vm4049, %v4019, %v3636
          %v4053 = vsel %vm4049, %v4020, %v3638
          %v4054 = vsel %vm4049, %v4021, %v3640
          %v4055 = vsel %vm4049, %v4022, %v3642
          %v4056 = vsel %vm4049, %v4023, %v3644
          %v4057 = vsel %vm4049, %v4024, %v3646
          %v4058 = vsel %vm4049, %v4025, %v3648
          %v4059 = vsel %vm4049, %v4026, %v3650
          %v4060 = vsel %vm4049, %v4027, %v3652
          %v4061 = vsel %vm4049, %v4028, %v3654
          %v4062 = vsel %vm4049, %v4029, %v3656
          %v4063 = vsel %vm4049, %v4030, %v3658
          %v4064 = vsel %vm4049, %v4031, %v3660
          %v4065 = vsel %vm4049, %v4032, %v3662
          %v4066 = vsel %vm4049, %v4033, %v3664
          %v4067 = vsel %vm4049, %v4034, %v3666
          %v4068 = vsel %vm4049, %v4035, %v3668
          %v4069 = vsel %vm4049, %v4036, %v3670
          %v4070 = vsel %vm4049, %v4037, %v3672
          %v4071 = vsel %vm4049, %v4038, %v3674
          %v4072 = vsel %vm4049, %v4039, %v3676
          %v4073 = vsel %vm4049, %v4040, %v3678
          %v4074 = vsel %vm4049, %v4041, %v3680
          %v4075 = vsel %vm4049, %v4042, %v3682
          %v4076 = vsel %vm4049, %v4043, %v3684
          %v4077 = vsel %vm4049, %v4044, %v3686
          %v4078 = vsel %vm4049, %v4045, %v3688
          %v4079 = vsel %vm4049, %v4046, %v3690
          %v4080 = vsel %vm4049, %v4047, %v3692
          %v4081 = vsel %vm4049, %v4048, %v3694
          %vm4082 = vcmask 523264
          %v4083 = vsel %vm4082, %v4050, %v3760
          %v4084 = vsel %vm4082, %v4051, %v3762
          %v4085 = vsel %vm4082, %v4052, %v3764
          %v4086 = vsel %vm4082, %v4053, %v3766
          %v4087 = vsel %vm4082, %v4054, %v3768
          %v4088 = vsel %vm4082, %v4055, %v3770
          %v4089 = vsel %vm4082, %v4056, %v3772
          %v4090 = vsel %vm4082, %v4057, %v3774
          %v4091 = vsel %vm4082, %v4058, %v3776
          %v4092 = vsel %vm4082, %v4059, %v3778
          %v4093 = vsel %vm4082, %v4060, %v3780
          %v4094 = vsel %vm4082, %v4061, %v3782
          %v4095 = vsel %vm4082, %v4062, %v3784
          %v4096 = vsel %vm4082, %v4063, %v3786
          %v4097 = vsel %vm4082, %v4064, %v3788
          %v4098 = vsel %vm4082, %v4065, %v3790
          %v4099 = vsel %vm4082, %v4066, %v3792
          %v4100 = vsel %vm4082, %v4067, %v3794
          %v4101 = vsel %vm4082, %v4068, %v3796
          %v4102 = vsel %vm4082, %v4069, %v3798
          %v4103 = vsel %vm4082, %v4070, %v3800
          %v4104 = vsel %vm4082, %v4071, %v3802
          %v4105 = vsel %vm4082, %v4072, %v3804
          %v4106 = vsel %vm4082, %v4073, %v3806
          %v4107 = vsel %vm4082, %v4074, %v3808
          %v4108 = vsel %vm4082, %v4075, %v3810
          %v4109 = vsel %vm4082, %v4076, %v3812
          %v4110 = vsel %vm4082, %v4077, %v3814
          %v4111 = vsel %vm4082, %v4078, %v3816
          %v4112 = vsel %vm4082, %v4079, %v3818
          %v4113 = vsel %vm4082, %v4080, %v3820
          %v4114 = vsel %vm4082, %v4081, %v3822
          %v4115 = vpack.c.bf16 %v4084, %v4083
          %v4116 = vpack.c.bf16 %v4086, %v4085
          %v4117 = vpack.c.bf16 %v4088, %v4087
          %v4118 = vpack.c.bf16 %v4090, %v4089
          %v4119 = vpack.c.bf16 %v4092, %v4091
          %v4120 = vpack.c.bf16 %v4094, %v4093
          %v4121 = vpack.c.bf16 %v4096, %v4095
          %v4122 = vpack.c.bf16 %v4098, %v4097
          %v4123 = vpack.c.bf16 %v4100, %v4099
          %v4124 = vpack.c.bf16 %v4102, %v4101
          %v4125 = vpack.c.bf16 %v4104, %v4103
          %v4126 = vpack.c.bf16 %v4106, %v4105
          %v4127 = vpack.c.bf16 %v4108, %v4107
          %v4128 = vpack.c.bf16 %v4110, %v4109
          %v4129 = vpack.c.bf16 %v4112, %v4111
          %v4130 = vpack.c.bf16 %v4114, %v4113
          %s4131 = smul.u32 %s2400, 9
          %s4132 = smul.addr %s4131, 4
          %s4133 = scalar_lea.vmem %s3, %s4132
          %v4134 = vld [vmem:[%s4133] sm:$0xf]
          %v4135 = vld [vmem:[%s4133 + $0x4] sm:$0xf]
          %v4136 = vld [vmem:[%s4133 + $0x8] sm:$0xf]
          %v4137 = vld [vmem:[%s4133 + $0xc] sm:$0xf]
          %v4138 = vld [vmem:[%s4133 + $0x10] sm:$0xf]
          %v4139 = vld [vmem:[%s4133 + $0x14] sm:$0xf]
          %v4140 = vld [vmem:[%s4133 + $0x18] sm:$0xf]
          %v4141 = vld [vmem:[%s4133 + $0x1c] sm:$0xf]
          %v4142 = vld [vmem:[%s4133 + $0x20] sm:$0xf]
          %s4143 = scalar_lea.vmem %s4, %s2400
          %v4144 = vld [vmem:[%s4143] sm:$0x1]
          %v4146 = vlaneseq
          %v4147 = vshrl.u32 %v4146, 7
          %v4148 = vsub.s32 0, %v4147
          %v4149 = vrot.slane %v4144, %v4148
          %v4160 = vunpack.c.l.b16 %v4134
          %v4161 = vunpack.c.l.b16 %v4135
          %v4162 = vunpack.c.l.b16 %v4136
          %v4163 = vunpack.c.l.b16 %v4137
          %v4164 = vunpack.c.l.b16 %v4138
          %v4165 = vunpack.c.l.b16 %v4139
          %v4166 = vunpack.c.l.b16 %v4140
          %v4167 = vunpack.c.l.b16 %v4141
          %v4168 = vunpack.c.l.b16 %v4142
          %v4169 = vpack.c.b16 %v4161, %v4160
          %v4170 = vpack.c.b16 %v4163, %v4162
          %v4171 = vpack.c.b16 %v4165, %v4164
          %v4172 = vpack.c.b16 %v4167, %v4166
          %v4173 = vpack.c.b16 %v4168, %v4168
          %vm4178 = vcmask 588800
          %v4180 = vsel %vm4178, %v4115, 0
          %v4183 = vsel %vm4178, %v4116, 0
          %v4186 = vsel %vm4178, %v4117, 0
          %v4189 = vsel %vm4178, %v4118, 0
          %v4192 = vsel %vm4178, %v4119, 0
          %v4195 = vsel %vm4178, %v4120, 0
          %v4198 = vsel %vm4178, %v4121, 0
          %v4201 = vsel %vm4178, %v4122, 0
          %v4204 = vsel %vm4178, %v4123, 0
          %v4207 = vsel %vm4178, %v4124, 0
          %v4210 = vsel %vm4178, %v4125, 0
          %v4213 = vsel %vm4178, %v4126, 0
          %v4216 = vsel %vm4178, %v4127, 0
          %v4219 = vsel %vm4178, %v4128, 0
          %v4222 = vsel %vm4178, %v4129, 0
          %v4225 = vsel %vm4178, %v4130, 0
          %vm4227 = vcmask 1043456
          %v4229 = vsel %vm4227, %v4173, 0
          %4231 = vmatprep.subr.bf16.mxu0 0
          %4232 = vmatpush1.bf16.msra.mxu0 0
          %4233 = vmatprep.subr.bf16.mxu0 0
          %4234 = vmatpush1.bf16.msra.mxu0 0
          %4235 = vmatprep.subr.bf16.mxu0 0
          %4236 = vmatpush1.bf16.msra.mxu0 0
          %4237 = vmatprep.subr.bf16.mxu0 0
          %4238 = vmatpush1.bf16.msra.mxu0 %v4229
          %4239 = vmatprep.subr.bf16.mxu0 0
          %4240 = vmatpush1.bf16.msra.mxu0 %v4172
          %4241 = vmatprep.subr.bf16.mxu0 0
          %4242 = vmatpush1.bf16.msra.mxu0 %v4171
          %4243 = vmatprep.subr.bf16.mxu0 0
          %4244 = vmatpush1.bf16.msra.mxu0 %v4170
          %4245 = vmatprep.subr.bf16.mxu0 0
          %4246 = vmatpush1.bf16.msra.mxu0 %v4169
          %4247 = vmatprep.subr.bf16.mxu0 0
          %4248 = vmatpush2.bf16.msra.mxu0 0
          %4249 = vmatprep.subr.bf16.mxu0 0
          %4250 = vmatpush2.bf16.msra.mxu0 0
          %4251 = vmatprep.subr.bf16.mxu0 0
          %4252 = vmatpush2.bf16.msra.mxu0 0
          %4253 = vmatprep.subr.bf16.mxu0 0
          %4254 = vmatpush2.bf16.msra.mxu0 0
          %4255 = vmatprep.subr.bf16.mxu0 0
          %4256 = vmatpush2.bf16.msra.mxu0 0
          %4257 = vmatprep.subr.bf16.mxu0 0
          %4258 = vmatpush2.bf16.msra.mxu0 0
          %4259 = vmatprep.subr.bf16.mxu0 0
          %4260 = vmatpush2.bf16.msra.mxu0 0
          %4261 = vmatprep.subr.bf16.mxu0 0
          %4262 = vmatpush2.bf16.msra.mxu0 0
          %4263 = vmatprep.mubr.bf16.mxu0 0
          %4264 = vmatmul.mubr.bf16.gmra.mxu0 %v4180
          %v4265 = vpop.f32.mrf.mxu0
          %v4266 = vadd.f32 %v4149, %v4265
          %v4267 = vpop.f32.mrf.mxu0
          %v4268 = vpop.f32.mrf.mxu0
          %v4269 = vadd.f32 %v4149, %v4268
          %v4270 = vpop.f32.mrf.mxu0
          %4271 = vmatprep.mubr.bf16.mxu0 0
          %4272 = vmatmul.mubr.bf16.gmra.mxu0 %v4183
          %v4273 = vpop.f32.mrf.mxu0
          %v4274 = vadd.f32 %v4149, %v4273
          %v4275 = vpop.f32.mrf.mxu0
          %v4276 = vpop.f32.mrf.mxu0
          %v4277 = vadd.f32 %v4149, %v4276
          %v4278 = vpop.f32.mrf.mxu0
          %4279 = vmatprep.mubr.bf16.mxu0 0
          %4280 = vmatmul.mubr.bf16.gmra.mxu0 %v4186
          %v4281 = vpop.f32.mrf.mxu0
          %v4282 = vadd.f32 %v4149, %v4281
          %v4283 = vpop.f32.mrf.mxu0
          %v4284 = vpop.f32.mrf.mxu0
          %v4285 = vadd.f32 %v4149, %v4284
          %v4286 = vpop.f32.mrf.mxu0
          %4287 = vmatprep.mubr.bf16.mxu0 0
          %4288 = vmatmul.mubr.bf16.gmra.mxu0 %v4189
          %v4289 = vpop.f32.mrf.mxu0
          %v4290 = vadd.f32 %v4149, %v4289
          %v4291 = vpop.f32.mrf.mxu0
          %v4292 = vpop.f32.mrf.mxu0
          %v4293 = vadd.f32 %v4149, %v4292
          %v4294 = vpop.f32.mrf.mxu0
          %4295 = vmatprep.mubr.bf16.mxu0 0
          %4296 = vmatmul.mubr.bf16.gmra.mxu0 %v4192
          %v4297 = vpop.f32.mrf.mxu0
          %v4298 = vadd.f32 %v4149, %v4297
          %v4299 = vpop.f32.mrf.mxu0
          %v4300 = vpop.f32.mrf.mxu0
          %v4301 = vadd.f32 %v4149, %v4300
          %v4302 = vpop.f32.mrf.mxu0
          %4303 = vmatprep.mubr.bf16.mxu0 0
          %4304 = vmatmul.mubr.bf16.gmra.mxu0 %v4195
          %v4305 = vpop.f32.mrf.mxu0
          %v4306 = vadd.f32 %v4149, %v4305
          %v4307 = vpop.f32.mrf.mxu0
          %v4308 = vpop.f32.mrf.mxu0
          %v4309 = vadd.f32 %v4149, %v4308
          %v4310 = vpop.f32.mrf.mxu0
          %4311 = vmatprep.mubr.bf16.mxu0 0
          %4312 = vmatmul.mubr.bf16.gmra.mxu0 %v4198
          %v4313 = vpop.f32.mrf.mxu0
          %v4314 = vadd.f32 %v4149, %v4313
          %v4315 = vpop.f32.mrf.mxu0
          %v4316 = vpop.f32.mrf.mxu0
          %v4317 = vadd.f32 %v4149, %v4316
          %v4318 = vpop.f32.mrf.mxu0
          %4319 = vmatprep.mubr.bf16.mxu0 0
          %4320 = vmatmul.mubr.bf16.gmra.mxu0 %v4201
          %v4321 = vpop.f32.mrf.mxu0
          %v4322 = vadd.f32 %v4149, %v4321
          %v4323 = vpop.f32.mrf.mxu0
          %v4324 = vpop.f32.mrf.mxu0
          %v4325 = vadd.f32 %v4149, %v4324
          %v4326 = vpop.f32.mrf.mxu0
          %4327 = vmatprep.mubr.bf16.mxu0 0
          %4328 = vmatmul.mubr.bf16.gmra.mxu0 %v4204
          %v4329 = vpop.f32.mrf.mxu0
          %v4330 = vadd.f32 %v4149, %v4329
          %v4331 = vpop.f32.mrf.mxu0
          %v4332 = vpop.f32.mrf.mxu0
          %v4333 = vadd.f32 %v4149, %v4332
          %v4334 = vpop.f32.mrf.mxu0
          %4335 = vmatprep.mubr.bf16.mxu0 0
          %4336 = vmatmul.mubr.bf16.gmra.mxu0 %v4207
          %v4337 = vpop.f32.mrf.mxu0
          %v4338 = vadd.f32 %v4149, %v4337
          %v4339 = vpop.f32.mrf.mxu0
          %v4340 = vpop.f32.mrf.mxu0
          %v4341 = vadd.f32 %v4149, %v4340
          %v4342 = vpop.f32.mrf.mxu0
          %4343 = vmatprep.mubr.bf16.mxu0 0
          %4344 = vmatmul.mubr.bf16.gmra.mxu0 %v4210
          %v4345 = vpop.f32.mrf.mxu0
          %v4346 = vadd.f32 %v4149, %v4345
          %v4347 = vpop.f32.mrf.mxu0
          %v4348 = vpop.f32.mrf.mxu0
          %v4349 = vadd.f32 %v4149, %v4348
          %v4350 = vpop.f32.mrf.mxu0
          %4351 = vmatprep.mubr.bf16.mxu0 0
          %4352 = vmatmul.mubr.bf16.gmra.mxu0 %v4213
          %v4353 = vpop.f32.mrf.mxu0
          %v4354 = vadd.f32 %v4149, %v4353
          %v4355 = vpop.f32.mrf.mxu0
          %v4356 = vpop.f32.mrf.mxu0
          %v4357 = vadd.f32 %v4149, %v4356
          %v4358 = vpop.f32.mrf.mxu0
          %4359 = vmatprep.mubr.bf16.mxu0 0
          %4360 = vmatmul.mubr.bf16.gmra.mxu0 %v4216
          %v4361 = vpop.f32.mrf.mxu0
          %v4362 = vadd.f32 %v4149, %v4361
          %v4363 = vpop.f32.mrf.mxu0
          %v4364 = vpop.f32.mrf.mxu0
          %v4365 = vadd.f32 %v4149, %v4364
          %v4366 = vpop.f32.mrf.mxu0
          %4367 = vmatprep.mubr.bf16.mxu0 0
          %4368 = vmatmul.mubr.bf16.gmra.mxu0 %v4219
          %v4369 = vpop.f32.mrf.mxu0
          %v4370 = vadd.f32 %v4149, %v4369
          %v4371 = vpop.f32.mrf.mxu0
          %v4372 = vpop.f32.mrf.mxu0
          %v4373 = vadd.f32 %v4149, %v4372
          %v4374 = vpop.f32.mrf.mxu0
          %4375 = vmatprep.mubr.bf16.mxu0 0
          %4376 = vmatmul.mubr.bf16.gmra.mxu0 %v4222
          %v4377 = vpop.f32.mrf.mxu0
          %v4378 = vadd.f32 %v4149, %v4377
          %v4379 = vpop.f32.mrf.mxu0
          %v4380 = vpop.f32.mrf.mxu0
          %v4381 = vadd.f32 %v4149, %v4380
          %v4382 = vpop.f32.mrf.mxu0
          %4383 = vmatprep.mubr.bf16.mxu0 0
          %4384 = vmatmul.mubr.bf16.gmra.mxu0 %v4225
          %v4385 = vpop.f32.mrf.mxu0
          %v4386 = vadd.f32 %v4149, %v4385
          %v4387 = vpop.f32.mrf.mxu0
          %v4388 = vpop.f32.mrf.mxu0
          %v4389 = vadd.f32 %v4149, %v4388
          %v4390 = vpop.f32.mrf.mxu0
          %4391 = vdwg.mxu0
          %s4392 = smul.u32 %s2400, 2
          %s4393 = sld [smem:[#allocation7 + %s4392]]
          %s4394 = sadd.s32 %s4392, 1
          %s4395 = sld [smem:[#allocation7 + %s4394]]
          %v4396 = vstv %s4393
          %v4397 = vmul.f32 %v4396, %v4266
          %v4398 = vmul.f32 %v4396, %v4269
          %v4399 = vmul.f32 %v4396, %v4274
          %v4400 = vmul.f32 %v4396, %v4277
          %v4401 = vmul.f32 %v4396, %v4282
          %v4402 = vmul.f32 %v4396, %v4285
          %v4403 = vmul.f32 %v4396, %v4290
          %v4404 = vmul.f32 %v4396, %v4293
          %v4405 = vmul.f32 %v4396, %v4298
          %v4406 = vmul.f32 %v4396, %v4301
          %v4407 = vmul.f32 %v4396, %v4306
          %v4408 = vmul.f32 %v4396, %v4309
          %v4409 = vmul.f32 %v4396, %v4314
          %v4410 = vmul.f32 %v4396, %v4317
          %v4411 = vmul.f32 %v4396, %v4322
          %v4412 = vmul.f32 %v4396, %v4325
          %v4413 = vmul.f32 %v4396, %v4330
          %v4414 = vmul.f32 %v4396, %v4333
          %v4415 = vmul.f32 %v4396, %v4338
          %v4416 = vmul.f32 %v4396, %v4341
          %v4417 = vmul.f32 %v4396, %v4346
          %v4418 = vmul.f32 %v4396, %v4349
          %v4419 = vmul.f32 %v4396, %v4354
          %v4420 = vmul.f32 %v4396, %v4357
          %v4421 = vmul.f32 %v4396, %v4362
          %v4422 = vmul.f32 %v4396, %v4365
          %v4423 = vmul.f32 %v4396, %v4370
          %v4424 = vmul.f32 %v4396, %v4373
          %v4425 = vmul.f32 %v4396, %v4378
          %v4426 = vmul.f32 %v4396, %v4381
          %v4427 = vmul.f32 %v4396, %v4386
          %v4428 = vmul.f32 %v4396, %v4389
          %v4429 = vld [vmem:[#allocation4] sm:$0xff]
          %v4430 = vld [vmem:[#allocation4 + $0x8] sm:$0xff]
          %v4431 = vld [vmem:[#allocation4 + $0x10] sm:$0xff]
          %v4432 = vld [vmem:[#allocation4 + $0x18] sm:$0xff]
          %v4433 = vld [vmem:[#allocation4 + $0x20] sm:$0xff]
          %v4434 = vld [vmem:[#allocation4 + $0x28] sm:$0xff]
          %v4435 = vld [vmem:[#allocation4 + $0x30] sm:$0xff]
          %v4436 = vld [vmem:[#allocation4 + $0x38] sm:$0xff]
          %v4437 = vld [vmem:[#allocation4 + $0x40] sm:$0xff]
          %v4438 = vld [vmem:[#allocation4 + $0x48] sm:$0xff]
          %v4439 = vld [vmem:[#allocation4 + $0x50] sm:$0xff]
          %v4440 = vld [vmem:[#allocation4 + $0x58] sm:$0xff]
          %v4441 = vld [vmem:[#allocation4 + $0x60] sm:$0xff]
          %v4442 = vld [vmem:[#allocation4 + $0x68] sm:$0xff]
          %v4443 = vld [vmem:[#allocation4 + $0x70] sm:$0xff]
          %v4444 = vld [vmem:[#allocation4 + $0x78] sm:$0xff]
          %v4445 = vld [vmem:[#allocation4 + $0x80] sm:$0xff]
          %v4446 = vld [vmem:[#allocation4 + $0x88] sm:$0xff]
          %v4447 = vld [vmem:[#allocation4 + $0x90] sm:$0xff]
          %v4448 = vld [vmem:[#allocation4 + $0x98] sm:$0xff]
          %v4449 = vld [vmem:[#allocation4 + $0xa0] sm:$0xff]
          %v4450 = vld [vmem:[#allocation4 + $0xa8] sm:$0xff]
          %v4451 = vld [vmem:[#allocation4 + $0xb0] sm:$0xff]
          %v4452 = vld [vmem:[#allocation4 + $0xb8] sm:$0xff]
          %v4453 = vld [vmem:[#allocation4 + $0xc0] sm:$0xff]
          %v4454 = vld [vmem:[#allocation4 + $0xc8] sm:$0xff]
          %v4455 = vld [vmem:[#allocation4 + $0xd0] sm:$0xff]
          %v4456 = vld [vmem:[#allocation4 + $0xd8] sm:$0xff]
          %v4457 = vld [vmem:[#allocation4 + $0xe0] sm:$0xff]
          %v4458 = vld [vmem:[#allocation4 + $0xe8] sm:$0xff]
          %v4459 = vld [vmem:[#allocation4 + $0xf0] sm:$0xff]
          %v4460 = vld [vmem:[#allocation4 + $0xf8] sm:$0xff]
          %v4461 = vstv %s4395
          %v4462 = vmul.f32 %v4461, %v4429
          %v4463 = vmul.f32 %v4461, %v4430
          %v4464 = vmul.f32 %v4461, %v4431
          %v4465 = vmul.f32 %v4461, %v4432
          %v4466 = vmul.f32 %v4461, %v4433
          %v4467 = vmul.f32 %v4461, %v4434
          %v4468 = vmul.f32 %v4461, %v4435
          %v4469 = vmul.f32 %v4461, %v4436
          %v4470 = vmul.f32 %v4461, %v4437
          %v4471 = vmul.f32 %v4461, %v4438
          %v4472 = vmul.f32 %v4461, %v4439
          %v4473 = vmul.f32 %v4461, %v4440
          %v4474 = vmul.f32 %v4461, %v4441
          %v4475 = vmul.f32 %v4461, %v4442
          %v4476 = vmul.f32 %v4461, %v4443
          %v4477 = vmul.f32 %v4461, %v4444
          %v4478 = vmul.f32 %v4461, %v4445
          %v4479 = vmul.f32 %v4461, %v4446
          %v4480 = vmul.f32 %v4461, %v4447
          %v4481 = vmul.f32 %v4461, %v4448
          %v4482 = vmul.f32 %v4461, %v4449
          %v4483 = vmul.f32 %v4461, %v4450
          %v4484 = vmul.f32 %v4461, %v4451
          %v4485 = vmul.f32 %v4461, %v4452
          %v4486 = vmul.f32 %v4461, %v4453
          %v4487 = vmul.f32 %v4461, %v4454
          %v4488 = vmul.f32 %v4461, %v4455
          %v4489 = vmul.f32 %v4461, %v4456
          %v4490 = vmul.f32 %v4461, %v4457
          %v4491 = vmul.f32 %v4461, %v4458
          %v4492 = vmul.f32 %v4461, %v4459
          %v4493 = vmul.f32 %v4461, %v4460
          %v4494 = vadd.f32 %v4397, %v4462
          %v4495 = vadd.f32 %v4398, %v4463
          %v4496 = vadd.f32 %v4399, %v4464
          %v4497 = vadd.f32 %v4400, %v4465
          %v4498 = vadd.f32 %v4401, %v4466
          %v4499 = vadd.f32 %v4402, %v4467
          %v4500 = vadd.f32 %v4403, %v4468
          %v4501 = vadd.f32 %v4404, %v4469
          %v4502 = vadd.f32 %v4405, %v4470
          %v4503 = vadd.f32 %v4406, %v4471
          %v4504 = vadd.f32 %v4407, %v4472
          %v4505 = vadd.f32 %v4408, %v4473
          %v4506 = vadd.f32 %v4409, %v4474
          %v4507 = vadd.f32 %v4410, %v4475
          %v4508 = vadd.f32 %v4411, %v4476
          %v4509 = vadd.f32 %v4412, %v4477
          %v4510 = vadd.f32 %v4413, %v4478
          %v4511 = vadd.f32 %v4414, %v4479
          %v4512 = vadd.f32 %v4415, %v4480
          %v4513 = vadd.f32 %v4416, %v4481
          %v4514 = vadd.f32 %v4417, %v4482
          %v4515 = vadd.f32 %v4418, %v4483
          %v4516 = vadd.f32 %v4419, %v4484
          %v4517 = vadd.f32 %v4420, %v4485
          %v4518 = vadd.f32 %v4421, %v4486
          %v4519 = vadd.f32 %v4422, %v4487
          %v4520 = vadd.f32 %v4423, %v4488
          %v4521 = vadd.f32 %v4424, %v4489
          %v4522 = vadd.f32 %v4425, %v4490
          %v4523 = vadd.f32 %v4426, %v4491
          %v4524 = vadd.f32 %v4427, %v4492
          %v4525 = vadd.f32 %v4428, %v4493
          %4526 = vst.msk [vmem:[#allocation4] sm:$0xff] %vm321, %v4494
          %4527 = vst.msk [vmem:[#allocation4 + $0x8] sm:$0xff] %vm321, %v4495
          %4528 = vst.msk [vmem:[#allocation4 + $0x10] sm:$0xff] %vm321, %v4496
          %4529 = vst.msk [vmem:[#allocation4 + $0x18] sm:$0xff] %vm321, %v4497
          %4530 = vst.msk [vmem:[#allocation4 + $0x20] sm:$0xff] %vm321, %v4498
          %4531 = vst.msk [vmem:[#allocation4 + $0x28] sm:$0xff] %vm321, %v4499
          %4532 = vst.msk [vmem:[#allocation4 + $0x30] sm:$0xff] %vm321, %v4500
          %4533 = vst.msk [vmem:[#allocation4 + $0x38] sm:$0xff] %vm321, %v4501
          %4534 = vst.msk [vmem:[#allocation4 + $0x40] sm:$0xff] %vm321, %v4502
          %4535 = vst.msk [vmem:[#allocation4 + $0x48] sm:$0xff] %vm321, %v4503
          %4536 = vst.msk [vmem:[#allocation4 + $0x50] sm:$0xff] %vm321, %v4504
          %4537 = vst.msk [vmem:[#allocation4 + $0x58] sm:$0xff] %vm321, %v4505
          %4538 = vst.msk [vmem:[#allocation4 + $0x60] sm:$0xff] %vm321, %v4506
          %4539 = vst.msk [vmem:[#allocation4 + $0x68] sm:$0xff] %vm321, %v4507
          %4540 = vst.msk [vmem:[#allocation4 + $0x70] sm:$0xff] %vm321, %v4508
          %4541 = vst.msk [vmem:[#allocation4 + $0x78] sm:$0xff] %vm321, %v4509
          %4542 = vst.msk [vmem:[#allocation4 + $0x80] sm:$0xff] %vm321, %v4510
          %4543 = vst.msk [vmem:[#allocation4 + $0x88] sm:$0xff] %vm321, %v4511
          %4544 = vst.msk [vmem:[#allocation4 + $0x90] sm:$0xff] %vm321, %v4512
          %4545 = vst.msk [vmem:[#allocation4 + $0x98] sm:$0xff] %vm321, %v4513
          %4546 = vst.msk [vmem:[#allocation4 + $0xa0] sm:$0xff] %vm321, %v4514
          %4547 = vst.msk [vmem:[#allocation4 + $0xa8] sm:$0xff] %vm321, %v4515
          %4548 = vst.msk [vmem:[#allocation4 + $0xb0] sm:$0xff] %vm321, %v4516
          %4549 = vst.msk [vmem:[#allocation4 + $0xb8] sm:$0xff] %vm321, %v4517
          %4550 = vst.msk [vmem:[#allocation4 + $0xc0] sm:$0xff] %vm321, %v4518
          %4551 = vst.msk [vmem:[#allocation4 + $0xc8] sm:$0xff] %vm321, %v4519
          %4552 = vst.msk [vmem:[#allocation4 + $0xd0] sm:$0xff] %vm321, %v4520
          %4553 = vst.msk [vmem:[#allocation4 + $0xd8] sm:$0xff] %vm321, %v4521
          %4554 = vst.msk [vmem:[#allocation4 + $0xe0] sm:$0xff] %vm321, %v4522
          %4555 = vst.msk [vmem:[#allocation4 + $0xe8] sm:$0xff] %vm321, %v4523
          %4556 = vst.msk [vmem:[#allocation4 + $0xf0] sm:$0xff] %vm321, %v4524
          %4557 = vst.msk [vmem:[#allocation4 + $0xf8] sm:$0xff] %vm321, %v4525
          %4558 = vst.msk [vmem:[%s509 + $0x8] sm:$0xff] %vm321, %v4494
          %4559 = vst.msk [vmem:[%s509 + $0x10] sm:$0xff] %vm321, %v4495
          %4560 = vst.msk [vmem:[%s509 + $0x28] sm:$0xff] %vm321, %v4496
          %4561 = vst.msk [vmem:[%s509 + $0x30] sm:$0xff] %vm321, %v4497
          %4562 = vst.msk [vmem:[%s509 + $0x48] sm:$0xff] %vm321, %v4498
          %4563 = vst.msk [vmem:[%s509 + $0x50] sm:$0xff] %vm321, %v4499
          %4564 = vst.msk [vmem:[%s509 + $0x68] sm:$0xff] %vm321, %v4500
          %4565 = vst.msk [vmem:[%s509 + $0x70] sm:$0xff] %vm321, %v4501
          %4566 = vst.msk [vmem:[%s509 + $0x88] sm:$0xff] %vm321, %v4502
          %4567 = vst.msk [vmem:[%s509 + $0x90] sm:$0xff] %vm321, %v4503
          %4568 = vst.msk [vmem:[%s509 + $0xa8] sm:$0xff] %vm321, %v4504
          %4569 = vst.msk [vmem:[%s509 + $0xb0] sm:$0xff] %vm321, %v4505
          %4570 = vst.msk [vmem:[%s509 + $0xc8] sm:$0xff] %vm321, %v4506
          %4571 = vst.msk [vmem:[%s509 + $0xd0] sm:$0xff] %vm321, %v4507
          %4572 = vst.msk [vmem:[%s509 + $0xe8] sm:$0xff] %vm321, %v4508
          %4573 = vst.msk [vmem:[%s509 + $0xf0] sm:$0xff] %vm321, %v4509
          %4574 = vst.msk [vmem:[%s509 + $0x108] sm:$0xff] %vm321, %v4510
          %4575 = vst.msk [vmem:[%s509 + $0x110] sm:$0xff] %vm321, %v4511
          %4576 = vst.msk [vmem:[%s509 + $0x128] sm:$0xff] %vm321, %v4512
          %4577 = vst.msk [vmem:[%s509 + $0x130] sm:$0xff] %vm321, %v4513
          %4578 = vst.msk [vmem:[%s509 + $0x148] sm:$0xff] %vm321, %v4514
          %4579 = vst.msk [vmem:[%s509 + $0x150] sm:$0xff] %vm321, %v4515
          %4580 = vst.msk [vmem:[%s509 + $0x168] sm:$0xff] %vm321, %v4516
          %4581 = vst.msk [vmem:[%s509 + $0x170] sm:$0xff] %vm321, %v4517
          %4582 = vst.msk [vmem:[%s509 + $0x188] sm:$0xff] %vm321, %v4518
          %4583 = vst.msk [vmem:[%s509 + $0x190] sm:$0xff] %vm321, %v4519
          %4584 = vst.msk [vmem:[%s509 + $0x1a8] sm:$0xff] %vm321, %v4520
          %4585 = vst.msk [vmem:[%s509 + $0x1b0] sm:$0xff] %vm321, %v4521
          %4586 = vst.msk [vmem:[%s509 + $0x1c8] sm:$0xff] %vm321, %v4522
          %4587 = vst.msk [vmem:[%s509 + $0x1d0] sm:$0xff] %vm321, %v4523
          %4588 = vst.msk [vmem:[%s509 + $0x1e8] sm:$0xff] %vm321, %v4524
          %4589 = vst.msk [vmem:[%s509 + $0x1f0] sm:$0xff] %vm321, %v4525
          %v4590 = vld [vmem:[#allocation2 + $0x7] sm:$0xff]
          %v4591 = vld [vmem:[#allocation2 + $0xf] sm:$0xff]
          %v4592 = vld [vmem:[#allocation2 + $0x27] sm:$0xff]
          %v4593 = vld [vmem:[#allocation2 + $0x2f] sm:$0xff]
          %v4594 = vld [vmem:[#allocation2 + $0x47] sm:$0xff]
          %v4595 = vld [vmem:[#allocation2 + $0x4f] sm:$0xff]
          %v4596 = vld [vmem:[#allocation2 + $0x67] sm:$0xff]
          %v4597 = vld [vmem:[#allocation2 + $0x6f] sm:$0xff]
          %v4598 = vld [vmem:[#allocation2 + $0x87] sm:$0xff]
          %v4599 = vld [vmem:[#allocation2 + $0x8f] sm:$0xff]
          %v4600 = vld [vmem:[#allocation2 + $0xa7] sm:$0xff]
          %v4601 = vld [vmem:[#allocation2 + $0xaf] sm:$0xff]
          %v4602 = vld [vmem:[#allocation2 + $0xc7] sm:$0xff]
          %v4603 = vld [vmem:[#allocation2 + $0xcf] sm:$0xff]
          %v4604 = vld [vmem:[#allocation2 + $0xe7] sm:$0xff]
          %v4605 = vld [vmem:[#allocation2 + $0xef] sm:$0xff]
          %v4606 = vld [vmem:[#allocation2 + $0x107] sm:$0xff]
          %v4607 = vld [vmem:[#allocation2 + $0x10f] sm:$0xff]
          %v4608 = vld [vmem:[#allocation2 + $0x127] sm:$0xff]
          %v4609 = vld [vmem:[#allocation2 + $0x12f] sm:$0xff]
          %v4610 = vld [vmem:[#allocation2 + $0x147] sm:$0xff]
          %v4611 = vld [vmem:[#allocation2 + $0x14f] sm:$0xff]
          %v4612 = vld [vmem:[#allocation2 + $0x167] sm:$0xff]
          %v4613 = vld [vmem:[#allocation2 + $0x16f] sm:$0xff]
          %v4614 = vld [vmem:[#allocation2 + $0x187] sm:$0xff]
          %v4615 = vld [vmem:[#allocation2 + $0x18f] sm:$0xff]
          %v4616 = vld [vmem:[#allocation2 + $0x1a7] sm:$0xff]
          %v4617 = vld [vmem:[#allocation2 + $0x1af] sm:$0xff]
          %v4618 = vld [vmem:[#allocation2 + $0x1c7] sm:$0xff]
          %v4619 = vld [vmem:[#allocation2 + $0x1cf] sm:$0xff]
          %v4620 = vld [vmem:[#allocation2 + $0x1e7] sm:$0xff]
          %v4621 = vld [vmem:[#allocation2 + $0x1ef] sm:$0xff]
          %v4622 = vld [vmem:[#allocation2 + $0x8] sm:$0xff]
          %v4623 = vld [vmem:[#allocation2 + $0x10] sm:$0xff]
          %v4624 = vld [vmem:[#allocation2 + $0x28] sm:$0xff]
          %v4625 = vld [vmem:[#allocation2 + $0x30] sm:$0xff]
          %v4626 = vld [vmem:[#allocation2 + $0x48] sm:$0xff]
          %v4627 = vld [vmem:[#allocation2 + $0x50] sm:$0xff]
          %v4628 = vld [vmem:[#allocation2 + $0x68] sm:$0xff]
          %v4629 = vld [vmem:[#allocation2 + $0x70] sm:$0xff]
          %v4630 = vld [vmem:[#allocation2 + $0x88] sm:$0xff]
          %v4631 = vld [vmem:[#allocation2 + $0x90] sm:$0xff]
          %v4632 = vld [vmem:[#allocation2 + $0xa8] sm:$0xff]
          %v4633 = vld [vmem:[#allocation2 + $0xb0] sm:$0xff]
          %v4634 = vld [vmem:[#allocation2 + $0xc8] sm:$0xff]
          %v4635 = vld [vmem:[#allocation2 + $0xd0] sm:$0xff]
          %v4636 = vld [vmem:[#allocation2 + $0xe8] sm:$0xff]
          %v4637 = vld [vmem:[#allocation2 + $0xf0] sm:$0xff]
          %v4638 = vld [vmem:[#allocation2 + $0x108] sm:$0xff]
          %v4639 = vld [vmem:[#allocation2 + $0x110] sm:$0xff]
          %v4640 = vld [vmem:[#allocation2 + $0x128] sm:$0xff]
          %v4641 = vld [vmem:[#allocation2 + $0x130] sm:$0xff]
          %v4642 = vld [vmem:[#allocation2 + $0x148] sm:$0xff]
          %v4643 = vld [vmem:[#allocation2 + $0x150] sm:$0xff]
          %v4644 = vld [vmem:[#allocation2 + $0x168] sm:$0xff]
          %v4645 = vld [vmem:[#allocation2 + $0x170] sm:$0xff]
          %v4646 = vld [vmem:[#allocation2 + $0x188] sm:$0xff]
          %v4647 = vld [vmem:[#allocation2 + $0x190] sm:$0xff]
          %v4648 = vld [vmem:[#allocation2 + $0x1a8] sm:$0xff]
          %v4649 = vld [vmem:[#allocation2 + $0x1b0] sm:$0xff]
          %v4650 = vld [vmem:[#allocation2 + $0x1c8] sm:$0xff]
          %v4651 = vld [vmem:[#allocation2 + $0x1d0] sm:$0xff]
          %v4652 = vld [vmem:[#allocation2 + $0x1e8] sm:$0xff]
          %v4653 = vld [vmem:[#allocation2 + $0x1f0] sm:$0xff]
          %v4654 = vld [vmem:[#allocation2 + $0x9] sm:$0xff]
          %v4655 = vld [vmem:[#allocation2 + $0x11] sm:$0xff]
          %v4656 = vld [vmem:[#allocation2 + $0x29] sm:$0xff]
          %v4657 = vld [vmem:[#allocation2 + $0x31] sm:$0xff]
          %v4658 = vld [vmem:[#allocation2 + $0x49] sm:$0xff]
          %v4659 = vld [vmem:[#allocation2 + $0x51] sm:$0xff]
          %v4660 = vld [vmem:[#allocation2 + $0x69] sm:$0xff]
          %v4661 = vld [vmem:[#allocation2 + $0x71] sm:$0xff]
          %v4662 = vld [vmem:[#allocation2 + $0x89] sm:$0xff]
          %v4663 = vld [vmem:[#allocation2 + $0x91] sm:$0xff]
          %v4664 = vld [vmem:[#allocation2 + $0xa9] sm:$0xff]
          %v4665 = vld [vmem:[#allocation2 + $0xb1] sm:$0xff]
          %v4666 = vld [vmem:[#allocation2 + $0xc9] sm:$0xff]
          %v4667 = vld [vmem:[#allocation2 + $0xd1] sm:$0xff]
          %v4668 = vld [vmem:[#allocation2 + $0xe9] sm:$0xff]
          %v4669 = vld [vmem:[#allocation2 + $0xf1] sm:$0xff]
          %v4670 = vld [vmem:[#allocation2 + $0x109] sm:$0xff]
          %v4671 = vld [vmem:[#allocation2 + $0x111] sm:$0xff]
          %v4672 = vld [vmem:[#allocation2 + $0x129] sm:$0xff]
          %v4673 = vld [vmem:[#allocation2 + $0x131] sm:$0xff]
          %v4674 = vld [vmem:[#allocation2 + $0x149] sm:$0xff]
          %v4675 = vld [vmem:[#allocation2 + $0x151] sm:$0xff]
          %v4676 = vld [vmem:[#allocation2 + $0x169] sm:$0xff]
          %v4677 = vld [vmem:[#allocation2 + $0x171] sm:$0xff]
          %v4678 = vld [vmem:[#allocation2 + $0x189] sm:$0xff]
          %v4679 = vld [vmem:[#allocation2 + $0x191] sm:$0xff]
          %v4680 = vld [vmem:[#allocation2 + $0x1a9] sm:$0xff]
          %v4681 = vld [vmem:[#allocation2 + $0x1b1] sm:$0xff]
          %v4682 = vld [vmem:[#allocation2 + $0x1c9] sm:$0xff]
          %v4683 = vld [vmem:[#allocation2 + $0x1d1] sm:$0xff]
          %v4684 = vld [vmem:[#allocation2 + $0x1e9] sm:$0xff]
          %v4685 = vld [vmem:[#allocation2 + $0x1f1] sm:$0xff]
          %v4686 = vld [vmem:[%s509 + $0x7] sm:$0xff]
          %v4687 = vld [vmem:[%s509 + $0xf] sm:$0xff]
          %v4688 = vld [vmem:[%s509 + $0x27] sm:$0xff]
          %v4689 = vld [vmem:[%s509 + $0x2f] sm:$0xff]
          %v4690 = vld [vmem:[%s509 + $0x47] sm:$0xff]
          %v4691 = vld [vmem:[%s509 + $0x4f] sm:$0xff]
          %v4692 = vld [vmem:[%s509 + $0x67] sm:$0xff]
          %v4693 = vld [vmem:[%s509 + $0x6f] sm:$0xff]
          %v4694 = vld [vmem:[%s509 + $0x87] sm:$0xff]
          %v4695 = vld [vmem:[%s509 + $0x8f] sm:$0xff]
          %v4696 = vld [vmem:[%s509 + $0xa7] sm:$0xff]
          %v4697 = vld [vmem:[%s509 + $0xaf] sm:$0xff]
          %v4698 = vld [vmem:[%s509 + $0xc7] sm:$0xff]
          %v4699 = vld [vmem:[%s509 + $0xcf] sm:$0xff]
          %v4700 = vld [vmem:[%s509 + $0xe7] sm:$0xff]
          %v4701 = vld [vmem:[%s509 + $0xef] sm:$0xff]
          %v4702 = vld [vmem:[%s509 + $0x107] sm:$0xff]
          %v4703 = vld [vmem:[%s509 + $0x10f] sm:$0xff]
          %v4704 = vld [vmem:[%s509 + $0x127] sm:$0xff]
          %v4705 = vld [vmem:[%s509 + $0x12f] sm:$0xff]
          %v4706 = vld [vmem:[%s509 + $0x147] sm:$0xff]
          %v4707 = vld [vmem:[%s509 + $0x14f] sm:$0xff]
          %v4708 = vld [vmem:[%s509 + $0x167] sm:$0xff]
          %v4709 = vld [vmem:[%s509 + $0x16f] sm:$0xff]
          %v4710 = vld [vmem:[%s509 + $0x187] sm:$0xff]
          %v4711 = vld [vmem:[%s509 + $0x18f] sm:$0xff]
          %v4712 = vld [vmem:[%s509 + $0x1a7] sm:$0xff]
          %v4713 = vld [vmem:[%s509 + $0x1af] sm:$0xff]
          %v4714 = vld [vmem:[%s509 + $0x1c7] sm:$0xff]
          %v4715 = vld [vmem:[%s509 + $0x1cf] sm:$0xff]
          %v4716 = vld [vmem:[%s509 + $0x1e7] sm:$0xff]
          %v4717 = vld [vmem:[%s509 + $0x1ef] sm:$0xff]
          %v4718 = vld [vmem:[%s509 + $0x8] sm:$0xff]
          %v4719 = vld [vmem:[%s509 + $0x10] sm:$0xff]
          %v4720 = vld [vmem:[%s509 + $0x28] sm:$0xff]
          %v4721 = vld [vmem:[%s509 + $0x30] sm:$0xff]
          %v4722 = vld [vmem:[%s509 + $0x48] sm:$0xff]
          %v4723 = vld [vmem:[%s509 + $0x50] sm:$0xff]
          %v4724 = vld [vmem:[%s509 + $0x68] sm:$0xff]
          %v4725 = vld [vmem:[%s509 + $0x70] sm:$0xff]
          %v4726 = vld [vmem:[%s509 + $0x88] sm:$0xff]
          %v4727 = vld [vmem:[%s509 + $0x90] sm:$0xff]
          %v4728 = vld [vmem:[%s509 + $0xa8] sm:$0xff]
          %v4729 = vld [vmem:[%s509 + $0xb0] sm:$0xff]
          %v4730 = vld [vmem:[%s509 + $0xc8] sm:$0xff]
          %v4731 = vld [vmem:[%s509 + $0xd0] sm:$0xff]
          %v4732 = vld [vmem:[%s509 + $0xe8] sm:$0xff]
          %v4733 = vld [vmem:[%s509 + $0xf0] sm:$0xff]
          %v4734 = vld [vmem:[%s509 + $0x108] sm:$0xff]
          %v4735 = vld [vmem:[%s509 + $0x110] sm:$0xff]
          %v4736 = vld [vmem:[%s509 + $0x128] sm:$0xff]
          %v4737 = vld [vmem:[%s509 + $0x130] sm:$0xff]
          %v4738 = vld [vmem:[%s509 + $0x148] sm:$0xff]
          %v4739 = vld [vmem:[%s509 + $0x150] sm:$0xff]
          %v4740 = vld [vmem:[%s509 + $0x168] sm:$0xff]
          %v4741 = vld [vmem:[%s509 + $0x170] sm:$0xff]
          %v4742 = vld [vmem:[%s509 + $0x188] sm:$0xff]
          %v4743 = vld [vmem:[%s509 + $0x190] sm:$0xff]
          %v4744 = vld [vmem:[%s509 + $0x1a8] sm:$0xff]
          %v4745 = vld [vmem:[%s509 + $0x1b0] sm:$0xff]
          %v4746 = vld [vmem:[%s509 + $0x1c8] sm:$0xff]
          %v4747 = vld [vmem:[%s509 + $0x1d0] sm:$0xff]
          %v4748 = vld [vmem:[%s509 + $0x1e8] sm:$0xff]
          %v4749 = vld [vmem:[%s509 + $0x1f0] sm:$0xff]
          %v4750 = vld [vmem:[%s509 + $0x9] sm:$0xff]
          %v4751 = vld [vmem:[%s509 + $0x11] sm:$0xff]
          %v4752 = vld [vmem:[%s509 + $0x29] sm:$0xff]
          %v4753 = vld [vmem:[%s509 + $0x31] sm:$0xff]
          %v4754 = vld [vmem:[%s509 + $0x49] sm:$0xff]
          %v4755 = vld [vmem:[%s509 + $0x51] sm:$0xff]
          %v4756 = vld [vmem:[%s509 + $0x69] sm:$0xff]
          %v4757 = vld [vmem:[%s509 + $0x71] sm:$0xff]
          %v4758 = vld [vmem:[%s509 + $0x89] sm:$0xff]
          %v4759 = vld [vmem:[%s509 + $0x91] sm:$0xff]
          %v4760 = vld [vmem:[%s509 + $0xa9] sm:$0xff]
          %v4761 = vld [vmem:[%s509 + $0xb1] sm:$0xff]
          %v4762 = vld [vmem:[%s509 + $0xc9] sm:$0xff]
          %v4763 = vld [vmem:[%s509 + $0xd1] sm:$0xff]
          %v4764 = vld [vmem:[%s509 + $0xe9] sm:$0xff]
          %v4765 = vld [vmem:[%s509 + $0xf1] sm:$0xff]
          %v4766 = vld [vmem:[%s509 + $0x109] sm:$0xff]
          %v4767 = vld [vmem:[%s509 + $0x111] sm:$0xff]
          %v4768 = vld [vmem:[%s509 + $0x129] sm:$0xff]
          %v4769 = vld [vmem:[%s509 + $0x131] sm:$0xff]
          %v4770 = vld [vmem:[%s509 + $0x149] sm:$0xff]
          %v4771 = vld [vmem:[%s509 + $0x151] sm:$0xff]
          %v4772 = vld [vmem:[%s509 + $0x169] sm:$0xff]
          %v4773 = vld [vmem:[%s509 + $0x171] sm:$0xff]
          %v4774 = vld [vmem:[%s509 + $0x189] sm:$0xff]
          %v4775 = vld [vmem:[%s509 + $0x191] sm:$0xff]
          %v4776 = vld [vmem:[%s509 + $0x1a9] sm:$0xff]
          %v4777 = vld [vmem:[%s509 + $0x1b1] sm:$0xff]
          %v4778 = vld [vmem:[%s509 + $0x1c9] sm:$0xff]
          %v4779 = vld [vmem:[%s509 + $0x1d1] sm:$0xff]
          %v4780 = vld [vmem:[%s509 + $0x1e9] sm:$0xff]
          %v4781 = vld [vmem:[%s509 + $0x1f1] sm:$0xff]
          %v4782 = vld [vmem:[%s734 + $0x7] sm:$0xff]
          %v4783 = vld [vmem:[%s734 + $0xf] sm:$0xff]
          %v4784 = vld [vmem:[%s734 + $0x27] sm:$0xff]
          %v4785 = vld [vmem:[%s734 + $0x2f] sm:$0xff]
          %v4786 = vld [vmem:[%s734 + $0x47] sm:$0xff]
          %v4787 = vld [vmem:[%s734 + $0x4f] sm:$0xff]
          %v4788 = vld [vmem:[%s734 + $0x67] sm:$0xff]
          %v4789 = vld [vmem:[%s734 + $0x6f] sm:$0xff]
          %v4790 = vld [vmem:[%s734 + $0x87] sm:$0xff]
          %v4791 = vld [vmem:[%s734 + $0x8f] sm:$0xff]
          %v4792 = vld [vmem:[%s734 + $0xa7] sm:$0xff]
          %v4793 = vld [vmem:[%s734 + $0xaf] sm:$0xff]
          %v4794 = vld [vmem:[%s734 + $0xc7] sm:$0xff]
          %v4795 = vld [vmem:[%s734 + $0xcf] sm:$0xff]
          %v4796 = vld [vmem:[%s734 + $0xe7] sm:$0xff]
          %v4797 = vld [vmem:[%s734 + $0xef] sm:$0xff]
          %v4798 = vld [vmem:[%s734 + $0x107] sm:$0xff]
          %v4799 = vld [vmem:[%s734 + $0x10f] sm:$0xff]
          %v4800 = vld [vmem:[%s734 + $0x127] sm:$0xff]
          %v4801 = vld [vmem:[%s734 + $0x12f] sm:$0xff]
          %v4802 = vld [vmem:[%s734 + $0x147] sm:$0xff]
          %v4803 = vld [vmem:[%s734 + $0x14f] sm:$0xff]
          %v4804 = vld [vmem:[%s734 + $0x167] sm:$0xff]
          %v4805 = vld [vmem:[%s734 + $0x16f] sm:$0xff]
          %v4806 = vld [vmem:[%s734 + $0x187] sm:$0xff]
          %v4807 = vld [vmem:[%s734 + $0x18f] sm:$0xff]
          %v4808 = vld [vmem:[%s734 + $0x1a7] sm:$0xff]
          %v4809 = vld [vmem:[%s734 + $0x1af] sm:$0xff]
          %v4810 = vld [vmem:[%s734 + $0x1c7] sm:$0xff]
          %v4811 = vld [vmem:[%s734 + $0x1cf] sm:$0xff]
          %v4812 = vld [vmem:[%s734 + $0x1e7] sm:$0xff]
          %v4813 = vld [vmem:[%s734 + $0x1ef] sm:$0xff]
          %v4814 = vld [vmem:[%s734 + $0x8] sm:$0xff]
          %v4815 = vld [vmem:[%s734 + $0x10] sm:$0xff]
          %v4816 = vld [vmem:[%s734 + $0x28] sm:$0xff]
          %v4817 = vld [vmem:[%s734 + $0x30] sm:$0xff]
          %v4818 = vld [vmem:[%s734 + $0x48] sm:$0xff]
          %v4819 = vld [vmem:[%s734 + $0x50] sm:$0xff]
          %v4820 = vld [vmem:[%s734 + $0x68] sm:$0xff]
          %v4821 = vld [vmem:[%s734 + $0x70] sm:$0xff]
          %v4822 = vld [vmem:[%s734 + $0x88] sm:$0xff]
          %v4823 = vld [vmem:[%s734 + $0x90] sm:$0xff]
          %v4824 = vld [vmem:[%s734 + $0xa8] sm:$0xff]
          %v4825 = vld [vmem:[%s734 + $0xb0] sm:$0xff]
          %v4826 = vld [vmem:[%s734 + $0xc8] sm:$0xff]
          %v4827 = vld [vmem:[%s734 + $0xd0] sm:$0xff]
          %v4828 = vld [vmem:[%s734 + $0xe8] sm:$0xff]
          %v4829 = vld [vmem:[%s734 + $0xf0] sm:$0xff]
          %v4830 = vld [vmem:[%s734 + $0x108] sm:$0xff]
          %v4831 = vld [vmem:[%s734 + $0x110] sm:$0xff]
          %v4832 = vld [vmem:[%s734 + $0x128] sm:$0xff]
          %v4833 = vld [vmem:[%s734 + $0x130] sm:$0xff]
          %v4834 = vld [vmem:[%s734 + $0x148] sm:$0xff]
          %v4835 = vld [vmem:[%s734 + $0x150] sm:$0xff]
          %v4836 = vld [vmem:[%s734 + $0x168] sm:$0xff]
          %v4837 = vld [vmem:[%s734 + $0x170] sm:$0xff]
          %v4838 = vld [vmem:[%s734 + $0x188] sm:$0xff]
          %v4839 = vld [vmem:[%s734 + $0x190] sm:$0xff]
          %v4840 = vld [vmem:[%s734 + $0x1a8] sm:$0xff]
          %v4841 = vld [vmem:[%s734 + $0x1b0] sm:$0xff]
          %v4842 = vld [vmem:[%s734 + $0x1c8] sm:$0xff]
          %v4843 = vld [vmem:[%s734 + $0x1d0] sm:$0xff]
          %v4844 = vld [vmem:[%s734 + $0x1e8] sm:$0xff]
          %v4845 = vld [vmem:[%s734 + $0x1f0] sm:$0xff]
          %v4846 = vld [vmem:[%s734 + $0x9] sm:$0xff]
          %v4847 = vld [vmem:[%s734 + $0x11] sm:$0xff]
          %v4848 = vld [vmem:[%s734 + $0x29] sm:$0xff]
          %v4849 = vld [vmem:[%s734 + $0x31] sm:$0xff]
          %v4850 = vld [vmem:[%s734 + $0x49] sm:$0xff]
          %v4851 = vld [vmem:[%s734 + $0x51] sm:$0xff]
          %v4852 = vld [vmem:[%s734 + $0x69] sm:$0xff]
          %v4853 = vld [vmem:[%s734 + $0x71] sm:$0xff]
          %v4854 = vld [vmem:[%s734 + $0x89] sm:$0xff]
          %v4855 = vld [vmem:[%s734 + $0x91] sm:$0xff]
          %v4856 = vld [vmem:[%s734 + $0xa9] sm:$0xff]
          %v4857 = vld [vmem:[%s734 + $0xb1] sm:$0xff]
          %v4858 = vld [vmem:[%s734 + $0xc9] sm:$0xff]
          %v4859 = vld [vmem:[%s734 + $0xd1] sm:$0xff]
          %v4860 = vld [vmem:[%s734 + $0xe9] sm:$0xff]
          %v4861 = vld [vmem:[%s734 + $0xf1] sm:$0xff]
          %v4862 = vld [vmem:[%s734 + $0x109] sm:$0xff]
          %v4863 = vld [vmem:[%s734 + $0x111] sm:$0xff]
          %v4864 = vld [vmem:[%s734 + $0x129] sm:$0xff]
          %v4865 = vld [vmem:[%s734 + $0x131] sm:$0xff]
          %v4866 = vld [vmem:[%s734 + $0x149] sm:$0xff]
          %v4867 = vld [vmem:[%s734 + $0x151] sm:$0xff]
          %v4868 = vld [vmem:[%s734 + $0x169] sm:$0xff]
          %v4869 = vld [vmem:[%s734 + $0x171] sm:$0xff]
          %v4870 = vld [vmem:[%s734 + $0x189] sm:$0xff]
          %v4871 = vld [vmem:[%s734 + $0x191] sm:$0xff]
          %v4872 = vld [vmem:[%s734 + $0x1a9] sm:$0xff]
          %v4873 = vld [vmem:[%s734 + $0x1b1] sm:$0xff]
          %v4874 = vld [vmem:[%s734 + $0x1c9] sm:$0xff]
          %v4875 = vld [vmem:[%s734 + $0x1d1] sm:$0xff]
          %v4876 = vld [vmem:[%s734 + $0x1e9] sm:$0xff]
          %v4877 = vld [vmem:[%s734 + $0x1f1] sm:$0xff]
          %4910 = vrot.lane.b32.xlu0 %v4622, 4
          %v4911 = vpop.permute.xlu0 %4910
          %4912 = vrot.lane.b32.xlu0 %v4623, 4
          %v4913 = vpop.permute.xlu0 %4912
          %4914 = vrot.lane.b32.xlu0 %v4624, 4
          %v4915 = vpop.permute.xlu0 %4914
          %4916 = vrot.lane.b32.xlu0 %v4625, 4
          %v4917 = vpop.permute.xlu0 %4916
          %4918 = vrot.lane.b32.xlu0 %v4626, 4
          %v4919 = vpop.permute.xlu0 %4918
          %4920 = vrot.lane.b32.xlu0 %v4627, 4
          %v4921 = vpop.permute.xlu0 %4920
          %4922 = vrot.lane.b32.xlu0 %v4628, 4
          %v4923 = vpop.permute.xlu0 %4922
          %4924 = vrot.lane.b32.xlu0 %v4629, 4
          %v4925 = vpop.permute.xlu0 %4924
          %4926 = vrot.lane.b32.xlu0 %v4630, 4
          %v4927 = vpop.permute.xlu0 %4926
          %4928 = vrot.lane.b32.xlu0 %v4631, 4
          %v4929 = vpop.permute.xlu0 %4928
          %4930 = vrot.lane.b32.xlu0 %v4632, 4
          %v4931 = vpop.permute.xlu0 %4930
          %4932 = vrot.lane.b32.xlu0 %v4633, 4
          %v4933 = vpop.permute.xlu0 %4932
          %4934 = vrot.lane.b32.xlu0 %v4634, 4
          %v4935 = vpop.permute.xlu0 %4934
          %4936 = vrot.lane.b32.xlu0 %v4635, 4
          %v4937 = vpop.permute.xlu0 %4936
          %4938 = vrot.lane.b32.xlu0 %v4636, 4
          %v4939 = vpop.permute.xlu0 %4938
          %4940 = vrot.lane.b32.xlu0 %v4637, 4
          %v4941 = vpop.permute.xlu0 %4940
          %4942 = vrot.lane.b32.xlu0 %v4638, 4
          %v4943 = vpop.permute.xlu0 %4942
          %4944 = vrot.lane.b32.xlu0 %v4639, 4
          %v4945 = vpop.permute.xlu0 %4944
          %4946 = vrot.lane.b32.xlu0 %v4640, 4
          %v4947 = vpop.permute.xlu0 %4946
          %4948 = vrot.lane.b32.xlu0 %v4641, 4
          %v4949 = vpop.permute.xlu0 %4948
          %4950 = vrot.lane.b32.xlu0 %v4642, 4
          %v4951 = vpop.permute.xlu0 %4950
          %4952 = vrot.lane.b32.xlu0 %v4643, 4
          %v4953 = vpop.permute.xlu0 %4952
          %4954 = vrot.lane.b32.xlu0 %v4644, 4
          %v4955 = vpop.permute.xlu0 %4954
          %4956 = vrot.lane.b32.xlu0 %v4645, 4
          %v4957 = vpop.permute.xlu0 %4956
          %4958 = vrot.lane.b32.xlu0 %v4646, 4
          %v4959 = vpop.permute.xlu0 %4958
          %4960 = vrot.lane.b32.xlu0 %v4647, 4
          %v4961 = vpop.permute.xlu0 %4960
          %4962 = vrot.lane.b32.xlu0 %v4648, 4
          %v4963 = vpop.permute.xlu0 %4962
          %4964 = vrot.lane.b32.xlu0 %v4649, 4
          %v4965 = vpop.permute.xlu0 %4964
          %4966 = vrot.lane.b32.xlu0 %v4650, 4
          %v4967 = vpop.permute.xlu0 %4966
          %4968 = vrot.lane.b32.xlu0 %v4651, 4
          %v4969 = vpop.permute.xlu0 %4968
          %4970 = vrot.lane.b32.xlu0 %v4652, 4
          %v4971 = vpop.permute.xlu0 %4970
          %4972 = vrot.lane.b32.xlu0 %v4653, 4
          %v4973 = vpop.permute.xlu0 %4972
          %5038 = vrot.lane.b32.xlu0 %v4654, 8
          %v5039 = vpop.permute.xlu0 %5038
          %5040 = vrot.lane.b32.xlu0 %v4655, 8
          %v5041 = vpop.permute.xlu0 %5040
          %5042 = vrot.lane.b32.xlu0 %v4656, 8
          %v5043 = vpop.permute.xlu0 %5042
          %5044 = vrot.lane.b32.xlu0 %v4657, 8
          %v5045 = vpop.permute.xlu0 %5044
          %5046 = vrot.lane.b32.xlu0 %v4658, 8
          %v5047 = vpop.permute.xlu0 %5046
          %5048 = vrot.lane.b32.xlu0 %v4659, 8
          %v5049 = vpop.permute.xlu0 %5048
          %5050 = vrot.lane.b32.xlu0 %v4660, 8
          %v5051 = vpop.permute.xlu0 %5050
          %5052 = vrot.lane.b32.xlu0 %v4661, 8
          %v5053 = vpop.permute.xlu0 %5052
          %5054 = vrot.lane.b32.xlu0 %v4662, 8
          %v5055 = vpop.permute.xlu0 %5054
          %5056 = vrot.lane.b32.xlu0 %v4663, 8
          %v5057 = vpop.permute.xlu0 %5056
          %5058 = vrot.lane.b32.xlu0 %v4664, 8
          %v5059 = vpop.permute.xlu0 %5058
          %5060 = vrot.lane.b32.xlu0 %v4665, 8
          %v5061 = vpop.permute.xlu0 %5060
          %5062 = vrot.lane.b32.xlu0 %v4666, 8
          %v5063 = vpop.permute.xlu0 %5062
          %5064 = vrot.lane.b32.xlu0 %v4667, 8
          %v5065 = vpop.permute.xlu0 %5064
          %5066 = vrot.lane.b32.xlu0 %v4668, 8
          %v5067 = vpop.permute.xlu0 %5066
          %5068 = vrot.lane.b32.xlu0 %v4669, 8
          %v5069 = vpop.permute.xlu0 %5068
          %5070 = vrot.lane.b32.xlu0 %v4670, 8
          %v5071 = vpop.permute.xlu0 %5070
          %5072 = vrot.lane.b32.xlu0 %v4671, 8
          %v5073 = vpop.permute.xlu0 %5072
          %5074 = vrot.lane.b32.xlu0 %v4672, 8
          %v5075 = vpop.permute.xlu0 %5074
          %5076 = vrot.lane.b32.xlu0 %v4673, 8
          %v5077 = vpop.permute.xlu0 %5076
          %5078 = vrot.lane.b32.xlu0 %v4674, 8
          %v5079 = vpop.permute.xlu0 %5078
          %5080 = vrot.lane.b32.xlu0 %v4675, 8
          %v5081 = vpop.permute.xlu0 %5080
          %5082 = vrot.lane.b32.xlu0 %v4676, 8
          %v5083 = vpop.permute.xlu0 %5082
          %5084 = vrot.lane.b32.xlu0 %v4677, 8
          %v5085 = vpop.permute.xlu0 %5084
          %5086 = vrot.lane.b32.xlu0 %v4678, 8
          %v5087 = vpop.permute.xlu0 %5086
          %5088 = vrot.lane.b32.xlu0 %v4679, 8
          %v5089 = vpop.permute.xlu0 %5088
          %5090 = vrot.lane.b32.xlu0 %v4680, 8
          %v5091 = vpop.permute.xlu0 %5090
          %5092 = vrot.lane.b32.xlu0 %v4681, 8
          %v5093 = vpop.permute.xlu0 %5092
          %5094 = vrot.lane.b32.xlu0 %v4682, 8
          %v5095 = vpop.permute.xlu0 %5094
          %5096 = vrot.lane.b32.xlu0 %v4683, 8
          %v5097 = vpop.permute.xlu0 %5096
          %5098 = vrot.lane.b32.xlu0 %v4684, 8
          %v5099 = vpop.permute.xlu0 %5098
          %5100 = vrot.lane.b32.xlu0 %v4685, 8
          %v5101 = vpop.permute.xlu0 %5100
          %5166 = vrot.lane.b32.xlu0 %v4686, 12
          %v5167 = vpop.permute.xlu0 %5166
          %5168 = vrot.lane.b32.xlu0 %v4687, 12
          %v5169 = vpop.permute.xlu0 %5168
          %5170 = vrot.lane.b32.xlu0 %v4688, 12
          %v5171 = vpop.permute.xlu0 %5170
          %5172 = vrot.lane.b32.xlu0 %v4689, 12
          %v5173 = vpop.permute.xlu0 %5172
          %5174 = vrot.lane.b32.xlu0 %v4690, 12
          %v5175 = vpop.permute.xlu0 %5174
          %5176 = vrot.lane.b32.xlu0 %v4691, 12
          %v5177 = vpop.permute.xlu0 %5176
          %5178 = vrot.lane.b32.xlu0 %v4692, 12
          %v5179 = vpop.permute.xlu0 %5178
          %5180 = vrot.lane.b32.xlu0 %v4693, 12
          %v5181 = vpop.permute.xlu0 %5180
          %5182 = vrot.lane.b32.xlu0 %v4694, 12
          %v5183 = vpop.permute.xlu0 %5182
          %5184 = vrot.lane.b32.xlu0 %v4695, 12
          %v5185 = vpop.permute.xlu0 %5184
          %5186 = vrot.lane.b32.xlu0 %v4696, 12
          %v5187 = vpop.permute.xlu0 %5186
          %5188 = vrot.lane.b32.xlu0 %v4697, 12
          %v5189 = vpop.permute.xlu0 %5188
          %5190 = vrot.lane.b32.xlu0 %v4698, 12
          %v5191 = vpop.permute.xlu0 %5190
          %5192 = vrot.lane.b32.xlu0 %v4699, 12
          %v5193 = vpop.permute.xlu0 %5192
          %5194 = vrot.lane.b32.xlu0 %v4700, 12
          %v5195 = vpop.permute.xlu0 %5194
          %5196 = vrot.lane.b32.xlu0 %v4701, 12
          %v5197 = vpop.permute.xlu0 %5196
          %5198 = vrot.lane.b32.xlu0 %v4702, 12
          %v5199 = vpop.permute.xlu0 %5198
          %5200 = vrot.lane.b32.xlu0 %v4703, 12
          %v5201 = vpop.permute.xlu0 %5200
          %5202 = vrot.lane.b32.xlu0 %v4704, 12
          %v5203 = vpop.permute.xlu0 %5202
          %5204 = vrot.lane.b32.xlu0 %v4705, 12
          %v5205 = vpop.permute.xlu0 %5204
          %5206 = vrot.lane.b32.xlu0 %v4706, 12
          %v5207 = vpop.permute.xlu0 %5206
          %5208 = vrot.lane.b32.xlu0 %v4707, 12
          %v5209 = vpop.permute.xlu0 %5208
          %5210 = vrot.lane.b32.xlu0 %v4708, 12
          %v5211 = vpop.permute.xlu0 %5210
          %5212 = vrot.lane.b32.xlu0 %v4709, 12
          %v5213 = vpop.permute.xlu0 %5212
          %5214 = vrot.lane.b32.xlu0 %v4710, 12
          %v5215 = vpop.permute.xlu0 %5214
          %5216 = vrot.lane.b32.xlu0 %v4711, 12
          %v5217 = vpop.permute.xlu0 %5216
          %5218 = vrot.lane.b32.xlu0 %v4712, 12
          %v5219 = vpop.permute.xlu0 %5218
          %5220 = vrot.lane.b32.xlu0 %v4713, 12
          %v5221 = vpop.permute.xlu0 %5220
          %5222 = vrot.lane.b32.xlu0 %v4714, 12
          %v5223 = vpop.permute.xlu0 %5222
          %5224 = vrot.lane.b32.xlu0 %v4715, 12
          %v5225 = vpop.permute.xlu0 %5224
          %5226 = vrot.lane.b32.xlu0 %v4716, 12
          %v5227 = vpop.permute.xlu0 %5226
          %5228 = vrot.lane.b32.xlu0 %v4717, 12
          %v5229 = vpop.permute.xlu0 %5228
          %5294 = vrot.lane.b32.xlu0 %v4718, 16
          %v5295 = vpop.permute.xlu0 %5294
          %5296 = vrot.lane.b32.xlu0 %v4719, 16
          %v5297 = vpop.permute.xlu0 %5296
          %5298 = vrot.lane.b32.xlu0 %v4720, 16
          %v5299 = vpop.permute.xlu0 %5298
          %5300 = vrot.lane.b32.xlu0 %v4721, 16
          %v5301 = vpop.permute.xlu0 %5300
          %5302 = vrot.lane.b32.xlu0 %v4722, 16
          %v5303 = vpop.permute.xlu0 %5302
          %5304 = vrot.lane.b32.xlu0 %v4723, 16
          %v5305 = vpop.permute.xlu0 %5304
          %5306 = vrot.lane.b32.xlu0 %v4724, 16
          %v5307 = vpop.permute.xlu0 %5306
          %5308 = vrot.lane.b32.xlu0 %v4725, 16
          %v5309 = vpop.permute.xlu0 %5308
          %5310 = vrot.lane.b32.xlu0 %v4726, 16
          %v5311 = vpop.permute.xlu0 %5310
          %5312 = vrot.lane.b32.xlu0 %v4727, 16
          %v5313 = vpop.permute.xlu0 %5312
          %5314 = vrot.lane.b32.xlu0 %v4728, 16
          %v5315 = vpop.permute.xlu0 %5314
          %5316 = vrot.lane.b32.xlu0 %v4729, 16
          %v5317 = vpop.permute.xlu0 %5316
          %5318 = vrot.lane.b32.xlu0 %v4730, 16
          %v5319 = vpop.permute.xlu0 %5318
          %5320 = vrot.lane.b32.xlu0 %v4731, 16
          %v5321 = vpop.permute.xlu0 %5320
          %5322 = vrot.lane.b32.xlu0 %v4732, 16
          %v5323 = vpop.permute.xlu0 %5322
          %5324 = vrot.lane.b32.xlu0 %v4733, 16
          %v5325 = vpop.permute.xlu0 %5324
          %5326 = vrot.lane.b32.xlu0 %v4734, 16
          %v5327 = vpop.permute.xlu0 %5326
          %5328 = vrot.lane.b32.xlu0 %v4735, 16
          %v5329 = vpop.permute.xlu0 %5328
          %5330 = vrot.lane.b32.xlu0 %v4736, 16
          %v5331 = vpop.permute.xlu0 %5330
          %5332 = vrot.lane.b32.xlu0 %v4737, 16
          %v5333 = vpop.permute.xlu0 %5332
          %5334 = vrot.lane.b32.xlu0 %v4738, 16
          %v5335 = vpop.permute.xlu0 %5334
          %5336 = vrot.lane.b32.xlu0 %v4739, 16
          %v5337 = vpop.permute.xlu0 %5336
          %5338 = vrot.lane.b32.xlu0 %v4740, 16
          %v5339 = vpop.permute.xlu0 %5338
          %5340 = vrot.lane.b32.xlu0 %v4741, 16
          %v5341 = vpop.permute.xlu0 %5340
          %5342 = vrot.lane.b32.xlu0 %v4742, 16
          %v5343 = vpop.permute.xlu0 %5342
          %5344 = vrot.lane.b32.xlu0 %v4743, 16
          %v5345 = vpop.permute.xlu0 %5344
          %5346 = vrot.lane.b32.xlu0 %v4744, 16
          %v5347 = vpop.permute.xlu0 %5346
          %5348 = vrot.lane.b32.xlu0 %v4745, 16
          %v5349 = vpop.permute.xlu0 %5348
          %5350 = vrot.lane.b32.xlu0 %v4746, 16
          %v5351 = vpop.permute.xlu0 %5350
          %5352 = vrot.lane.b32.xlu0 %v4747, 16
          %v5353 = vpop.permute.xlu0 %5352
          %5354 = vrot.lane.b32.xlu0 %v4748, 16
          %v5355 = vpop.permute.xlu0 %5354
          %5356 = vrot.lane.b32.xlu0 %v4749, 16
          %v5357 = vpop.permute.xlu0 %5356
          %5422 = vrot.lane.b32.xlu0 %v4750, 20
          %v5423 = vpop.permute.xlu0 %5422
          %5424 = vrot.lane.b32.xlu0 %v4751, 20
          %v5425 = vpop.permute.xlu0 %5424
          %5426 = vrot.lane.b32.xlu0 %v4752, 20
          %v5427 = vpop.permute.xlu0 %5426
          %5428 = vrot.lane.b32.xlu0 %v4753, 20
          %v5429 = vpop.permute.xlu0 %5428
          %5430 = vrot.lane.b32.xlu0 %v4754, 20
          %v5431 = vpop.permute.xlu0 %5430
          %5432 = vrot.lane.b32.xlu0 %v4755, 20
          %v5433 = vpop.permute.xlu0 %5432
          %5434 = vrot.lane.b32.xlu0 %v4756, 20
          %v5435 = vpop.permute.xlu0 %5434
          %5436 = vrot.lane.b32.xlu0 %v4757, 20
          %v5437 = vpop.permute.xlu0 %5436
          %5438 = vrot.lane.b32.xlu0 %v4758, 20
          %v5439 = vpop.permute.xlu0 %5438
          %5440 = vrot.lane.b32.xlu0 %v4759, 20
          %v5441 = vpop.permute.xlu0 %5440
          %5442 = vrot.lane.b32.xlu0 %v4760, 20
          %v5443 = vpop.permute.xlu0 %5442
          %5444 = vrot.lane.b32.xlu0 %v4761, 20
          %v5445 = vpop.permute.xlu0 %5444
          %5446 = vrot.lane.b32.xlu0 %v4762, 20
          %v5447 = vpop.permute.xlu0 %5446
          %5448 = vrot.lane.b32.xlu0 %v4763, 20
          %v5449 = vpop.permute.xlu0 %5448
          %5450 = vrot.lane.b32.xlu0 %v4764, 20
          %v5451 = vpop.permute.xlu0 %5450
          %5452 = vrot.lane.b32.xlu0 %v4765, 20
          %v5453 = vpop.permute.xlu0 %5452
          %5454 = vrot.lane.b32.xlu0 %v4766, 20
          %v5455 = vpop.permute.xlu0 %5454
          %5456 = vrot.lane.b32.xlu0 %v4767, 20
          %v5457 = vpop.permute.xlu0 %5456
          %5458 = vrot.lane.b32.xlu0 %v4768, 20
          %v5459 = vpop.permute.xlu0 %5458
          %5460 = vrot.lane.b32.xlu0 %v4769, 20
          %v5461 = vpop.permute.xlu0 %5460
          %5462 = vrot.lane.b32.xlu0 %v4770, 20
          %v5463 = vpop.permute.xlu0 %5462
          %5464 = vrot.lane.b32.xlu0 %v4771, 20
          %v5465 = vpop.permute.xlu0 %5464
          %5466 = vrot.lane.b32.xlu0 %v4772, 20
          %v5467 = vpop.permute.xlu0 %5466
          %5468 = vrot.lane.b32.xlu0 %v4773, 20
          %v5469 = vpop.permute.xlu0 %5468
          %5470 = vrot.lane.b32.xlu0 %v4774, 20
          %v5471 = vpop.permute.xlu0 %5470
          %5472 = vrot.lane.b32.xlu0 %v4775, 20
          %v5473 = vpop.permute.xlu0 %5472
          %5474 = vrot.lane.b32.xlu0 %v4776, 20
          %v5475 = vpop.permute.xlu0 %5474
          %5476 = vrot.lane.b32.xlu0 %v4777, 20
          %v5477 = vpop.permute.xlu0 %5476
          %5478 = vrot.lane.b32.xlu0 %v4778, 20
          %v5479 = vpop.permute.xlu0 %5478
          %5480 = vrot.lane.b32.xlu0 %v4779, 20
          %v5481 = vpop.permute.xlu0 %5480
          %5482 = vrot.lane.b32.xlu0 %v4780, 20
          %v5483 = vpop.permute.xlu0 %5482
          %5484 = vrot.lane.b32.xlu0 %v4781, 20
          %v5485 = vpop.permute.xlu0 %5484
          %5550 = vrot.lane.b32.xlu0 %v4782, 24
          %v5551 = vpop.permute.xlu0 %5550
          %5552 = vrot.lane.b32.xlu0 %v4783, 24
          %v5553 = vpop.permute.xlu0 %5552
          %5554 = vrot.lane.b32.xlu0 %v4784, 24
          %v5555 = vpop.permute.xlu0 %5554
          %5556 = vrot.lane.b32.xlu0 %v4785, 24
          %v5557 = vpop.permute.xlu0 %5556
          %5558 = vrot.lane.b32.xlu0 %v4786, 24
          %v5559 = vpop.permute.xlu0 %5558
          %5560 = vrot.lane.b32.xlu0 %v4787, 24
          %v5561 = vpop.permute.xlu0 %5560
          %5562 = vrot.lane.b32.xlu0 %v4788, 24
          %v5563 = vpop.permute.xlu0 %5562
          %5564 = vrot.lane.b32.xlu0 %v4789, 24
          %v5565 = vpop.permute.xlu0 %5564
          %5566 = vrot.lane.b32.xlu0 %v4790, 24
          %v5567 = vpop.permute.xlu0 %5566
          %5568 = vrot.lane.b32.xlu0 %v4791, 24
          %v5569 = vpop.permute.xlu0 %5568
          %5570 = vrot.lane.b32.xlu0 %v4792, 24
          %v5571 = vpop.permute.xlu0 %5570
          %5572 = vrot.lane.b32.xlu0 %v4793, 24
          %v5573 = vpop.permute.xlu0 %5572
          %5574 = vrot.lane.b32.xlu0 %v4794, 24
          %v5575 = vpop.permute.xlu0 %5574
          %5576 = vrot.lane.b32.xlu0 %v4795, 24
          %v5577 = vpop.permute.xlu0 %5576
          %5578 = vrot.lane.b32.xlu0 %v4796, 24
          %v5579 = vpop.permute.xlu0 %5578
          %5580 = vrot.lane.b32.xlu0 %v4797, 24
          %v5581 = vpop.permute.xlu0 %5580
          %5582 = vrot.lane.b32.xlu0 %v4798, 24
          %v5583 = vpop.permute.xlu0 %5582
          %5584 = vrot.lane.b32.xlu0 %v4799, 24
          %v5585 = vpop.permute.xlu0 %5584
          %5586 = vrot.lane.b32.xlu0 %v4800, 24
          %v5587 = vpop.permute.xlu0 %5586
          %5588 = vrot.lane.b32.xlu0 %v4801, 24
          %v5589 = vpop.permute.xlu0 %5588
          %5590 = vrot.lane.b32.xlu0 %v4802, 24
          %v5591 = vpop.permute.xlu0 %5590
          %5592 = vrot.lane.b32.xlu0 %v4803, 24
          %v5593 = vpop.permute.xlu0 %5592
          %5594 = vrot.lane.b32.xlu0 %v4804, 24
          %v5595 = vpop.permute.xlu0 %5594
          %5596 = vrot.lane.b32.xlu0 %v4805, 24
          %v5597 = vpop.permute.xlu0 %5596
          %5598 = vrot.lane.b32.xlu0 %v4806, 24
          %v5599 = vpop.permute.xlu0 %5598
          %5600 = vrot.lane.b32.xlu0 %v4807, 24
          %v5601 = vpop.permute.xlu0 %5600
          %5602 = vrot.lane.b32.xlu0 %v4808, 24
          %v5603 = vpop.permute.xlu0 %5602
          %5604 = vrot.lane.b32.xlu0 %v4809, 24
          %v5605 = vpop.permute.xlu0 %5604
          %5606 = vrot.lane.b32.xlu0 %v4810, 24
          %v5607 = vpop.permute.xlu0 %5606
          %5608 = vrot.lane.b32.xlu0 %v4811, 24
          %v5609 = vpop.permute.xlu0 %5608
          %5610 = vrot.lane.b32.xlu0 %v4812, 24
          %v5611 = vpop.permute.xlu0 %5610
          %5612 = vrot.lane.b32.xlu0 %v4813, 24
          %v5613 = vpop.permute.xlu0 %5612
          %5678 = vrot.lane.b32.xlu0 %v4814, 28
          %v5679 = vpop.permute.xlu0 %5678
          %5680 = vrot.lane.b32.xlu0 %v4815, 28
          %v5681 = vpop.permute.xlu0 %5680
          %5682 = vrot.lane.b32.xlu0 %v4816, 28
          %v5683 = vpop.permute.xlu0 %5682
          %5684 = vrot.lane.b32.xlu0 %v4817, 28
          %v5685 = vpop.permute.xlu0 %5684
          %5686 = vrot.lane.b32.xlu0 %v4818, 28
          %v5687 = vpop.permute.xlu0 %5686
          %5688 = vrot.lane.b32.xlu0 %v4819, 28
          %v5689 = vpop.permute.xlu0 %5688
          %5690 = vrot.lane.b32.xlu0 %v4820, 28
          %v5691 = vpop.permute.xlu0 %5690
          %5692 = vrot.lane.b32.xlu0 %v4821, 28
          %v5693 = vpop.permute.xlu0 %5692
          %5694 = vrot.lane.b32.xlu0 %v4822, 28
          %v5695 = vpop.permute.xlu0 %5694
          %5696 = vrot.lane.b32.xlu0 %v4823, 28
          %v5697 = vpop.permute.xlu0 %5696
          %5698 = vrot.lane.b32.xlu0 %v4824, 28
          %v5699 = vpop.permute.xlu0 %5698
          %5700 = vrot.lane.b32.xlu0 %v4825, 28
          %v5701 = vpop.permute.xlu0 %5700
          %5702 = vrot.lane.b32.xlu0 %v4826, 28
          %v5703 = vpop.permute.xlu0 %5702
          %5704 = vrot.lane.b32.xlu0 %v4827, 28
          %v5705 = vpop.permute.xlu0 %5704
          %5706 = vrot.lane.b32.xlu0 %v4828, 28
          %v5707 = vpop.permute.xlu0 %5706
          %5708 = vrot.lane.b32.xlu0 %v4829, 28
          %v5709 = vpop.permute.xlu0 %5708
          %5710 = vrot.lane.b32.xlu0 %v4830, 28
          %v5711 = vpop.permute.xlu0 %5710
          %5712 = vrot.lane.b32.xlu0 %v4831, 28
          %v5713 = vpop.permute.xlu0 %5712
          %5714 = vrot.lane.b32.xlu0 %v4832, 28
          %v5715 = vpop.permute.xlu0 %5714
          %5716 = vrot.lane.b32.xlu0 %v4833, 28
          %v5717 = vpop.permute.xlu0 %5716
          %5718 = vrot.lane.b32.xlu0 %v4834, 28
          %v5719 = vpop.permute.xlu0 %5718
          %5720 = vrot.lane.b32.xlu0 %v4835, 28
          %v5721 = vpop.permute.xlu0 %5720
          %5722 = vrot.lane.b32.xlu0 %v4836, 28
          %v5723 = vpop.permute.xlu0 %5722
          %5724 = vrot.lane.b32.xlu0 %v4837, 28
          %v5725 = vpop.permute.xlu0 %5724
          %5726 = vrot.lane.b32.xlu0 %v4838, 28
          %v5727 = vpop.permute.xlu0 %5726
          %5728 = vrot.lane.b32.xlu0 %v4839, 28
          %v5729 = vpop.permute.xlu0 %5728
          %5730 = vrot.lane.b32.xlu0 %v4840, 28
          %v5731 = vpop.permute.xlu0 %5730
          %5732 = vrot.lane.b32.xlu0 %v4841, 28
          %v5733 = vpop.permute.xlu0 %5732
          %5734 = vrot.lane.b32.xlu0 %v4842, 28
          %v5735 = vpop.permute.xlu0 %5734
          %5736 = vrot.lane.b32.xlu0 %v4843, 28
          %v5737 = vpop.permute.xlu0 %5736
          %5738 = vrot.lane.b32.xlu0 %v4844, 28
          %v5739 = vpop.permute.xlu0 %5738
          %5740 = vrot.lane.b32.xlu0 %v4845, 28
          %v5741 = vpop.permute.xlu0 %5740
          %5806 = vrot.lane.b32.xlu0 %v4846, 32
          %v5807 = vpop.permute.xlu0 %5806
          %5808 = vrot.lane.b32.xlu0 %v4847, 32
          %v5809 = vpop.permute.xlu0 %5808
          %5810 = vrot.lane.b32.xlu0 %v4848, 32
          %v5811 = vpop.permute.xlu0 %5810
          %5812 = vrot.lane.b32.xlu0 %v4849, 32
          %v5813 = vpop.permute.xlu0 %5812
          %5814 = vrot.lane.b32.xlu0 %v4850, 32
          %v5815 = vpop.permute.xlu0 %5814
          %5816 = vrot.lane.b32.xlu0 %v4851, 32
          %v5817 = vpop.permute.xlu0 %5816
          %5818 = vrot.lane.b32.xlu0 %v4852, 32
          %v5819 = vpop.permute.xlu0 %5818
          %5820 = vrot.lane.b32.xlu0 %v4853, 32
          %v5821 = vpop.permute.xlu0 %5820
          %5822 = vrot.lane.b32.xlu0 %v4854, 32
          %v5823 = vpop.permute.xlu0 %5822
          %5824 = vrot.lane.b32.xlu0 %v4855, 32
          %v5825 = vpop.permute.xlu0 %5824
          %5826 = vrot.lane.b32.xlu0 %v4856, 32
          %v5827 = vpop.permute.xlu0 %5826
          %5828 = vrot.lane.b32.xlu0 %v4857, 32
          %v5829 = vpop.permute.xlu0 %5828
          %5830 = vrot.lane.b32.xlu0 %v4858, 32
          %v5831 = vpop.permute.xlu0 %5830
          %5832 = vrot.lane.b32.xlu0 %v4859, 32
          %v5833 = vpop.permute.xlu0 %5832
          %5834 = vrot.lane.b32.xlu0 %v4860, 32
          %v5835 = vpop.permute.xlu0 %5834
          %5836 = vrot.lane.b32.xlu0 %v4861, 32
          %v5837 = vpop.permute.xlu0 %5836
          %5838 = vrot.lane.b32.xlu0 %v4862, 32
          %v5839 = vpop.permute.xlu0 %5838
          %5840 = vrot.lane.b32.xlu0 %v4863, 32
          %v5841 = vpop.permute.xlu0 %5840
          %5842 = vrot.lane.b32.xlu0 %v4864, 32
          %v5843 = vpop.permute.xlu0 %5842
          %5844 = vrot.lane.b32.xlu0 %v4865, 32
          %v5845 = vpop.permute.xlu0 %5844
          %5846 = vrot.lane.b32.xlu0 %v4866, 32
          %v5847 = vpop.permute.xlu0 %5846
          %5848 = vrot.lane.b32.xlu0 %v4867, 32
          %v5849 = vpop.permute.xlu0 %5848
          %5850 = vrot.lane.b32.xlu0 %v4868, 32
          %v5851 = vpop.permute.xlu0 %5850
          %5852 = vrot.lane.b32.xlu0 %v4869, 32
          %v5853 = vpop.permute.xlu0 %5852
          %5854 = vrot.lane.b32.xlu0 %v4870, 32
          %v5855 = vpop.permute.xlu0 %5854
          %5856 = vrot.lane.b32.xlu0 %v4871, 32
          %v5857 = vpop.permute.xlu0 %5856
          %5858 = vrot.lane.b32.xlu0 %v4872, 32
          %v5859 = vpop.permute.xlu0 %5858
          %5860 = vrot.lane.b32.xlu0 %v4873, 32
          %v5861 = vpop.permute.xlu0 %5860
          %5862 = vrot.lane.b32.xlu0 %v4874, 32
          %v5863 = vpop.permute.xlu0 %5862
          %5864 = vrot.lane.b32.xlu0 %v4875, 32
          %v5865 = vpop.permute.xlu0 %5864
          %5866 = vrot.lane.b32.xlu0 %v4876, 32
          %v5867 = vpop.permute.xlu0 %5866
          %5868 = vrot.lane.b32.xlu0 %v4877, 32
          %v5869 = vpop.permute.xlu0 %5868
          %v5902 = vsel %vm321, %v4590, %v4911
          %v5903 = vsel %vm321, %v4591, %v4913
          %v5904 = vsel %vm321, %v4592, %v4915
          %v5905 = vsel %vm321, %v4593, %v4917
          %v5906 = vsel %vm321, %v4594, %v4919
          %v5907 = vsel %vm321, %v4595, %v4921
          %v5908 = vsel %vm321, %v4596, %v4923
          %v5909 = vsel %vm321, %v4597, %v4925
          %v5910 = vsel %vm321, %v4598, %v4927
          %v5911 = vsel %vm321, %v4599, %v4929
          %v5912 = vsel %vm321, %v4600, %v4931
          %v5913 = vsel %vm321, %v4601, %v4933
          %v5914 = vsel %vm321, %v4602, %v4935
          %v5915 = vsel %vm321, %v4603, %v4937
          %v5916 = vsel %vm321, %v4604, %v4939
          %v5917 = vsel %vm321, %v4605, %v4941
          %v5918 = vsel %vm321, %v4606, %v4943
          %v5919 = vsel %vm321, %v4607, %v4945
          %v5920 = vsel %vm321, %v4608, %v4947
          %v5921 = vsel %vm321, %v4609, %v4949
          %v5922 = vsel %vm321, %v4610, %v4951
          %v5923 = vsel %vm321, %v4611, %v4953
          %v5924 = vsel %vm321, %v4612, %v4955
          %v5925 = vsel %vm321, %v4613, %v4957
          %v5926 = vsel %vm321, %v4614, %v4959
          %v5927 = vsel %vm321, %v4615, %v4961
          %v5928 = vsel %vm321, %v4616, %v4963
          %v5929 = vsel %vm321, %v4617, %v4965
          %v5930 = vsel %vm321, %v4618, %v4967
          %v5931 = vsel %vm321, %v4619, %v4969
          %v5932 = vsel %vm321, %v4620, %v4971
          %v5933 = vsel %vm321, %v4621, %v4973
          %v5934 = vsel %vm367, %v5902, %v5039
          %v5935 = vsel %vm367, %v5903, %v5041
          %v5936 = vsel %vm367, %v5904, %v5043
          %v5937 = vsel %vm367, %v5905, %v5045
          %v5938 = vsel %vm367, %v5906, %v5047
          %v5939 = vsel %vm367, %v5907, %v5049
          %v5940 = vsel %vm367, %v5908, %v5051
          %v5941 = vsel %vm367, %v5909, %v5053
          %v5942 = vsel %vm367, %v5910, %v5055
          %v5943 = vsel %vm367, %v5911, %v5057
          %v5944 = vsel %vm367, %v5912, %v5059
          %v5945 = vsel %vm367, %v5913, %v5061
          %v5946 = vsel %vm367, %v5914, %v5063
          %v5947 = vsel %vm367, %v5915, %v5065
          %v5948 = vsel %vm367, %v5916, %v5067
          %v5949 = vsel %vm367, %v5917, %v5069
          %v5950 = vsel %vm367, %v5918, %v5071
          %v5951 = vsel %vm367, %v5919, %v5073
          %v5952 = vsel %vm367, %v5920, %v5075
          %v5953 = vsel %vm367, %v5921, %v5077
          %v5954 = vsel %vm367, %v5922, %v5079
          %v5955 = vsel %vm367, %v5923, %v5081
          %v5956 = vsel %vm367, %v5924, %v5083
          %v5957 = vsel %vm367, %v5925, %v5085
          %v5958 = vsel %vm367, %v5926, %v5087
          %v5959 = vsel %vm367, %v5927, %v5089
          %v5960 = vsel %vm367, %v5928, %v5091
          %v5961 = vsel %vm367, %v5929, %v5093
          %v5962 = vsel %vm367, %v5930, %v5095
          %v5963 = vsel %vm367, %v5931, %v5097
          %v5964 = vsel %vm367, %v5932, %v5099
          %v5965 = vsel %vm367, %v5933, %v5101
          %v5966 = vsel %vm1919, %v5934, %v5167
          %v5967 = vsel %vm1919, %v5935, %v5169
          %v5968 = vsel %vm1919, %v5936, %v5171
          %v5969 = vsel %vm1919, %v5937, %v5173
          %v5970 = vsel %vm1919, %v5938, %v5175
          %v5971 = vsel %vm1919, %v5939, %v5177
          %v5972 = vsel %vm1919, %v5940, %v5179
          %v5973 = vsel %vm1919, %v5941, %v5181
          %v5974 = vsel %vm1919, %v5942, %v5183
          %v5975 = vsel %vm1919, %v5943, %v5185
          %v5976 = vsel %vm1919, %v5944, %v5187
          %v5977 = vsel %vm1919, %v5945, %v5189
          %v5978 = vsel %vm1919, %v5946, %v5191
          %v5979 = vsel %vm1919, %v5947, %v5193
          %v5980 = vsel %vm1919, %v5948, %v5195
          %v5981 = vsel %vm1919, %v5949, %v5197
          %v5982 = vsel %vm1919, %v5950, %v5199
          %v5983 = vsel %vm1919, %v5951, %v5201
          %v5984 = vsel %vm1919, %v5952, %v5203
          %v5985 = vsel %vm1919, %v5953, %v5205
          %v5986 = vsel %vm1919, %v5954, %v5207
          %v5987 = vsel %vm1919, %v5955, %v5209
          %v5988 = vsel %vm1919, %v5956, %v5211
          %v5989 = vsel %vm1919, %v5957, %v5213
          %v5990 = vsel %vm1919, %v5958, %v5215
          %v5991 = vsel %vm1919, %v5959, %v5217
          %v5992 = vsel %vm1919, %v5960, %v5219
          %v5993 = vsel %vm1919, %v5961, %v5221
          %v5994 = vsel %vm1919, %v5962, %v5223
          %v5995 = vsel %vm1919, %v5963, %v5225
          %v5996 = vsel %vm1919, %v5964, %v5227
          %v5997 = vsel %vm1919, %v5965, %v5229
          %v5998 = vsel %vm1952, %v5966, %v5295
          %v5999 = vsel %vm1952, %v5967, %v5297
          %v6000 = vsel %vm1952, %v5968, %v5299
          %v6001 = vsel %vm1952, %v5969, %v5301
          %v6002 = vsel %vm1952, %v5970, %v5303
          %v6003 = vsel %vm1952, %v5971, %v5305
          %v6004 = vsel %vm1952, %v5972, %v5307
          %v6005 = vsel %vm1952, %v5973, %v5309
          %v6006 = vsel %vm1952, %v5974, %v5311
          %v6007 = vsel %vm1952, %v5975, %v5313
          %v6008 = vsel %vm1952, %v5976, %v5315
          %v6009 = vsel %vm1952, %v5977, %v5317
          %v6010 = vsel %vm1952, %v5978, %v5319
          %v6011 = vsel %vm1952, %v5979, %v5321
          %v6012 = vsel %vm1952, %v5980, %v5323
          %v6013 = vsel %vm1952, %v5981, %v5325
          %v6014 = vsel %vm1952, %v5982, %v5327
          %v6015 = vsel %vm1952, %v5983, %v5329
          %v6016 = vsel %vm1952, %v5984, %v5331
          %v6017 = vsel %vm1952, %v5985, %v5333
          %v6018 = vsel %vm1952, %v5986, %v5335
          %v6019 = vsel %vm1952, %v5987, %v5337
          %v6020 = vsel %vm1952, %v5988, %v5339
          %v6021 = vsel %vm1952, %v5989, %v5341
          %v6022 = vsel %vm1952, %v5990, %v5343
          %v6023 = vsel %vm1952, %v5991, %v5345
          %v6024 = vsel %vm1952, %v5992, %v5347
          %v6025 = vsel %vm1952, %v5993, %v5349
          %v6026 = vsel %vm1952, %v5994, %v5351
          %v6027 = vsel %vm1952, %v5995, %v5353
          %v6028 = vsel %vm1952, %v5996, %v5355
          %v6029 = vsel %vm1952, %v5997, %v5357
          %v6030 = vsel %vm1985, %v5998, %v5423
          %v6031 = vsel %vm1985, %v5999, %v5425
          %v6032 = vsel %vm1985, %v6000, %v5427
          %v6033 = vsel %vm1985, %v6001, %v5429
          %v6034 = vsel %vm1985, %v6002, %v5431
          %v6035 = vsel %vm1985, %v6003, %v5433
          %v6036 = vsel %vm1985, %v6004, %v5435
          %v6037 = vsel %vm1985, %v6005, %v5437
          %v6038 = vsel %vm1985, %v6006, %v5439
          %v6039 = vsel %vm1985, %v6007, %v5441
          %v6040 = vsel %vm1985, %v6008, %v5443
          %v6041 = vsel %vm1985, %v6009, %v5445
          %v6042 = vsel %vm1985, %v6010, %v5447
          %v6043 = vsel %vm1985, %v6011, %v5449
          %v6044 = vsel %vm1985, %v6012, %v5451
          %v6045 = vsel %vm1985, %v6013, %v5453
          %v6046 = vsel %vm1985, %v6014, %v5455
          %v6047 = vsel %vm1985, %v6015, %v5457
          %v6048 = vsel %vm1985, %v6016, %v5459
          %v6049 = vsel %vm1985, %v6017, %v5461
          %v6050 = vsel %vm1985, %v6018, %v5463
          %v6051 = vsel %vm1985, %v6019, %v5465
          %v6052 = vsel %vm1985, %v6020, %v5467
          %v6053 = vsel %vm1985, %v6021, %v5469
          %v6054 = vsel %vm1985, %v6022, %v5471
          %v6055 = vsel %vm1985, %v6023, %v5473
          %v6056 = vsel %vm1985, %v6024, %v5475
          %v6057 = vsel %vm1985, %v6025, %v5477
          %v6058 = vsel %vm1985, %v6026, %v5479
          %v6059 = vsel %vm1985, %v6027, %v5481
          %v6060 = vsel %vm1985, %v6028, %v5483
          %v6061 = vsel %vm1985, %v6029, %v5485
          %v6062 = vsel %vm2018, %v6030, %v5551
          %v6063 = vsel %vm2018, %v6031, %v5553
          %v6064 = vsel %vm2018, %v6032, %v5555
          %v6065 = vsel %vm2018, %v6033, %v5557
          %v6066 = vsel %vm2018, %v6034, %v5559
          %v6067 = vsel %vm2018, %v6035, %v5561
          %v6068 = vsel %vm2018, %v6036, %v5563
          %v6069 = vsel %vm2018, %v6037, %v5565
          %v6070 = vsel %vm2018, %v6038, %v5567
          %v6071 = vsel %vm2018, %v6039, %v5569
          %v6072 = vsel %vm2018, %v6040, %v5571
          %v6073 = vsel %vm2018, %v6041, %v5573
          %v6074 = vsel %vm2018, %v6042, %v5575
          %v6075 = vsel %vm2018, %v6043, %v5577
          %v6076 = vsel %vm2018, %v6044, %v5579
          %v6077 = vsel %vm2018, %v6045, %v5581
          %v6078 = vsel %vm2018, %v6046, %v5583
          %v6079 = vsel %vm2018, %v6047, %v5585
          %v6080 = vsel %vm2018, %v6048, %v5587
          %v6081 = vsel %vm2018, %v6049, %v5589
          %v6082 = vsel %vm2018, %v6050, %v5591
          %v6083 = vsel %vm2018, %v6051, %v5593
          %v6084 = vsel %vm2018, %v6052, %v5595
          %v6085 = vsel %vm2018, %v6053, %v5597
          %v6086 = vsel %vm2018, %v6054, %v5599
          %v6087 = vsel %vm2018, %v6055, %v5601
          %v6088 = vsel %vm2018, %v6056, %v5603
          %v6089 = vsel %vm2018, %v6057, %v5605
          %v6090 = vsel %vm2018, %v6058, %v5607
          %v6091 = vsel %vm2018, %v6059, %v5609
          %v6092 = vsel %vm2018, %v6060, %v5611
          %v6093 = vsel %vm2018, %v6061, %v5613
          %v6094 = vsel %vm2051, %v6062, %v5679
          %v6095 = vsel %vm2051, %v6063, %v5681
          %v6096 = vsel %vm2051, %v6064, %v5683
          %v6097 = vsel %vm2051, %v6065, %v5685
          %v6098 = vsel %vm2051, %v6066, %v5687
          %v6099 = vsel %vm2051, %v6067, %v5689
          %v6100 = vsel %vm2051, %v6068, %v5691
          %v6101 = vsel %vm2051, %v6069, %v5693
          %v6102 = vsel %vm2051, %v6070, %v5695
          %v6103 = vsel %vm2051, %v6071, %v5697
          %v6104 = vsel %vm2051, %v6072, %v5699
          %v6105 = vsel %vm2051, %v6073, %v5701
          %v6106 = vsel %vm2051, %v6074, %v5703
          %v6107 = vsel %vm2051, %v6075, %v5705
          %v6108 = vsel %vm2051, %v6076, %v5707
          %v6109 = vsel %vm2051, %v6077, %v5709
          %v6110 = vsel %vm2051, %v6078, %v5711
          %v6111 = vsel %vm2051, %v6079, %v5713
          %v6112 = vsel %vm2051, %v6080, %v5715
          %v6113 = vsel %vm2051, %v6081, %v5717
          %v6114 = vsel %vm2051, %v6082, %v5719
          %v6115 = vsel %vm2051, %v6083, %v5721
          %v6116 = vsel %vm2051, %v6084, %v5723
          %v6117 = vsel %vm2051, %v6085, %v5725
          %v6118 = vsel %vm2051, %v6086, %v5727
          %v6119 = vsel %vm2051, %v6087, %v5729
          %v6120 = vsel %vm2051, %v6088, %v5731
          %v6121 = vsel %vm2051, %v6089, %v5733
          %v6122 = vsel %vm2051, %v6090, %v5735
          %v6123 = vsel %vm2051, %v6091, %v5737
          %v6124 = vsel %vm2051, %v6092, %v5739
          %v6125 = vsel %vm2051, %v6093, %v5741
          %v6126 = vsel %vm2084, %v6094, %v5807
          %v6127 = vsel %vm2084, %v6095, %v5809
          %v6128 = vsel %vm2084, %v6096, %v5811
          %v6129 = vsel %vm2084, %v6097, %v5813
          %v6130 = vsel %vm2084, %v6098, %v5815
          %v6131 = vsel %vm2084, %v6099, %v5817
          %v6132 = vsel %vm2084, %v6100, %v5819
          %v6133 = vsel %vm2084, %v6101, %v5821
          %v6134 = vsel %vm2084, %v6102, %v5823
          %v6135 = vsel %vm2084, %v6103, %v5825
          %v6136 = vsel %vm2084, %v6104, %v5827
          %v6137 = vsel %vm2084, %v6105, %v5829
          %v6138 = vsel %vm2084, %v6106, %v5831
          %v6139 = vsel %vm2084, %v6107, %v5833
          %v6140 = vsel %vm2084, %v6108, %v5835
          %v6141 = vsel %vm2084, %v6109, %v5837
          %v6142 = vsel %vm2084, %v6110, %v5839
          %v6143 = vsel %vm2084, %v6111, %v5841
          %v6144 = vsel %vm2084, %v6112, %v5843
          %v6145 = vsel %vm2084, %v6113, %v5845
          %v6146 = vsel %vm2084, %v6114, %v5847
          %v6147 = vsel %vm2084, %v6115, %v5849
          %v6148 = vsel %vm2084, %v6116, %v5851
          %v6149 = vsel %vm2084, %v6117, %v5853
          %v6150 = vsel %vm2084, %v6118, %v5855
          %v6151 = vsel %vm2084, %v6119, %v5857
          %v6152 = vsel %vm2084, %v6120, %v5859
          %v6153 = vsel %vm2084, %v6121, %v5861
          %v6154 = vsel %vm2084, %v6122, %v5863
          %v6155 = vsel %vm2084, %v6123, %v5865
          %v6156 = vsel %vm2084, %v6124, %v5867
          %v6157 = vsel %vm2084, %v6125, %v5869
          %v6158 = vpack.c.bf16 %v6127, %v6126
          %v6159 = vpack.c.bf16 %v6129, %v6128
          %v6160 = vpack.c.bf16 %v6131, %v6130
          %v6161 = vpack.c.bf16 %v6133, %v6132
          %v6162 = vpack.c.bf16 %v6135, %v6134
          %v6163 = vpack.c.bf16 %v6137, %v6136
          %v6164 = vpack.c.bf16 %v6139, %v6138
          %v6165 = vpack.c.bf16 %v6141, %v6140
          %v6166 = vpack.c.bf16 %v6143, %v6142
          %v6167 = vpack.c.bf16 %v6145, %v6144
          %v6168 = vpack.c.bf16 %v6147, %v6146
          %v6169 = vpack.c.bf16 %v6149, %v6148
          %v6170 = vpack.c.bf16 %v6151, %v6150
          %v6171 = vpack.c.bf16 %v6153, %v6152
          %v6172 = vpack.c.bf16 %v6155, %v6154
          %v6173 = vpack.c.bf16 %v6157, %v6156
          %s6174 = smul.u32 %s2400, 5
          %s6175 = smul.addr %s6174, 4
          %s6176 = scalar_lea.vmem %s5, %s6175
          %v6177 = vld [vmem:[%s6176] sm:$0xf]
          %v6178 = vld [vmem:[%s6176 + $0x4] sm:$0xf]
          %v6179 = vld [vmem:[%s6176 + $0x8] sm:$0xf]
          %v6180 = vld [vmem:[%s6176 + $0xc] sm:$0xf]
          %v6181 = vld [vmem:[%s6176 + $0x10] sm:$0x3]
          %v6187 = vunpack.c.l.b16 %v6177
          %v6188 = vunpack.c.l.b16 %v6178
          %v6189 = vunpack.c.l.b16 %v6179
          %v6190 = vunpack.c.l.b16 %v6180
          %v6191 = vunpack.c.l.b16 %v6181
          %v6192 = vpack.c.b16 %v6188, %v6187
          %v6193 = vpack.c.b16 %v6190, %v6189
          %v6194 = vpack.c.b16 %v6191, %v6191
          %v6198 = vsel %vm2153, %v6158, 0
          %v6201 = vsel %vm2153, %v6159, 0
          %v6204 = vsel %vm2153, %v6160, 0
          %v6207 = vsel %vm2153, %v6161, 0
          %v6210 = vsel %vm2153, %v6162, 0
          %v6213 = vsel %vm2153, %v6163, 0
          %v6216 = vsel %vm2153, %v6164, 0
          %v6219 = vsel %vm2153, %v6165, 0
          %v6222 = vsel %vm2153, %v6166, 0
          %v6225 = vsel %vm2153, %v6167, 0
          %v6228 = vsel %vm2153, %v6168, 0
          %v6231 = vsel %vm2153, %v6169, 0
          %v6234 = vsel %vm2153, %v6170, 0
          %v6237 = vsel %vm2153, %v6171, 0
          %v6240 = vsel %vm2153, %v6172, 0
          %v6243 = vsel %vm2153, %v6173, 0
          %v6246 = vsel %vm2202, %v6194, 0
          %6248 = vmatprep.subr.bf16.mxu0 0
          %6249 = vmatpush1.bf16.msra.mxu0 0
          %6250 = vmatprep.subr.bf16.mxu0 0
          %6251 = vmatpush1.bf16.msra.mxu0 0
          %6252 = vmatprep.subr.bf16.mxu0 0
          %6253 = vmatpush1.bf16.msra.mxu0 0
          %6254 = vmatprep.subr.bf16.mxu0 0
          %6255 = vmatpush1.bf16.msra.mxu0 0
          %6256 = vmatprep.subr.bf16.mxu0 0
          %6257 = vmatpush1.bf16.msra.mxu0 0
          %6258 = vmatprep.subr.bf16.mxu0 0
          %6259 = vmatpush1.bf16.msra.mxu0 %v6246
          %6260 = vmatprep.subr.bf16.mxu0 0
          %6261 = vmatpush1.bf16.msra.mxu0 %v6193
          %6262 = vmatprep.subr.bf16.mxu0 0
          %6263 = vmatpush1.bf16.msra.mxu0 %v6192
          %6264 = vmatprep.subr.bf16.mxu0 0
          %6265 = vmatpush2.bf16.msra.mxu0 0
          %6266 = vmatprep.subr.bf16.mxu0 0
          %6267 = vmatpush2.bf16.msra.mxu0 0
          %6268 = vmatprep.subr.bf16.mxu0 0
          %6269 = vmatpush2.bf16.msra.mxu0 0
          %6270 = vmatprep.subr.bf16.mxu0 0
          %6271 = vmatpush2.bf16.msra.mxu0 0
          %6272 = vmatprep.subr.bf16.mxu0 0
          %6273 = vmatpush2.bf16.msra.mxu0 0
          %6274 = vmatprep.subr.bf16.mxu0 0
          %6275 = vmatpush2.bf16.msra.mxu0 0
          %6276 = vmatprep.subr.bf16.mxu0 0
          %6277 = vmatpush2.bf16.msra.mxu0 0
          %6278 = vmatprep.subr.bf16.mxu0 0
          %6279 = vmatpush2.bf16.msra.mxu0 0
          %6280 = vmatprep.mubr.bf16.mxu0 0
          %6281 = vmatmul.mubr.bf16.gmra.mxu0 %v6198
          %v6282 = vpop.f32.mrf.mxu0
          %v6283 = vadd.f32 0.0, %v6282
          %v6284 = vpop.f32.mrf.mxu0
          %v6285 = vpop.f32.mrf.mxu0
          %v6286 = vadd.f32 0.0, %v6285
          %v6287 = vpop.f32.mrf.mxu0
          %6288 = vmatprep.mubr.bf16.mxu0 0
          %6289 = vmatmul.mubr.bf16.gmra.mxu0 %v6201
          %v6290 = vpop.f32.mrf.mxu0
          %v6291 = vadd.f32 0.0, %v6290
          %v6292 = vpop.f32.mrf.mxu0
          %v6293 = vpop.f32.mrf.mxu0
          %v6294 = vadd.f32 0.0, %v6293
          %v6295 = vpop.f32.mrf.mxu0
          %6296 = vmatprep.mubr.bf16.mxu0 0
          %6297 = vmatmul.mubr.bf16.gmra.mxu0 %v6204
          %v6298 = vpop.f32.mrf.mxu0
          %v6299 = vadd.f32 0.0, %v6298
          %v6300 = vpop.f32.mrf.mxu0
          %v6301 = vpop.f32.mrf.mxu0
          %v6302 = vadd.f32 0.0, %v6301
          %v6303 = vpop.f32.mrf.mxu0
          %6304 = vmatprep.mubr.bf16.mxu0 0
          %6305 = vmatmul.mubr.bf16.gmra.mxu0 %v6207
          %v6306 = vpop.f32.mrf.mxu0
          %v6307 = vadd.f32 0.0, %v6306
          %v6308 = vpop.f32.mrf.mxu0
          %v6309 = vpop.f32.mrf.mxu0
          %v6310 = vadd.f32 0.0, %v6309
          %v6311 = vpop.f32.mrf.mxu0
          %6312 = vmatprep.mubr.bf16.mxu0 0
          %6313 = vmatmul.mubr.bf16.gmra.mxu0 %v6210
          %v6314 = vpop.f32.mrf.mxu0
          %v6315 = vadd.f32 0.0, %v6314
          %v6316 = vpop.f32.mrf.mxu0
          %v6317 = vpop.f32.mrf.mxu0
          %v6318 = vadd.f32 0.0, %v6317
          %v6319 = vpop.f32.mrf.mxu0
          %6320 = vmatprep.mubr.bf16.mxu0 0
          %6321 = vmatmul.mubr.bf16.gmra.mxu0 %v6213
          %v6322 = vpop.f32.mrf.mxu0
          %v6323 = vadd.f32 0.0, %v6322
          %v6324 = vpop.f32.mrf.mxu0
          %v6325 = vpop.f32.mrf.mxu0
          %v6326 = vadd.f32 0.0, %v6325
          %v6327 = vpop.f32.mrf.mxu0
          %6328 = vmatprep.mubr.bf16.mxu0 0
          %6329 = vmatmul.mubr.bf16.gmra.mxu0 %v6216
          %v6330 = vpop.f32.mrf.mxu0
          %v6331 = vadd.f32 0.0, %v6330
          %v6332 = vpop.f32.mrf.mxu0
          %v6333 = vpop.f32.mrf.mxu0
          %v6334 = vadd.f32 0.0, %v6333
          %v6335 = vpop.f32.mrf.mxu0
          %6336 = vmatprep.mubr.bf16.mxu0 0
          %6337 = vmatmul.mubr.bf16.gmra.mxu0 %v6219
          %v6338 = vpop.f32.mrf.mxu0
          %v6339 = vadd.f32 0.0, %v6338
          %v6340 = vpop.f32.mrf.mxu0
          %v6341 = vpop.f32.mrf.mxu0
          %v6342 = vadd.f32 0.0, %v6341
          %v6343 = vpop.f32.mrf.mxu0
          %6344 = vmatprep.mubr.bf16.mxu0 0
          %6345 = vmatmul.mubr.bf16.gmra.mxu0 %v6222
          %v6346 = vpop.f32.mrf.mxu0
          %v6347 = vadd.f32 0.0, %v6346
          %v6348 = vpop.f32.mrf.mxu0
          %v6349 = vpop.f32.mrf.mxu0
          %v6350 = vadd.f32 0.0, %v6349
          %v6351 = vpop.f32.mrf.mxu0
          %6352 = vmatprep.mubr.bf16.mxu0 0
          %6353 = vmatmul.mubr.bf16.gmra.mxu0 %v6225
          %v6354 = vpop.f32.mrf.mxu0
          %v6355 = vadd.f32 0.0, %v6354
          %v6356 = vpop.f32.mrf.mxu0
          %v6357 = vpop.f32.mrf.mxu0
          %v6358 = vadd.f32 0.0, %v6357
          %v6359 = vpop.f32.mrf.mxu0
          %6360 = vmatprep.mubr.bf16.mxu0 0
          %6361 = vmatmul.mubr.bf16.gmra.mxu0 %v6228
          %v6362 = vpop.f32.mrf.mxu0
          %v6363 = vadd.f32 0.0, %v6362
          %v6364 = vpop.f32.mrf.mxu0
          %v6365 = vpop.f32.mrf.mxu0
          %v6366 = vadd.f32 0.0, %v6365
          %v6367 = vpop.f32.mrf.mxu0
          %6368 = vmatprep.mubr.bf16.mxu0 0
          %6369 = vmatmul.mubr.bf16.gmra.mxu0 %v6231
          %v6370 = vpop.f32.mrf.mxu0
          %v6371 = vadd.f32 0.0, %v6370
          %v6372 = vpop.f32.mrf.mxu0
          %v6373 = vpop.f32.mrf.mxu0
          %v6374 = vadd.f32 0.0, %v6373
          %v6375 = vpop.f32.mrf.mxu0
          %6376 = vmatprep.mubr.bf16.mxu0 0
          %6377 = vmatmul.mubr.bf16.gmra.mxu0 %v6234
          %v6378 = vpop.f32.mrf.mxu0
          %v6379 = vadd.f32 0.0, %v6378
          %v6380 = vpop.f32.mrf.mxu0
          %v6381 = vpop.f32.mrf.mxu0
          %v6382 = vadd.f32 0.0, %v6381
          %v6383 = vpop.f32.mrf.mxu0
          %6384 = vmatprep.mubr.bf16.mxu0 0
          %6385 = vmatmul.mubr.bf16.gmra.mxu0 %v6237
          %v6386 = vpop.f32.mrf.mxu0
          %v6387 = vadd.f32 0.0, %v6386
          %v6388 = vpop.f32.mrf.mxu0
          %v6389 = vpop.f32.mrf.mxu0
          %v6390 = vadd.f32 0.0, %v6389
          %v6391 = vpop.f32.mrf.mxu0
          %6392 = vmatprep.mubr.bf16.mxu0 0
          %6393 = vmatmul.mubr.bf16.gmra.mxu0 %v6240
          %v6394 = vpop.f32.mrf.mxu0
          %v6395 = vadd.f32 0.0, %v6394
          %v6396 = vpop.f32.mrf.mxu0
          %v6397 = vpop.f32.mrf.mxu0
          %v6398 = vadd.f32 0.0, %v6397
          %v6399 = vpop.f32.mrf.mxu0
          %6400 = vmatprep.mubr.bf16.mxu0 0
          %6401 = vmatmul.mubr.bf16.gmra.mxu0 %v6243
          %v6402 = vpop.f32.mrf.mxu0
          %v6403 = vadd.f32 0.0, %v6402
          %v6404 = vpop.f32.mrf.mxu0
          %v6405 = vpop.f32.mrf.mxu0
          %v6406 = vadd.f32 0.0, %v6405
          %v6407 = vpop.f32.mrf.mxu0
          %6408 = vdwg.mxu0
          %6409 = vst.msk [vmem:[#allocation6] sm:$0xff] %vm367, %v6283
          %6410 = vst.msk [vmem:[#allocation6 + $0x8] sm:$0xff] %vm367, %v6286
          %6411 = vst.msk [vmem:[#allocation6 + $0x10] sm:$0xff] %vm367, %v6291
          %6412 = vst.msk [vmem:[#allocation6 + $0x18] sm:$0xff] %vm367, %v6294
          %6413 = vst.msk [vmem:[#allocation6 + $0x20] sm:$0xff] %vm367, %v6299
          %6414 = vst.msk [vmem:[#allocation6 + $0x28] sm:$0xff] %vm367, %v6302
          %6415 = vst.msk [vmem:[#allocation6 + $0x30] sm:$0xff] %vm367, %v6307
          %6416 = vst.msk [vmem:[#allocation6 + $0x38] sm:$0xff] %vm367, %v6310
          %6417 = vst.msk [vmem:[#allocation6 + $0x40] sm:$0xff] %vm367, %v6315
          %6418 = vst.msk [vmem:[#allocation6 + $0x48] sm:$0xff] %vm367, %v6318
          %6419 = vst.msk [vmem:[#allocation6 + $0x50] sm:$0xff] %vm367, %v6323
          %6420 = vst.msk [vmem:[#allocation6 + $0x58] sm:$0xff] %vm367, %v6326
          %6421 = vst.msk [vmem:[#allocation6 + $0x60] sm:$0xff] %vm367, %v6331
          %6422 = vst.msk [vmem:[#allocation6 + $0x68] sm:$0xff] %vm367, %v6334
          %6423 = vst.msk [vmem:[#allocation6 + $0x70] sm:$0xff] %vm367, %v6339
          %6424 = vst.msk [vmem:[#allocation6 + $0x78] sm:$0xff] %vm367, %v6342
          %6425 = vst.msk [vmem:[#allocation6 + $0x80] sm:$0xff] %vm367, %v6347
          %6426 = vst.msk [vmem:[#allocation6 + $0x88] sm:$0xff] %vm367, %v6350
          %6427 = vst.msk [vmem:[#allocation6 + $0x90] sm:$0xff] %vm367, %v6355
          %6428 = vst.msk [vmem:[#allocation6 + $0x98] sm:$0xff] %vm367, %v6358
          %6429 = vst.msk [vmem:[#allocation6 + $0xa0] sm:$0xff] %vm367, %v6363
          %6430 = vst.msk [vmem:[#allocation6 + $0xa8] sm:$0xff] %vm367, %v6366
          %6431 = vst.msk [vmem:[#allocation6 + $0xb0] sm:$0xff] %vm367, %v6371
          %6432 = vst.msk [vmem:[#allocation6 + $0xb8] sm:$0xff] %vm367, %v6374
          %6433 = vst.msk [vmem:[#allocation6 + $0xc0] sm:$0xff] %vm367, %v6379
          %6434 = vst.msk [vmem:[#allocation6 + $0xc8] sm:$0xff] %vm367, %v6382
          %6435 = vst.msk [vmem:[#allocation6 + $0xd0] sm:$0xff] %vm367, %v6387
          %6436 = vst.msk [vmem:[#allocation6 + $0xd8] sm:$0xff] %vm367, %v6390
          %6437 = vst.msk [vmem:[#allocation6 + $0xe0] sm:$0xff] %vm367, %v6395
          %6438 = vst.msk [vmem:[#allocation6 + $0xe8] sm:$0xff] %vm367, %v6398
          %6439 = vst.msk [vmem:[#allocation6 + $0xf0] sm:$0xff] %vm367, %v6403
          %6440 = vst.msk [vmem:[#allocation6 + $0xf8] sm:$0xff] %vm367, %v6406
          %v6441 = vld [vmem:[#allocation5] sm:$0xff]
          %v6442 = vld [vmem:[#allocation5 + $0x8] sm:$0xff]
          %v6443 = vld [vmem:[#allocation5 + $0x10] sm:$0xff]
          %v6444 = vld [vmem:[#allocation5 + $0x18] sm:$0xff]
          %v6445 = vld [vmem:[#allocation5 + $0x20] sm:$0xff]
          %v6446 = vld [vmem:[#allocation5 + $0x28] sm:$0xff]
          %v6447 = vld [vmem:[#allocation5 + $0x30] sm:$0xff]
          %v6448 = vld [vmem:[#allocation5 + $0x38] sm:$0xff]
          %v6449 = vld [vmem:[#allocation5 + $0x40] sm:$0xff]
          %v6450 = vld [vmem:[#allocation5 + $0x48] sm:$0xff]
          %v6451 = vld [vmem:[#allocation5 + $0x50] sm:$0xff]
          %v6452 = vld [vmem:[#allocation5 + $0x58] sm:$0xff]
          %v6453 = vld [vmem:[#allocation5 + $0x60] sm:$0xff]
          %v6454 = vld [vmem:[#allocation5 + $0x68] sm:$0xff]
          %v6455 = vld [vmem:[#allocation5 + $0x70] sm:$0xff]
          %v6456 = vld [vmem:[#allocation5 + $0x78] sm:$0xff]
          %v6457 = vld [vmem:[#allocation5 + $0x80] sm:$0xff]
          %v6458 = vld [vmem:[#allocation5 + $0x88] sm:$0xff]
          %v6459 = vld [vmem:[#allocation5 + $0x90] sm:$0xff]
          %v6460 = vld [vmem:[#allocation5 + $0x98] sm:$0xff]
          %v6461 = vld [vmem:[#allocation5 + $0xa0] sm:$0xff]
          %v6462 = vld [vmem:[#allocation5 + $0xa8] sm:$0xff]
          %v6463 = vld [vmem:[#allocation5 + $0xb0] sm:$0xff]
          %v6464 = vld [vmem:[#allocation5 + $0xb8] sm:$0xff]
          %v6465 = vld [vmem:[#allocation5 + $0xc0] sm:$0xff]
          %v6466 = vld [vmem:[#allocation5 + $0xc8] sm:$0xff]
          %v6467 = vld [vmem:[#allocation5 + $0xd0] sm:$0xff]
          %v6468 = vld [vmem:[#allocation5 + $0xd8] sm:$0xff]
          %v6469 = vld [vmem:[#allocation5 + $0xe0] sm:$0xff]
          %v6470 = vld [vmem:[#allocation5 + $0xe8] sm:$0xff]
          %v6471 = vld [vmem:[#allocation5 + $0xf0] sm:$0xff]
          %v6472 = vld [vmem:[#allocation5 + $0xf8] sm:$0xff]
          %6505 = vrot.lane.b32.xlu0 %v6283, 120
          %v6506 = vpop.permute.xlu0 %6505
          %6507 = vrot.lane.b32.xlu0 %v6286, 120
          %v6508 = vpop.permute.xlu0 %6507
          %6509 = vrot.lane.b32.xlu0 %v6291, 120
          %v6510 = vpop.permute.xlu0 %6509
          %6511 = vrot.lane.b32.xlu0 %v6294, 120
          %v6512 = vpop.permute.xlu0 %6511
          %6513 = vrot.lane.b32.xlu0 %v6299, 120
          %v6514 = vpop.permute.xlu0 %6513
          %6515 = vrot.lane.b32.xlu0 %v6302, 120
          %v6516 = vpop.permute.xlu0 %6515
          %6517 = vrot.lane.b32.xlu0 %v6307, 120
          %v6518 = vpop.permute.xlu0 %6517
          %6519 = vrot.lane.b32.xlu0 %v6310, 120
          %v6520 = vpop.permute.xlu0 %6519
          %6521 = vrot.lane.b32.xlu0 %v6315, 120
          %v6522 = vpop.permute.xlu0 %6521
          %6523 = vrot.lane.b32.xlu0 %v6318, 120
          %v6524 = vpop.permute.xlu0 %6523
          %6525 = vrot.lane.b32.xlu0 %v6323, 120
          %v6526 = vpop.permute.xlu0 %6525
          %6527 = vrot.lane.b32.xlu0 %v6326, 120
          %v6528 = vpop.permute.xlu0 %6527
          %6529 = vrot.lane.b32.xlu0 %v6331, 120
          %v6530 = vpop.permute.xlu0 %6529
          %6531 = vrot.lane.b32.xlu0 %v6334, 120
          %v6532 = vpop.permute.xlu0 %6531
          %6533 = vrot.lane.b32.xlu0 %v6339, 120
          %v6534 = vpop.permute.xlu0 %6533
          %6535 = vrot.lane.b32.xlu0 %v6342, 120
          %v6536 = vpop.permute.xlu0 %6535
          %6537 = vrot.lane.b32.xlu0 %v6347, 120
          %v6538 = vpop.permute.xlu0 %6537
          %6539 = vrot.lane.b32.xlu0 %v6350, 120
          %v6540 = vpop.permute.xlu0 %6539
          %6541 = vrot.lane.b32.xlu0 %v6355, 120
          %v6542 = vpop.permute.xlu0 %6541
          %6543 = vrot.lane.b32.xlu0 %v6358, 120
          %v6544 = vpop.permute.xlu0 %6543
          %6545 = vrot.lane.b32.xlu0 %v6363, 120
          %v6546 = vpop.permute.xlu0 %6545
          %6547 = vrot.lane.b32.xlu0 %v6366, 120
          %v6548 = vpop.permute.xlu0 %6547
          %6549 = vrot.lane.b32.xlu0 %v6371, 120
          %v6550 = vpop.permute.xlu0 %6549
          %6551 = vrot.lane.b32.xlu0 %v6374, 120
          %v6552 = vpop.permute.xlu0 %6551
          %6553 = vrot.lane.b32.xlu0 %v6379, 120
          %v6554 = vpop.permute.xlu0 %6553
          %6555 = vrot.lane.b32.xlu0 %v6382, 120
          %v6556 = vpop.permute.xlu0 %6555
          %6557 = vrot.lane.b32.xlu0 %v6387, 120
          %v6558 = vpop.permute.xlu0 %6557
          %6559 = vrot.lane.b32.xlu0 %v6390, 120
          %v6560 = vpop.permute.xlu0 %6559
          %6561 = vrot.lane.b32.xlu0 %v6395, 120
          %v6562 = vpop.permute.xlu0 %6561
          %6563 = vrot.lane.b32.xlu0 %v6398, 120
          %v6564 = vpop.permute.xlu0 %6563
          %6565 = vrot.lane.b32.xlu0 %v6403, 120
          %v6566 = vpop.permute.xlu0 %6565
          %6567 = vrot.lane.b32.xlu0 %v6406, 120
          %v6568 = vpop.permute.xlu0 %6567
          %v6601 = vadd.f32 %v6441, %v6506
          %v6602 = vadd.f32 %v6442, %v6508
          %v6603 = vadd.f32 %v6443, %v6510
          %v6604 = vadd.f32 %v6444, %v6512
          %v6605 = vadd.f32 %v6445, %v6514
          %v6606 = vadd.f32 %v6446, %v6516
          %v6607 = vadd.f32 %v6447, %v6518
          %v6608 = vadd.f32 %v6448, %v6520
          %v6609 = vadd.f32 %v6449, %v6522
          %v6610 = vadd.f32 %v6450, %v6524
          %v6611 = vadd.f32 %v6451, %v6526
          %v6612 = vadd.f32 %v6452, %v6528
          %v6613 = vadd.f32 %v6453, %v6530
          %v6614 = vadd.f32 %v6454, %v6532
          %v6615 = vadd.f32 %v6455, %v6534
          %v6616 = vadd.f32 %v6456, %v6536
          %v6617 = vadd.f32 %v6457, %v6538
          %v6618 = vadd.f32 %v6458, %v6540
          %v6619 = vadd.f32 %v6459, %v6542
          %v6620 = vadd.f32 %v6460, %v6544
          %v6621 = vadd.f32 %v6461, %v6546
          %v6622 = vadd.f32 %v6462, %v6548
          %v6623 = vadd.f32 %v6463, %v6550
          %v6624 = vadd.f32 %v6464, %v6552
          %v6625 = vadd.f32 %v6465, %v6554
          %v6626 = vadd.f32 %v6466, %v6556
          %v6627 = vadd.f32 %v6467, %v6558
          %v6628 = vadd.f32 %v6468, %v6560
          %v6629 = vadd.f32 %v6469, %v6562
          %v6630 = vadd.f32 %v6470, %v6564
          %v6631 = vadd.f32 %v6471, %v6566
          %v6632 = vadd.f32 %v6472, %v6568
          %6633 = vst.msk [vmem:[#allocation5] sm:$0xff] %vm321, %v6601
          %6634 = vst.msk [vmem:[#allocation5 + $0x8] sm:$0xff] %vm321, %v6602
          %6635 = vst.msk [vmem:[#allocation5 + $0x10] sm:$0xff] %vm321, %v6603
          %6636 = vst.msk [vmem:[#allocation5 + $0x18] sm:$0xff] %vm321, %v6604
          %6637 = vst.msk [vmem:[#allocation5 + $0x20] sm:$0xff] %vm321, %v6605
          %6638 = vst.msk [vmem:[#allocation5 + $0x28] sm:$0xff] %vm321, %v6606
          %6639 = vst.msk [vmem:[#allocation5 + $0x30] sm:$0xff] %vm321, %v6607
          %6640 = vst.msk [vmem:[#allocation5 + $0x38] sm:$0xff] %vm321, %v6608
          %6641 = vst.msk [vmem:[#allocation5 + $0x40] sm:$0xff] %vm321, %v6609
          %6642 = vst.msk [vmem:[#allocation5 + $0x48] sm:$0xff] %vm321, %v6610
          %6643 = vst.msk [vmem:[#allocation5 + $0x50] sm:$0xff] %vm321, %v6611
          %6644 = vst.msk [vmem:[#allocation5 + $0x58] sm:$0xff] %vm321, %v6612
          %6645 = vst.msk [vmem:[#allocation5 + $0x60] sm:$0xff] %vm321, %v6613
          %6646 = vst.msk [vmem:[#allocation5 + $0x68] sm:$0xff] %vm321, %v6614
          %6647 = vst.msk [vmem:[#allocation5 + $0x70] sm:$0xff] %vm321, %v6615
          %6648 = vst.msk [vmem:[#allocation5 + $0x78] sm:$0xff] %vm321, %v6616
          %6649 = vst.msk [vmem:[#allocation5 + $0x80] sm:$0xff] %vm321, %v6617
          %6650 = vst.msk [vmem:[#allocation5 + $0x88] sm:$0xff] %vm321, %v6618
          %6651 = vst.msk [vmem:[#allocation5 + $0x90] sm:$0xff] %vm321, %v6619
          %6652 = vst.msk [vmem:[#allocation5 + $0x98] sm:$0xff] %vm321, %v6620
          %6653 = vst.msk [vmem:[#allocation5 + $0xa0] sm:$0xff] %vm321, %v6621
          %6654 = vst.msk [vmem:[#allocation5 + $0xa8] sm:$0xff] %vm321, %v6622
          %6655 = vst.msk [vmem:[#allocation5 + $0xb0] sm:$0xff] %vm321, %v6623
          %6656 = vst.msk [vmem:[#allocation5 + $0xb8] sm:$0xff] %vm321, %v6624
          %6657 = vst.msk [vmem:[#allocation5 + $0xc0] sm:$0xff] %vm321, %v6625
          %6658 = vst.msk [vmem:[#allocation5 + $0xc8] sm:$0xff] %vm321, %v6626
          %6659 = vst.msk [vmem:[#allocation5 + $0xd0] sm:$0xff] %vm321, %v6627
          %6660 = vst.msk [vmem:[#allocation5 + $0xd8] sm:$0xff] %vm321, %v6628
          %6661 = vst.msk [vmem:[#allocation5 + $0xe0] sm:$0xff] %vm321, %v6629
          %6662 = vst.msk [vmem:[#allocation5 + $0xe8] sm:$0xff] %vm321, %v6630
          %6663 = vst.msk [vmem:[#allocation5 + $0xf0] sm:$0xff] %vm321, %v6631
          %6664 = vst.msk [vmem:[#allocation5 + $0xf8] sm:$0xff] %vm321, %v6632
        $region61: #{lfb_d_forward.1} parent=51 // loop_footer
          %s2404 = sadd.s32 1, %s2400
        $region62: #{lfb_d_forward.1} parent=51 // loop_footer_branch
          %2399 = sbr.rel target = $region58
        $region63: #{lfb_d_forward.1} parent=51 // loop_exit
          _
        %v6665 = vld [vmem:[#allocation5] sm:$0xff]
        %v6666 = vld [vmem:[#allocation5 + $0x8] sm:$0xff]
        %v6667 = vld [vmem:[#allocation5 + $0x10] sm:$0xff]
        %v6668 = vld [vmem:[#allocation5 + $0x18] sm:$0xff]
        %v6669 = vld [vmem:[#allocation5 + $0x20] sm:$0xff]
        %v6670 = vld [vmem:[#allocation5 + $0x28] sm:$0xff]
        %v6671 = vld [vmem:[#allocation5 + $0x30] sm:$0xff]
        %v6672 = vld [vmem:[#allocation5 + $0x38] sm:$0xff]
        %v6673 = vld [vmem:[#allocation5 + $0x40] sm:$0xff]
        %v6674 = vld [vmem:[#allocation5 + $0x48] sm:$0xff]
        %v6675 = vld [vmem:[#allocation5 + $0x50] sm:$0xff]
        %v6676 = vld [vmem:[#allocation5 + $0x58] sm:$0xff]
        %v6677 = vld [vmem:[#allocation5 + $0x60] sm:$0xff]
        %v6678 = vld [vmem:[#allocation5 + $0x68] sm:$0xff]
        %v6679 = vld [vmem:[#allocation5 + $0x70] sm:$0xff]
        %v6680 = vld [vmem:[#allocation5 + $0x78] sm:$0xff]
        %v6681 = vld [vmem:[#allocation5 + $0x80] sm:$0xff]
        %v6682 = vld [vmem:[#allocation5 + $0x88] sm:$0xff]
        %v6683 = vld [vmem:[#allocation5 + $0x90] sm:$0xff]
        %v6684 = vld [vmem:[#allocation5 + $0x98] sm:$0xff]
        %v6685 = vld [vmem:[#allocation5 + $0xa0] sm:$0xff]
        %v6686 = vld [vmem:[#allocation5 + $0xa8] sm:$0xff]
        %v6687 = vld [vmem:[#allocation5 + $0xb0] sm:$0xff]
        %v6688 = vld [vmem:[#allocation5 + $0xb8] sm:$0xff]
        %v6689 = vld [vmem:[#allocation5 + $0xc0] sm:$0xff]
        %v6690 = vld [vmem:[#allocation5 + $0xc8] sm:$0xff]
        %v6691 = vld [vmem:[#allocation5 + $0xd0] sm:$0xff]
        %v6692 = vld [vmem:[#allocation5 + $0xd8] sm:$0xff]
        %v6693 = vld [vmem:[#allocation5 + $0xe0] sm:$0xff]
        %v6694 = vld [vmem:[#allocation5 + $0xe8] sm:$0xff]
        %v6695 = vld [vmem:[#allocation5 + $0xf0] sm:$0xff]
        %v6696 = vld [vmem:[#allocation5 + $0xf8] sm:$0xff]
        %v6697 = vld [vmem:[%s6] sm:$0x1]
        %v6699 = vlaneseq
        %v6700 = vshrl.u32 %v6699, 7
        %v6701 = vsub.s32 0, %v6700
        %v6702 = vrot.slane %v6697, %v6701
        %v6704 = vadd.f32 %v6665, %v6702
        %v6705 = vadd.f32 %v6666, %v6702
        %v6706 = vadd.f32 %v6667, %v6702
        %v6707 = vadd.f32 %v6668, %v6702
        %v6708 = vadd.f32 %v6669, %v6702
        %v6709 = vadd.f32 %v6670, %v6702
        %v6710 = vadd.f32 %v6671, %v6702
        %v6711 = vadd.f32 %v6672, %v6702
        %v6712 = vadd.f32 %v6673, %v6702
        %v6713 = vadd.f32 %v6674, %v6702
        %v6714 = vadd.f32 %v6675, %v6702
        %v6715 = vadd.f32 %v6676, %v6702
        %v6716 = vadd.f32 %v6677, %v6702
        %v6717 = vadd.f32 %v6678, %v6702
        %v6718 = vadd.f32 %v6679, %v6702
        %v6719 = vadd.f32 %v6680, %v6702
        %v6720 = vadd.f32 %v6681, %v6702
        %v6721 = vadd.f32 %v6682, %v6702
        %v6722 = vadd.f32 %v6683, %v6702
        %v6723 = vadd.f32 %v6684, %v6702
        %v6724 = vadd.f32 %v6685, %v6702
        %v6725 = vadd.f32 %v6686, %v6702
        %v6726 = vadd.f32 %v6687, %v6702
        %v6727 = vadd.f32 %v6688, %v6702
        %v6728 = vadd.f32 %v6689, %v6702
        %v6729 = vadd.f32 %v6690, %v6702
        %v6730 = vadd.f32 %v6691, %v6702
        %v6731 = vadd.f32 %v6692, %v6702
        %v6732 = vadd.f32 %v6693, %v6702
        %v6733 = vadd.f32 %v6694, %v6702
        %v6734 = vadd.f32 %v6695, %v6702
        %v6735 = vadd.f32 %v6696, %v6702
        %s6736 = sld [smem:[#allocation7 + $0x10]]
        %v6737 = vstv %s6736
        %v6738 = vmul.f32 %v6737, %v6704
        %v6739 = vmul.f32 %v6737, %v6705
        %v6740 = vmul.f32 %v6737, %v6706
        %v6741 = vmul.f32 %v6737, %v6707
        %v6742 = vmul.f32 %v6737, %v6708
        %v6743 = vmul.f32 %v6737, %v6709
        %v6744 = vmul.f32 %v6737, %v6710
        %v6745 = vmul.f32 %v6737, %v6711
        %v6746 = vmul.f32 %v6737, %v6712
        %v6747 = vmul.f32 %v6737, %v6713
        %v6748 = vmul.f32 %v6737, %v6714
        %v6749 = vmul.f32 %v6737, %v6715
        %v6750 = vmul.f32 %v6737, %v6716
        %v6751 = vmul.f32 %v6737, %v6717
        %v6752 = vmul.f32 %v6737, %v6718
        %v6753 = vmul.f32 %v6737, %v6719
        %v6754 = vmul.f32 %v6737, %v6720
        %v6755 = vmul.f32 %v6737, %v6721
        %v6756 = vmul.f32 %v6737, %v6722
        %v6757 = vmul.f32 %v6737, %v6723
        %v6758 = vmul.f32 %v6737, %v6724
        %v6759 = vmul.f32 %v6737, %v6725
        %v6760 = vmul.f32 %v6737, %v6726
        %v6761 = vmul.f32 %v6737, %v6727
        %v6762 = vmul.f32 %v6737, %v6728
        %v6763 = vmul.f32 %v6737, %v6729
        %v6764 = vmul.f32 %v6737, %v6730
        %v6765 = vmul.f32 %v6737, %v6731
        %v6766 = vmul.f32 %v6737, %v6732
        %v6767 = vmul.f32 %v6737, %v6733
        %v6768 = vmul.f32 %v6737, %v6734
        %v6769 = vmul.f32 %v6737, %v6735
        %s6770 = sld [smem:[#allocation7 + $0x11]]
        %v6771 = vld [vmem:[%s314] sm:$0xff]
        %v6772 = vld [vmem:[%s314 + $0x8] sm:$0xff]
        %v6773 = vld [vmem:[%s314 + $0x10] sm:$0xff]
        %v6774 = vld [vmem:[%s314 + $0x18] sm:$0xff]
        %v6775 = vld [vmem:[%s314 + $0x20] sm:$0xff]
        %v6776 = vld [vmem:[%s314 + $0x28] sm:$0xff]
        %v6777 = vld [vmem:[%s314 + $0x30] sm:$0xff]
        %v6778 = vld [vmem:[%s314 + $0x38] sm:$0xff]
        %v6779 = vld [vmem:[%s314 + $0x40] sm:$0xff]
        %v6780 = vld [vmem:[%s314 + $0x48] sm:$0xff]
        %v6781 = vld [vmem:[%s314 + $0x50] sm:$0xff]
        %v6782 = vld [vmem:[%s314 + $0x58] sm:$0xff]
        %v6783 = vld [vmem:[%s314 + $0x60] sm:$0xff]
        %v6784 = vld [vmem:[%s314 + $0x68] sm:$0xff]
        %v6785 = vld [vmem:[%s314 + $0x70] sm:$0xff]
        %v6786 = vld [vmem:[%s314 + $0x78] sm:$0xff]
        %v6787 = vld [vmem:[%s314 + $0x80] sm:$0xff]
        %v6788 = vld [vmem:[%s314 + $0x88] sm:$0xff]
        %v6789 = vld [vmem:[%s314 + $0x90] sm:$0xff]
        %v6790 = vld [vmem:[%s314 + $0x98] sm:$0xff]
        %v6791 = vld [vmem:[%s314 + $0xa0] sm:$0xff]
        %v6792 = vld [vmem:[%s314 + $0xa8] sm:$0xff]
        %v6793 = vld [vmem:[%s314 + $0xb0] sm:$0xff]
        %v6794 = vld [vmem:[%s314 + $0xb8] sm:$0xff]
        %v6795 = vld [vmem:[%s314 + $0xc0] sm:$0xff]
        %v6796 = vld [vmem:[%s314 + $0xc8] sm:$0xff]
        %v6797 = vld [vmem:[%s314 + $0xd0] sm:$0xff]
        %v6798 = vld [vmem:[%s314 + $0xd8] sm:$0xff]
        %v6799 = vld [vmem:[%s314 + $0xe0] sm:$0xff]
        %v6800 = vld [vmem:[%s314 + $0xe8] sm:$0xff]
        %v6801 = vld [vmem:[%s314 + $0xf0] sm:$0xff]
        %v6802 = vld [vmem:[%s314 + $0xf8] sm:$0xff]
        %v6803 = vstv %s6770
        %v6804 = vmul.f32 %v6803, %v6771
        %v6805 = vmul.f32 %v6803, %v6772
        %v6806 = vmul.f32 %v6803, %v6773
        %v6807 = vmul.f32 %v6803, %v6774
        %v6808 = vmul.f32 %v6803, %v6775
        %v6809 = vmul.f32 %v6803, %v6776
        %v6810 = vmul.f32 %v6803, %v6777
        %v6811 = vmul.f32 %v6803, %v6778
        %v6812 = vmul.f32 %v6803, %v6779
        %v6813 = vmul.f32 %v6803, %v6780
        %v6814 = vmul.f32 %v6803, %v6781
        %v6815 = vmul.f32 %v6803, %v6782
        %v6816 = vmul.f32 %v6803, %v6783
        %v6817 = vmul.f32 %v6803, %v6784
        %v6818 = vmul.f32 %v6803, %v6785
        %v6819 = vmul.f32 %v6803, %v6786
        %v6820 = vmul.f32 %v6803, %v6787
        %v6821 = vmul.f32 %v6803, %v6788
        %v6822 = vmul.f32 %v6803, %v6789
        %v6823 = vmul.f32 %v6803, %v6790
        %v6824 = vmul.f32 %v6803, %v6791
        %v6825 = vmul.f32 %v6803, %v6792
        %v6826 = vmul.f32 %v6803, %v6793
        %v6827 = vmul.f32 %v6803, %v6794
        %v6828 = vmul.f32 %v6803, %v6795
        %v6829 = vmul.f32 %v6803, %v6796
        %v6830 = vmul.f32 %v6803, %v6797
        %v6831 = vmul.f32 %v6803, %v6798
        %v6832 = vmul.f32 %v6803, %v6799
        %v6833 = vmul.f32 %v6803, %v6800
        %v6834 = vmul.f32 %v6803, %v6801
        %v6835 = vmul.f32 %v6803, %v6802
        %v6836 = vadd.f32 %v6738, %v6804
        %v6837 = vadd.f32 %v6739, %v6805
        %v6838 = vadd.f32 %v6740, %v6806
        %v6839 = vadd.f32 %v6741, %v6807
        %v6840 = vadd.f32 %v6742, %v6808
        %v6841 = vadd.f32 %v6743, %v6809
        %v6842 = vadd.f32 %v6744, %v6810
        %v6843 = vadd.f32 %v6745, %v6811
        %v6844 = vadd.f32 %v6746, %v6812
        %v6845 = vadd.f32 %v6747, %v6813
        %v6846 = vadd.f32 %v6748, %v6814
        %v6847 = vadd.f32 %v6749, %v6815
        %v6848 = vadd.f32 %v6750, %v6816
        %v6849 = vadd.f32 %v6751, %v6817
        %v6850 = vadd.f32 %v6752, %v6818
        %v6851 = vadd.f32 %v6753, %v6819
        %v6852 = vadd.f32 %v6754, %v6820
        %v6853 = vadd.f32 %v6755, %v6821
        %v6854 = vadd.f32 %v6756, %v6822
        %v6855 = vadd.f32 %v6757, %v6823
        %v6856 = vadd.f32 %v6758, %v6824
        %v6857 = vadd.f32 %v6759, %v6825
        %v6858 = vadd.f32 %v6760, %v6826
        %v6859 = vadd.f32 %v6761, %v6827
        %v6860 = vadd.f32 %v6762, %v6828
        %v6861 = vadd.f32 %v6763, %v6829
        %v6862 = vadd.f32 %v6764, %v6830
        %v6863 = vadd.f32 %v6765, %v6831
        %v6864 = vadd.f32 %v6766, %v6832
        %v6865 = vadd.f32 %v6767, %v6833
        %v6866 = vadd.f32 %v6768, %v6834
        %v6867 = vadd.f32 %v6769, %v6835
        %6868 = vst.msk [vmem:[%s319] sm:$0xff] %vm321, %v6836
        %6869 = vst.msk [vmem:[%s319 + $0x8] sm:$0xff] %vm321, %v6837
        %6870 = vst.msk [vmem:[%s319 + $0x10] sm:$0xff] %vm321, %v6838
        %6871 = vst.msk [vmem:[%s319 + $0x18] sm:$0xff] %vm321, %v6839
        %6872 = vst.msk [vmem:[%s319 + $0x20] sm:$0xff] %vm321, %v6840
        %6873 = vst.msk [vmem:[%s319 + $0x28] sm:$0xff] %vm321, %v6841
        %6874 = vst.msk [vmem:[%s319 + $0x30] sm:$0xff] %vm321, %v6842
        %6875 = vst.msk [vmem:[%s319 + $0x38] sm:$0xff] %vm321, %v6843
        %6876 = vst.msk [vmem:[%s319 + $0x40] sm:$0xff] %vm321, %v6844
        %6877 = vst.msk [vmem:[%s319 + $0x48] sm:$0xff] %vm321, %v6845
        %6878 = vst.msk [vmem:[%s319 + $0x50] sm:$0xff] %vm321, %v6846
        %6879 = vst.msk [vmem:[%s319 + $0x58] sm:$0xff] %vm321, %v6847
        %6880 = vst.msk [vmem:[%s319 + $0x60] sm:$0xff] %vm321, %v6848
        %6881 = vst.msk [vmem:[%s319 + $0x68] sm:$0xff] %vm321, %v6849
        %6882 = vst.msk [vmem:[%s319 + $0x70] sm:$0xff] %vm321, %v6850
        %6883 = vst.msk [vmem:[%s319 + $0x78] sm:$0xff] %vm321, %v6851
        %6884 = vst.msk [vmem:[%s319 + $0x80] sm:$0xff] %vm321, %v6852
        %6885 = vst.msk [vmem:[%s319 + $0x88] sm:$0xff] %vm321, %v6853
        %6886 = vst.msk [vmem:[%s319 + $0x90] sm:$0xff] %vm321, %v6854
        %6887 = vst.msk [vmem:[%s319 + $0x98] sm:$0xff] %vm321, %v6855
        %6888 = vst.msk [vmem:[%s319 + $0xa0] sm:$0xff] %vm321, %v6856
        %6889 = vst.msk [vmem:[%s319 + $0xa8] sm:$0xff] %vm321, %v6857
        %6890 = vst.msk [vmem:[%s319 + $0xb0] sm:$0xff] %vm321, %v6858
        %6891 = vst.msk [vmem:[%s319 + $0xb8] sm:$0xff] %vm321, %v6859
        %6892 = vst.msk [vmem:[%s319 + $0xc0] sm:$0xff] %vm321, %v6860
        %6893 = vst.msk [vmem:[%s319 + $0xc8] sm:$0xff] %vm321, %v6861
        %6894 = vst.msk [vmem:[%s319 + $0xd0] sm:$0xff] %vm321, %v6862
        %6895 = vst.msk [vmem:[%s319 + $0xd8] sm:$0xff] %vm321, %v6863
        %6896 = vst.msk [vmem:[%s319 + $0xe0] sm:$0xff] %vm321, %v6864
        %6897 = vst.msk [vmem:[%s319 + $0xe8] sm:$0xff] %vm321, %v6865
        %6898 = vst.msk [vmem:[%s319 + $0xf0] sm:$0xff] %vm321, %v6866
        %6899 = vst.msk [vmem:[%s319 + $0xf8] sm:$0xff] %vm321, %v6867
        %p6900 = scmp.lt.s32.totalorder %s20, 1
        %s6901 = scalar_select %p6900, %s20, 1
        %s6902 = smul.addr %s6901, 32
        %s6903 = smul.addr %s6902, 8
        %s6904 = scalar_lea.vmem %s8, %s6903
        // Predicated region
        $region64: #{lfb_d_forward.1} parent=51 // pred_check
          %p6905 = pneg %p211
        $region65: #{lfb_d_forward.1} parent=51 // pred_check_branch
          %6907 = sbr.rel (%p6905) target = $region67
        $region66: #{lfb_d_forward.1} parent=51 // pred_region
          _
        $region67: #{lfb_d_forward.1} parent=51 // pred_fallthru
          _
      $region52: #{lfb_d_forward.1} parent=5 // pred_fallthru
        _
      %p6908 = scmp.le.s32.totalorder 2, %s15
      // Predicated region
      $region68: #{lfb_d_forward.1} parent=5 // pred_check
        %p6909 = pneg %p6908
      $region69: #{lfb_d_forward.1} parent=5 // pred_check_branch
        %6911 = sbr.rel (%p6909) target = $region71
      $region70: #{lfb_d_forward.1} parent=5 // pred_region
        %s6912 = ssub.s32 %s15, 2
        // Predicated region
        $region72: #{lfb_d_forward.1} parent=70 // pred_check
          %p6913 = pneg %p217
        $region73: #{lfb_d_forward.1} parent=70 // pred_check_branch
          %6915 = sbr.rel (%p6913) target = $region75
        $region74: #{lfb_d_forward.1} parent=70 // pred_region
          %p6916 = scmp.lt.s32.totalorder %s21, 1
          %s6917 = scalar_select %p6916, %s21, 1
          %s6918 = smul.addr %s6917, 32
          %s6919 = smul.addr %s6918, 8
          %s6920 = scalar_lea.vmem %s8, %s6919
        $region75: #{lfb_d_forward.1} parent=70 // pred_fallthru
          _
      $region71: #{lfb_d_forward.1} parent=5 // pred_fallthru
        _
    $region6: #{lfb_d_forward.1} parent=1 // loop_footer
      %s19 = sadd.s32 1, %s15
    $region7: #{lfb_d_forward.1} parent=1 // loop_footer_branch
      %14 = sbr.rel target = $region3
    $region8: #{lfb_d_forward.1} parent=1 // loop_exit
      _
    %6921 = vsyncpa [#allocation8], 1
    %s6922 = scalar_lea.sflag [#allocation8], 1
    %6923 = vsyncpa %s6922, 1

</llo_original>
